<compile_context>
chip_gen: v6e
topology: v6e:2x2x1
jax: 0.10.0
libtpu: 0.0.40
codegen_flags: <defaults>
</compile_context>

<pallas_src>
import functools

import jax
import jax.numpy as jnp
from jax.experimental import pallas as pl
from jax.experimental.pallas import tpu as pltpu


def _round_up(x, m):
    return (x + m - 1) // m * m


def _tanh_dtype():
    """bf16 tanh on chips with a bf16 EUP (v6e/v7x); f32 elsewhere (v5e...)."""
    try:
        kind = jax.devices()[0].device_kind.lower()
    except Exception:
        kind = ""
    return jnp.bfloat16 if ("v6" in kind or "v7" in kind) else jnp.float32


def mlp_kernel(x_ref, w1_ref, b1_ref, w2_ref, b2_ref, w3_ref, b3_ref, o_ref,
               *, tanh_dtype):
    # Layer 1: [TB,896]bf16 @ [896,896]bf16 -> f32 acc (MXU), +bias (VPU f32),
    # tanh on the EUP in `tanh_dtype`; activation materialized directly in bf16.
    a1 = (jnp.dot(x_ref[...], w1_ref[...], preferred_element_type=jnp.float32)
          + b1_ref[...])
    h1 = jnp.tanh(a1.astype(tanh_dtype)).astype(jnp.bfloat16)

    # Layer 2.
    a2 = (jnp.dot(h1, w2_ref[...], preferred_element_type=jnp.float32)
          + b2_ref[...])
    h2 = jnp.tanh(a2.astype(tanh_dtype)).astype(jnp.bfloat16)

    # Final: [TB,896] @ [896,128] + [1,128]; padded logit columns are exact 0.
    out = (jnp.dot(h2, w3_ref[...], preferred_element_type=jnp.float32)
           + b3_ref[...])
    o_ref[...] = out.astype(o_ref.dtype)


def prepare_params(params):
    """Zero-pad every dim to a multiple of 128 and cast weights to bf16.

    784 -> 896 (input K), 800 -> 896 (hidden), 10 -> 128 (logits).  Exact:
    zero input columns hit zero weight rows, tanh(0)=0 feeds zero weight rows,
    and padded logit columns come out exactly 0 and are sliced off.
    Weights are [in, out] bf16; biases are [1, out] f32.  Done once, offline.
    """
    w1, b1, w2, b2, w3, b3 = params
    k_in, h1 = w1.shape
    _, h2 = w2.shape
    n_out = w3.shape[1]
    pk, p1, p2, po = (_round_up(d, 128) for d in (k_in, h1, h2, n_out))

    w1p = jnp.zeros((pk, p1), jnp.bfloat16).at[:k_in, :h1].set(w1.astype(jnp.bfloat16))
    b1p = jnp.zeros((1, p1), jnp.float32).at[:, :h1].set(b1)
    w2p = jnp.zeros((p1, p2), jnp.bfloat16).at[:h1, :h2].set(w2.astype(jnp.bfloat16))
    b2p = jnp.zeros((1, p2), jnp.float32).at[:, :h2].set(b2)
    w3p = jnp.zeros((p2, po), jnp.bfloat16).at[:h2, :n_out].set(w3.astype(jnp.bfloat16))
    b3p = jnp.zeros((1, po), jnp.float32).at[:, :n_out].set(b3)
    return w1p, b1p, w2p, b2p, w3p, b3p


def _choose_tile(B, tb):
    """Pick (TB, padded_B).

    Tiny batches: one full-extent tile rounded up to 16 rows (bf16 sublanes).
    Otherwise TB is a multiple of 128, capped at `tb`, and forced so the grid
    has at least 2 steps (both v7x TensorCores get work via "parallel").
    """
    b16 = _round_up(B, 16)
    if b16 <= 128:
        return b16, b16
    Bp = _round_up(B, 128)
    TB = min(tb, Bp)
    if TB == Bp:                       # would be a single grid step
        TB = max(128, (Bp // 2) // 128 * 128)
    Bp = _round_up(B, TB)
    return TB, Bp


def _run(x, w1, b1, w2, b2, w3, b3, TB, Bp, tanh_dtype, single_buffer_weights):
    n_in = x.shape[1]          # 896
    n_out = w3.shape[1]        # 128 (padded logits)
    grid = (Bp // TB,)

    # Weight/bias index_maps always return block (0, 0): loaded into VMEM once
    # and resident across grid steps; single-buffered to halve their footprint.
    wkw = {"pipeline_mode": pl.Buffered(1)} if single_buffer_weights else {}

    def resident(shape):
        return pl.BlockSpec(shape, lambda i: (0, 0), **wkw)

    kernel = functools.partial(mlp_kernel, tanh_dtype=tanh_dtype)

    h1w, h2w = w1.shape[1], w2.shape[1]
    flops = 2 * Bp * (n_in * h1w + h1w * h2w + h2w * n_out)
    transcendentals = Bp * (h1w + h2w)
    bytes_accessed = int(
        sum(int(a.size) * a.dtype.itemsize for a in (w1, b1, w2, b2, w3, b3))
        + int(x.size) * x.dtype.itemsize
        + Bp * n_out * 4)

    return pl.pallas_call(
        kernel,
        out_shape=jax.ShapeDtypeStruct((Bp, n_out), jnp.float32),
        grid_spec=pltpu.PrefetchScalarGridSpec(
            num_scalar_prefetch=0,
            grid=grid,
            in_specs=[
                pl.BlockSpec((TB, n_in), lambda i: (i, 0)),   # streamed x tile
                resident(w1.shape), resident(b1.shape),
                resident(w2.shape), resident(b2.shape),
                resident(w3.shape), resident(b3.shape),
            ],
            out_specs=pl.BlockSpec((TB, n_out), lambda i: (i, 0)),
        ),
        compiler_params=pltpu.CompilerParams(
            dimension_semantics=("parallel",),   # megacore batch split on v7x
            vmem_limit_bytes=32 << 20,           # sized for TB=1024 + resident weights
        ),
        cost_estimate=pl.CostEstimate(
            flops=flops,
            transcendentals=transcendentals,
            bytes_accessed=bytes_accessed),
    )(x, w1, b1, w2, b2, w3, b3)


def mlp_forward(x_nchw, prepared_params, tb=1024):
    """x_nchw: [B, 1, 28, 28] float32. Returns logits [B, 10] float32."""
    w1, b1, w2, b2, w3, b3 = prepared_params
    B = x_nchw.shape[0]
    n_in_raw = x_nchw.shape[1] * x_nchw.shape[2] * x_nchw.shape[3]   # 784
    n_in = w1.shape[0]                                               # 896 padded K
    n_out_raw = 10

    x = x_nchw.reshape(B, n_in_raw).astype(jnp.bfloat16)   # same as torch .view

    TB, Bp = _choose_tile(B, tb)
    # Pad batch rows (to a multiple of TB) and feature columns (784 -> 896) so
    # every tile is lane-dense.  Padded rows/cols are zeros and sliced off.
    x = jnp.pad(x, ((0, Bp - B), (0, n_in - n_in_raw)))

    tanh_dtype = _tanh_dtype()
    try:
        out = _run(x, w1, b1, w2, b2, w3, b3, TB, Bp, tanh_dtype, True)
    except Exception:
        # pl.Buffered(1) unsupported on this jax version: fall back to default
        # double-buffered weight blocks (correct, slightly more VMEM).
        out = _run(x, w1, b1, w2, b2, w3, b3, TB, Bp, tanh_dtype, False)

    return out[:B, :n_out_raw]


def init_params(key, hidden_layers=(800, 800)):
    """Deterministic init mimicking torch.nn.Linear default U(-1/sqrt(in), 1/sqrt(in))."""
    dims = [28 * 28, hidden_layers[0], hidden_layers[1], 10]
    params = []
    for i in range(3):
        key, kw, kb = jax.random.split(key, 3)
        fan_in, fan_out = dims[i], dims[i + 1]
        bound = 1.0 / (fan_in ** 0.5)
        w = jax.random.uniform(kw, (fan_in, fan_out), jnp.float32, -bound, bound)
        b = jax.random.uniform(kb, (1, fan_out), jnp.float32, -bound, bound)
        params += [w, b]
    return tuple(params)


def mlp_reference(x_nchw, params):
    """f32 reference matching the PyTorch forward (dropout p=0 => identity)."""
    w1, b1, w2, b2, w3, b3 = params
    x = x_nchw.reshape(x_nchw.shape[0], 28 * 28)
    h1 = jnp.tanh(x @ w1 + b1)
    h2 = jnp.tanh(h1 @ w2 + b2)
    return h2 @ w3 + b3


if __name__ == "__main__":
    key = jax.random.PRNGKey(0)
    key, kx1, kx2 = jax.random.split(key, 3)

    params = init_params(key)
    prepared = prepare_params(params)

    # Small batch: single full-extent tile (16 rows after sublane rounding).
    B1 = 8
    x1 = jax.random.normal(kx1, (B1, 1, 28, 28), jnp.float32)  # NCHW like PyTorch
    out1 = jax.block_until_ready(mlp_forward(x1, prepared))
    ref1 = mlp_reference(x1, params)
    assert out1.shape == (B1, 10), out1.shape
    assert jnp.allclose(out1, ref1, atol=3e-2, rtol=3e-2), (
        "mismatch vs JAX reference (small batch): "
        f"max abs diff {float(jnp.max(jnp.abs(out1 - ref1)))}")

    # Batch that is not a multiple of the tile: exercises padding plus a
    # multi-step grid (>= 2 steps) with resident single-buffered weights.
    B2 = 272
    x2 = jax.random.normal(kx2, (B2, 1, 28, 28), jnp.float32)
    out2 = jax.block_until_ready(mlp_forward(x2, prepared))
    ref2 = mlp_reference(x2, params)
    assert out2.shape == (B2, 10), out2.shape
    assert jnp.allclose(out2, ref2, atol=3e-2, rtol=3e-2), (
        "mismatch vs JAX reference (tiled batch): "
        f"max abs diff {float(jnp.max(jnp.abs(out2 - ref2)))}")

    print("KERNEL_OK")
</pallas_src>

<mosaic_0001>
module attributes {stable_mosaic.version = 11 : i64} {
  func.func @mlp_kernel(%arg0: i32, %arg1: memref<16x896xbf16, #tpu.memory_space<vmem>>, %arg2: memref<896x896xbf16, #tpu.memory_space<vmem>>, %arg3: memref<1x896xf32, #tpu.memory_space<vmem>>, %arg4: memref<896x896xbf16, #tpu.memory_space<vmem>>, %arg5: memref<1x896xf32, #tpu.memory_space<vmem>>, %arg6: memref<896x128xbf16, #tpu.memory_space<vmem>>, %arg7: memref<1x128xf32, #tpu.memory_space<vmem>>, %arg8: memref<16x128xf32, #tpu.memory_space<vmem>>) attributes {dimension_semantics = [#tpu.dimension_semantics<parallel>], iteration_bounds = array<i64: 1>, scalar_prefetch = 0 : i64, scratch_operands = 0 : i64, tpu.core_type = #tpu.core_type<tc>, window_params = [{transform_indices = @transform_0, window_bounds = array<i64: 16, 896>}, {pipeline_mode = #tpu.pipeline_mode<synchronous>, transform_indices = @transform_1, window_bounds = array<i64: 896, 896>}, {pipeline_mode = #tpu.pipeline_mode<synchronous>, transform_indices = @transform_2, window_bounds = array<i64: 1, 896>}, {pipeline_mode = #tpu.pipeline_mode<synchronous>, transform_indices = @transform_3, window_bounds = array<i64: 896, 896>}, {pipeline_mode = #tpu.pipeline_mode<synchronous>, transform_indices = @transform_4, window_bounds = array<i64: 1, 896>}, {pipeline_mode = #tpu.pipeline_mode<synchronous>, transform_indices = @transform_5, window_bounds = array<i64: 896, 128>}, {pipeline_mode = #tpu.pipeline_mode<synchronous>, transform_indices = @transform_6, window_bounds = array<i64: 1, 128>}, {transform_indices = @transform_7, window_bounds = array<i64: 16, 128>}]} {
    %c0 = arith.constant 0 : index
    %c0_0 = arith.constant 0 : index
    %0 = vector.load %arg1[%c0, %c0_0] : memref<16x896xbf16, #tpu.memory_space<vmem>>, vector<16x896xbf16>
    %c0_1 = arith.constant 0 : index
    %c0_2 = arith.constant 0 : index
    %1 = vector.load %arg2[%c0_1, %c0_2] : memref<896x896xbf16, #tpu.memory_space<vmem>>, vector<896x896xbf16>
    %cst = arith.constant dense<0.000000e+00> : vector<16x896xf32>
    %2 = tpu.matmul %0, %1, %cst {dimension_numbers = #tpu.dot_dimension_numbers<[1], [0], [0], [1], [0, 0, 1, 1], [], []>} : vector<16x896xbf16>, vector<896x896xbf16>, vector<16x896xf32> -> vector<16x896xf32>
    %c0_3 = arith.constant 0 : index
    %c0_4 = arith.constant 0 : index
    %3 = vector.load %arg3[%c0_3, %c0_4] : memref<1x896xf32, #tpu.memory_space<vmem>>, vector<1x896xf32>
    %4 = vector.broadcast %3 : vector<1x896xf32> to vector<16x896xf32>
    %5 = arith.addf %2, %4 : vector<16x896xf32>
    %6 = math.tanh %5 : vector<16x896xf32>
    %7 = arith.truncf %6 : vector<16x896xf32> to vector<16x896xbf16>
    %c0_5 = arith.constant 0 : index
    %c0_6 = arith.constant 0 : index
    %8 = vector.load %arg4[%c0_5, %c0_6] : memref<896x896xbf16, #tpu.memory_space<vmem>>, vector<896x896xbf16>
    %cst_7 = arith.constant dense<0.000000e+00> : vector<16x896xf32>
    %9 = tpu.matmul %7, %8, %cst_7 {dimension_numbers = #tpu.dot_dimension_numbers<[1], [0], [0], [1], [0, 0, 1, 1], [], []>} : vector<16x896xbf16>, vector<896x896xbf16>, vector<16x896xf32> -> vector<16x896xf32>
    %c0_8 = arith.constant 0 : index
    %c0_9 = arith.constant 0 : index
    %10 = vector.load %arg5[%c0_8, %c0_9] : memref<1x896xf32, #tpu.memory_space<vmem>>, vector<1x896xf32>
    %11 = vector.broadcast %10 : vector<1x896xf32> to vector<16x896xf32>
    %12 = arith.addf %9, %11 : vector<16x896xf32>
    %13 = math.tanh %12 : vector<16x896xf32>
    %14 = arith.truncf %13 : vector<16x896xf32> to vector<16x896xbf16>
    %c0_10 = arith.constant 0 : index
    %c0_11 = arith.constant 0 : index
    %15 = vector.load %arg6[%c0_10, %c0_11] : memref<896x128xbf16, #tpu.memory_space<vmem>>, vector<896x128xbf16>
    %cst_12 = arith.constant dense<0.000000e+00> : vector<16x128xf32>
    %16 = tpu.matmul %14, %15, %cst_12 {dimension_numbers = #tpu.dot_dimension_numbers<[1], [0], [0], [1], [0, 0, 1, 1], [], []>} : vector<16x896xbf16>, vector<896x128xbf16>, vector<16x128xf32> -> vector<16x128xf32>
    %c0_13 = arith.constant 0 : index
    %c0_14 = arith.constant 0 : index
    %17 = vector.load %arg7[%c0_13, %c0_14] : memref<1x128xf32, #tpu.memory_space<vmem>>, vector<1x128xf32>
    %18 = vector.broadcast %17 : vector<1x128xf32> to vector<16x128xf32>
    %19 = arith.addf %16, %18 : vector<16x128xf32>
    %c0_15 = arith.constant 0 : index
    %c0_16 = arith.constant 0 : index
    %20 = vector.load %arg8[%c0_15, %c0_16] : memref<16x128xf32, #tpu.memory_space<vmem>>, vector<16x128xf32>
    tpu.vector_store %arg8[%c0_15, %c0_16], %19 {strides = array<i32>} : memref<16x128xf32, #tpu.memory_space<vmem>>, vector<16x128xf32>,
    return
  }
  func.func @transform_0(%arg0: i32) -> (i32, i32) {
    %c0_i32 = arith.constant 0 : i32
    %c0_i32_0 = arith.constant 0 : i32
    return %arg0, %c0_i32 : i32, i32
  }
  func.func @transform_1(%arg0: i32) -> (i32, i32) {
    %c0_i32 = arith.constant 0 : i32
    %c0_i32_0 = arith.constant 0 : i32
    %c0_i32_1 = arith.constant 0 : i32
    return %c0_i32, %c0_i32_0 : i32, i32
  }
  func.func @transform_2(%arg0: i32) -> (i32, i32) {
    %c0_i32 = arith.constant 0 : i32
    %c0_i32_0 = arith.constant 0 : i32
    %c0_i32_1 = arith.constant 0 : i32
    return %c0_i32, %c0_i32_0 : i32, i32
  }
  func.func @transform_3(%arg0: i32) -> (i32, i32) {
    %c0_i32 = arith.constant 0 : i32
    %c0_i32_0 = arith.constant 0 : i32
    %c0_i32_1 = arith.constant 0 : i32
    return %c0_i32, %c0_i32_0 : i32, i32
  }
  func.func @transform_4(%arg0: i32) -> (i32, i32) {
    %c0_i32 = arith.constant 0 : i32
    %c0_i32_0 = arith.constant 0 : i32
    %c0_i32_1 = arith.constant 0 : i32
    return %c0_i32, %c0_i32_0 : i32, i32
  }
  func.func @transform_5(%arg0: i32) -> (i32, i32) {
    %c0_i32 = arith.constant 0 : i32
    %c0_i32_0 = arith.constant 0 : i32
    %c0_i32_1 = arith.constant 0 : i32
    return %c0_i32, %c0_i32_0 : i32, i32
  }
  func.func @transform_6(%arg0: i32) -> (i32, i32) {
    %c0_i32 = arith.constant 0 : i32
    %c0_i32_0 = arith.constant 0 : i32
    %c0_i32_1 = arith.constant 0 : i32
    return %c0_i32, %c0_i32_0 : i32, i32
  }
  func.func @transform_7(%arg0: i32) -> (i32, i32) {
    %c0_i32 = arith.constant 0 : i32
    %c0_i32_0 = arith.constant 0 : i32
    return %arg0, %c0_i32 : i32, i32
  }
}

module attributes {stable_mosaic.version = 11 : i64} {
  func.func @mlp_kernel(%arg0: i32, %arg1: memref<16x896xbf16, #tpu.memory_space<vmem>>, %arg2: memref<896x896xbf16, #tpu.memory_space<vmem>>, %arg3: memref<1x896xf32, #tpu.memory_space<vmem>>, %arg4: memref<896x896xbf16, #tpu.memory_space<vmem>>, %arg5: memref<1x896xf32, #tpu.memory_space<vmem>>, %arg6: memref<896x128xbf16, #tpu.memory_space<vmem>>, %arg7: memref<1x128xf32, #tpu.memory_space<vmem>>, %arg8: memref<16x128xf32, #tpu.memory_space<vmem>>) attributes {dimension_semantics = [#tpu.dimension_semantics<parallel>], iteration_bounds = array<i64: 1>, scalar_prefetch = 0 : i64, scratch_operands = 0 : i64, tpu.core_type = #tpu.core_type<tc>, window_params = [{transform_indices = @transform_0, window_bounds = array<i64: 16, 896>}, {pipeline_mode = #tpu.pipeline_mode<synchronous>, transform_indices = @transform_1, window_bounds = array<i64: 896, 896>}, {pipeline_mode = #tpu.pipeline_mode<synchronous>, transform_indices = @transform_2, window_bounds = array<i64: 1, 896>}, {pipeline_mode = #tpu.pipeline_mode<synchronous>, transform_indices = @transform_3, window_bounds = array<i64: 896, 896>}, {pipeline_mode = #tpu.pipeline_mode<synchronous>, transform_indices = @transform_4, window_bounds = array<i64: 1, 896>}, {pipeline_mode = #tpu.pipeline_mode<synchronous>, transform_indices = @transform_5, window_bounds = array<i64: 896, 128>}, {pipeline_mode = #tpu.pipeline_mode<synchronous>, transform_indices = @transform_6, window_bounds = array<i64: 1, 128>}, {transform_indices = @transform_7, window_bounds = array<i64: 16, 128>}]} {
    %c0 = arith.constant 0 : index
    %c0_0 = arith.constant 0 : index
    %0 = vector.load %arg1[%c0, %c0_0] : memref<16x896xbf16, #tpu.memory_space<vmem>>, vector<16x896xbf16>
    %c0_1 = arith.constant 0 : index
    %c0_2 = arith.constant 0 : index
    %1 = vector.load %arg2[%c0_1, %c0_2] : memref<896x896xbf16, #tpu.memory_space<vmem>>, vector<896x896xbf16>
    %cst = arith.constant dense<0.000000e+00> : vector<16x896xf32>
    %2 = tpu.matmul %0, %1, %cst {dimension_numbers = #tpu.dot_dimension_numbers<[1], [0], [0], [1], [0, 0, 1, 1], [], []>} : vector<16x896xbf16>, vector<896x896xbf16>, vector<16x896xf32> -> vector<16x896xf32>
    %c0_3 = arith.constant 0 : index
    %c0_4 = arith.constant 0 : index
    %3 = vector.load %arg3[%c0_3, %c0_4] : memref<1x896xf32, #tpu.memory_space<vmem>>, vector<1x896xf32>
    %4 = vector.broadcast %3 : vector<1x896xf32> to vector<16x896xf32>
    %5 = arith.addf %2, %4 : vector<16x896xf32>
    %6 = math.tanh %5 : vector<16x896xf32>
    %7 = arith.truncf %6 : vector<16x896xf32> to vector<16x896xbf16>
    %c0_5 = arith.constant 0 : index
    %c0_6 = arith.constant 0 : index
    %8 = vector.load %arg4[%c0_5, %c0_6] : memref<896x896xbf16, #tpu.memory_space<vmem>>, vector<896x896xbf16>
    %cst_7 = arith.constant dense<0.000000e+00> : vector<16x896xf32>
    %9 = tpu.matmul %7, %8, %cst_7 {dimension_numbers = #tpu.dot_dimension_numbers<[1], [0], [0], [1], [0, 0, 1, 1], [], []>} : vector<16x896xbf16>, vector<896x896xbf16>, vector<16x896xf32> -> vector<16x896xf32>
    %c0_8 = arith.constant 0 : index
    %c0_9 = arith.constant 0 : index
    %10 = vector.load %arg5[%c0_8, %c0_9] : memref<1x896xf32, #tpu.memory_space<vmem>>, vector<1x896xf32>
    %11 = vector.broadcast %10 : vector<1x896xf32> to vector<16x896xf32>
    %12 = arith.addf %9, %11 : vector<16x896xf32>
    %13 = math.tanh %12 : vector<16x896xf32>
    %14 = arith.truncf %13 : vector<16x896xf32> to vector<16x896xbf16>
    %c0_10 = arith.constant 0 : index
    %c0_11 = arith.constant 0 : index
    %15 = vector.load %arg6[%c0_10, %c0_11] : memref<896x128xbf16, #tpu.memory_space<vmem>>, vector<896x128xbf16>
    %cst_12 = arith.constant dense<0.000000e+00> : vector<16x128xf32>
    %16 = tpu.matmul %14, %15, %cst_12 {dimension_numbers = #tpu.dot_dimension_numbers<[1], [0], [0], [1], [0, 0, 1, 1], [], []>} : vector<16x896xbf16>, vector<896x128xbf16>, vector<16x128xf32> -> vector<16x128xf32>
    %c0_13 = arith.constant 0 : index
    %c0_14 = arith.constant 0 : index
    %17 = vector.load %arg7[%c0_13, %c0_14] : memref<1x128xf32, #tpu.memory_space<vmem>>, vector<1x128xf32>
    %18 = vector.broadcast %17 : vector<1x128xf32> to vector<16x128xf32>
    %19 = arith.addf %16, %18 : vector<16x128xf32>
    %c0_15 = arith.constant 0 : index
    %c0_16 = arith.constant 0 : index
    %20 = vector.load %arg8[%c0_15, %c0_16] : memref<16x128xf32, #tpu.memory_space<vmem>>, vector<16x128xf32>
    tpu.vector_store %arg8[%c0_15, %c0_16], %19 {strides = array<i32>} : memref<16x128xf32, #tpu.memory_space<vmem>>, vector<16x128xf32>,
    return
  }
  func.func @transform_0(%arg0: i32) -> (i32, i32) {
    %c0_i32 = arith.constant 0 : i32
    %c0_i32_0 = arith.constant 0 : i32
    return %arg0, %c0_i32 : i32, i32
  }
  func.func @transform_1(%arg0: i32) -> (i32, i32) {
    %c0_i32 = arith.constant 0 : i32
    %c0_i32_0 = arith.constant 0 : i32
    %c0_i32_1 = arith.constant 0 : i32
    return %c0_i32, %c0_i32_0 : i32, i32
  }
  func.func @transform_2(%arg0: i32) -> (i32, i32) {
    %c0_i32 = arith.constant 0 : i32
    %c0_i32_0 = arith.constant 0 : i32
    %c0_i32_1 = arith.constant 0 : i32
    return %c0_i32, %c0_i32_0 : i32, i32
  }
  func.func @transform_3(%arg0: i32) -> (i32, i32) {
    %c0_i32 = arith.constant 0 : i32
    %c0_i32_0 = arith.constant 0 : i32
    %c0_i32_1 = arith.constant 0 : i32
    return %c0_i32, %c0_i32_0 : i32, i32
  }
  func.func @transform_4(%arg0: i32) -> (i32, i32) {
    %c0_i32 = arith.constant 0 : i32
    %c0_i32_0 = arith.constant 0 : i32
    %c0_i32_1 = arith.constant 0 : i32
    return %c0_i32, %c0_i32_0 : i32, i32
  }
  func.func @transform_5(%arg0: i32) -> (i32, i32) {
    %c0_i32 = arith.constant 0 : i32
    %c0_i32_0 = arith.constant 0 : i32
    %c0_i32_1 = arith.constant 0 : i32
    return %c0_i32, %c0_i32_0 : i32, i32
  }
  func.func @transform_6(%arg0: i32) -> (i32, i32) {
    %c0_i32 = arith.constant 0 : i32
    %c0_i32_0 = arith.constant 0 : i32
    %c0_i32_1 = arith.constant 0 : i32
    return %c0_i32, %c0_i32_0 : i32, i32
  }
  func.func @transform_7(%arg0: i32) -> (i32, i32) {
    %c0_i32 = arith.constant 0 : i32
    %c0_i32_0 = arith.constant 0 : i32
    return %arg0, %c0_i32 : i32, i32
  }
}

</mosaic_0001>

<llo_original>
// kernel: tpu_custom_call.1
$region0: #{tpu_custom_call.1}
  #allocation0 [shape = 'u32[]', space=smem, size = 0x4, offset = 0x4, fixed_abs, tag = 'smem constant byte address 0x4 - core index']
  #allocation1 [shape = 'u32[144,128]{1,0:T(1,128)}', space=vmem, size = 0x12000, scoped, tag = 'internal scratch']
  %s0 = inlined_call_operand.hbm [shape: bf16[16,896], index: 0, kind: input, shape index: {}]
  %s1 = inlined_call_operand.hbm [shape: bf16[896,896], index: 1, kind: input, shape index: {}]
  %s2 = inlined_call_operand.hbm [shape: f32[1,896], index: 2, kind: input, shape index: {}]
  %s3 = inlined_call_operand.hbm [shape: bf16[896,896], index: 3, kind: input, shape index: {}]
  %s4 = inlined_call_operand.hbm [shape: f32[1,896], index: 4, kind: input, shape index: {}]
  %s5 = inlined_call_operand.hbm [shape: bf16[896,128], index: 5, kind: input, shape index: {}]
  %s6 = inlined_call_operand.hbm [shape: f32[1,128], index: 6, kind: input, shape index: {}]
  %s7 = inlined_call_operand.hbm [shape: f32[16,128], index: 7, kind: output, shape index: {}]
  %s8 = sld [smem:[#allocation0]]
  $region66: #{tpu_custom_call.1} parent=0
    _
  %s10 = ssub.s32 1, %s8
  %s11 = scalar_select 0, %s10, %s8
  $region1: #{tpu_custom_call.1} parent=0
    #allocation2 [shape = 'u8[28672]{0}', space=vmem, size = 0x7000, scoped, tag = 'input window, operand 0, single buffered']
    #allocation3 [shape = 's32[1]{0}', space=sflag, size = 0x4, scoped, tag = 'scoped memory for tpu_custom_call.1']
    #allocation4 [shape = 's32[1]{0}', space=sflag, size = 0x4, scoped, tag = 'scoped memory for tpu_custom_call.1']
    #allocation5 [shape = 'u8[1605632]{0}', space=vmem, size = 0x188000, scoped, tag = 'input window, operand 1, single buffered']
    #allocation6 [shape = 's32[1]{0}', space=sflag, size = 0x4, scoped, tag = 'scoped memory for tpu_custom_call.1']
    #allocation7 [shape = 'u8[3584]{0}', space=vmem, size = 0x1000, scoped, tag = 'input window, operand 2, single buffered']
    #allocation8 [shape = 'u8[1605632]{0}', space=vmem, size = 0x188000, scoped, tag = 'input window, operand 3, single buffered']
    #allocation9 [shape = 's32[1]{0}', space=sflag, size = 0x4, scoped, tag = 'scoped memory for tpu_custom_call.1']
    #allocation10 [shape = 'u8[3584]{0}', space=vmem, size = 0x1000, scoped, tag = 'input window, operand 4, single buffered']
    #allocation11 [shape = 'u8[229376]{0}', space=vmem, size = 0x38000, scoped, tag = 'input window, operand 5, single buffered']
    #allocation12 [shape = 's32[1]{0}', space=sflag, size = 0x4, scoped, tag = 'scoped memory for tpu_custom_call.1']
    #allocation13 [shape = 'u8[512]{0}', space=vmem, size = 0x400, scoped, tag = 'input window, operand 6, single buffered']
    #allocation14 [shape = 'u8[8192]{0}', space=vmem, size = 0x2000, scoped, tag = 'output window, operand 0, single buffered']
    %12 = vsyncpa [#allocation3], 0
    %13 = vsyncpa [#allocation6], 0
    %14 = vsyncpa [#allocation9], 0
    %15 = vsyncpa [#allocation12], 0
    %16 = vsyncpa [#allocation4], 0
    // Predicated region
    $region2: #{tpu_custom_call.1} parent=1 // pred_check
      _
    $region3: #{tpu_custom_call.1} parent=1 // pred_check_branch
      %18 = sbr.rel (0) target = $region5
    $region4: #{tpu_custom_call.1} parent=1 // pred_region
      %s20 = ssub.s32 896, 896
      %21 = vsyncadd [#allocation3], %s20
      %s22 = sshll.u32 [#allocation2], 4
      %s23 = int_to_ptr.vmem [resolvable:$true] %s22
      %28 = dma.hbm_to_vmem [thread:$0]  %s0, 896, %s23, [#allocation3], 448, 448, 28
    $region5: #{tpu_custom_call.1} parent=1 // pred_fallthru
      _
    // Predicated region
    $region6: #{tpu_custom_call.1} parent=1 // pred_check
      _
    $region7: #{tpu_custom_call.1} parent=1 // pred_check_branch
      %30 = sbr.rel (0) target = $region9
    $region8: #{tpu_custom_call.1} parent=1 // pred_region
      %s32 = ssub.s32 50176, 50176
      %33 = vsyncadd [#allocation6], %s32
      %s34 = sshll.u32 [#allocation5], 4
      %s35 = int_to_ptr.vmem [resolvable:$true] %s34
      %40 = dma.hbm_to_vmem [thread:$0]  %s1, 50176, %s35, [#allocation6], 448, 448, 28
    $region9: #{tpu_custom_call.1} parent=1 // pred_fallthru
      _
    // Predicated region
    $region10: #{tpu_custom_call.1} parent=1 // pred_check
      _
    $region11: #{tpu_custom_call.1} parent=1 // pred_check_branch
      %42 = sbr.rel (0) target = $region13
    $region12: #{tpu_custom_call.1} parent=1 // pred_region
      %s44 = ssub.s32 112, 112
      %45 = vsyncadd [#allocation6], %s44
      %s47 = sshll.u32 [#allocation7], 4
      %s48 = int_to_ptr.vmem [resolvable:$true] %s47
      %50 = dma.hbm_to_vmem [thread:$0]  %s2, 112, %s48, [#allocation6]
    $region13: #{tpu_custom_call.1} parent=1 // pred_fallthru
      _
    // Predicated region
    $region14: #{tpu_custom_call.1} parent=1 // pred_check
      _
    $region15: #{tpu_custom_call.1} parent=1 // pred_check_branch
      %52 = sbr.rel (0) target = $region17
    $region16: #{tpu_custom_call.1} parent=1 // pred_region
      %s54 = ssub.s32 50176, 50176
      %55 = vsyncadd [#allocation9], %s54
      %s56 = sshll.u32 [#allocation8], 4
      %s57 = int_to_ptr.vmem [resolvable:$true] %s56
      %62 = dma.hbm_to_vmem [thread:$0]  %s3, 50176, %s57, [#allocation9], 448, 448, 28
    $region17: #{tpu_custom_call.1} parent=1 // pred_fallthru
      _
    // Predicated region
    $region18: #{tpu_custom_call.1} parent=1 // pred_check
      _
    $region19: #{tpu_custom_call.1} parent=1 // pred_check_branch
      %64 = sbr.rel (0) target = $region21
    $region20: #{tpu_custom_call.1} parent=1 // pred_region
      %s66 = ssub.s32 112, 112
      %67 = vsyncadd [#allocation9], %s66
      %s69 = sshll.u32 [#allocation10], 4
      %s70 = int_to_ptr.vmem [resolvable:$true] %s69
      %72 = dma.hbm_to_vmem [thread:$0]  %s4, 112, %s70, [#allocation9]
    $region21: #{tpu_custom_call.1} parent=1 // pred_fallthru
      _
    // Predicated region
    $region22: #{tpu_custom_call.1} parent=1 // pred_check
      _
    $region23: #{tpu_custom_call.1} parent=1 // pred_check_branch
      %74 = sbr.rel (0) target = $region25
    $region24: #{tpu_custom_call.1} parent=1 // pred_region
      %s76 = ssub.s32 7168, 7168
      %77 = vsyncadd [#allocation12], %s76
      %s78 = sshll.u32 [#allocation11], 4
      %s79 = int_to_ptr.vmem [resolvable:$true] %s78
      %84 = dma.hbm_to_vmem [thread:$0]  %s5, 7168, %s79, [#allocation12], 64, 64, 4
    $region25: #{tpu_custom_call.1} parent=1 // pred_fallthru
      _
    // Predicated region
    $region26: #{tpu_custom_call.1} parent=1 // pred_check
      _
    $region27: #{tpu_custom_call.1} parent=1 // pred_check_branch
      %86 = sbr.rel (0) target = $region29
    $region28: #{tpu_custom_call.1} parent=1 // pred_region
      %s88 = ssub.s32 16, 16
      %89 = vsyncadd [#allocation12], %s88
      %s91 = sshll.u32 [#allocation13], 4
      %s92 = int_to_ptr.vmem [resolvable:$true] %s91
      %94 = dma.hbm_to_vmem [thread:$0]  %s6, 16, %s92, [#allocation12]
    $region29: #{tpu_custom_call.1} parent=1 // pred_fallthru
      _
    // Predicated region
    $region30: #{tpu_custom_call.1} parent=1 // pred_check
      _
    $region31: #{tpu_custom_call.1} parent=1 // pred_check_branch
      %96 = sbr.rel (0) target = $region33
    $region32: #{tpu_custom_call.1} parent=1 // pred_region
      %97 = dma.done [#allocation3], 896
    $region33: #{tpu_custom_call.1} parent=1 // pred_fallthru
      _
    // Predicated region
    $region34: #{tpu_custom_call.1} parent=1 // pred_check
      _
    $region35: #{tpu_custom_call.1} parent=1 // pred_check_branch
      %99 = sbr.rel (0) target = $region37
    $region36: #{tpu_custom_call.1} parent=1 // pred_region
      %100 = dma.done [#allocation6], 50176
    $region37: #{tpu_custom_call.1} parent=1 // pred_fallthru
      _
    // Predicated region
    $region38: #{tpu_custom_call.1} parent=1 // pred_check
      _
    $region39: #{tpu_custom_call.1} parent=1 // pred_check_branch
      %102 = sbr.rel (0) target = $region41
    $region40: #{tpu_custom_call.1} parent=1 // pred_region
      %103 = dma.done [#allocation6], 112
    $region41: #{tpu_custom_call.1} parent=1 // pred_fallthru
      _
    // Predicated region
    $region42: #{tpu_custom_call.1} parent=1 // pred_check
      _
    $region43: #{tpu_custom_call.1} parent=1 // pred_check_branch
      %105 = sbr.rel (0) target = $region45
    $region44: #{tpu_custom_call.1} parent=1 // pred_region
      %106 = dma.done [#allocation9], 50176
    $region45: #{tpu_custom_call.1} parent=1 // pred_fallthru
      _
    // Predicated region
    $region46: #{tpu_custom_call.1} parent=1 // pred_check
      _
    $region47: #{tpu_custom_call.1} parent=1 // pred_check_branch
      %108 = sbr.rel (0) target = $region49
    $region48: #{tpu_custom_call.1} parent=1 // pred_region
      %109 = dma.done [#allocation9], 112
    $region49: #{tpu_custom_call.1} parent=1 // pred_fallthru
      _
    // Predicated region
    $region50: #{tpu_custom_call.1} parent=1 // pred_check
      _
    $region51: #{tpu_custom_call.1} parent=1 // pred_check_branch
      %111 = sbr.rel (0) target = $region53
    $region52: #{tpu_custom_call.1} parent=1 // pred_region
      %112 = dma.done [#allocation12], 7168
    $region53: #{tpu_custom_call.1} parent=1 // pred_fallthru
      _
    // Predicated region
    $region54: #{tpu_custom_call.1} parent=1 // pred_check
      _
    $region55: #{tpu_custom_call.1} parent=1 // pred_check_branch
      %114 = sbr.rel (0) target = $region57
    $region56: #{tpu_custom_call.1} parent=1 // pred_region
      %115 = dma.done [#allocation12], 16
    $region57: #{tpu_custom_call.1} parent=1 // pred_fallthru
      _
    %v117 = vld [vmem:[#allocation2] sm:$0xff]
    %v118 = vld [vmem:[#allocation2 + $0x8] sm:$0xff]
    %v119 = vld [vmem:[#allocation2 + $0x10] sm:$0xff]
    %v120 = vld [vmem:[#allocation2 + $0x18] sm:$0xf]
    %v121 = vld [vmem:[#allocation2 + $0x1c] sm:$0xff]
    %v122 = vld [vmem:[#allocation2 + $0x24] sm:$0xff]
    %v123 = vld [vmem:[#allocation2 + $0x2c] sm:$0xff]
    %v124 = vld [vmem:[#allocation2 + $0x34] sm:$0xf]
    %v125 = vld [vmem:[#allocation5] sm:$0xff]
    %v126 = vld [vmem:[#allocation5 + $0x8] sm:$0xff]
    %v127 = vld [vmem:[#allocation5 + $0x10] sm:$0xff]
    %v128 = vld [vmem:[#allocation5 + $0x18] sm:$0xf]
    %v129 = vld [vmem:[#allocation5 + $0x1c] sm:$0xff]
    %v130 = vld [vmem:[#allocation5 + $0x24] sm:$0xff]
    %v131 = vld [vmem:[#allocation5 + $0x2c] sm:$0xff]
    %v132 = vld [vmem:[#allocation5 + $0x34] sm:$0xf]
    %v133 = vld [vmem:[#allocation5 + $0x38] sm:$0xff]
    %v134 = vld [vmem:[#allocation5 + $0x40] sm:$0xff]
    %v135 = vld [vmem:[#allocation5 + $0x48] sm:$0xff]
    %v136 = vld [vmem:[#allocation5 + $0x50] sm:$0xf]
    %v137 = vld [vmem:[#allocation5 + $0x54] sm:$0xff]
    %v138 = vld [vmem:[#allocation5 + $0x5c] sm:$0xff]
    %v139 = vld [vmem:[#allocation5 + $0x64] sm:$0xff]
    %v140 = vld [vmem:[#allocation5 + $0x6c] sm:$0xf]
    %v141 = vld [vmem:[#allocation5 + $0x70] sm:$0xff]
    %v142 = vld [vmem:[#allocation5 + $0x78] sm:$0xff]
    %v143 = vld [vmem:[#allocation5 + $0x80] sm:$0xff]
    %v144 = vld [vmem:[#allocation5 + $0x88] sm:$0xf]
    %v145 = vld [vmem:[#allocation5 + $0x8c] sm:$0xff]
    %v146 = vld [vmem:[#allocation5 + $0x94] sm:$0xff]
    %v147 = vld [vmem:[#allocation5 + $0x9c] sm:$0xff]
    %v148 = vld [vmem:[#allocation5 + $0xa4] sm:$0xf]
    %v149 = vld [vmem:[#allocation5 + $0xa8] sm:$0xff]
    %v150 = vld [vmem:[#allocation5 + $0xb0] sm:$0xff]
    %v151 = vld [vmem:[#allocation5 + $0xb8] sm:$0xff]
    %v152 = vld [vmem:[#allocation5 + $0xc0] sm:$0xf]
    %v153 = vld [vmem:[#allocation5 + $0xc4] sm:$0xff]
    %v154 = vld [vmem:[#allocation5 + $0xcc] sm:$0xff]
    %v155 = vld [vmem:[#allocation5 + $0xd4] sm:$0xff]
    %v156 = vld [vmem:[#allocation5 + $0xdc] sm:$0xf]
    %v157 = vld [vmem:[#allocation5 + $0xe0] sm:$0xff]
    %v158 = vld [vmem:[#allocation5 + $0xe8] sm:$0xff]
    %v159 = vld [vmem:[#allocation5 + $0xf0] sm:$0xff]
    %v160 = vld [vmem:[#allocation5 + $0xf8] sm:$0xf]
    %v161 = vld [vmem:[#allocation5 + $0xfc] sm:$0xff]
    %v162 = vld [vmem:[#allocation5 + $0x104] sm:$0xff]
    %v163 = vld [vmem:[#allocation5 + $0x10c] sm:$0xff]
    %v164 = vld [vmem:[#allocation5 + $0x114] sm:$0xf]
    %v165 = vld [vmem:[#allocation5 + $0x118] sm:$0xff]
    %v166 = vld [vmem:[#allocation5 + $0x120] sm:$0xff]
    %v167 = vld [vmem:[#allocation5 + $0x128] sm:$0xff]
    %v168 = vld [vmem:[#allocation5 + $0x130] sm:$0xf]
    %v169 = vld [vmem:[#allocation5 + $0x134] sm:$0xff]
    %v170 = vld [vmem:[#allocation5 + $0x13c] sm:$0xff]
    %v171 = vld [vmem:[#allocation5 + $0x144] sm:$0xff]
    %v172 = vld [vmem:[#allocation5 + $0x14c] sm:$0xf]
    %v173 = vld [vmem:[#allocation5 + $0x150] sm:$0xff]
    %v174 = vld [vmem:[#allocation5 + $0x158] sm:$0xff]
    %v175 = vld [vmem:[#allocation5 + $0x160] sm:$0xff]
    %v176 = vld [vmem:[#allocation5 + $0x168] sm:$0xf]
    %v177 = vld [vmem:[#allocation5 + $0x16c] sm:$0xff]
    %v178 = vld [vmem:[#allocation5 + $0x174] sm:$0xff]
    %v179 = vld [vmem:[#allocation5 + $0x17c] sm:$0xff]
    %v180 = vld [vmem:[#allocation5 + $0x184] sm:$0xf]
    %v181 = vld [vmem:[#allocation5 + $0x188] sm:$0xff]
    %v182 = vld [vmem:[#allocation5 + $0x190] sm:$0xff]
    %v183 = vld [vmem:[#allocation5 + $0x198] sm:$0xff]
    %v184 = vld [vmem:[#allocation5 + $0x1a0] sm:$0xf]
    %v185 = vld [vmem:[#allocation5 + $0x1a4] sm:$0xff]
    %v186 = vld [vmem:[#allocation5 + $0x1ac] sm:$0xff]
    %v187 = vld [vmem:[#allocation5 + $0x1b4] sm:$0xff]
    %v188 = vld [vmem:[#allocation5 + $0x1bc] sm:$0xf]
    %v189 = vld [vmem:[#allocation5 + $0x1c0] sm:$0xff]
    %v190 = vld [vmem:[#allocation5 + $0x1c8] sm:$0xff]
    %v191 = vld [vmem:[#allocation5 + $0x1d0] sm:$0xff]
    %v192 = vld [vmem:[#allocation5 + $0x1d8] sm:$0xf]
    %v193 = vld [vmem:[#allocation5 + $0x1dc] sm:$0xff]
    %v194 = vld [vmem:[#allocation5 + $0x1e4] sm:$0xff]
    %v195 = vld [vmem:[#allocation5 + $0x1ec] sm:$0xff]
    %v196 = vld [vmem:[#allocation5 + $0x1f4] sm:$0xf]
    %v197 = vld [vmem:[#allocation5 + $0x1f8] sm:$0xff]
    %v198 = vld [vmem:[#allocation5 + $0x200] sm:$0xff]
    %v199 = vld [vmem:[#allocation5 + $0x208] sm:$0xff]
    %v200 = vld [vmem:[#allocation5 + $0x210] sm:$0xf]
    %v201 = vld [vmem:[#allocation5 + $0x214] sm:$0xff]
    %v202 = vld [vmem:[#allocation5 + $0x21c] sm:$0xff]
    %v203 = vld [vmem:[#allocation5 + $0x224] sm:$0xff]
    %v204 = vld [vmem:[#allocation5 + $0x22c] sm:$0xf]
    %v205 = vld [vmem:[#allocation5 + $0x230] sm:$0xff]
    %v206 = vld [vmem:[#allocation5 + $0x238] sm:$0xff]
    %v207 = vld [vmem:[#allocation5 + $0x240] sm:$0xff]
    %v208 = vld [vmem:[#allocation5 + $0x248] sm:$0xf]
    %v209 = vld [vmem:[#allocation5 + $0x24c] sm:$0xff]
    %v210 = vld [vmem:[#allocation5 + $0x254] sm:$0xff]
    %v211 = vld [vmem:[#allocation5 + $0x25c] sm:$0xff]
    %v212 = vld [vmem:[#allocation5 + $0x264] sm:$0xf]
    %v213 = vld [vmem:[#allocation5 + $0x268] sm:$0xff]
    %v214 = vld [vmem:[#allocation5 + $0x270] sm:$0xff]
    %v215 = vld [vmem:[#allocation5 + $0x278] sm:$0xff]
    %v216 = vld [vmem:[#allocation5 + $0x280] sm:$0xf]
    %v217 = vld [vmem:[#allocation5 + $0x284] sm:$0xff]
    %v218 = vld [vmem:[#allocation5 + $0x28c] sm:$0xff]
    %v219 = vld [vmem:[#allocation5 + $0x294] sm:$0xff]
    %v220 = vld [vmem:[#allocation5 + $0x29c] sm:$0xf]
    %v221 = vld [vmem:[#allocation5 + $0x2a0] sm:$0xff]
    %v222 = vld [vmem:[#allocation5 + $0x2a8] sm:$0xff]
    %v223 = vld [vmem:[#allocation5 + $0x2b0] sm:$0xff]
    %v224 = vld [vmem:[#allocation5 + $0x2b8] sm:$0xf]
    %v225 = vld [vmem:[#allocation5 + $0x2bc] sm:$0xff]
    %v226 = vld [vmem:[#allocation5 + $0x2c4] sm:$0xff]
    %v227 = vld [vmem:[#allocation5 + $0x2cc] sm:$0xff]
    %v228 = vld [vmem:[#allocation5 + $0x2d4] sm:$0xf]
    %v229 = vld [vmem:[#allocation5 + $0x2d8] sm:$0xff]
    %v230 = vld [vmem:[#allocation5 + $0x2e0] sm:$0xff]
    %v231 = vld [vmem:[#allocation5 + $0x2e8] sm:$0xff]
    %v232 = vld [vmem:[#allocation5 + $0x2f0] sm:$0xf]
    %v233 = vld [vmem:[#allocation5 + $0x2f4] sm:$0xff]
    %v234 = vld [vmem:[#allocation5 + $0x2fc] sm:$0xff]
    %v235 = vld [vmem:[#allocation5 + $0x304] sm:$0xff]
    %v236 = vld [vmem:[#allocation5 + $0x30c] sm:$0xf]
    %v237 = vld [vmem:[#allocation5 + $0x310] sm:$0xff]
    %v238 = vld [vmem:[#allocation5 + $0x318] sm:$0xff]
    %v239 = vld [vmem:[#allocation5 + $0x320] sm:$0xff]
    %v240 = vld [vmem:[#allocation5 + $0x328] sm:$0xf]
    %v241 = vld [vmem:[#allocation5 + $0x32c] sm:$0xff]
    %v242 = vld [vmem:[#allocation5 + $0x334] sm:$0xff]
    %v243 = vld [vmem:[#allocation5 + $0x33c] sm:$0xff]
    %v244 = vld [vmem:[#allocation5 + $0x344] sm:$0xf]
    %v245 = vld [vmem:[#allocation5 + $0x348] sm:$0xff]
    %v246 = vld [vmem:[#allocation5 + $0x350] sm:$0xff]
    %v247 = vld [vmem:[#allocation5 + $0x358] sm:$0xff]
    %v248 = vld [vmem:[#allocation5 + $0x360] sm:$0xf]
    %v249 = vld [vmem:[#allocation5 + $0x364] sm:$0xff]
    %v250 = vld [vmem:[#allocation5 + $0x36c] sm:$0xff]
    %v251 = vld [vmem:[#allocation5 + $0x374] sm:$0xff]
    %v252 = vld [vmem:[#allocation5 + $0x37c] sm:$0xf]
    %v253 = vld [vmem:[#allocation5 + $0x380] sm:$0xff]
    %v254 = vld [vmem:[#allocation5 + $0x388] sm:$0xff]
    %v255 = vld [vmem:[#allocation5 + $0x390] sm:$0xff]
    %v256 = vld [vmem:[#allocation5 + $0x398] sm:$0xf]
    %v257 = vld [vmem:[#allocation5 + $0x39c] sm:$0xff]
    %v258 = vld [vmem:[#allocation5 + $0x3a4] sm:$0xff]
    %v259 = vld [vmem:[#allocation5 + $0x3ac] sm:$0xff]
    %v260 = vld [vmem:[#allocation5 + $0x3b4] sm:$0xf]
    %v261 = vld [vmem:[#allocation5 + $0x3b8] sm:$0xff]
    %v262 = vld [vmem:[#allocation5 + $0x3c0] sm:$0xff]
    %v263 = vld [vmem:[#allocation5 + $0x3c8] sm:$0xff]
    %v264 = vld [vmem:[#allocation5 + $0x3d0] sm:$0xf]
    %v265 = vld [vmem:[#allocation5 + $0x3d4] sm:$0xff]
    %v266 = vld [vmem:[#allocation5 + $0x3dc] sm:$0xff]
    %v267 = vld [vmem:[#allocation5 + $0x3e4] sm:$0xff]
    %v268 = vld [vmem:[#allocation5 + $0x3ec] sm:$0xf]
    %v269 = vld [vmem:[#allocation5 + $0x3f0] sm:$0xff]
    %v270 = vld [vmem:[#allocation5 + $0x3f8] sm:$0xff]
    %v271 = vld [vmem:[#allocation5 + $0x400] sm:$0xff]
    %v272 = vld [vmem:[#allocation5 + $0x408] sm:$0xf]
    %v273 = vld [vmem:[#allocation5 + $0x40c] sm:$0xff]
    %v274 = vld [vmem:[#allocation5 + $0x414] sm:$0xff]
    %v275 = vld [vmem:[#allocation5 + $0x41c] sm:$0xff]
    %v276 = vld [vmem:[#allocation5 + $0x424] sm:$0xf]
    %v277 = vld [vmem:[#allocation5 + $0x428] sm:$0xff]
    %v278 = vld [vmem:[#allocation5 + $0x430] sm:$0xff]
    %v279 = vld [vmem:[#allocation5 + $0x438] sm:$0xff]
    %v280 = vld [vmem:[#allocation5 + $0x440] sm:$0xf]
    %v281 = vld [vmem:[#allocation5 + $0x444] sm:$0xff]
    %v282 = vld [vmem:[#allocation5 + $0x44c] sm:$0xff]
    %v283 = vld [vmem:[#allocation5 + $0x454] sm:$0xff]
    %v284 = vld [vmem:[#allocation5 + $0x45c] sm:$0xf]
    %v285 = vld [vmem:[#allocation5 + $0x460] sm:$0xff]
    %v286 = vld [vmem:[#allocation5 + $0x468] sm:$0xff]
    %v287 = vld [vmem:[#allocation5 + $0x470] sm:$0xff]
    %v288 = vld [vmem:[#allocation5 + $0x478] sm:$0xf]
    %v289 = vld [vmem:[#allocation5 + $0x47c] sm:$0xff]
    %v290 = vld [vmem:[#allocation5 + $0x484] sm:$0xff]
    %v291 = vld [vmem:[#allocation5 + $0x48c] sm:$0xff]
    %v292 = vld [vmem:[#allocation5 + $0x494] sm:$0xf]
    %v293 = vld [vmem:[#allocation5 + $0x498] sm:$0xff]
    %v294 = vld [vmem:[#allocation5 + $0x4a0] sm:$0xff]
    %v295 = vld [vmem:[#allocation5 + $0x4a8] sm:$0xff]
    %v296 = vld [vmem:[#allocation5 + $0x4b0] sm:$0xf]
    %v297 = vld [vmem:[#allocation5 + $0x4b4] sm:$0xff]
    %v298 = vld [vmem:[#allocation5 + $0x4bc] sm:$0xff]
    %v299 = vld [vmem:[#allocation5 + $0x4c4] sm:$0xff]
    %v300 = vld [vmem:[#allocation5 + $0x4cc] sm:$0xf]
    %v301 = vld [vmem:[#allocation5 + $0x4d0] sm:$0xff]
    %v302 = vld [vmem:[#allocation5 + $0x4d8] sm:$0xff]
    %v303 = vld [vmem:[#allocation5 + $0x4e0] sm:$0xff]
    %v304 = vld [vmem:[#allocation5 + $0x4e8] sm:$0xf]
    %v305 = vld [vmem:[#allocation5 + $0x4ec] sm:$0xff]
    %v306 = vld [vmem:[#allocation5 + $0x4f4] sm:$0xff]
    %v307 = vld [vmem:[#allocation5 + $0x4fc] sm:$0xff]
    %v308 = vld [vmem:[#allocation5 + $0x504] sm:$0xf]
    %v309 = vld [vmem:[#allocation5 + $0x508] sm:$0xff]
    %v310 = vld [vmem:[#allocation5 + $0x510] sm:$0xff]
    %v311 = vld [vmem:[#allocation5 + $0x518] sm:$0xff]
    %v312 = vld [vmem:[#allocation5 + $0x520] sm:$0xf]
    %v313 = vld [vmem:[#allocation5 + $0x524] sm:$0xff]
    %v314 = vld [vmem:[#allocation5 + $0x52c] sm:$0xff]
    %v315 = vld [vmem:[#allocation5 + $0x534] sm:$0xff]
    %v316 = vld [vmem:[#allocation5 + $0x53c] sm:$0xf]
    %v317 = vld [vmem:[#allocation5 + $0x540] sm:$0xff]
    %v318 = vld [vmem:[#allocation5 + $0x548] sm:$0xff]
    %v319 = vld [vmem:[#allocation5 + $0x550] sm:$0xff]
    %v320 = vld [vmem:[#allocation5 + $0x558] sm:$0xf]
    %v321 = vld [vmem:[#allocation5 + $0x55c] sm:$0xff]
    %v322 = vld [vmem:[#allocation5 + $0x564] sm:$0xff]
    %v323 = vld [vmem:[#allocation5 + $0x56c] sm:$0xff]
    %v324 = vld [vmem:[#allocation5 + $0x574] sm:$0xf]
    %v325 = vld [vmem:[#allocation5 + $0x578] sm:$0xff]
    %v326 = vld [vmem:[#allocation5 + $0x580] sm:$0xff]
    %v327 = vld [vmem:[#allocation5 + $0x588] sm:$0xff]
    %v328 = vld [vmem:[#allocation5 + $0x590] sm:$0xf]
    %v329 = vld [vmem:[#allocation5 + $0x594] sm:$0xff]
    %v330 = vld [vmem:[#allocation5 + $0x59c] sm:$0xff]
    %v331 = vld [vmem:[#allocation5 + $0x5a4] sm:$0xff]
    %v332 = vld [vmem:[#allocation5 + $0x5ac] sm:$0xf]
    %v333 = vld [vmem:[#allocation5 + $0x5b0] sm:$0xff]
    %v334 = vld [vmem:[#allocation5 + $0x5b8] sm:$0xff]
    %v335 = vld [vmem:[#allocation5 + $0x5c0] sm:$0xff]
    %v336 = vld [vmem:[#allocation5 + $0x5c8] sm:$0xf]
    %v337 = vld [vmem:[#allocation5 + $0x5cc] sm:$0xff]
    %v338 = vld [vmem:[#allocation5 + $0x5d4] sm:$0xff]
    %v339 = vld [vmem:[#allocation5 + $0x5dc] sm:$0xff]
    %v340 = vld [vmem:[#allocation5 + $0x5e4] sm:$0xf]
    %v341 = vld [vmem:[#allocation5 + $0x5e8] sm:$0xff]
    %v342 = vld [vmem:[#allocation5 + $0x5f0] sm:$0xff]
    %v343 = vld [vmem:[#allocation5 + $0x5f8] sm:$0xff]
    %v344 = vld [vmem:[#allocation5 + $0x600] sm:$0xf]
    %v345 = vld [vmem:[#allocation5 + $0x604] sm:$0xff]
    %v346 = vld [vmem:[#allocation5 + $0x60c] sm:$0xff]
    %v347 = vld [vmem:[#allocation5 + $0x614] sm:$0xff]
    %v348 = vld [vmem:[#allocation5 + $0x61c] sm:$0xf]
    %v349 = vld [vmem:[#allocation5 + $0x620] sm:$0xff]
    %v350 = vld [vmem:[#allocation5 + $0x628] sm:$0xff]
    %v351 = vld [vmem:[#allocation5 + $0x630] sm:$0xff]
    %v352 = vld [vmem:[#allocation5 + $0x638] sm:$0xf]
    %v353 = vld [vmem:[#allocation5 + $0x63c] sm:$0xff]
    %v354 = vld [vmem:[#allocation5 + $0x644] sm:$0xff]
    %v355 = vld [vmem:[#allocation5 + $0x64c] sm:$0xff]
    %v356 = vld [vmem:[#allocation5 + $0x654] sm:$0xf]
    %v357 = vld [vmem:[#allocation5 + $0x658] sm:$0xff]
    %v358 = vld [vmem:[#allocation5 + $0x660] sm:$0xff]
    %v359 = vld [vmem:[#allocation5 + $0x668] sm:$0xff]
    %v360 = vld [vmem:[#allocation5 + $0x670] sm:$0xf]
    %v361 = vld [vmem:[#allocation5 + $0x674] sm:$0xff]
    %v362 = vld [vmem:[#allocation5 + $0x67c] sm:$0xff]
    %v363 = vld [vmem:[#allocation5 + $0x684] sm:$0xff]
    %v364 = vld [vmem:[#allocation5 + $0x68c] sm:$0xf]
    %v365 = vld [vmem:[#allocation5 + $0x690] sm:$0xff]
    %v366 = vld [vmem:[#allocation5 + $0x698] sm:$0xff]
    %v367 = vld [vmem:[#allocation5 + $0x6a0] sm:$0xff]
    %v368 = vld [vmem:[#allocation5 + $0x6a8] sm:$0xf]
    %v369 = vld [vmem:[#allocation5 + $0x6ac] sm:$0xff]
    %v370 = vld [vmem:[#allocation5 + $0x6b4] sm:$0xff]
    %v371 = vld [vmem:[#allocation5 + $0x6bc] sm:$0xff]
    %v372 = vld [vmem:[#allocation5 + $0x6c4] sm:$0xf]
    %v373 = vld [vmem:[#allocation5 + $0x6c8] sm:$0xff]
    %v374 = vld [vmem:[#allocation5 + $0x6d0] sm:$0xff]
    %v375 = vld [vmem:[#allocation5 + $0x6d8] sm:$0xff]
    %v376 = vld [vmem:[#allocation5 + $0x6e0] sm:$0xf]
    %v377 = vld [vmem:[#allocation5 + $0x6e4] sm:$0xff]
    %v378 = vld [vmem:[#allocation5 + $0x6ec] sm:$0xff]
    %v379 = vld [vmem:[#allocation5 + $0x6f4] sm:$0xff]
    %v380 = vld [vmem:[#allocation5 + $0x6fc] sm:$0xf]
    %v381 = vld [vmem:[#allocation5 + $0x700] sm:$0xff]
    %v382 = vld [vmem:[#allocation5 + $0x708] sm:$0xff]
    %v383 = vld [vmem:[#allocation5 + $0x710] sm:$0xff]
    %v384 = vld [vmem:[#allocation5 + $0x718] sm:$0xf]
    %v385 = vld [vmem:[#allocation5 + $0x71c] sm:$0xff]
    %v386 = vld [vmem:[#allocation5 + $0x724] sm:$0xff]
    %v387 = vld [vmem:[#allocation5 + $0x72c] sm:$0xff]
    %v388 = vld [vmem:[#allocation5 + $0x734] sm:$0xf]
    %v389 = vld [vmem:[#allocation5 + $0x738] sm:$0xff]
    %v390 = vld [vmem:[#allocation5 + $0x740] sm:$0xff]
    %v391 = vld [vmem:[#allocation5 + $0x748] sm:$0xff]
    %v392 = vld [vmem:[#allocation5 + $0x750] sm:$0xf]
    %v393 = vld [vmem:[#allocation5 + $0x754] sm:$0xff]
    %v394 = vld [vmem:[#allocation5 + $0x75c] sm:$0xff]
    %v395 = vld [vmem:[#allocation5 + $0x764] sm:$0xff]
    %v396 = vld [vmem:[#allocation5 + $0x76c] sm:$0xf]
    %v397 = vld [vmem:[#allocation5 + $0x770] sm:$0xff]
    %v398 = vld [vmem:[#allocation5 + $0x778] sm:$0xff]
    %v399 = vld [vmem:[#allocation5 + $0x780] sm:$0xff]
    %v400 = vld [vmem:[#allocation5 + $0x788] sm:$0xf]
    %v401 = vld [vmem:[#allocation5 + $0x78c] sm:$0xff]
    %v402 = vld [vmem:[#allocation5 + $0x794] sm:$0xff]
    %v403 = vld [vmem:[#allocation5 + $0x79c] sm:$0xff]
    %v404 = vld [vmem:[#allocation5 + $0x7a4] sm:$0xf]
    %v405 = vld [vmem:[#allocation5 + $0x7a8] sm:$0xff]
    %v406 = vld [vmem:[#allocation5 + $0x7b0] sm:$0xff]
    %v407 = vld [vmem:[#allocation5 + $0x7b8] sm:$0xff]
    %v408 = vld [vmem:[#allocation5 + $0x7c0] sm:$0xf]
    %v409 = vld [vmem:[#allocation5 + $0x7c4] sm:$0xff]
    %v410 = vld [vmem:[#allocation5 + $0x7cc] sm:$0xff]
    %v411 = vld [vmem:[#allocation5 + $0x7d4] sm:$0xff]
    %v412 = vld [vmem:[#allocation5 + $0x7dc] sm:$0xf]
    %v413 = vld [vmem:[#allocation5 + $0x7e0] sm:$0xff]
    %v414 = vld [vmem:[#allocation5 + $0x7e8] sm:$0xff]
    %v415 = vld [vmem:[#allocation5 + $0x7f0] sm:$0xff]
    %v416 = vld [vmem:[#allocation5 + $0x7f8] sm:$0xf]
    %v417 = vld [vmem:[#allocation5 + $0x7fc] sm:$0xff]
    %v418 = vld [vmem:[#allocation5 + $0x804] sm:$0xff]
    %v419 = vld [vmem:[#allocation5 + $0x80c] sm:$0xff]
    %v420 = vld [vmem:[#allocation5 + $0x814] sm:$0xf]
    %v421 = vld [vmem:[#allocation5 + $0x818] sm:$0xff]
    %v422 = vld [vmem:[#allocation5 + $0x820] sm:$0xff]
    %v423 = vld [vmem:[#allocation5 + $0x828] sm:$0xff]
    %v424 = vld [vmem:[#allocation5 + $0x830] sm:$0xf]
    %v425 = vld [vmem:[#allocation5 + $0x834] sm:$0xff]
    %v426 = vld [vmem:[#allocation5 + $0x83c] sm:$0xff]
    %v427 = vld [vmem:[#allocation5 + $0x844] sm:$0xff]
    %v428 = vld [vmem:[#allocation5 + $0x84c] sm:$0xf]
    %v429 = vld [vmem:[#allocation5 + $0x850] sm:$0xff]
    %v430 = vld [vmem:[#allocation5 + $0x858] sm:$0xff]
    %v431 = vld [vmem:[#allocation5 + $0x860] sm:$0xff]
    %v432 = vld [vmem:[#allocation5 + $0x868] sm:$0xf]
    %v433 = vld [vmem:[#allocation5 + $0x86c] sm:$0xff]
    %v434 = vld [vmem:[#allocation5 + $0x874] sm:$0xff]
    %v435 = vld [vmem:[#allocation5 + $0x87c] sm:$0xff]
    %v436 = vld [vmem:[#allocation5 + $0x884] sm:$0xf]
    %v437 = vld [vmem:[#allocation5 + $0x888] sm:$0xff]
    %v438 = vld [vmem:[#allocation5 + $0x890] sm:$0xff]
    %v439 = vld [vmem:[#allocation5 + $0x898] sm:$0xff]
    %v440 = vld [vmem:[#allocation5 + $0x8a0] sm:$0xf]
    %v441 = vld [vmem:[#allocation5 + $0x8a4] sm:$0xff]
    %v442 = vld [vmem:[#allocation5 + $0x8ac] sm:$0xff]
    %v443 = vld [vmem:[#allocation5 + $0x8b4] sm:$0xff]
    %v444 = vld [vmem:[#allocation5 + $0x8bc] sm:$0xf]
    %v445 = vld [vmem:[#allocation5 + $0x8c0] sm:$0xff]
    %v446 = vld [vmem:[#allocation5 + $0x8c8] sm:$0xff]
    %v447 = vld [vmem:[#allocation5 + $0x8d0] sm:$0xff]
    %v448 = vld [vmem:[#allocation5 + $0x8d8] sm:$0xf]
    %v449 = vld [vmem:[#allocation5 + $0x8dc] sm:$0xff]
    %v450 = vld [vmem:[#allocation5 + $0x8e4] sm:$0xff]
    %v451 = vld [vmem:[#allocation5 + $0x8ec] sm:$0xff]
    %v452 = vld [vmem:[#allocation5 + $0x8f4] sm:$0xf]
    %v453 = vld [vmem:[#allocation5 + $0x8f8] sm:$0xff]
    %v454 = vld [vmem:[#allocation5 + $0x900] sm:$0xff]
    %v455 = vld [vmem:[#allocation5 + $0x908] sm:$0xff]
    %v456 = vld [vmem:[#allocation5 + $0x910] sm:$0xf]
    %v457 = vld [vmem:[#allocation5 + $0x914] sm:$0xff]
    %v458 = vld [vmem:[#allocation5 + $0x91c] sm:$0xff]
    %v459 = vld [vmem:[#allocation5 + $0x924] sm:$0xff]
    %v460 = vld [vmem:[#allocation5 + $0x92c] sm:$0xf]
    %v461 = vld [vmem:[#allocation5 + $0x930] sm:$0xff]
    %v462 = vld [vmem:[#allocation5 + $0x938] sm:$0xff]
    %v463 = vld [vmem:[#allocation5 + $0x940] sm:$0xff]
    %v464 = vld [vmem:[#allocation5 + $0x948] sm:$0xf]
    %v465 = vld [vmem:[#allocation5 + $0x94c] sm:$0xff]
    %v466 = vld [vmem:[#allocation5 + $0x954] sm:$0xff]
    %v467 = vld [vmem:[#allocation5 + $0x95c] sm:$0xff]
    %v468 = vld [vmem:[#allocation5 + $0x964] sm:$0xf]
    %v469 = vld [vmem:[#allocation5 + $0x968] sm:$0xff]
    %v470 = vld [vmem:[#allocation5 + $0x970] sm:$0xff]
    %v471 = vld [vmem:[#allocation5 + $0x978] sm:$0xff]
    %v472 = vld [vmem:[#allocation5 + $0x980] sm:$0xf]
    %v473 = vld [vmem:[#allocation5 + $0x984] sm:$0xff]
    %v474 = vld [vmem:[#allocation5 + $0x98c] sm:$0xff]
    %v475 = vld [vmem:[#allocation5 + $0x994] sm:$0xff]
    %v476 = vld [vmem:[#allocation5 + $0x99c] sm:$0xf]
    %v477 = vld [vmem:[#allocation5 + $0x9a0] sm:$0xff]
    %v478 = vld [vmem:[#allocation5 + $0x9a8] sm:$0xff]
    %v479 = vld [vmem:[#allocation5 + $0x9b0] sm:$0xff]
    %v480 = vld [vmem:[#allocation5 + $0x9b8] sm:$0xf]
    %v481 = vld [vmem:[#allocation5 + $0x9bc] sm:$0xff]
    %v482 = vld [vmem:[#allocation5 + $0x9c4] sm:$0xff]
    %v483 = vld [vmem:[#allocation5 + $0x9cc] sm:$0xff]
    %v484 = vld [vmem:[#allocation5 + $0x9d4] sm:$0xf]
    %v485 = vld [vmem:[#allocation5 + $0x9d8] sm:$0xff]
    %v486 = vld [vmem:[#allocation5 + $0x9e0] sm:$0xff]
    %v487 = vld [vmem:[#allocation5 + $0x9e8] sm:$0xff]
    %v488 = vld [vmem:[#allocation5 + $0x9f0] sm:$0xf]
    %v489 = vld [vmem:[#allocation5 + $0x9f4] sm:$0xff]
    %v490 = vld [vmem:[#allocation5 + $0x9fc] sm:$0xff]
    %v491 = vld [vmem:[#allocation5 + $0xa04] sm:$0xff]
    %v492 = vld [vmem:[#allocation5 + $0xa0c] sm:$0xf]
    %v493 = vld [vmem:[#allocation5 + $0xa10] sm:$0xff]
    %v494 = vld [vmem:[#allocation5 + $0xa18] sm:$0xff]
    %v495 = vld [vmem:[#allocation5 + $0xa20] sm:$0xff]
    %v496 = vld [vmem:[#allocation5 + $0xa28] sm:$0xf]
    %v497 = vld [vmem:[#allocation5 + $0xa2c] sm:$0xff]
    %v498 = vld [vmem:[#allocation5 + $0xa34] sm:$0xff]
    %v499 = vld [vmem:[#allocation5 + $0xa3c] sm:$0xff]
    %v500 = vld [vmem:[#allocation5 + $0xa44] sm:$0xf]
    %v501 = vld [vmem:[#allocation5 + $0xa48] sm:$0xff]
    %v502 = vld [vmem:[#allocation5 + $0xa50] sm:$0xff]
    %v503 = vld [vmem:[#allocation5 + $0xa58] sm:$0xff]
    %v504 = vld [vmem:[#allocation5 + $0xa60] sm:$0xf]
    %v505 = vld [vmem:[#allocation5 + $0xa64] sm:$0xff]
    %v506 = vld [vmem:[#allocation5 + $0xa6c] sm:$0xff]
    %v507 = vld [vmem:[#allocation5 + $0xa74] sm:$0xff]
    %v508 = vld [vmem:[#allocation5 + $0xa7c] sm:$0xf]
    %v509 = vld [vmem:[#allocation5 + $0xa80] sm:$0xff]
    %v510 = vld [vmem:[#allocation5 + $0xa88] sm:$0xff]
    %v511 = vld [vmem:[#allocation5 + $0xa90] sm:$0xff]
    %v512 = vld [vmem:[#allocation5 + $0xa98] sm:$0xf]
    %v513 = vld [vmem:[#allocation5 + $0xa9c] sm:$0xff]
    %v514 = vld [vmem:[#allocation5 + $0xaa4] sm:$0xff]
    %v515 = vld [vmem:[#allocation5 + $0xaac] sm:$0xff]
    %v516 = vld [vmem:[#allocation5 + $0xab4] sm:$0xf]
    %v517 = vld [vmem:[#allocation5 + $0xab8] sm:$0xff]
    %v518 = vld [vmem:[#allocation5 + $0xac0] sm:$0xff]
    %v519 = vld [vmem:[#allocation5 + $0xac8] sm:$0xff]
    %v520 = vld [vmem:[#allocation5 + $0xad0] sm:$0xf]
    %v521 = vld [vmem:[#allocation5 + $0xad4] sm:$0xff]
    %v522 = vld [vmem:[#allocation5 + $0xadc] sm:$0xff]
    %v523 = vld [vmem:[#allocation5 + $0xae4] sm:$0xff]
    %v524 = vld [vmem:[#allocation5 + $0xaec] sm:$0xf]
    %v525 = vld [vmem:[#allocation5 + $0xaf0] sm:$0xff]
    %v526 = vld [vmem:[#allocation5 + $0xaf8] sm:$0xff]
    %v527 = vld [vmem:[#allocation5 + $0xb00] sm:$0xff]
    %v528 = vld [vmem:[#allocation5 + $0xb08] sm:$0xf]
    %v529 = vld [vmem:[#allocation5 + $0xb0c] sm:$0xff]
    %v530 = vld [vmem:[#allocation5 + $0xb14] sm:$0xff]
    %v531 = vld [vmem:[#allocation5 + $0xb1c] sm:$0xff]
    %v532 = vld [vmem:[#allocation5 + $0xb24] sm:$0xf]
    %v533 = vld [vmem:[#allocation5 + $0xb28] sm:$0xff]
    %v534 = vld [vmem:[#allocation5 + $0xb30] sm:$0xff]
    %v535 = vld [vmem:[#allocation5 + $0xb38] sm:$0xff]
    %v536 = vld [vmem:[#allocation5 + $0xb40] sm:$0xf]
    %v537 = vld [vmem:[#allocation5 + $0xb44] sm:$0xff]
    %v538 = vld [vmem:[#allocation5 + $0xb4c] sm:$0xff]
    %v539 = vld [vmem:[#allocation5 + $0xb54] sm:$0xff]
    %v540 = vld [vmem:[#allocation5 + $0xb5c] sm:$0xf]
    %v541 = vld [vmem:[#allocation5 + $0xb60] sm:$0xff]
    %v542 = vld [vmem:[#allocation5 + $0xb68] sm:$0xff]
    %v543 = vld [vmem:[#allocation5 + $0xb70] sm:$0xff]
    %v544 = vld [vmem:[#allocation5 + $0xb78] sm:$0xf]
    %v545 = vld [vmem:[#allocation5 + $0xb7c] sm:$0xff]
    %v546 = vld [vmem:[#allocation5 + $0xb84] sm:$0xff]
    %v547 = vld [vmem:[#allocation5 + $0xb8c] sm:$0xff]
    %v548 = vld [vmem:[#allocation5 + $0xb94] sm:$0xf]
    %v549 = vld [vmem:[#allocation5 + $0xb98] sm:$0xff]
    %v550 = vld [vmem:[#allocation5 + $0xba0] sm:$0xff]
    %v551 = vld [vmem:[#allocation5 + $0xba8] sm:$0xff]
    %v552 = vld [vmem:[#allocation5 + $0xbb0] sm:$0xf]
    %v553 = vld [vmem:[#allocation5 + $0xbb4] sm:$0xff]
    %v554 = vld [vmem:[#allocation5 + $0xbbc] sm:$0xff]
    %v555 = vld [vmem:[#allocation5 + $0xbc4] sm:$0xff]
    %v556 = vld [vmem:[#allocation5 + $0xbcc] sm:$0xf]
    %v557 = vld [vmem:[#allocation5 + $0xbd0] sm:$0xff]
    %v558 = vld [vmem:[#allocation5 + $0xbd8] sm:$0xff]
    %v559 = vld [vmem:[#allocation5 + $0xbe0] sm:$0xff]
    %v560 = vld [vmem:[#allocation5 + $0xbe8] sm:$0xf]
    %v561 = vld [vmem:[#allocation5 + $0xbec] sm:$0xff]
    %v562 = vld [vmem:[#allocation5 + $0xbf4] sm:$0xff]
    %v563 = vld [vmem:[#allocation5 + $0xbfc] sm:$0xff]
    %v564 = vld [vmem:[#allocation5 + $0xc04] sm:$0xf]
    %v565 = vld [vmem:[#allocation5 + $0xc08] sm:$0xff]
    %v566 = vld [vmem:[#allocation5 + $0xc10] sm:$0xff]
    %v567 = vld [vmem:[#allocation5 + $0xc18] sm:$0xff]
    %v568 = vld [vmem:[#allocation5 + $0xc20] sm:$0xf]
    %v569 = vld [vmem:[#allocation5 + $0xc24] sm:$0xff]
    %v570 = vld [vmem:[#allocation5 + $0xc2c] sm:$0xff]
    %v571 = vld [vmem:[#allocation5 + $0xc34] sm:$0xff]
    %v572 = vld [vmem:[#allocation5 + $0xc3c] sm:$0xf]
    %v573 = vld [vmem:[#allocation7] sm:$0xff]
    %v575 = vlaneseq
    %v576 = vshrl.u32 %v575, 7
    %v577 = vsub.s32 0, %v576
    %v578 = vrot.slane %v573, %v577
    %v579 = vlaneseq
    %v580 = vshrl.u32 %v579, 7
    %v581 = vsub.s32 1, %v580
    %v582 = vrot.slane %v573, %v581
    %v583 = vlaneseq
    %v584 = vshrl.u32 %v583, 7
    %v585 = vsub.s32 2, %v584
    %v586 = vrot.slane %v573, %v585
    %v587 = vlaneseq
    %v588 = vshrl.u32 %v587, 7
    %v589 = vsub.s32 3, %v588
    %v590 = vrot.slane %v573, %v589
    %v591 = vlaneseq
    %v592 = vshrl.u32 %v591, 7
    %v593 = vsub.s32 4, %v592
    %v594 = vrot.slane %v573, %v593
    %v595 = vlaneseq
    %v596 = vshrl.u32 %v595, 7
    %v597 = vsub.s32 5, %v596
    %v598 = vrot.slane %v573, %v597
    %v599 = vlaneseq
    %v600 = vshrl.u32 %v599, 7
    %v601 = vsub.s32 6, %v600
    %v602 = vrot.slane %v573, %v601
    %v618 = vunpack.c.l.b16 %v117
    %v619 = vunpack.c.h.b16 %v117
    %v620 = vunpack.c.l.b16 %v118
    %v621 = vunpack.c.h.b16 %v118
    %v622 = vunpack.c.l.b16 %v119
    %v623 = vunpack.c.h.b16 %v119
    %v624 = vunpack.c.l.b16 %v120
    %v625 = vunpack.c.l.b16 %v121
    %v626 = vunpack.c.h.b16 %v121
    %v627 = vunpack.c.l.b16 %v122
    %v628 = vunpack.c.h.b16 %v122
    %v629 = vunpack.c.l.b16 %v123
    %v630 = vunpack.c.h.b16 %v123
    %v631 = vunpack.c.l.b16 %v124
    %v632 = vpack.c.b16 %v625, %v618
    %v633 = vpack.c.b16 %v626, %v619
    %v634 = vpack.c.b16 %v627, %v620
    %v635 = vpack.c.b16 %v628, %v621
    %v636 = vpack.c.b16 %v629, %v622
    %v637 = vpack.c.b16 %v630, %v623
    %v638 = vpack.c.b16 %v631, %v624
    %v1094 = vunpack.c.l.b16 %v125
    %v1095 = vunpack.c.h.b16 %v125
    %v1096 = vunpack.c.l.b16 %v126
    %v1097 = vunpack.c.h.b16 %v126
    %v1098 = vunpack.c.l.b16 %v127
    %v1099 = vunpack.c.h.b16 %v127
    %v1100 = vunpack.c.l.b16 %v128
    %v1101 = vunpack.c.l.b16 %v129
    %v1102 = vunpack.c.h.b16 %v129
    %v1103 = vunpack.c.l.b16 %v130
    %v1104 = vunpack.c.h.b16 %v130
    %v1105 = vunpack.c.l.b16 %v131
    %v1106 = vunpack.c.h.b16 %v131
    %v1107 = vunpack.c.l.b16 %v132
    %v1108 = vunpack.c.l.b16 %v133
    %v1109 = vunpack.c.h.b16 %v133
    %v1110 = vunpack.c.l.b16 %v134
    %v1111 = vunpack.c.h.b16 %v134
    %v1112 = vunpack.c.l.b16 %v135
    %v1113 = vunpack.c.h.b16 %v135
    %v1114 = vunpack.c.l.b16 %v136
    %v1115 = vunpack.c.l.b16 %v137
    %v1116 = vunpack.c.h.b16 %v137
    %v1117 = vunpack.c.l.b16 %v138
    %v1118 = vunpack.c.h.b16 %v138
    %v1119 = vunpack.c.l.b16 %v139
    %v1120 = vunpack.c.h.b16 %v139
    %v1121 = vunpack.c.l.b16 %v140
    %v1122 = vunpack.c.l.b16 %v141
    %v1123 = vunpack.c.h.b16 %v141
    %v1124 = vunpack.c.l.b16 %v142
    %v1125 = vunpack.c.h.b16 %v142
    %v1126 = vunpack.c.l.b16 %v143
    %v1127 = vunpack.c.h.b16 %v143
    %v1128 = vunpack.c.l.b16 %v144
    %v1129 = vunpack.c.l.b16 %v145
    %v1130 = vunpack.c.h.b16 %v145
    %v1131 = vunpack.c.l.b16 %v146
    %v1132 = vunpack.c.h.b16 %v146
    %v1133 = vunpack.c.l.b16 %v147
    %v1134 = vunpack.c.h.b16 %v147
    %v1135 = vunpack.c.l.b16 %v148
    %v1136 = vunpack.c.l.b16 %v149
    %v1137 = vunpack.c.h.b16 %v149
    %v1138 = vunpack.c.l.b16 %v150
    %v1139 = vunpack.c.h.b16 %v150
    %v1140 = vunpack.c.l.b16 %v151
    %v1141 = vunpack.c.h.b16 %v151
    %v1142 = vunpack.c.l.b16 %v152
    %v1143 = vunpack.c.l.b16 %v153
    %v1144 = vunpack.c.h.b16 %v153
    %v1145 = vunpack.c.l.b16 %v154
    %v1146 = vunpack.c.h.b16 %v154
    %v1147 = vunpack.c.l.b16 %v155
    %v1148 = vunpack.c.h.b16 %v155
    %v1149 = vunpack.c.l.b16 %v156
    %v1150 = vunpack.c.l.b16 %v157
    %v1151 = vunpack.c.h.b16 %v157
    %v1152 = vunpack.c.l.b16 %v158
    %v1153 = vunpack.c.h.b16 %v158
    %v1154 = vunpack.c.l.b16 %v159
    %v1155 = vunpack.c.h.b16 %v159
    %v1156 = vunpack.c.l.b16 %v160
    %v1157 = vunpack.c.l.b16 %v161
    %v1158 = vunpack.c.h.b16 %v161
    %v1159 = vunpack.c.l.b16 %v162
    %v1160 = vunpack.c.h.b16 %v162
    %v1161 = vunpack.c.l.b16 %v163
    %v1162 = vunpack.c.h.b16 %v163
    %v1163 = vunpack.c.l.b16 %v164
    %v1164 = vunpack.c.l.b16 %v165
    %v1165 = vunpack.c.h.b16 %v165
    %v1166 = vunpack.c.l.b16 %v166
    %v1167 = vunpack.c.h.b16 %v166
    %v1168 = vunpack.c.l.b16 %v167
    %v1169 = vunpack.c.h.b16 %v167
    %v1170 = vunpack.c.l.b16 %v168
    %v1171 = vunpack.c.l.b16 %v169
    %v1172 = vunpack.c.h.b16 %v169
    %v1173 = vunpack.c.l.b16 %v170
    %v1174 = vunpack.c.h.b16 %v170
    %v1175 = vunpack.c.l.b16 %v171
    %v1176 = vunpack.c.h.b16 %v171
    %v1177 = vunpack.c.l.b16 %v172
    %v1178 = vunpack.c.l.b16 %v173
    %v1179 = vunpack.c.h.b16 %v173
    %v1180 = vunpack.c.l.b16 %v174
    %v1181 = vunpack.c.h.b16 %v174
    %v1182 = vunpack.c.l.b16 %v175
    %v1183 = vunpack.c.h.b16 %v175
    %v1184 = vunpack.c.l.b16 %v176
    %v1185 = vunpack.c.l.b16 %v177
    %v1186 = vunpack.c.h.b16 %v177
    %v1187 = vunpack.c.l.b16 %v178
    %v1188 = vunpack.c.h.b16 %v178
    %v1189 = vunpack.c.l.b16 %v179
    %v1190 = vunpack.c.h.b16 %v179
    %v1191 = vunpack.c.l.b16 %v180
    %v1192 = vunpack.c.l.b16 %v181
    %v1193 = vunpack.c.h.b16 %v181
    %v1194 = vunpack.c.l.b16 %v182
    %v1195 = vunpack.c.h.b16 %v182
    %v1196 = vunpack.c.l.b16 %v183
    %v1197 = vunpack.c.h.b16 %v183
    %v1198 = vunpack.c.l.b16 %v184
    %v1199 = vunpack.c.l.b16 %v185
    %v1200 = vunpack.c.h.b16 %v185
    %v1201 = vunpack.c.l.b16 %v186
    %v1202 = vunpack.c.h.b16 %v186
    %v1203 = vunpack.c.l.b16 %v187
    %v1204 = vunpack.c.h.b16 %v187
    %v1205 = vunpack.c.l.b16 %v188
    %v1206 = vunpack.c.l.b16 %v189
    %v1207 = vunpack.c.h.b16 %v189
    %v1208 = vunpack.c.l.b16 %v190
    %v1209 = vunpack.c.h.b16 %v190
    %v1210 = vunpack.c.l.b16 %v191
    %v1211 = vunpack.c.h.b16 %v191
    %v1212 = vunpack.c.l.b16 %v192
    %v1213 = vunpack.c.l.b16 %v193
    %v1214 = vunpack.c.h.b16 %v193
    %v1215 = vunpack.c.l.b16 %v194
    %v1216 = vunpack.c.h.b16 %v194
    %v1217 = vunpack.c.l.b16 %v195
    %v1218 = vunpack.c.h.b16 %v195
    %v1219 = vunpack.c.l.b16 %v196
    %v1220 = vunpack.c.l.b16 %v197
    %v1221 = vunpack.c.h.b16 %v197
    %v1222 = vunpack.c.l.b16 %v198
    %v1223 = vunpack.c.h.b16 %v198
    %v1224 = vunpack.c.l.b16 %v199
    %v1225 = vunpack.c.h.b16 %v199
    %v1226 = vunpack.c.l.b16 %v200
    %v1227 = vunpack.c.l.b16 %v201
    %v1228 = vunpack.c.h.b16 %v201
    %v1229 = vunpack.c.l.b16 %v202
    %v1230 = vunpack.c.h.b16 %v202
    %v1231 = vunpack.c.l.b16 %v203
    %v1232 = vunpack.c.h.b16 %v203
    %v1233 = vunpack.c.l.b16 %v204
    %v1234 = vunpack.c.l.b16 %v205
    %v1235 = vunpack.c.h.b16 %v205
    %v1236 = vunpack.c.l.b16 %v206
    %v1237 = vunpack.c.h.b16 %v206
    %v1238 = vunpack.c.l.b16 %v207
    %v1239 = vunpack.c.h.b16 %v207
    %v1240 = vunpack.c.l.b16 %v208
    %v1241 = vunpack.c.l.b16 %v209
    %v1242 = vunpack.c.h.b16 %v209
    %v1243 = vunpack.c.l.b16 %v210
    %v1244 = vunpack.c.h.b16 %v210
    %v1245 = vunpack.c.l.b16 %v211
    %v1246 = vunpack.c.h.b16 %v211
    %v1247 = vunpack.c.l.b16 %v212
    %v1248 = vunpack.c.l.b16 %v213
    %v1249 = vunpack.c.h.b16 %v213
    %v1250 = vunpack.c.l.b16 %v214
    %v1251 = vunpack.c.h.b16 %v214
    %v1252 = vunpack.c.l.b16 %v215
    %v1253 = vunpack.c.h.b16 %v215
    %v1254 = vunpack.c.l.b16 %v216
    %v1255 = vunpack.c.l.b16 %v217
    %v1256 = vunpack.c.h.b16 %v217
    %v1257 = vunpack.c.l.b16 %v218
    %v1258 = vunpack.c.h.b16 %v218
    %v1259 = vunpack.c.l.b16 %v219
    %v1260 = vunpack.c.h.b16 %v219
    %v1261 = vunpack.c.l.b16 %v220
    %v1262 = vunpack.c.l.b16 %v221
    %v1263 = vunpack.c.h.b16 %v221
    %v1264 = vunpack.c.l.b16 %v222
    %v1265 = vunpack.c.h.b16 %v222
    %v1266 = vunpack.c.l.b16 %v223
    %v1267 = vunpack.c.h.b16 %v223
    %v1268 = vunpack.c.l.b16 %v224
    %v1269 = vunpack.c.l.b16 %v225
    %v1270 = vunpack.c.h.b16 %v225
    %v1271 = vunpack.c.l.b16 %v226
    %v1272 = vunpack.c.h.b16 %v226
    %v1273 = vunpack.c.l.b16 %v227
    %v1274 = vunpack.c.h.b16 %v227
    %v1275 = vunpack.c.l.b16 %v228
    %v1276 = vunpack.c.l.b16 %v229
    %v1277 = vunpack.c.h.b16 %v229
    %v1278 = vunpack.c.l.b16 %v230
    %v1279 = vunpack.c.h.b16 %v230
    %v1280 = vunpack.c.l.b16 %v231
    %v1281 = vunpack.c.h.b16 %v231
    %v1282 = vunpack.c.l.b16 %v232
    %v1283 = vunpack.c.l.b16 %v233
    %v1284 = vunpack.c.h.b16 %v233
    %v1285 = vunpack.c.l.b16 %v234
    %v1286 = vunpack.c.h.b16 %v234
    %v1287 = vunpack.c.l.b16 %v235
    %v1288 = vunpack.c.h.b16 %v235
    %v1289 = vunpack.c.l.b16 %v236
    %v1290 = vunpack.c.l.b16 %v237
    %v1291 = vunpack.c.h.b16 %v237
    %v1292 = vunpack.c.l.b16 %v238
    %v1293 = vunpack.c.h.b16 %v238
    %v1294 = vunpack.c.l.b16 %v239
    %v1295 = vunpack.c.h.b16 %v239
    %v1296 = vunpack.c.l.b16 %v240
    %v1297 = vunpack.c.l.b16 %v241
    %v1298 = vunpack.c.h.b16 %v241
    %v1299 = vunpack.c.l.b16 %v242
    %v1300 = vunpack.c.h.b16 %v242
    %v1301 = vunpack.c.l.b16 %v243
    %v1302 = vunpack.c.h.b16 %v243
    %v1303 = vunpack.c.l.b16 %v244
    %v1304 = vunpack.c.l.b16 %v245
    %v1305 = vunpack.c.h.b16 %v245
    %v1306 = vunpack.c.l.b16 %v246
    %v1307 = vunpack.c.h.b16 %v246
    %v1308 = vunpack.c.l.b16 %v247
    %v1309 = vunpack.c.h.b16 %v247
    %v1310 = vunpack.c.l.b16 %v248
    %v1311 = vunpack.c.l.b16 %v249
    %v1312 = vunpack.c.h.b16 %v249
    %v1313 = vunpack.c.l.b16 %v250
    %v1314 = vunpack.c.h.b16 %v250
    %v1315 = vunpack.c.l.b16 %v251
    %v1316 = vunpack.c.h.b16 %v251
    %v1317 = vunpack.c.l.b16 %v252
    %v1318 = vunpack.c.l.b16 %v253
    %v1319 = vunpack.c.h.b16 %v253
    %v1320 = vunpack.c.l.b16 %v254
    %v1321 = vunpack.c.h.b16 %v254
    %v1322 = vunpack.c.l.b16 %v255
    %v1323 = vunpack.c.h.b16 %v255
    %v1324 = vunpack.c.l.b16 %v256
    %v1325 = vunpack.c.l.b16 %v257
    %v1326 = vunpack.c.h.b16 %v257
    %v1327 = vunpack.c.l.b16 %v258
    %v1328 = vunpack.c.h.b16 %v258
    %v1329 = vunpack.c.l.b16 %v259
    %v1330 = vunpack.c.h.b16 %v259
    %v1331 = vunpack.c.l.b16 %v260
    %v1332 = vunpack.c.l.b16 %v261
    %v1333 = vunpack.c.h.b16 %v261
    %v1334 = vunpack.c.l.b16 %v262
    %v1335 = vunpack.c.h.b16 %v262
    %v1336 = vunpack.c.l.b16 %v263
    %v1337 = vunpack.c.h.b16 %v263
    %v1338 = vunpack.c.l.b16 %v264
    %v1339 = vunpack.c.l.b16 %v265
    %v1340 = vunpack.c.h.b16 %v265
    %v1341 = vunpack.c.l.b16 %v266
    %v1342 = vunpack.c.h.b16 %v266
    %v1343 = vunpack.c.l.b16 %v267
    %v1344 = vunpack.c.h.b16 %v267
    %v1345 = vunpack.c.l.b16 %v268
    %v1346 = vunpack.c.l.b16 %v269
    %v1347 = vunpack.c.h.b16 %v269
    %v1348 = vunpack.c.l.b16 %v270
    %v1349 = vunpack.c.h.b16 %v270
    %v1350 = vunpack.c.l.b16 %v271
    %v1351 = vunpack.c.h.b16 %v271
    %v1352 = vunpack.c.l.b16 %v272
    %v1353 = vunpack.c.l.b16 %v273
    %v1354 = vunpack.c.h.b16 %v273
    %v1355 = vunpack.c.l.b16 %v274
    %v1356 = vunpack.c.h.b16 %v274
    %v1357 = vunpack.c.l.b16 %v275
    %v1358 = vunpack.c.h.b16 %v275
    %v1359 = vunpack.c.l.b16 %v276
    %v1360 = vunpack.c.l.b16 %v277
    %v1361 = vunpack.c.h.b16 %v277
    %v1362 = vunpack.c.l.b16 %v278
    %v1363 = vunpack.c.h.b16 %v278
    %v1364 = vunpack.c.l.b16 %v279
    %v1365 = vunpack.c.h.b16 %v279
    %v1366 = vunpack.c.l.b16 %v280
    %v1367 = vunpack.c.l.b16 %v281
    %v1368 = vunpack.c.h.b16 %v281
    %v1369 = vunpack.c.l.b16 %v282
    %v1370 = vunpack.c.h.b16 %v282
    %v1371 = vunpack.c.l.b16 %v283
    %v1372 = vunpack.c.h.b16 %v283
    %v1373 = vunpack.c.l.b16 %v284
    %v1374 = vunpack.c.l.b16 %v285
    %v1375 = vunpack.c.h.b16 %v285
    %v1376 = vunpack.c.l.b16 %v286
    %v1377 = vunpack.c.h.b16 %v286
    %v1378 = vunpack.c.l.b16 %v287
    %v1379 = vunpack.c.h.b16 %v287
    %v1380 = vunpack.c.l.b16 %v288
    %v1381 = vunpack.c.l.b16 %v289
    %v1382 = vunpack.c.h.b16 %v289
    %v1383 = vunpack.c.l.b16 %v290
    %v1384 = vunpack.c.h.b16 %v290
    %v1385 = vunpack.c.l.b16 %v291
    %v1386 = vunpack.c.h.b16 %v291
    %v1387 = vunpack.c.l.b16 %v292
    %v1388 = vunpack.c.l.b16 %v293
    %v1389 = vunpack.c.h.b16 %v293
    %v1390 = vunpack.c.l.b16 %v294
    %v1391 = vunpack.c.h.b16 %v294
    %v1392 = vunpack.c.l.b16 %v295
    %v1393 = vunpack.c.h.b16 %v295
    %v1394 = vunpack.c.l.b16 %v296
    %v1395 = vunpack.c.l.b16 %v297
    %v1396 = vunpack.c.h.b16 %v297
    %v1397 = vunpack.c.l.b16 %v298
    %v1398 = vunpack.c.h.b16 %v298
    %v1399 = vunpack.c.l.b16 %v299
    %v1400 = vunpack.c.h.b16 %v299
    %v1401 = vunpack.c.l.b16 %v300
    %v1402 = vunpack.c.l.b16 %v301
    %v1403 = vunpack.c.h.b16 %v301
    %v1404 = vunpack.c.l.b16 %v302
    %v1405 = vunpack.c.h.b16 %v302
    %v1406 = vunpack.c.l.b16 %v303
    %v1407 = vunpack.c.h.b16 %v303
    %v1408 = vunpack.c.l.b16 %v304
    %v1409 = vunpack.c.l.b16 %v305
    %v1410 = vunpack.c.h.b16 %v305
    %v1411 = vunpack.c.l.b16 %v306
    %v1412 = vunpack.c.h.b16 %v306
    %v1413 = vunpack.c.l.b16 %v307
    %v1414 = vunpack.c.h.b16 %v307
    %v1415 = vunpack.c.l.b16 %v308
    %v1416 = vunpack.c.l.b16 %v309
    %v1417 = vunpack.c.h.b16 %v309
    %v1418 = vunpack.c.l.b16 %v310
    %v1419 = vunpack.c.h.b16 %v310
    %v1420 = vunpack.c.l.b16 %v311
    %v1421 = vunpack.c.h.b16 %v311
    %v1422 = vunpack.c.l.b16 %v312
    %v1423 = vunpack.c.l.b16 %v313
    %v1424 = vunpack.c.h.b16 %v313
    %v1425 = vunpack.c.l.b16 %v314
    %v1426 = vunpack.c.h.b16 %v314
    %v1427 = vunpack.c.l.b16 %v315
    %v1428 = vunpack.c.h.b16 %v315
    %v1429 = vunpack.c.l.b16 %v316
    %v1430 = vunpack.c.l.b16 %v317
    %v1431 = vunpack.c.h.b16 %v317
    %v1432 = vunpack.c.l.b16 %v318
    %v1433 = vunpack.c.h.b16 %v318
    %v1434 = vunpack.c.l.b16 %v319
    %v1435 = vunpack.c.h.b16 %v319
    %v1436 = vunpack.c.l.b16 %v320
    %v1437 = vunpack.c.l.b16 %v321
    %v1438 = vunpack.c.h.b16 %v321
    %v1439 = vunpack.c.l.b16 %v322
    %v1440 = vunpack.c.h.b16 %v322
    %v1441 = vunpack.c.l.b16 %v323
    %v1442 = vunpack.c.h.b16 %v323
    %v1443 = vunpack.c.l.b16 %v324
    %v1444 = vunpack.c.l.b16 %v325
    %v1445 = vunpack.c.h.b16 %v325
    %v1446 = vunpack.c.l.b16 %v326
    %v1447 = vunpack.c.h.b16 %v326
    %v1448 = vunpack.c.l.b16 %v327
    %v1449 = vunpack.c.h.b16 %v327
    %v1450 = vunpack.c.l.b16 %v328
    %v1451 = vunpack.c.l.b16 %v329
    %v1452 = vunpack.c.h.b16 %v329
    %v1453 = vunpack.c.l.b16 %v330
    %v1454 = vunpack.c.h.b16 %v330
    %v1455 = vunpack.c.l.b16 %v331
    %v1456 = vunpack.c.h.b16 %v331
    %v1457 = vunpack.c.l.b16 %v332
    %v1458 = vunpack.c.l.b16 %v333
    %v1459 = vunpack.c.h.b16 %v333
    %v1460 = vunpack.c.l.b16 %v334
    %v1461 = vunpack.c.h.b16 %v334
    %v1462 = vunpack.c.l.b16 %v335
    %v1463 = vunpack.c.h.b16 %v335
    %v1464 = vunpack.c.l.b16 %v336
    %v1465 = vunpack.c.l.b16 %v337
    %v1466 = vunpack.c.h.b16 %v337
    %v1467 = vunpack.c.l.b16 %v338
    %v1468 = vunpack.c.h.b16 %v338
    %v1469 = vunpack.c.l.b16 %v339
    %v1470 = vunpack.c.h.b16 %v339
    %v1471 = vunpack.c.l.b16 %v340
    %v1472 = vunpack.c.l.b16 %v341
    %v1473 = vunpack.c.h.b16 %v341
    %v1474 = vunpack.c.l.b16 %v342
    %v1475 = vunpack.c.h.b16 %v342
    %v1476 = vunpack.c.l.b16 %v343
    %v1477 = vunpack.c.h.b16 %v343
    %v1478 = vunpack.c.l.b16 %v344
    %v1479 = vunpack.c.l.b16 %v345
    %v1480 = vunpack.c.h.b16 %v345
    %v1481 = vunpack.c.l.b16 %v346
    %v1482 = vunpack.c.h.b16 %v346
    %v1483 = vunpack.c.l.b16 %v347
    %v1484 = vunpack.c.h.b16 %v347
    %v1485 = vunpack.c.l.b16 %v348
    %v1486 = vunpack.c.l.b16 %v349
    %v1487 = vunpack.c.h.b16 %v349
    %v1488 = vunpack.c.l.b16 %v350
    %v1489 = vunpack.c.h.b16 %v350
    %v1490 = vunpack.c.l.b16 %v351
    %v1491 = vunpack.c.h.b16 %v351
    %v1492 = vunpack.c.l.b16 %v352
    %v1493 = vunpack.c.l.b16 %v353
    %v1494 = vunpack.c.h.b16 %v353
    %v1495 = vunpack.c.l.b16 %v354
    %v1496 = vunpack.c.h.b16 %v354
    %v1497 = vunpack.c.l.b16 %v355
    %v1498 = vunpack.c.h.b16 %v355
    %v1499 = vunpack.c.l.b16 %v356
    %v1500 = vunpack.c.l.b16 %v357
    %v1501 = vunpack.c.h.b16 %v357
    %v1502 = vunpack.c.l.b16 %v358
    %v1503 = vunpack.c.h.b16 %v358
    %v1504 = vunpack.c.l.b16 %v359
    %v1505 = vunpack.c.h.b16 %v359
    %v1506 = vunpack.c.l.b16 %v360
    %v1507 = vunpack.c.l.b16 %v361
    %v1508 = vunpack.c.h.b16 %v361
    %v1509 = vunpack.c.l.b16 %v362
    %v1510 = vunpack.c.h.b16 %v362
    %v1511 = vunpack.c.l.b16 %v363
    %v1512 = vunpack.c.h.b16 %v363
    %v1513 = vunpack.c.l.b16 %v364
    %v1514 = vunpack.c.l.b16 %v365
    %v1515 = vunpack.c.h.b16 %v365
    %v1516 = vunpack.c.l.b16 %v366
    %v1517 = vunpack.c.h.b16 %v366
    %v1518 = vunpack.c.l.b16 %v367
    %v1519 = vunpack.c.h.b16 %v367
    %v1520 = vunpack.c.l.b16 %v368
    %v1521 = vunpack.c.l.b16 %v369
    %v1522 = vunpack.c.h.b16 %v369
    %v1523 = vunpack.c.l.b16 %v370
    %v1524 = vunpack.c.h.b16 %v370
    %v1525 = vunpack.c.l.b16 %v371
    %v1526 = vunpack.c.h.b16 %v371
    %v1527 = vunpack.c.l.b16 %v372
    %v1528 = vunpack.c.l.b16 %v373
    %v1529 = vunpack.c.h.b16 %v373
    %v1530 = vunpack.c.l.b16 %v374
    %v1531 = vunpack.c.h.b16 %v374
    %v1532 = vunpack.c.l.b16 %v375
    %v1533 = vunpack.c.h.b16 %v375
    %v1534 = vunpack.c.l.b16 %v376
    %v1535 = vunpack.c.l.b16 %v377
    %v1536 = vunpack.c.h.b16 %v377
    %v1537 = vunpack.c.l.b16 %v378
    %v1538 = vunpack.c.h.b16 %v378
    %v1539 = vunpack.c.l.b16 %v379
    %v1540 = vunpack.c.h.b16 %v379
    %v1541 = vunpack.c.l.b16 %v380
    %v1542 = vunpack.c.l.b16 %v381
    %v1543 = vunpack.c.h.b16 %v381
    %v1544 = vunpack.c.l.b16 %v382
    %v1545 = vunpack.c.h.b16 %v382
    %v1546 = vunpack.c.l.b16 %v383
    %v1547 = vunpack.c.h.b16 %v383
    %v1548 = vunpack.c.l.b16 %v384
    %v1549 = vunpack.c.l.b16 %v385
    %v1550 = vunpack.c.h.b16 %v385
    %v1551 = vunpack.c.l.b16 %v386
    %v1552 = vunpack.c.h.b16 %v386
    %v1553 = vunpack.c.l.b16 %v387
    %v1554 = vunpack.c.h.b16 %v387
    %v1555 = vunpack.c.l.b16 %v388
    %v1556 = vunpack.c.l.b16 %v389
    %v1557 = vunpack.c.h.b16 %v389
    %v1558 = vunpack.c.l.b16 %v390
    %v1559 = vunpack.c.h.b16 %v390
    %v1560 = vunpack.c.l.b16 %v391
    %v1561 = vunpack.c.h.b16 %v391
    %v1562 = vunpack.c.l.b16 %v392
    %v1563 = vunpack.c.l.b16 %v393
    %v1564 = vunpack.c.h.b16 %v393
    %v1565 = vunpack.c.l.b16 %v394
    %v1566 = vunpack.c.h.b16 %v394
    %v1567 = vunpack.c.l.b16 %v395
    %v1568 = vunpack.c.h.b16 %v395
    %v1569 = vunpack.c.l.b16 %v396
    %v1570 = vunpack.c.l.b16 %v397
    %v1571 = vunpack.c.h.b16 %v397
    %v1572 = vunpack.c.l.b16 %v398
    %v1573 = vunpack.c.h.b16 %v398
    %v1574 = vunpack.c.l.b16 %v399
    %v1575 = vunpack.c.h.b16 %v399
    %v1576 = vunpack.c.l.b16 %v400
    %v1577 = vunpack.c.l.b16 %v401
    %v1578 = vunpack.c.h.b16 %v401
    %v1579 = vunpack.c.l.b16 %v402
    %v1580 = vunpack.c.h.b16 %v402
    %v1581 = vunpack.c.l.b16 %v403
    %v1582 = vunpack.c.h.b16 %v403
    %v1583 = vunpack.c.l.b16 %v404
    %v1584 = vunpack.c.l.b16 %v405
    %v1585 = vunpack.c.h.b16 %v405
    %v1586 = vunpack.c.l.b16 %v406
    %v1587 = vunpack.c.h.b16 %v406
    %v1588 = vunpack.c.l.b16 %v407
    %v1589 = vunpack.c.h.b16 %v407
    %v1590 = vunpack.c.l.b16 %v408
    %v1591 = vunpack.c.l.b16 %v409
    %v1592 = vunpack.c.h.b16 %v409
    %v1593 = vunpack.c.l.b16 %v410
    %v1594 = vunpack.c.h.b16 %v410
    %v1595 = vunpack.c.l.b16 %v411
    %v1596 = vunpack.c.h.b16 %v411
    %v1597 = vunpack.c.l.b16 %v412
    %v1598 = vunpack.c.l.b16 %v413
    %v1599 = vunpack.c.h.b16 %v413
    %v1600 = vunpack.c.l.b16 %v414
    %v1601 = vunpack.c.h.b16 %v414
    %v1602 = vunpack.c.l.b16 %v415
    %v1603 = vunpack.c.h.b16 %v415
    %v1604 = vunpack.c.l.b16 %v416
    %v1605 = vunpack.c.l.b16 %v417
    %v1606 = vunpack.c.h.b16 %v417
    %v1607 = vunpack.c.l.b16 %v418
    %v1608 = vunpack.c.h.b16 %v418
    %v1609 = vunpack.c.l.b16 %v419
    %v1610 = vunpack.c.h.b16 %v419
    %v1611 = vunpack.c.l.b16 %v420
    %v1612 = vunpack.c.l.b16 %v421
    %v1613 = vunpack.c.h.b16 %v421
    %v1614 = vunpack.c.l.b16 %v422
    %v1615 = vunpack.c.h.b16 %v422
    %v1616 = vunpack.c.l.b16 %v423
    %v1617 = vunpack.c.h.b16 %v423
    %v1618 = vunpack.c.l.b16 %v424
    %v1619 = vunpack.c.l.b16 %v425
    %v1620 = vunpack.c.h.b16 %v425
    %v1621 = vunpack.c.l.b16 %v426
    %v1622 = vunpack.c.h.b16 %v426
    %v1623 = vunpack.c.l.b16 %v427
    %v1624 = vunpack.c.h.b16 %v427
    %v1625 = vunpack.c.l.b16 %v428
    %v1626 = vunpack.c.l.b16 %v429
    %v1627 = vunpack.c.h.b16 %v429
    %v1628 = vunpack.c.l.b16 %v430
    %v1629 = vunpack.c.h.b16 %v430
    %v1630 = vunpack.c.l.b16 %v431
    %v1631 = vunpack.c.h.b16 %v431
    %v1632 = vunpack.c.l.b16 %v432
    %v1633 = vunpack.c.l.b16 %v433
    %v1634 = vunpack.c.h.b16 %v433
    %v1635 = vunpack.c.l.b16 %v434
    %v1636 = vunpack.c.h.b16 %v434
    %v1637 = vunpack.c.l.b16 %v435
    %v1638 = vunpack.c.h.b16 %v435
    %v1639 = vunpack.c.l.b16 %v436
    %v1640 = vunpack.c.l.b16 %v437
    %v1641 = vunpack.c.h.b16 %v437
    %v1642 = vunpack.c.l.b16 %v438
    %v1643 = vunpack.c.h.b16 %v438
    %v1644 = vunpack.c.l.b16 %v439
    %v1645 = vunpack.c.h.b16 %v439
    %v1646 = vunpack.c.l.b16 %v440
    %v1647 = vunpack.c.l.b16 %v441
    %v1648 = vunpack.c.h.b16 %v441
    %v1649 = vunpack.c.l.b16 %v442
    %v1650 = vunpack.c.h.b16 %v442
    %v1651 = vunpack.c.l.b16 %v443
    %v1652 = vunpack.c.h.b16 %v443
    %v1653 = vunpack.c.l.b16 %v444
    %v1654 = vunpack.c.l.b16 %v445
    %v1655 = vunpack.c.h.b16 %v445
    %v1656 = vunpack.c.l.b16 %v446
    %v1657 = vunpack.c.h.b16 %v446
    %v1658 = vunpack.c.l.b16 %v447
    %v1659 = vunpack.c.h.b16 %v447
    %v1660 = vunpack.c.l.b16 %v448
    %v1661 = vunpack.c.l.b16 %v449
    %v1662 = vunpack.c.h.b16 %v449
    %v1663 = vunpack.c.l.b16 %v450
    %v1664 = vunpack.c.h.b16 %v450
    %v1665 = vunpack.c.l.b16 %v451
    %v1666 = vunpack.c.h.b16 %v451
    %v1667 = vunpack.c.l.b16 %v452
    %v1668 = vunpack.c.l.b16 %v453
    %v1669 = vunpack.c.h.b16 %v453
    %v1670 = vunpack.c.l.b16 %v454
    %v1671 = vunpack.c.h.b16 %v454
    %v1672 = vunpack.c.l.b16 %v455
    %v1673 = vunpack.c.h.b16 %v455
    %v1674 = vunpack.c.l.b16 %v456
    %v1675 = vunpack.c.l.b16 %v457
    %v1676 = vunpack.c.h.b16 %v457
    %v1677 = vunpack.c.l.b16 %v458
    %v1678 = vunpack.c.h.b16 %v458
    %v1679 = vunpack.c.l.b16 %v459
    %v1680 = vunpack.c.h.b16 %v459
    %v1681 = vunpack.c.l.b16 %v460
    %v1682 = vunpack.c.l.b16 %v461
    %v1683 = vunpack.c.h.b16 %v461
    %v1684 = vunpack.c.l.b16 %v462
    %v1685 = vunpack.c.h.b16 %v462
    %v1686 = vunpack.c.l.b16 %v463
    %v1687 = vunpack.c.h.b16 %v463
    %v1688 = vunpack.c.l.b16 %v464
    %v1689 = vunpack.c.l.b16 %v465
    %v1690 = vunpack.c.h.b16 %v465
    %v1691 = vunpack.c.l.b16 %v466
    %v1692 = vunpack.c.h.b16 %v466
    %v1693 = vunpack.c.l.b16 %v467
    %v1694 = vunpack.c.h.b16 %v467
    %v1695 = vunpack.c.l.b16 %v468
    %v1696 = vunpack.c.l.b16 %v469
    %v1697 = vunpack.c.h.b16 %v469
    %v1698 = vunpack.c.l.b16 %v470
    %v1699 = vunpack.c.h.b16 %v470
    %v1700 = vunpack.c.l.b16 %v471
    %v1701 = vunpack.c.h.b16 %v471
    %v1702 = vunpack.c.l.b16 %v472
    %v1703 = vunpack.c.l.b16 %v473
    %v1704 = vunpack.c.h.b16 %v473
    %v1705 = vunpack.c.l.b16 %v474
    %v1706 = vunpack.c.h.b16 %v474
    %v1707 = vunpack.c.l.b16 %v475
    %v1708 = vunpack.c.h.b16 %v475
    %v1709 = vunpack.c.l.b16 %v476
    %v1710 = vunpack.c.l.b16 %v477
    %v1711 = vunpack.c.h.b16 %v477
    %v1712 = vunpack.c.l.b16 %v478
    %v1713 = vunpack.c.h.b16 %v478
    %v1714 = vunpack.c.l.b16 %v479
    %v1715 = vunpack.c.h.b16 %v479
    %v1716 = vunpack.c.l.b16 %v480
    %v1717 = vunpack.c.l.b16 %v481
    %v1718 = vunpack.c.h.b16 %v481
    %v1719 = vunpack.c.l.b16 %v482
    %v1720 = vunpack.c.h.b16 %v482
    %v1721 = vunpack.c.l.b16 %v483
    %v1722 = vunpack.c.h.b16 %v483
    %v1723 = vunpack.c.l.b16 %v484
    %v1724 = vunpack.c.l.b16 %v485
    %v1725 = vunpack.c.h.b16 %v485
    %v1726 = vunpack.c.l.b16 %v486
    %v1727 = vunpack.c.h.b16 %v486
    %v1728 = vunpack.c.l.b16 %v487
    %v1729 = vunpack.c.h.b16 %v487
    %v1730 = vunpack.c.l.b16 %v488
    %v1731 = vunpack.c.l.b16 %v489
    %v1732 = vunpack.c.h.b16 %v489
    %v1733 = vunpack.c.l.b16 %v490
    %v1734 = vunpack.c.h.b16 %v490
    %v1735 = vunpack.c.l.b16 %v491
    %v1736 = vunpack.c.h.b16 %v491
    %v1737 = vunpack.c.l.b16 %v492
    %v1738 = vunpack.c.l.b16 %v493
    %v1739 = vunpack.c.h.b16 %v493
    %v1740 = vunpack.c.l.b16 %v494
    %v1741 = vunpack.c.h.b16 %v494
    %v1742 = vunpack.c.l.b16 %v495
    %v1743 = vunpack.c.h.b16 %v495
    %v1744 = vunpack.c.l.b16 %v496
    %v1745 = vunpack.c.l.b16 %v497
    %v1746 = vunpack.c.h.b16 %v497
    %v1747 = vunpack.c.l.b16 %v498
    %v1748 = vunpack.c.h.b16 %v498
    %v1749 = vunpack.c.l.b16 %v499
    %v1750 = vunpack.c.h.b16 %v499
    %v1751 = vunpack.c.l.b16 %v500
    %v1752 = vunpack.c.l.b16 %v501
    %v1753 = vunpack.c.h.b16 %v501
    %v1754 = vunpack.c.l.b16 %v502
    %v1755 = vunpack.c.h.b16 %v502
    %v1756 = vunpack.c.l.b16 %v503
    %v1757 = vunpack.c.h.b16 %v503
    %v1758 = vunpack.c.l.b16 %v504
    %v1759 = vunpack.c.l.b16 %v505
    %v1760 = vunpack.c.h.b16 %v505
    %v1761 = vunpack.c.l.b16 %v506
    %v1762 = vunpack.c.h.b16 %v506
    %v1763 = vunpack.c.l.b16 %v507
    %v1764 = vunpack.c.h.b16 %v507
    %v1765 = vunpack.c.l.b16 %v508
    %v1766 = vunpack.c.l.b16 %v509
    %v1767 = vunpack.c.h.b16 %v509
    %v1768 = vunpack.c.l.b16 %v510
    %v1769 = vunpack.c.h.b16 %v510
    %v1770 = vunpack.c.l.b16 %v511
    %v1771 = vunpack.c.h.b16 %v511
    %v1772 = vunpack.c.l.b16 %v512
    %v1773 = vunpack.c.l.b16 %v513
    %v1774 = vunpack.c.h.b16 %v513
    %v1775 = vunpack.c.l.b16 %v514
    %v1776 = vunpack.c.h.b16 %v514
    %v1777 = vunpack.c.l.b16 %v515
    %v1778 = vunpack.c.h.b16 %v515
    %v1779 = vunpack.c.l.b16 %v516
    %v1780 = vunpack.c.l.b16 %v517
    %v1781 = vunpack.c.h.b16 %v517
    %v1782 = vunpack.c.l.b16 %v518
    %v1783 = vunpack.c.h.b16 %v518
    %v1784 = vunpack.c.l.b16 %v519
    %v1785 = vunpack.c.h.b16 %v519
    %v1786 = vunpack.c.l.b16 %v520
    %v1787 = vunpack.c.l.b16 %v521
    %v1788 = vunpack.c.h.b16 %v521
    %v1789 = vunpack.c.l.b16 %v522
    %v1790 = vunpack.c.h.b16 %v522
    %v1791 = vunpack.c.l.b16 %v523
    %v1792 = vunpack.c.h.b16 %v523
    %v1793 = vunpack.c.l.b16 %v524
    %v1794 = vunpack.c.l.b16 %v525
    %v1795 = vunpack.c.h.b16 %v525
    %v1796 = vunpack.c.l.b16 %v526
    %v1797 = vunpack.c.h.b16 %v526
    %v1798 = vunpack.c.l.b16 %v527
    %v1799 = vunpack.c.h.b16 %v527
    %v1800 = vunpack.c.l.b16 %v528
    %v1801 = vunpack.c.l.b16 %v529
    %v1802 = vunpack.c.h.b16 %v529
    %v1803 = vunpack.c.l.b16 %v530
    %v1804 = vunpack.c.h.b16 %v530
    %v1805 = vunpack.c.l.b16 %v531
    %v1806 = vunpack.c.h.b16 %v531
    %v1807 = vunpack.c.l.b16 %v532
    %v1808 = vunpack.c.l.b16 %v533
    %v1809 = vunpack.c.h.b16 %v533
    %v1810 = vunpack.c.l.b16 %v534
    %v1811 = vunpack.c.h.b16 %v534
    %v1812 = vunpack.c.l.b16 %v535
    %v1813 = vunpack.c.h.b16 %v535
    %v1814 = vunpack.c.l.b16 %v536
    %v1815 = vunpack.c.l.b16 %v537
    %v1816 = vunpack.c.h.b16 %v537
    %v1817 = vunpack.c.l.b16 %v538
    %v1818 = vunpack.c.h.b16 %v538
    %v1819 = vunpack.c.l.b16 %v539
    %v1820 = vunpack.c.h.b16 %v539
    %v1821 = vunpack.c.l.b16 %v540
    %v1822 = vunpack.c.l.b16 %v541
    %v1823 = vunpack.c.h.b16 %v541
    %v1824 = vunpack.c.l.b16 %v542
    %v1825 = vunpack.c.h.b16 %v542
    %v1826 = vunpack.c.l.b16 %v543
    %v1827 = vunpack.c.h.b16 %v543
    %v1828 = vunpack.c.l.b16 %v544
    %v1829 = vunpack.c.l.b16 %v545
    %v1830 = vunpack.c.h.b16 %v545
    %v1831 = vunpack.c.l.b16 %v546
    %v1832 = vunpack.c.h.b16 %v546
    %v1833 = vunpack.c.l.b16 %v547
    %v1834 = vunpack.c.h.b16 %v547
    %v1835 = vunpack.c.l.b16 %v548
    %v1836 = vunpack.c.l.b16 %v549
    %v1837 = vunpack.c.h.b16 %v549
    %v1838 = vunpack.c.l.b16 %v550
    %v1839 = vunpack.c.h.b16 %v550
    %v1840 = vunpack.c.l.b16 %v551
    %v1841 = vunpack.c.h.b16 %v551
    %v1842 = vunpack.c.l.b16 %v552
    %v1843 = vunpack.c.l.b16 %v553
    %v1844 = vunpack.c.h.b16 %v553
    %v1845 = vunpack.c.l.b16 %v554
    %v1846 = vunpack.c.h.b16 %v554
    %v1847 = vunpack.c.l.b16 %v555
    %v1848 = vunpack.c.h.b16 %v555
    %v1849 = vunpack.c.l.b16 %v556
    %v1850 = vunpack.c.l.b16 %v557
    %v1851 = vunpack.c.h.b16 %v557
    %v1852 = vunpack.c.l.b16 %v558
    %v1853 = vunpack.c.h.b16 %v558
    %v1854 = vunpack.c.l.b16 %v559
    %v1855 = vunpack.c.h.b16 %v559
    %v1856 = vunpack.c.l.b16 %v560
    %v1857 = vunpack.c.l.b16 %v561
    %v1858 = vunpack.c.h.b16 %v561
    %v1859 = vunpack.c.l.b16 %v562
    %v1860 = vunpack.c.h.b16 %v562
    %v1861 = vunpack.c.l.b16 %v563
    %v1862 = vunpack.c.h.b16 %v563
    %v1863 = vunpack.c.l.b16 %v564
    %v1864 = vunpack.c.l.b16 %v565
    %v1865 = vunpack.c.h.b16 %v565
    %v1866 = vunpack.c.l.b16 %v566
    %v1867 = vunpack.c.h.b16 %v566
    %v1868 = vunpack.c.l.b16 %v567
    %v1869 = vunpack.c.h.b16 %v567
    %v1870 = vunpack.c.l.b16 %v568
    %v1871 = vunpack.c.l.b16 %v569
    %v1872 = vunpack.c.h.b16 %v569
    %v1873 = vunpack.c.l.b16 %v570
    %v1874 = vunpack.c.h.b16 %v570
    %v1875 = vunpack.c.l.b16 %v571
    %v1876 = vunpack.c.h.b16 %v571
    %v1877 = vunpack.c.l.b16 %v572
    %v1878 = vpack.c.b16 %v1101, %v1094
    %v1879 = vpack.c.b16 %v1102, %v1095
    %v1880 = vpack.c.b16 %v1103, %v1096
    %v1881 = vpack.c.b16 %v1104, %v1097
    %v1882 = vpack.c.b16 %v1105, %v1098
    %v1883 = vpack.c.b16 %v1106, %v1099
    %v1884 = vpack.c.b16 %v1107, %v1100
    %v1885 = vpack.c.b16 %v1115, %v1108
    %v1886 = vpack.c.b16 %v1116, %v1109
    %v1887 = vpack.c.b16 %v1117, %v1110
    %v1888 = vpack.c.b16 %v1118, %v1111
    %v1889 = vpack.c.b16 %v1119, %v1112
    %v1890 = vpack.c.b16 %v1120, %v1113
    %v1891 = vpack.c.b16 %v1121, %v1114
    %v1892 = vpack.c.b16 %v1129, %v1122
    %v1893 = vpack.c.b16 %v1130, %v1123
    %v1894 = vpack.c.b16 %v1131, %v1124
    %v1895 = vpack.c.b16 %v1132, %v1125
    %v1896 = vpack.c.b16 %v1133, %v1126
    %v1897 = vpack.c.b16 %v1134, %v1127
    %v1898 = vpack.c.b16 %v1135, %v1128
    %v1899 = vpack.c.b16 %v1143, %v1136
    %v1900 = vpack.c.b16 %v1144, %v1137
    %v1901 = vpack.c.b16 %v1145, %v1138
    %v1902 = vpack.c.b16 %v1146, %v1139
    %v1903 = vpack.c.b16 %v1147, %v1140
    %v1904 = vpack.c.b16 %v1148, %v1141
    %v1905 = vpack.c.b16 %v1149, %v1142
    %v1906 = vpack.c.b16 %v1157, %v1150
    %v1907 = vpack.c.b16 %v1158, %v1151
    %v1908 = vpack.c.b16 %v1159, %v1152
    %v1909 = vpack.c.b16 %v1160, %v1153
    %v1910 = vpack.c.b16 %v1161, %v1154
    %v1911 = vpack.c.b16 %v1162, %v1155
    %v1912 = vpack.c.b16 %v1163, %v1156
    %v1913 = vpack.c.b16 %v1171, %v1164
    %v1914 = vpack.c.b16 %v1172, %v1165
    %v1915 = vpack.c.b16 %v1173, %v1166
    %v1916 = vpack.c.b16 %v1174, %v1167
    %v1917 = vpack.c.b16 %v1175, %v1168
    %v1918 = vpack.c.b16 %v1176, %v1169
    %v1919 = vpack.c.b16 %v1177, %v1170
    %v1920 = vpack.c.b16 %v1185, %v1178
    %v1921 = vpack.c.b16 %v1186, %v1179
    %v1922 = vpack.c.b16 %v1187, %v1180
    %v1923 = vpack.c.b16 %v1188, %v1181
    %v1924 = vpack.c.b16 %v1189, %v1182
    %v1925 = vpack.c.b16 %v1190, %v1183
    %v1926 = vpack.c.b16 %v1191, %v1184
    %v1927 = vpack.c.b16 %v1199, %v1192
    %v1928 = vpack.c.b16 %v1200, %v1193
    %v1929 = vpack.c.b16 %v1201, %v1194
    %v1930 = vpack.c.b16 %v1202, %v1195
    %v1931 = vpack.c.b16 %v1203, %v1196
    %v1932 = vpack.c.b16 %v1204, %v1197
    %v1933 = vpack.c.b16 %v1205, %v1198
    %v1934 = vpack.c.b16 %v1213, %v1206
    %v1935 = vpack.c.b16 %v1214, %v1207
    %v1936 = vpack.c.b16 %v1215, %v1208
    %v1937 = vpack.c.b16 %v1216, %v1209
    %v1938 = vpack.c.b16 %v1217, %v1210
    %v1939 = vpack.c.b16 %v1218, %v1211
    %v1940 = vpack.c.b16 %v1219, %v1212
    %v1941 = vpack.c.b16 %v1227, %v1220
    %v1942 = vpack.c.b16 %v1228, %v1221
    %v1943 = vpack.c.b16 %v1229, %v1222
    %v1944 = vpack.c.b16 %v1230, %v1223
    %v1945 = vpack.c.b16 %v1231, %v1224
    %v1946 = vpack.c.b16 %v1232, %v1225
    %v1947 = vpack.c.b16 %v1233, %v1226
    %v1948 = vpack.c.b16 %v1241, %v1234
    %v1949 = vpack.c.b16 %v1242, %v1235
    %v1950 = vpack.c.b16 %v1243, %v1236
    %v1951 = vpack.c.b16 %v1244, %v1237
    %v1952 = vpack.c.b16 %v1245, %v1238
    %v1953 = vpack.c.b16 %v1246, %v1239
    %v1954 = vpack.c.b16 %v1247, %v1240
    %v1955 = vpack.c.b16 %v1255, %v1248
    %v1956 = vpack.c.b16 %v1256, %v1249
    %v1957 = vpack.c.b16 %v1257, %v1250
    %v1958 = vpack.c.b16 %v1258, %v1251
    %v1959 = vpack.c.b16 %v1259, %v1252
    %v1960 = vpack.c.b16 %v1260, %v1253
    %v1961 = vpack.c.b16 %v1261, %v1254
    %v1962 = vpack.c.b16 %v1269, %v1262
    %v1963 = vpack.c.b16 %v1270, %v1263
    %v1964 = vpack.c.b16 %v1271, %v1264
    %v1965 = vpack.c.b16 %v1272, %v1265
    %v1966 = vpack.c.b16 %v1273, %v1266
    %v1967 = vpack.c.b16 %v1274, %v1267
    %v1968 = vpack.c.b16 %v1275, %v1268
    %v1969 = vpack.c.b16 %v1283, %v1276
    %v1970 = vpack.c.b16 %v1284, %v1277
    %v1971 = vpack.c.b16 %v1285, %v1278
    %v1972 = vpack.c.b16 %v1286, %v1279
    %v1973 = vpack.c.b16 %v1287, %v1280
    %v1974 = vpack.c.b16 %v1288, %v1281
    %v1975 = vpack.c.b16 %v1289, %v1282
    %v1976 = vpack.c.b16 %v1297, %v1290
    %v1977 = vpack.c.b16 %v1298, %v1291
    %v1978 = vpack.c.b16 %v1299, %v1292
    %v1979 = vpack.c.b16 %v1300, %v1293
    %v1980 = vpack.c.b16 %v1301, %v1294
    %v1981 = vpack.c.b16 %v1302, %v1295
    %v1982 = vpack.c.b16 %v1303, %v1296
    %v1983 = vpack.c.b16 %v1311, %v1304
    %v1984 = vpack.c.b16 %v1312, %v1305
    %v1985 = vpack.c.b16 %v1313, %v1306
    %v1986 = vpack.c.b16 %v1314, %v1307
    %v1987 = vpack.c.b16 %v1315, %v1308
    %v1988 = vpack.c.b16 %v1316, %v1309
    %v1989 = vpack.c.b16 %v1317, %v1310
    %v1990 = vpack.c.b16 %v1325, %v1318
    %v1991 = vpack.c.b16 %v1326, %v1319
    %v1992 = vpack.c.b16 %v1327, %v1320
    %v1993 = vpack.c.b16 %v1328, %v1321
    %v1994 = vpack.c.b16 %v1329, %v1322
    %v1995 = vpack.c.b16 %v1330, %v1323
    %v1996 = vpack.c.b16 %v1331, %v1324
    %v1997 = vpack.c.b16 %v1339, %v1332
    %v1998 = vpack.c.b16 %v1340, %v1333
    %v1999 = vpack.c.b16 %v1341, %v1334
    %v2000 = vpack.c.b16 %v1342, %v1335
    %v2001 = vpack.c.b16 %v1343, %v1336
    %v2002 = vpack.c.b16 %v1344, %v1337
    %v2003 = vpack.c.b16 %v1345, %v1338
    %v2004 = vpack.c.b16 %v1353, %v1346
    %v2005 = vpack.c.b16 %v1354, %v1347
    %v2006 = vpack.c.b16 %v1355, %v1348
    %v2007 = vpack.c.b16 %v1356, %v1349
    %v2008 = vpack.c.b16 %v1357, %v1350
    %v2009 = vpack.c.b16 %v1358, %v1351
    %v2010 = vpack.c.b16 %v1359, %v1352
    %v2011 = vpack.c.b16 %v1367, %v1360
    %v2012 = vpack.c.b16 %v1368, %v1361
    %v2013 = vpack.c.b16 %v1369, %v1362
    %v2014 = vpack.c.b16 %v1370, %v1363
    %v2015 = vpack.c.b16 %v1371, %v1364
    %v2016 = vpack.c.b16 %v1372, %v1365
    %v2017 = vpack.c.b16 %v1373, %v1366
    %v2018 = vpack.c.b16 %v1381, %v1374
    %v2019 = vpack.c.b16 %v1382, %v1375
    %v2020 = vpack.c.b16 %v1383, %v1376
    %v2021 = vpack.c.b16 %v1384, %v1377
    %v2022 = vpack.c.b16 %v1385, %v1378
    %v2023 = vpack.c.b16 %v1386, %v1379
    %v2024 = vpack.c.b16 %v1387, %v1380
    %v2025 = vpack.c.b16 %v1395, %v1388
    %v2026 = vpack.c.b16 %v1396, %v1389
    %v2027 = vpack.c.b16 %v1397, %v1390
    %v2028 = vpack.c.b16 %v1398, %v1391
    %v2029 = vpack.c.b16 %v1399, %v1392
    %v2030 = vpack.c.b16 %v1400, %v1393
    %v2031 = vpack.c.b16 %v1401, %v1394
    %v2032 = vpack.c.b16 %v1409, %v1402
    %v2033 = vpack.c.b16 %v1410, %v1403
    %v2034 = vpack.c.b16 %v1411, %v1404
    %v2035 = vpack.c.b16 %v1412, %v1405
    %v2036 = vpack.c.b16 %v1413, %v1406
    %v2037 = vpack.c.b16 %v1414, %v1407
    %v2038 = vpack.c.b16 %v1415, %v1408
    %v2039 = vpack.c.b16 %v1423, %v1416
    %v2040 = vpack.c.b16 %v1424, %v1417
    %v2041 = vpack.c.b16 %v1425, %v1418
    %v2042 = vpack.c.b16 %v1426, %v1419
    %v2043 = vpack.c.b16 %v1427, %v1420
    %v2044 = vpack.c.b16 %v1428, %v1421
    %v2045 = vpack.c.b16 %v1429, %v1422
    %v2046 = vpack.c.b16 %v1437, %v1430
    %v2047 = vpack.c.b16 %v1438, %v1431
    %v2048 = vpack.c.b16 %v1439, %v1432
    %v2049 = vpack.c.b16 %v1440, %v1433
    %v2050 = vpack.c.b16 %v1441, %v1434
    %v2051 = vpack.c.b16 %v1442, %v1435
    %v2052 = vpack.c.b16 %v1443, %v1436
    %v2053 = vpack.c.b16 %v1451, %v1444
    %v2054 = vpack.c.b16 %v1452, %v1445
    %v2055 = vpack.c.b16 %v1453, %v1446
    %v2056 = vpack.c.b16 %v1454, %v1447
    %v2057 = vpack.c.b16 %v1455, %v1448
    %v2058 = vpack.c.b16 %v1456, %v1449
    %v2059 = vpack.c.b16 %v1457, %v1450
    %v2060 = vpack.c.b16 %v1465, %v1458
    %v2061 = vpack.c.b16 %v1466, %v1459
    %v2062 = vpack.c.b16 %v1467, %v1460
    %v2063 = vpack.c.b16 %v1468, %v1461
    %v2064 = vpack.c.b16 %v1469, %v1462
    %v2065 = vpack.c.b16 %v1470, %v1463
    %v2066 = vpack.c.b16 %v1471, %v1464
    %v2067 = vpack.c.b16 %v1479, %v1472
    %v2068 = vpack.c.b16 %v1480, %v1473
    %v2069 = vpack.c.b16 %v1481, %v1474
    %v2070 = vpack.c.b16 %v1482, %v1475
    %v2071 = vpack.c.b16 %v1483, %v1476
    %v2072 = vpack.c.b16 %v1484, %v1477
    %v2073 = vpack.c.b16 %v1485, %v1478
    %v2074 = vpack.c.b16 %v1493, %v1486
    %v2075 = vpack.c.b16 %v1494, %v1487
    %v2076 = vpack.c.b16 %v1495, %v1488
    %v2077 = vpack.c.b16 %v1496, %v1489
    %v2078 = vpack.c.b16 %v1497, %v1490
    %v2079 = vpack.c.b16 %v1498, %v1491
    %v2080 = vpack.c.b16 %v1499, %v1492
    %v2081 = vpack.c.b16 %v1507, %v1500
    %v2082 = vpack.c.b16 %v1508, %v1501
    %v2083 = vpack.c.b16 %v1509, %v1502
    %v2084 = vpack.c.b16 %v1510, %v1503
    %v2085 = vpack.c.b16 %v1511, %v1504
    %v2086 = vpack.c.b16 %v1512, %v1505
    %v2087 = vpack.c.b16 %v1513, %v1506
    %v2088 = vpack.c.b16 %v1521, %v1514
    %v2089 = vpack.c.b16 %v1522, %v1515
    %v2090 = vpack.c.b16 %v1523, %v1516
    %v2091 = vpack.c.b16 %v1524, %v1517
    %v2092 = vpack.c.b16 %v1525, %v1518
    %v2093 = vpack.c.b16 %v1526, %v1519
    %v2094 = vpack.c.b16 %v1527, %v1520
    %v2095 = vpack.c.b16 %v1535, %v1528
    %v2096 = vpack.c.b16 %v1536, %v1529
    %v2097 = vpack.c.b16 %v1537, %v1530
    %v2098 = vpack.c.b16 %v1538, %v1531
    %v2099 = vpack.c.b16 %v1539, %v1532
    %v2100 = vpack.c.b16 %v1540, %v1533
    %v2101 = vpack.c.b16 %v1541, %v1534
    %v2102 = vpack.c.b16 %v1549, %v1542
    %v2103 = vpack.c.b16 %v1550, %v1543
    %v2104 = vpack.c.b16 %v1551, %v1544
    %v2105 = vpack.c.b16 %v1552, %v1545
    %v2106 = vpack.c.b16 %v1553, %v1546
    %v2107 = vpack.c.b16 %v1554, %v1547
    %v2108 = vpack.c.b16 %v1555, %v1548
    %v2109 = vpack.c.b16 %v1563, %v1556
    %v2110 = vpack.c.b16 %v1564, %v1557
    %v2111 = vpack.c.b16 %v1565, %v1558
    %v2112 = vpack.c.b16 %v1566, %v1559
    %v2113 = vpack.c.b16 %v1567, %v1560
    %v2114 = vpack.c.b16 %v1568, %v1561
    %v2115 = vpack.c.b16 %v1569, %v1562
    %v2116 = vpack.c.b16 %v1577, %v1570
    %v2117 = vpack.c.b16 %v1578, %v1571
    %v2118 = vpack.c.b16 %v1579, %v1572
    %v2119 = vpack.c.b16 %v1580, %v1573
    %v2120 = vpack.c.b16 %v1581, %v1574
    %v2121 = vpack.c.b16 %v1582, %v1575
    %v2122 = vpack.c.b16 %v1583, %v1576
    %v2123 = vpack.c.b16 %v1591, %v1584
    %v2124 = vpack.c.b16 %v1592, %v1585
    %v2125 = vpack.c.b16 %v1593, %v1586
    %v2126 = vpack.c.b16 %v1594, %v1587
    %v2127 = vpack.c.b16 %v1595, %v1588
    %v2128 = vpack.c.b16 %v1596, %v1589
    %v2129 = vpack.c.b16 %v1597, %v1590
    %v2130 = vpack.c.b16 %v1605, %v1598
    %v2131 = vpack.c.b16 %v1606, %v1599
    %v2132 = vpack.c.b16 %v1607, %v1600
    %v2133 = vpack.c.b16 %v1608, %v1601
    %v2134 = vpack.c.b16 %v1609, %v1602
    %v2135 = vpack.c.b16 %v1610, %v1603
    %v2136 = vpack.c.b16 %v1611, %v1604
    %v2137 = vpack.c.b16 %v1619, %v1612
    %v2138 = vpack.c.b16 %v1620, %v1613
    %v2139 = vpack.c.b16 %v1621, %v1614
    %v2140 = vpack.c.b16 %v1622, %v1615
    %v2141 = vpack.c.b16 %v1623, %v1616
    %v2142 = vpack.c.b16 %v1624, %v1617
    %v2143 = vpack.c.b16 %v1625, %v1618
    %v2144 = vpack.c.b16 %v1633, %v1626
    %v2145 = vpack.c.b16 %v1634, %v1627
    %v2146 = vpack.c.b16 %v1635, %v1628
    %v2147 = vpack.c.b16 %v1636, %v1629
    %v2148 = vpack.c.b16 %v1637, %v1630
    %v2149 = vpack.c.b16 %v1638, %v1631
    %v2150 = vpack.c.b16 %v1639, %v1632
    %v2151 = vpack.c.b16 %v1647, %v1640
    %v2152 = vpack.c.b16 %v1648, %v1641
    %v2153 = vpack.c.b16 %v1649, %v1642
    %v2154 = vpack.c.b16 %v1650, %v1643
    %v2155 = vpack.c.b16 %v1651, %v1644
    %v2156 = vpack.c.b16 %v1652, %v1645
    %v2157 = vpack.c.b16 %v1653, %v1646
    %v2158 = vpack.c.b16 %v1661, %v1654
    %v2159 = vpack.c.b16 %v1662, %v1655
    %v2160 = vpack.c.b16 %v1663, %v1656
    %v2161 = vpack.c.b16 %v1664, %v1657
    %v2162 = vpack.c.b16 %v1665, %v1658
    %v2163 = vpack.c.b16 %v1666, %v1659
    %v2164 = vpack.c.b16 %v1667, %v1660
    %v2165 = vpack.c.b16 %v1675, %v1668
    %v2166 = vpack.c.b16 %v1676, %v1669
    %v2167 = vpack.c.b16 %v1677, %v1670
    %v2168 = vpack.c.b16 %v1678, %v1671
    %v2169 = vpack.c.b16 %v1679, %v1672
    %v2170 = vpack.c.b16 %v1680, %v1673
    %v2171 = vpack.c.b16 %v1681, %v1674
    %v2172 = vpack.c.b16 %v1689, %v1682
    %v2173 = vpack.c.b16 %v1690, %v1683
    %v2174 = vpack.c.b16 %v1691, %v1684
    %v2175 = vpack.c.b16 %v1692, %v1685
    %v2176 = vpack.c.b16 %v1693, %v1686
    %v2177 = vpack.c.b16 %v1694, %v1687
    %v2178 = vpack.c.b16 %v1695, %v1688
    %v2179 = vpack.c.b16 %v1703, %v1696
    %v2180 = vpack.c.b16 %v1704, %v1697
    %v2181 = vpack.c.b16 %v1705, %v1698
    %v2182 = vpack.c.b16 %v1706, %v1699
    %v2183 = vpack.c.b16 %v1707, %v1700
    %v2184 = vpack.c.b16 %v1708, %v1701
    %v2185 = vpack.c.b16 %v1709, %v1702
    %v2186 = vpack.c.b16 %v1717, %v1710
    %v2187 = vpack.c.b16 %v1718, %v1711
    %v2188 = vpack.c.b16 %v1719, %v1712
    %v2189 = vpack.c.b16 %v1720, %v1713
    %v2190 = vpack.c.b16 %v1721, %v1714
    %v2191 = vpack.c.b16 %v1722, %v1715
    %v2192 = vpack.c.b16 %v1723, %v1716
    %v2193 = vpack.c.b16 %v1731, %v1724
    %v2194 = vpack.c.b16 %v1732, %v1725
    %v2195 = vpack.c.b16 %v1733, %v1726
    %v2196 = vpack.c.b16 %v1734, %v1727
    %v2197 = vpack.c.b16 %v1735, %v1728
    %v2198 = vpack.c.b16 %v1736, %v1729
    %v2199 = vpack.c.b16 %v1737, %v1730
    %v2200 = vpack.c.b16 %v1745, %v1738
    %v2201 = vpack.c.b16 %v1746, %v1739
    %v2202 = vpack.c.b16 %v1747, %v1740
    %v2203 = vpack.c.b16 %v1748, %v1741
    %v2204 = vpack.c.b16 %v1749, %v1742
    %v2205 = vpack.c.b16 %v1750, %v1743
    %v2206 = vpack.c.b16 %v1751, %v1744
    %v2207 = vpack.c.b16 %v1759, %v1752
    %v2208 = vpack.c.b16 %v1760, %v1753
    %v2209 = vpack.c.b16 %v1761, %v1754
    %v2210 = vpack.c.b16 %v1762, %v1755
    %v2211 = vpack.c.b16 %v1763, %v1756
    %v2212 = vpack.c.b16 %v1764, %v1757
    %v2213 = vpack.c.b16 %v1765, %v1758
    %v2214 = vpack.c.b16 %v1773, %v1766
    %v2215 = vpack.c.b16 %v1774, %v1767
    %v2216 = vpack.c.b16 %v1775, %v1768
    %v2217 = vpack.c.b16 %v1776, %v1769
    %v2218 = vpack.c.b16 %v1777, %v1770
    %v2219 = vpack.c.b16 %v1778, %v1771
    %v2220 = vpack.c.b16 %v1779, %v1772
    %v2221 = vpack.c.b16 %v1787, %v1780
    %v2222 = vpack.c.b16 %v1788, %v1781
    %v2223 = vpack.c.b16 %v1789, %v1782
    %v2224 = vpack.c.b16 %v1790, %v1783
    %v2225 = vpack.c.b16 %v1791, %v1784
    %v2226 = vpack.c.b16 %v1792, %v1785
    %v2227 = vpack.c.b16 %v1793, %v1786
    %v2228 = vpack.c.b16 %v1801, %v1794
    %v2229 = vpack.c.b16 %v1802, %v1795
    %v2230 = vpack.c.b16 %v1803, %v1796
    %v2231 = vpack.c.b16 %v1804, %v1797
    %v2232 = vpack.c.b16 %v1805, %v1798
    %v2233 = vpack.c.b16 %v1806, %v1799
    %v2234 = vpack.c.b16 %v1807, %v1800
    %v2235 = vpack.c.b16 %v1815, %v1808
    %v2236 = vpack.c.b16 %v1816, %v1809
    %v2237 = vpack.c.b16 %v1817, %v1810
    %v2238 = vpack.c.b16 %v1818, %v1811
    %v2239 = vpack.c.b16 %v1819, %v1812
    %v2240 = vpack.c.b16 %v1820, %v1813
    %v2241 = vpack.c.b16 %v1821, %v1814
    %v2242 = vpack.c.b16 %v1829, %v1822
    %v2243 = vpack.c.b16 %v1830, %v1823
    %v2244 = vpack.c.b16 %v1831, %v1824
    %v2245 = vpack.c.b16 %v1832, %v1825
    %v2246 = vpack.c.b16 %v1833, %v1826
    %v2247 = vpack.c.b16 %v1834, %v1827
    %v2248 = vpack.c.b16 %v1835, %v1828
    %v2249 = vpack.c.b16 %v1843, %v1836
    %v2250 = vpack.c.b16 %v1844, %v1837
    %v2251 = vpack.c.b16 %v1845, %v1838
    %v2252 = vpack.c.b16 %v1846, %v1839
    %v2253 = vpack.c.b16 %v1847, %v1840
    %v2254 = vpack.c.b16 %v1848, %v1841
    %v2255 = vpack.c.b16 %v1849, %v1842
    %v2256 = vpack.c.b16 %v1857, %v1850
    %v2257 = vpack.c.b16 %v1858, %v1851
    %v2258 = vpack.c.b16 %v1859, %v1852
    %v2259 = vpack.c.b16 %v1860, %v1853
    %v2260 = vpack.c.b16 %v1861, %v1854
    %v2261 = vpack.c.b16 %v1862, %v1855
    %v2262 = vpack.c.b16 %v1863, %v1856
    %v2263 = vpack.c.b16 %v1871, %v1864
    %v2264 = vpack.c.b16 %v1872, %v1865
    %v2265 = vpack.c.b16 %v1873, %v1866
    %v2266 = vpack.c.b16 %v1874, %v1867
    %v2267 = vpack.c.b16 %v1875, %v1868
    %v2268 = vpack.c.b16 %v1876, %v1869
    %v2269 = vpack.c.b16 %v1877, %v1870
    %2662 = vmatprep.subr.bf16.mxu0 %v1928
    %2663 = vmatpush1.bf16.msra.mxu0 %v1927
    %2664 = vmatprep.subr.bf16.mxu0 %v1921
    %2665 = vmatpush1.bf16.msra.mxu0 %v1920
    %2666 = vmatprep.subr.bf16.mxu0 %v1914
    %2667 = vmatpush1.bf16.msra.mxu0 %v1913
    %2668 = vmatprep.subr.bf16.mxu0 %v1907
    %2669 = vmatpush1.bf16.msra.mxu0 %v1906
    %2670 = vmatprep.subr.bf16.mxu0 %v1900
    %2671 = vmatpush1.bf16.msra.mxu0 %v1899
    %2672 = vmatprep.subr.bf16.mxu0 %v1893
    %2673 = vmatpush1.bf16.msra.mxu0 %v1892
    %2674 = vmatprep.subr.bf16.mxu0 %v1886
    %2675 = vmatpush1.bf16.msra.mxu0 %v1885
    %2676 = vmatprep.subr.bf16.mxu0 %v1879
    %2677 = vmatpush1.bf16.msra.mxu0 %v1878
    %2678 = vmatprep.subr.bf16.mxu0 %v1984
    %2679 = vmatpush2.bf16.msra.mxu0 %v1983
    %2680 = vmatprep.subr.bf16.mxu0 %v1977
    %2681 = vmatpush2.bf16.msra.mxu0 %v1976
    %2682 = vmatprep.subr.bf16.mxu0 %v1970
    %2683 = vmatpush2.bf16.msra.mxu0 %v1969
    %2684 = vmatprep.subr.bf16.mxu0 %v1963
    %2685 = vmatpush2.bf16.msra.mxu0 %v1962
    %2686 = vmatprep.subr.bf16.mxu0 %v1956
    %2687 = vmatpush2.bf16.msra.mxu0 %v1955
    %2688 = vmatprep.subr.bf16.mxu0 %v1949
    %2689 = vmatpush2.bf16.msra.mxu0 %v1948
    %2690 = vmatprep.subr.bf16.mxu0 %v1942
    %2691 = vmatpush2.bf16.msra.mxu0 %v1941
    %2692 = vmatprep.subr.bf16.mxu0 %v1935
    %2693 = vmatpush2.bf16.msra.mxu0 %v1934
    %2694 = vmatprep.mubr.bf16.mxu0 %v633
    %2695 = vmatmul.mubr.bf16.gmra.mxu0 %v632
    %v2696 = vpop.f32.mrf.mxu0
    %v2697 = vadd.f32 %v578, %v2696
    %v2698 = vpop.f32.mrf.mxu0
    %v2699 = vadd.f32 %v582, %v2698
    %v2700 = vpop.f32.mrf.mxu0
    %v2701 = vadd.f32 %v578, %v2700
    %v2702 = vpop.f32.mrf.mxu0
    %v2703 = vadd.f32 %v582, %v2702
    %2704 = vdwg.mxu0
    %2705 = vmatprep.subr.bf16.mxu0 %v2040
    %2706 = vmatpush1.bf16.msra.mxu0 %v2039
    %2707 = vmatprep.subr.bf16.mxu0 %v2033
    %2708 = vmatpush1.bf16.msra.mxu0 %v2032
    %2709 = vmatprep.subr.bf16.mxu0 %v2026
    %2710 = vmatpush1.bf16.msra.mxu0 %v2025
    %2711 = vmatprep.subr.bf16.mxu0 %v2019
    %2712 = vmatpush1.bf16.msra.mxu0 %v2018
    %2713 = vmatprep.subr.bf16.mxu0 %v2012
    %2714 = vmatpush1.bf16.msra.mxu0 %v2011
    %2715 = vmatprep.subr.bf16.mxu0 %v2005
    %2716 = vmatpush1.bf16.msra.mxu0 %v2004
    %2717 = vmatprep.subr.bf16.mxu0 %v1998
    %2718 = vmatpush1.bf16.msra.mxu0 %v1997
    %2719 = vmatprep.subr.bf16.mxu0 %v1991
    %2720 = vmatpush1.bf16.msra.mxu0 %v1990
    %2721 = vmatprep.subr.bf16.mxu0 %v2096
    %2722 = vmatpush2.bf16.msra.mxu0 %v2095
    %2723 = vmatprep.subr.bf16.mxu0 %v2089
    %2724 = vmatpush2.bf16.msra.mxu0 %v2088
    %2725 = vmatprep.subr.bf16.mxu0 %v2082
    %2726 = vmatpush2.bf16.msra.mxu0 %v2081
    %2727 = vmatprep.subr.bf16.mxu0 %v2075
    %2728 = vmatpush2.bf16.msra.mxu0 %v2074
    %2729 = vmatprep.subr.bf16.mxu0 %v2068
    %2730 = vmatpush2.bf16.msra.mxu0 %v2067
    %2731 = vmatprep.subr.bf16.mxu0 %v2061
    %2732 = vmatpush2.bf16.msra.mxu0 %v2060
    %2733 = vmatprep.subr.bf16.mxu0 %v2054
    %2734 = vmatpush2.bf16.msra.mxu0 %v2053
    %2735 = vmatprep.subr.bf16.mxu0 %v2047
    %2736 = vmatpush2.bf16.msra.mxu0 %v2046
    %2737 = vmatprep.mubr.bf16.mxu0 %v635
    %2738 = vmatmul.mubr.bf16.gmra.mxu0 %v634
    %v2739 = vpop.f32.mrf.mxu0
    %v2740 = vadd.f32 %v2697, %v2739
    %v2741 = vpop.f32.mrf.mxu0
    %v2742 = vadd.f32 %v2699, %v2741
    %v2743 = vpop.f32.mrf.mxu0
    %v2744 = vadd.f32 %v2701, %v2743
    %v2745 = vpop.f32.mrf.mxu0
    %v2746 = vadd.f32 %v2703, %v2745
    %2747 = vdwg.mxu0
    %2748 = vmatprep.subr.bf16.mxu0 %v2152
    %2749 = vmatpush1.bf16.msra.mxu0 %v2151
    %2750 = vmatprep.subr.bf16.mxu0 %v2145
    %2751 = vmatpush1.bf16.msra.mxu0 %v2144
    %2752 = vmatprep.subr.bf16.mxu0 %v2138
    %2753 = vmatpush1.bf16.msra.mxu0 %v2137
    %2754 = vmatprep.subr.bf16.mxu0 %v2131
    %2755 = vmatpush1.bf16.msra.mxu0 %v2130
    %2756 = vmatprep.subr.bf16.mxu0 %v2124
    %2757 = vmatpush1.bf16.msra.mxu0 %v2123
    %2758 = vmatprep.subr.bf16.mxu0 %v2117
    %2759 = vmatpush1.bf16.msra.mxu0 %v2116
    %2760 = vmatprep.subr.bf16.mxu0 %v2110
    %2761 = vmatpush1.bf16.msra.mxu0 %v2109
    %2762 = vmatprep.subr.bf16.mxu0 %v2103
    %2763 = vmatpush1.bf16.msra.mxu0 %v2102
    %2764 = vmatprep.subr.bf16.mxu0 %v2208
    %2765 = vmatpush2.bf16.msra.mxu0 %v2207
    %2766 = vmatprep.subr.bf16.mxu0 %v2201
    %2767 = vmatpush2.bf16.msra.mxu0 %v2200
    %2768 = vmatprep.subr.bf16.mxu0 %v2194
    %2769 = vmatpush2.bf16.msra.mxu0 %v2193
    %2770 = vmatprep.subr.bf16.mxu0 %v2187
    %2771 = vmatpush2.bf16.msra.mxu0 %v2186
    %2772 = vmatprep.subr.bf16.mxu0 %v2180
    %2773 = vmatpush2.bf16.msra.mxu0 %v2179
    %2774 = vmatprep.subr.bf16.mxu0 %v2173
    %2775 = vmatpush2.bf16.msra.mxu0 %v2172
    %2776 = vmatprep.subr.bf16.mxu0 %v2166
    %2777 = vmatpush2.bf16.msra.mxu0 %v2165
    %2778 = vmatprep.subr.bf16.mxu0 %v2159
    %2779 = vmatpush2.bf16.msra.mxu0 %v2158
    %2780 = vmatprep.mubr.bf16.mxu0 %v637
    %2781 = vmatmul.mubr.bf16.gmra.mxu0 %v636
    %v2782 = vpop.f32.mrf.mxu0
    %v2783 = vadd.f32 %v2740, %v2782
    %v2784 = vpop.f32.mrf.mxu0
    %v2785 = vadd.f32 %v2742, %v2784
    %v2786 = vpop.f32.mrf.mxu0
    %v2787 = vadd.f32 %v2744, %v2786
    %v2788 = vpop.f32.mrf.mxu0
    %v2789 = vadd.f32 %v2746, %v2788
    %2790 = vdwg.mxu0
    %2791 = vmatprep.subr.bf16.mxu0 %v2264
    %2792 = vmatpush1.bf16.msra.mxu0 %v2263
    %2793 = vmatprep.subr.bf16.mxu0 %v2257
    %2794 = vmatpush1.bf16.msra.mxu0 %v2256
    %2795 = vmatprep.subr.bf16.mxu0 %v2250
    %2796 = vmatpush1.bf16.msra.mxu0 %v2249
    %2797 = vmatprep.subr.bf16.mxu0 %v2243
    %2798 = vmatpush1.bf16.msra.mxu0 %v2242
    %2799 = vmatprep.subr.bf16.mxu0 %v2236
    %2800 = vmatpush1.bf16.msra.mxu0 %v2235
    %2801 = vmatprep.subr.bf16.mxu0 %v2229
    %2802 = vmatpush1.bf16.msra.mxu0 %v2228
    %2803 = vmatprep.subr.bf16.mxu0 %v2222
    %2804 = vmatpush1.bf16.msra.mxu0 %v2221
    %2805 = vmatprep.subr.bf16.mxu0 %v2215
    %2806 = vmatpush1.bf16.msra.mxu0 %v2214
    %2807 = vmatprep.subr.bf16.mxu0 0
    %2808 = vmatpush2.bf16.msra.mxu0 0
    %2809 = vmatprep.subr.bf16.mxu0 0
    %2810 = vmatpush2.bf16.msra.mxu0 0
    %2811 = vmatprep.subr.bf16.mxu0 0
    %2812 = vmatpush2.bf16.msra.mxu0 0
    %2813 = vmatprep.subr.bf16.mxu0 0
    %2814 = vmatpush2.bf16.msra.mxu0 0
    %2815 = vmatprep.subr.bf16.mxu0 0
    %2816 = vmatpush2.bf16.msra.mxu0 0
    %2817 = vmatprep.subr.bf16.mxu0 0
    %2818 = vmatpush2.bf16.msra.mxu0 0
    %2819 = vmatprep.subr.bf16.mxu0 0
    %2820 = vmatpush2.bf16.msra.mxu0 0
    %2821 = vmatprep.subr.bf16.mxu0 0
    %2822 = vmatpush2.bf16.msra.mxu0 0
    %2823 = vmatprep.mubr.bf16.mxu0 0
    %2824 = vmatmul.mubr.bf16.gmra.mxu0 %v638
    %v2825 = vpop.f32.mrf.mxu0
    %v2826 = vadd.f32 %v2783, %v2825
    %v2827 = vpop.f32.mrf.mxu0
    %v2828 = vadd.f32 %v2785, %v2827
    %v2829 = vpop.f32.mrf.mxu0
    %v2830 = vadd.f32 %v2787, %v2829
    %v2831 = vpop.f32.mrf.mxu0
    %v2832 = vadd.f32 %v2789, %v2831
    %2833 = vdwg.mxu0
    %2834 = vmatprep.subr.bf16.mxu0 %v1930
    %2835 = vmatpush1.bf16.msra.mxu0 %v1929
    %2836 = vmatprep.subr.bf16.mxu0 %v1923
    %2837 = vmatpush1.bf16.msra.mxu0 %v1922
    %2838 = vmatprep.subr.bf16.mxu0 %v1916
    %2839 = vmatpush1.bf16.msra.mxu0 %v1915
    %2840 = vmatprep.subr.bf16.mxu0 %v1909
    %2841 = vmatpush1.bf16.msra.mxu0 %v1908
    %2842 = vmatprep.subr.bf16.mxu0 %v1902
    %2843 = vmatpush1.bf16.msra.mxu0 %v1901
    %2844 = vmatprep.subr.bf16.mxu0 %v1895
    %2845 = vmatpush1.bf16.msra.mxu0 %v1894
    %2846 = vmatprep.subr.bf16.mxu0 %v1888
    %2847 = vmatpush1.bf16.msra.mxu0 %v1887
    %2848 = vmatprep.subr.bf16.mxu0 %v1881
    %2849 = vmatpush1.bf16.msra.mxu0 %v1880
    %2850 = vmatprep.subr.bf16.mxu0 %v1986
    %2851 = vmatpush2.bf16.msra.mxu0 %v1985
    %2852 = vmatprep.subr.bf16.mxu0 %v1979
    %2853 = vmatpush2.bf16.msra.mxu0 %v1978
    %2854 = vmatprep.subr.bf16.mxu0 %v1972
    %2855 = vmatpush2.bf16.msra.mxu0 %v1971
    %2856 = vmatprep.subr.bf16.mxu0 %v1965
    %2857 = vmatpush2.bf16.msra.mxu0 %v1964
    %2858 = vmatprep.subr.bf16.mxu0 %v1958
    %2859 = vmatpush2.bf16.msra.mxu0 %v1957
    %2860 = vmatprep.subr.bf16.mxu0 %v1951
    %2861 = vmatpush2.bf16.msra.mxu0 %v1950
    %2862 = vmatprep.subr.bf16.mxu0 %v1944
    %2863 = vmatpush2.bf16.msra.mxu0 %v1943
    %2864 = vmatprep.subr.bf16.mxu0 %v1937
    %2865 = vmatpush2.bf16.msra.mxu0 %v1936
    %2866 = vmatprep.mubr.bf16.mxu0 %v633
    %2867 = vmatmul.mubr.bf16.gmra.mxu0 %v632
    %v2868 = vpop.f32.mrf.mxu0
    %v2869 = vadd.f32 %v586, %v2868
    %v2870 = vpop.f32.mrf.mxu0
    %v2871 = vadd.f32 %v590, %v2870
    %v2872 = vpop.f32.mrf.mxu0
    %v2873 = vadd.f32 %v586, %v2872
    %v2874 = vpop.f32.mrf.mxu0
    %v2875 = vadd.f32 %v590, %v2874
    %2876 = vdwg.mxu0
    %2877 = vmatprep.subr.bf16.mxu0 %v2042
    %2878 = vmatpush1.bf16.msra.mxu0 %v2041
    %2879 = vmatprep.subr.bf16.mxu0 %v2035
    %2880 = vmatpush1.bf16.msra.mxu0 %v2034
    %2881 = vmatprep.subr.bf16.mxu0 %v2028
    %2882 = vmatpush1.bf16.msra.mxu0 %v2027
    %2883 = vmatprep.subr.bf16.mxu0 %v2021
    %2884 = vmatpush1.bf16.msra.mxu0 %v2020
    %2885 = vmatprep.subr.bf16.mxu0 %v2014
    %2886 = vmatpush1.bf16.msra.mxu0 %v2013
    %2887 = vmatprep.subr.bf16.mxu0 %v2007
    %2888 = vmatpush1.bf16.msra.mxu0 %v2006
    %2889 = vmatprep.subr.bf16.mxu0 %v2000
    %2890 = vmatpush1.bf16.msra.mxu0 %v1999
    %2891 = vmatprep.subr.bf16.mxu0 %v1993
    %2892 = vmatpush1.bf16.msra.mxu0 %v1992
    %2893 = vmatprep.subr.bf16.mxu0 %v2098
    %2894 = vmatpush2.bf16.msra.mxu0 %v2097
    %2895 = vmatprep.subr.bf16.mxu0 %v2091
    %2896 = vmatpush2.bf16.msra.mxu0 %v2090
    %2897 = vmatprep.subr.bf16.mxu0 %v2084
    %2898 = vmatpush2.bf16.msra.mxu0 %v2083
    %2899 = vmatprep.subr.bf16.mxu0 %v2077
    %2900 = vmatpush2.bf16.msra.mxu0 %v2076
    %2901 = vmatprep.subr.bf16.mxu0 %v2070
    %2902 = vmatpush2.bf16.msra.mxu0 %v2069
    %2903 = vmatprep.subr.bf16.mxu0 %v2063
    %2904 = vmatpush2.bf16.msra.mxu0 %v2062
    %2905 = vmatprep.subr.bf16.mxu0 %v2056
    %2906 = vmatpush2.bf16.msra.mxu0 %v2055
    %2907 = vmatprep.subr.bf16.mxu0 %v2049
    %2908 = vmatpush2.bf16.msra.mxu0 %v2048
    %2909 = vmatprep.mubr.bf16.mxu0 %v635
    %2910 = vmatmul.mubr.bf16.gmra.mxu0 %v634
    %v2911 = vpop.f32.mrf.mxu0
    %v2912 = vadd.f32 %v2869, %v2911
    %v2913 = vpop.f32.mrf.mxu0
    %v2914 = vadd.f32 %v2871, %v2913
    %v2915 = vpop.f32.mrf.mxu0
    %v2916 = vadd.f32 %v2873, %v2915
    %v2917 = vpop.f32.mrf.mxu0
    %v2918 = vadd.f32 %v2875, %v2917
    %2919 = vdwg.mxu0
    %2920 = vmatprep.subr.bf16.mxu0 %v2154
    %2921 = vmatpush1.bf16.msra.mxu0 %v2153
    %2922 = vmatprep.subr.bf16.mxu0 %v2147
    %2923 = vmatpush1.bf16.msra.mxu0 %v2146
    %2924 = vmatprep.subr.bf16.mxu0 %v2140
    %2925 = vmatpush1.bf16.msra.mxu0 %v2139
    %2926 = vmatprep.subr.bf16.mxu0 %v2133
    %2927 = vmatpush1.bf16.msra.mxu0 %v2132
    %2928 = vmatprep.subr.bf16.mxu0 %v2126
    %2929 = vmatpush1.bf16.msra.mxu0 %v2125
    %2930 = vmatprep.subr.bf16.mxu0 %v2119
    %2931 = vmatpush1.bf16.msra.mxu0 %v2118
    %2932 = vmatprep.subr.bf16.mxu0 %v2112
    %2933 = vmatpush1.bf16.msra.mxu0 %v2111
    %2934 = vmatprep.subr.bf16.mxu0 %v2105
    %2935 = vmatpush1.bf16.msra.mxu0 %v2104
    %2936 = vmatprep.subr.bf16.mxu0 %v2210
    %2937 = vmatpush2.bf16.msra.mxu0 %v2209
    %2938 = vmatprep.subr.bf16.mxu0 %v2203
    %2939 = vmatpush2.bf16.msra.mxu0 %v2202
    %2940 = vmatprep.subr.bf16.mxu0 %v2196
    %2941 = vmatpush2.bf16.msra.mxu0 %v2195
    %2942 = vmatprep.subr.bf16.mxu0 %v2189
    %2943 = vmatpush2.bf16.msra.mxu0 %v2188
    %2944 = vmatprep.subr.bf16.mxu0 %v2182
    %2945 = vmatpush2.bf16.msra.mxu0 %v2181
    %2946 = vmatprep.subr.bf16.mxu0 %v2175
    %2947 = vmatpush2.bf16.msra.mxu0 %v2174
    %2948 = vmatprep.subr.bf16.mxu0 %v2168
    %2949 = vmatpush2.bf16.msra.mxu0 %v2167
    %2950 = vmatprep.subr.bf16.mxu0 %v2161
    %2951 = vmatpush2.bf16.msra.mxu0 %v2160
    %2952 = vmatprep.mubr.bf16.mxu0 %v637
    %2953 = vmatmul.mubr.bf16.gmra.mxu0 %v636
    %v2954 = vpop.f32.mrf.mxu0
    %v2955 = vadd.f32 %v2912, %v2954
    %v2956 = vpop.f32.mrf.mxu0
    %v2957 = vadd.f32 %v2914, %v2956
    %v2958 = vpop.f32.mrf.mxu0
    %v2959 = vadd.f32 %v2916, %v2958
    %v2960 = vpop.f32.mrf.mxu0
    %v2961 = vadd.f32 %v2918, %v2960
    %2962 = vdwg.mxu0
    %2963 = vmatprep.subr.bf16.mxu0 %v2266
    %2964 = vmatpush1.bf16.msra.mxu0 %v2265
    %2965 = vmatprep.subr.bf16.mxu0 %v2259
    %2966 = vmatpush1.bf16.msra.mxu0 %v2258
    %2967 = vmatprep.subr.bf16.mxu0 %v2252
    %2968 = vmatpush1.bf16.msra.mxu0 %v2251
    %2969 = vmatprep.subr.bf16.mxu0 %v2245
    %2970 = vmatpush1.bf16.msra.mxu0 %v2244
    %2971 = vmatprep.subr.bf16.mxu0 %v2238
    %2972 = vmatpush1.bf16.msra.mxu0 %v2237
    %2973 = vmatprep.subr.bf16.mxu0 %v2231
    %2974 = vmatpush1.bf16.msra.mxu0 %v2230
    %2975 = vmatprep.subr.bf16.mxu0 %v2224
    %2976 = vmatpush1.bf16.msra.mxu0 %v2223
    %2977 = vmatprep.subr.bf16.mxu0 %v2217
    %2978 = vmatpush1.bf16.msra.mxu0 %v2216
    %2979 = vmatprep.subr.bf16.mxu0 0
    %2980 = vmatpush2.bf16.msra.mxu0 0
    %2981 = vmatprep.subr.bf16.mxu0 0
    %2982 = vmatpush2.bf16.msra.mxu0 0
    %2983 = vmatprep.subr.bf16.mxu0 0
    %2984 = vmatpush2.bf16.msra.mxu0 0
    %2985 = vmatprep.subr.bf16.mxu0 0
    %2986 = vmatpush2.bf16.msra.mxu0 0
    %2987 = vmatprep.subr.bf16.mxu0 0
    %2988 = vmatpush2.bf16.msra.mxu0 0
    %2989 = vmatprep.subr.bf16.mxu0 0
    %2990 = vmatpush2.bf16.msra.mxu0 0
    %2991 = vmatprep.subr.bf16.mxu0 0
    %2992 = vmatpush2.bf16.msra.mxu0 0
    %2993 = vmatprep.subr.bf16.mxu0 0
    %2994 = vmatpush2.bf16.msra.mxu0 0
    %2995 = vmatprep.mubr.bf16.mxu0 0
    %2996 = vmatmul.mubr.bf16.gmra.mxu0 %v638
    %v2997 = vpop.f32.mrf.mxu0
    %v2998 = vadd.f32 %v2955, %v2997
    %v2999 = vpop.f32.mrf.mxu0
    %v3000 = vadd.f32 %v2957, %v2999
    %v3001 = vpop.f32.mrf.mxu0
    %v3002 = vadd.f32 %v2959, %v3001
    %v3003 = vpop.f32.mrf.mxu0
    %v3004 = vadd.f32 %v2961, %v3003
    %3005 = vdwg.mxu0
    %3006 = vmatprep.subr.bf16.mxu0 %v1932
    %3007 = vmatpush1.bf16.msra.mxu0 %v1931
    %3008 = vmatprep.subr.bf16.mxu0 %v1925
    %3009 = vmatpush1.bf16.msra.mxu0 %v1924
    %3010 = vmatprep.subr.bf16.mxu0 %v1918
    %3011 = vmatpush1.bf16.msra.mxu0 %v1917
    %3012 = vmatprep.subr.bf16.mxu0 %v1911
    %3013 = vmatpush1.bf16.msra.mxu0 %v1910
    %3014 = vmatprep.subr.bf16.mxu0 %v1904
    %3015 = vmatpush1.bf16.msra.mxu0 %v1903
    %3016 = vmatprep.subr.bf16.mxu0 %v1897
    %3017 = vmatpush1.bf16.msra.mxu0 %v1896
    %3018 = vmatprep.subr.bf16.mxu0 %v1890
    %3019 = vmatpush1.bf16.msra.mxu0 %v1889
    %3020 = vmatprep.subr.bf16.mxu0 %v1883
    %3021 = vmatpush1.bf16.msra.mxu0 %v1882
    %3022 = vmatprep.subr.bf16.mxu0 %v1988
    %3023 = vmatpush2.bf16.msra.mxu0 %v1987
    %3024 = vmatprep.subr.bf16.mxu0 %v1981
    %3025 = vmatpush2.bf16.msra.mxu0 %v1980
    %3026 = vmatprep.subr.bf16.mxu0 %v1974
    %3027 = vmatpush2.bf16.msra.mxu0 %v1973
    %3028 = vmatprep.subr.bf16.mxu0 %v1967
    %3029 = vmatpush2.bf16.msra.mxu0 %v1966
    %3030 = vmatprep.subr.bf16.mxu0 %v1960
    %3031 = vmatpush2.bf16.msra.mxu0 %v1959
    %3032 = vmatprep.subr.bf16.mxu0 %v1953
    %3033 = vmatpush2.bf16.msra.mxu0 %v1952
    %3034 = vmatprep.subr.bf16.mxu0 %v1946
    %3035 = vmatpush2.bf16.msra.mxu0 %v1945
    %3036 = vmatprep.subr.bf16.mxu0 %v1939
    %3037 = vmatpush2.bf16.msra.mxu0 %v1938
    %3038 = vmatprep.mubr.bf16.mxu0 %v633
    %3039 = vmatmul.mubr.bf16.gmra.mxu0 %v632
    %v3040 = vpop.f32.mrf.mxu0
    %v3041 = vadd.f32 %v594, %v3040
    %v3042 = vpop.f32.mrf.mxu0
    %v3043 = vadd.f32 %v598, %v3042
    %v3044 = vpop.f32.mrf.mxu0
    %v3045 = vadd.f32 %v594, %v3044
    %v3046 = vpop.f32.mrf.mxu0
    %v3047 = vadd.f32 %v598, %v3046
    %3048 = vdwg.mxu0
    %3049 = vmatprep.subr.bf16.mxu0 %v2044
    %3050 = vmatpush1.bf16.msra.mxu0 %v2043
    %3051 = vmatprep.subr.bf16.mxu0 %v2037
    %3052 = vmatpush1.bf16.msra.mxu0 %v2036
    %3053 = vmatprep.subr.bf16.mxu0 %v2030
    %3054 = vmatpush1.bf16.msra.mxu0 %v2029
    %3055 = vmatprep.subr.bf16.mxu0 %v2023
    %3056 = vmatpush1.bf16.msra.mxu0 %v2022
    %3057 = vmatprep.subr.bf16.mxu0 %v2016
    %3058 = vmatpush1.bf16.msra.mxu0 %v2015
    %3059 = vmatprep.subr.bf16.mxu0 %v2009
    %3060 = vmatpush1.bf16.msra.mxu0 %v2008
    %3061 = vmatprep.subr.bf16.mxu0 %v2002
    %3062 = vmatpush1.bf16.msra.mxu0 %v2001
    %3063 = vmatprep.subr.bf16.mxu0 %v1995
    %3064 = vmatpush1.bf16.msra.mxu0 %v1994
    %3065 = vmatprep.subr.bf16.mxu0 %v2100
    %3066 = vmatpush2.bf16.msra.mxu0 %v2099
    %3067 = vmatprep.subr.bf16.mxu0 %v2093
    %3068 = vmatpush2.bf16.msra.mxu0 %v2092
    %3069 = vmatprep.subr.bf16.mxu0 %v2086
    %3070 = vmatpush2.bf16.msra.mxu0 %v2085
    %3071 = vmatprep.subr.bf16.mxu0 %v2079
    %3072 = vmatpush2.bf16.msra.mxu0 %v2078
    %3073 = vmatprep.subr.bf16.mxu0 %v2072
    %3074 = vmatpush2.bf16.msra.mxu0 %v2071
    %3075 = vmatprep.subr.bf16.mxu0 %v2065
    %3076 = vmatpush2.bf16.msra.mxu0 %v2064
    %3077 = vmatprep.subr.bf16.mxu0 %v2058
    %3078 = vmatpush2.bf16.msra.mxu0 %v2057
    %3079 = vmatprep.subr.bf16.mxu0 %v2051
    %3080 = vmatpush2.bf16.msra.mxu0 %v2050
    %3081 = vmatprep.mubr.bf16.mxu0 %v635
    %3082 = vmatmul.mubr.bf16.gmra.mxu0 %v634
    %v3083 = vpop.f32.mrf.mxu0
    %v3084 = vadd.f32 %v3041, %v3083
    %v3085 = vpop.f32.mrf.mxu0
    %v3086 = vadd.f32 %v3043, %v3085
    %v3087 = vpop.f32.mrf.mxu0
    %v3088 = vadd.f32 %v3045, %v3087
    %v3089 = vpop.f32.mrf.mxu0
    %v3090 = vadd.f32 %v3047, %v3089
    %3091 = vdwg.mxu0
    %3092 = vmatprep.subr.bf16.mxu0 %v2156
    %3093 = vmatpush1.bf16.msra.mxu0 %v2155
    %3094 = vmatprep.subr.bf16.mxu0 %v2149
    %3095 = vmatpush1.bf16.msra.mxu0 %v2148
    %3096 = vmatprep.subr.bf16.mxu0 %v2142
    %3097 = vmatpush1.bf16.msra.mxu0 %v2141
    %3098 = vmatprep.subr.bf16.mxu0 %v2135
    %3099 = vmatpush1.bf16.msra.mxu0 %v2134
    %3100 = vmatprep.subr.bf16.mxu0 %v2128
    %3101 = vmatpush1.bf16.msra.mxu0 %v2127
    %3102 = vmatprep.subr.bf16.mxu0 %v2121
    %3103 = vmatpush1.bf16.msra.mxu0 %v2120
    %3104 = vmatprep.subr.bf16.mxu0 %v2114
    %3105 = vmatpush1.bf16.msra.mxu0 %v2113
    %3106 = vmatprep.subr.bf16.mxu0 %v2107
    %3107 = vmatpush1.bf16.msra.mxu0 %v2106
    %3108 = vmatprep.subr.bf16.mxu0 %v2212
    %3109 = vmatpush2.bf16.msra.mxu0 %v2211
    %3110 = vmatprep.subr.bf16.mxu0 %v2205
    %3111 = vmatpush2.bf16.msra.mxu0 %v2204
    %3112 = vmatprep.subr.bf16.mxu0 %v2198
    %3113 = vmatpush2.bf16.msra.mxu0 %v2197
    %3114 = vmatprep.subr.bf16.mxu0 %v2191
    %3115 = vmatpush2.bf16.msra.mxu0 %v2190
    %3116 = vmatprep.subr.bf16.mxu0 %v2184
    %3117 = vmatpush2.bf16.msra.mxu0 %v2183
    %3118 = vmatprep.subr.bf16.mxu0 %v2177
    %3119 = vmatpush2.bf16.msra.mxu0 %v2176
    %3120 = vmatprep.subr.bf16.mxu0 %v2170
    %3121 = vmatpush2.bf16.msra.mxu0 %v2169
    %3122 = vmatprep.subr.bf16.mxu0 %v2163
    %3123 = vmatpush2.bf16.msra.mxu0 %v2162
    %3124 = vmatprep.mubr.bf16.mxu0 %v637
    %3125 = vmatmul.mubr.bf16.gmra.mxu0 %v636
    %v3126 = vpop.f32.mrf.mxu0
    %v3127 = vadd.f32 %v3084, %v3126
    %v3128 = vpop.f32.mrf.mxu0
    %v3129 = vadd.f32 %v3086, %v3128
    %v3130 = vpop.f32.mrf.mxu0
    %v3131 = vadd.f32 %v3088, %v3130
    %v3132 = vpop.f32.mrf.mxu0
    %v3133 = vadd.f32 %v3090, %v3132
    %3134 = vdwg.mxu0
    %3135 = vmatprep.subr.bf16.mxu0 %v2268
    %3136 = vmatpush1.bf16.msra.mxu0 %v2267
    %3137 = vmatprep.subr.bf16.mxu0 %v2261
    %3138 = vmatpush1.bf16.msra.mxu0 %v2260
    %3139 = vmatprep.subr.bf16.mxu0 %v2254
    %3140 = vmatpush1.bf16.msra.mxu0 %v2253
    %3141 = vmatprep.subr.bf16.mxu0 %v2247
    %3142 = vmatpush1.bf16.msra.mxu0 %v2246
    %3143 = vmatprep.subr.bf16.mxu0 %v2240
    %3144 = vmatpush1.bf16.msra.mxu0 %v2239
    %3145 = vmatprep.subr.bf16.mxu0 %v2233
    %3146 = vmatpush1.bf16.msra.mxu0 %v2232
    %3147 = vmatprep.subr.bf16.mxu0 %v2226
    %3148 = vmatpush1.bf16.msra.mxu0 %v2225
    %3149 = vmatprep.subr.bf16.mxu0 %v2219
    %3150 = vmatpush1.bf16.msra.mxu0 %v2218
    %3151 = vmatprep.subr.bf16.mxu0 0
    %3152 = vmatpush2.bf16.msra.mxu0 0
    %3153 = vmatprep.subr.bf16.mxu0 0
    %3154 = vmatpush2.bf16.msra.mxu0 0
    %3155 = vmatprep.subr.bf16.mxu0 0
    %3156 = vmatpush2.bf16.msra.mxu0 0
    %3157 = vmatprep.subr.bf16.mxu0 0
    %3158 = vmatpush2.bf16.msra.mxu0 0
    %3159 = vmatprep.subr.bf16.mxu0 0
    %3160 = vmatpush2.bf16.msra.mxu0 0
    %3161 = vmatprep.subr.bf16.mxu0 0
    %3162 = vmatpush2.bf16.msra.mxu0 0
    %3163 = vmatprep.subr.bf16.mxu0 0
    %3164 = vmatpush2.bf16.msra.mxu0 0
    %3165 = vmatprep.subr.bf16.mxu0 0
    %3166 = vmatpush2.bf16.msra.mxu0 0
    %3167 = vmatprep.mubr.bf16.mxu0 0
    %3168 = vmatmul.mubr.bf16.gmra.mxu0 %v638
    %v3169 = vpop.f32.mrf.mxu0
    %v3170 = vadd.f32 %v3127, %v3169
    %v3171 = vpop.f32.mrf.mxu0
    %v3172 = vadd.f32 %v3129, %v3171
    %v3173 = vpop.f32.mrf.mxu0
    %v3174 = vadd.f32 %v3131, %v3173
    %v3175 = vpop.f32.mrf.mxu0
    %v3176 = vadd.f32 %v3133, %v3175
    %3177 = vdwg.mxu0
    %3178 = vmatprep.subr.bf16.mxu0 0
    %3179 = vmatpush1.bf16.msra.mxu0 %v1933
    %3180 = vmatprep.subr.bf16.mxu0 0
    %3181 = vmatpush1.bf16.msra.mxu0 %v1926
    %3182 = vmatprep.subr.bf16.mxu0 0
    %3183 = vmatpush1.bf16.msra.mxu0 %v1919
    %3184 = vmatprep.subr.bf16.mxu0 0
    %3185 = vmatpush1.bf16.msra.mxu0 %v1912
    %3186 = vmatprep.subr.bf16.mxu0 0
    %3187 = vmatpush1.bf16.msra.mxu0 %v1905
    %3188 = vmatprep.subr.bf16.mxu0 0
    %3189 = vmatpush1.bf16.msra.mxu0 %v1898
    %3190 = vmatprep.subr.bf16.mxu0 0
    %3191 = vmatpush1.bf16.msra.mxu0 %v1891
    %3192 = vmatprep.subr.bf16.mxu0 0
    %3193 = vmatpush1.bf16.msra.mxu0 %v1884
    %3194 = vmatprep.subr.bf16.mxu0 0
    %3195 = vmatpush2.bf16.msra.mxu0 %v1989
    %3196 = vmatprep.subr.bf16.mxu0 0
    %3197 = vmatpush2.bf16.msra.mxu0 %v1982
    %3198 = vmatprep.subr.bf16.mxu0 0
    %3199 = vmatpush2.bf16.msra.mxu0 %v1975
    %3200 = vmatprep.subr.bf16.mxu0 0
    %3201 = vmatpush2.bf16.msra.mxu0 %v1968
    %3202 = vmatprep.subr.bf16.mxu0 0
    %3203 = vmatpush2.bf16.msra.mxu0 %v1961
    %3204 = vmatprep.subr.bf16.mxu0 0
    %3205 = vmatpush2.bf16.msra.mxu0 %v1954
    %3206 = vmatprep.subr.bf16.mxu0 0
    %3207 = vmatpush2.bf16.msra.mxu0 %v1947
    %3208 = vmatprep.subr.bf16.mxu0 0
    %3209 = vmatpush2.bf16.msra.mxu0 %v1940
    %3210 = vmatprep.mubr.bf16.mxu0 %v633
    %3211 = vmatmul.mubr.bf16.gmra.mxu0 %v632
    %v3212 = vpop.f32.mrf.mxu0
    %v3213 = vadd.f32 %v602, %v3212
    %v3214 = vpop.f32.mrf.mxu0
    %v3215 = vpop.f32.mrf.mxu0
    %v3216 = vadd.f32 %v602, %v3215
    %v3217 = vpop.f32.mrf.mxu0
    %3218 = vdwg.mxu0
    %3219 = vmatprep.subr.bf16.mxu0 0
    %3220 = vmatpush1.bf16.msra.mxu0 %v2045
    %3221 = vmatprep.subr.bf16.mxu0 0
    %3222 = vmatpush1.bf16.msra.mxu0 %v2038
    %3223 = vmatprep.subr.bf16.mxu0 0
    %3224 = vmatpush1.bf16.msra.mxu0 %v2031
    %3225 = vmatprep.subr.bf16.mxu0 0
    %3226 = vmatpush1.bf16.msra.mxu0 %v2024
    %3227 = vmatprep.subr.bf16.mxu0 0
    %3228 = vmatpush1.bf16.msra.mxu0 %v2017
    %3229 = vmatprep.subr.bf16.mxu0 0
    %3230 = vmatpush1.bf16.msra.mxu0 %v2010
    %3231 = vmatprep.subr.bf16.mxu0 0
    %3232 = vmatpush1.bf16.msra.mxu0 %v2003
    %3233 = vmatprep.subr.bf16.mxu0 0
    %3234 = vmatpush1.bf16.msra.mxu0 %v1996
    %3235 = vmatprep.subr.bf16.mxu0 0
    %3236 = vmatpush2.bf16.msra.mxu0 %v2101
    %3237 = vmatprep.subr.bf16.mxu0 0
    %3238 = vmatpush2.bf16.msra.mxu0 %v2094
    %3239 = vmatprep.subr.bf16.mxu0 0
    %3240 = vmatpush2.bf16.msra.mxu0 %v2087
    %3241 = vmatprep.subr.bf16.mxu0 0
    %3242 = vmatpush2.bf16.msra.mxu0 %v2080
    %3243 = vmatprep.subr.bf16.mxu0 0
    %3244 = vmatpush2.bf16.msra.mxu0 %v2073
    %3245 = vmatprep.subr.bf16.mxu0 0
    %3246 = vmatpush2.bf16.msra.mxu0 %v2066
    %3247 = vmatprep.subr.bf16.mxu0 0
    %3248 = vmatpush2.bf16.msra.mxu0 %v2059
    %3249 = vmatprep.subr.bf16.mxu0 0
    %3250 = vmatpush2.bf16.msra.mxu0 %v2052
    %3251 = vmatprep.mubr.bf16.mxu0 %v635
    %3252 = vmatmul.mubr.bf16.gmra.mxu0 %v634
    %v3253 = vpop.f32.mrf.mxu0
    %v3254 = vadd.f32 %v3213, %v3253
    %v3255 = vpop.f32.mrf.mxu0
    %v3256 = vpop.f32.mrf.mxu0
    %v3257 = vadd.f32 %v3216, %v3256
    %v3258 = vpop.f32.mrf.mxu0
    %3259 = vdwg.mxu0
    %3260 = vmatprep.subr.bf16.mxu0 0
    %3261 = vmatpush1.bf16.msra.mxu0 %v2157
    %3262 = vmatprep.subr.bf16.mxu0 0
    %3263 = vmatpush1.bf16.msra.mxu0 %v2150
    %3264 = vmatprep.subr.bf16.mxu0 0
    %3265 = vmatpush1.bf16.msra.mxu0 %v2143
    %3266 = vmatprep.subr.bf16.mxu0 0
    %3267 = vmatpush1.bf16.msra.mxu0 %v2136
    %3268 = vmatprep.subr.bf16.mxu0 0
    %3269 = vmatpush1.bf16.msra.mxu0 %v2129
    %3270 = vmatprep.subr.bf16.mxu0 0
    %3271 = vmatpush1.bf16.msra.mxu0 %v2122
    %3272 = vmatprep.subr.bf16.mxu0 0
    %3273 = vmatpush1.bf16.msra.mxu0 %v2115
    %3274 = vmatprep.subr.bf16.mxu0 0
    %3275 = vmatpush1.bf16.msra.mxu0 %v2108
    %3276 = vmatprep.subr.bf16.mxu0 0
    %3277 = vmatpush2.bf16.msra.mxu0 %v2213
    %3278 = vmatprep.subr.bf16.mxu0 0
    %3279 = vmatpush2.bf16.msra.mxu0 %v2206
    %3280 = vmatprep.subr.bf16.mxu0 0
    %3281 = vmatpush2.bf16.msra.mxu0 %v2199
    %3282 = vmatprep.subr.bf16.mxu0 0
    %3283 = vmatpush2.bf16.msra.mxu0 %v2192
    %3284 = vmatprep.subr.bf16.mxu0 0
    %3285 = vmatpush2.bf16.msra.mxu0 %v2185
    %3286 = vmatprep.subr.bf16.mxu0 0
    %3287 = vmatpush2.bf16.msra.mxu0 %v2178
    %3288 = vmatprep.subr.bf16.mxu0 0
    %3289 = vmatpush2.bf16.msra.mxu0 %v2171
    %3290 = vmatprep.subr.bf16.mxu0 0
    %3291 = vmatpush2.bf16.msra.mxu0 %v2164
    %3292 = vmatprep.mubr.bf16.mxu0 %v637
    %3293 = vmatmul.mubr.bf16.gmra.mxu0 %v636
    %v3294 = vpop.f32.mrf.mxu0
    %v3295 = vadd.f32 %v3254, %v3294
    %v3296 = vpop.f32.mrf.mxu0
    %v3297 = vpop.f32.mrf.mxu0
    %v3298 = vadd.f32 %v3257, %v3297
    %v3299 = vpop.f32.mrf.mxu0
    %3300 = vdwg.mxu0
    %3301 = vmatprep.subr.bf16.mxu0 0
    %3302 = vmatpush1.bf16.msra.mxu0 %v2269
    %3303 = vmatprep.subr.bf16.mxu0 0
    %3304 = vmatpush1.bf16.msra.mxu0 %v2262
    %3305 = vmatprep.subr.bf16.mxu0 0
    %3306 = vmatpush1.bf16.msra.mxu0 %v2255
    %3307 = vmatprep.subr.bf16.mxu0 0
    %3308 = vmatpush1.bf16.msra.mxu0 %v2248
    %3309 = vmatprep.subr.bf16.mxu0 0
    %3310 = vmatpush1.bf16.msra.mxu0 %v2241
    %3311 = vmatprep.subr.bf16.mxu0 0
    %3312 = vmatpush1.bf16.msra.mxu0 %v2234
    %3313 = vmatprep.subr.bf16.mxu0 0
    %3314 = vmatpush1.bf16.msra.mxu0 %v2227
    %3315 = vmatprep.subr.bf16.mxu0 0
    %3316 = vmatpush1.bf16.msra.mxu0 %v2220
    %3317 = vmatprep.subr.bf16.mxu0 0
    %3318 = vmatpush2.bf16.msra.mxu0 0
    %3319 = vmatprep.subr.bf16.mxu0 0
    %3320 = vmatpush2.bf16.msra.mxu0 0
    %3321 = vmatprep.subr.bf16.mxu0 0
    %3322 = vmatpush2.bf16.msra.mxu0 0
    %3323 = vmatprep.subr.bf16.mxu0 0
    %3324 = vmatpush2.bf16.msra.mxu0 0
    %3325 = vmatprep.subr.bf16.mxu0 0
    %3326 = vmatpush2.bf16.msra.mxu0 0
    %3327 = vmatprep.subr.bf16.mxu0 0
    %3328 = vmatpush2.bf16.msra.mxu0 0
    %3329 = vmatprep.subr.bf16.mxu0 0
    %3330 = vmatpush2.bf16.msra.mxu0 0
    %3331 = vmatprep.subr.bf16.mxu0 0
    %3332 = vmatpush2.bf16.msra.mxu0 0
    %3333 = vmatprep.mubr.bf16.mxu0 0
    %3334 = vmatmul.mubr.bf16.gmra.mxu0 %v638
    %v3335 = vpop.f32.mrf.mxu0
    %v3336 = vadd.f32 %v3295, %v3335
    %v3337 = vpop.f32.mrf.mxu0
    %v3338 = vpop.f32.mrf.mxu0
    %v3339 = vadd.f32 %v3298, %v3338
    %v3340 = vpop.f32.mrf.mxu0
    %3341 = vdwg.mxu0
    %v3342 = vtanh.pop %v2826
    %v3343 = vtanh.pop %v2828
    %v3344 = vtanh.pop %v2998
    %v3345 = vtanh.pop %v3000
    %v3346 = vtanh.pop %v3170
    %v3347 = vtanh.pop %v3172
    %v3348 = vtanh.pop %v3336
    %v3349 = vtanh.pop %v2830
    %v3350 = vtanh.pop %v2832
    %v3351 = vtanh.pop %v3002
    %v3352 = vtanh.pop %v3004
    %v3353 = vtanh.pop %v3174
    %v3354 = vtanh.pop %v3176
    %v3355 = vtanh.pop %v3339
    %v3356 = vpack.c.bf16 %v3349, %v3342
    %v3357 = vpack.c.bf16 %v3350, %v3343
    %v3358 = vpack.c.bf16 %v3351, %v3344
    %v3359 = vpack.c.bf16 %v3352, %v3345
    %v3360 = vpack.c.bf16 %v3353, %v3346
    %v3361 = vpack.c.bf16 %v3354, %v3347
    %v3362 = vpack.c.bf16 %v3355, %v3348
    %v3363 = vld [vmem:[#allocation8] sm:$0xff]
    %v3364 = vld [vmem:[#allocation8 + $0x8] sm:$0xff]
    %v3365 = vld [vmem:[#allocation8 + $0x10] sm:$0xff]
    %v3366 = vld [vmem:[#allocation8 + $0x18] sm:$0xf]
    %v3367 = vld [vmem:[#allocation8 + $0x1c] sm:$0xff]
    %v3368 = vld [vmem:[#allocation8 + $0x24] sm:$0xff]
    %v3369 = vld [vmem:[#allocation8 + $0x2c] sm:$0xff]
    %v3370 = vld [vmem:[#allocation8 + $0x34] sm:$0xf]
    %v3371 = vld [vmem:[#allocation8 + $0x38] sm:$0xff]
    %v3372 = vld [vmem:[#allocation8 + $0x40] sm:$0xff]
    %v3373 = vld [vmem:[#allocation8 + $0x48] sm:$0xff]
    %v3374 = vld [vmem:[#allocation8 + $0x50] sm:$0xf]
    %v3375 = vld [vmem:[#allocation8 + $0x54] sm:$0xff]
    %v3376 = vld [vmem:[#allocation8 + $0x5c] sm:$0xff]
    %v3377 = vld [vmem:[#allocation8 + $0x64] sm:$0xff]
    %v3378 = vld [vmem:[#allocation8 + $0x6c] sm:$0xf]
    %v3379 = vld [vmem:[#allocation8 + $0x70] sm:$0xff]
    %v3380 = vld [vmem:[#allocation8 + $0x78] sm:$0xff]
    %v3381 = vld [vmem:[#allocation8 + $0x80] sm:$0xff]
    %v3382 = vld [vmem:[#allocation8 + $0x88] sm:$0xf]
    %v3383 = vld [vmem:[#allocation8 + $0x8c] sm:$0xff]
    %v3384 = vld [vmem:[#allocation8 + $0x94] sm:$0xff]
    %v3385 = vld [vmem:[#allocation8 + $0x9c] sm:$0xff]
    %v3386 = vld [vmem:[#allocation8 + $0xa4] sm:$0xf]
    %v3387 = vld [vmem:[#allocation8 + $0xa8] sm:$0xff]
    %v3388 = vld [vmem:[#allocation8 + $0xb0] sm:$0xff]
    %v3389 = vld [vmem:[#allocation8 + $0xb8] sm:$0xff]
    %v3390 = vld [vmem:[#allocation8 + $0xc0] sm:$0xf]
    %v3391 = vld [vmem:[#allocation8 + $0xc4] sm:$0xff]
    %v3392 = vld [vmem:[#allocation8 + $0xcc] sm:$0xff]
    %v3393 = vld [vmem:[#allocation8 + $0xd4] sm:$0xff]
    %v3394 = vld [vmem:[#allocation8 + $0xdc] sm:$0xf]
    %v3395 = vld [vmem:[#allocation8 + $0xe0] sm:$0xff]
    %v3396 = vld [vmem:[#allocation8 + $0xe8] sm:$0xff]
    %v3397 = vld [vmem:[#allocation8 + $0xf0] sm:$0xff]
    %v3398 = vld [vmem:[#allocation8 + $0xf8] sm:$0xf]
    %v3399 = vld [vmem:[#allocation8 + $0xfc] sm:$0xff]
    %v3400 = vld [vmem:[#allocation8 + $0x104] sm:$0xff]
    %v3401 = vld [vmem:[#allocation8 + $0x10c] sm:$0xff]
    %v3402 = vld [vmem:[#allocation8 + $0x114] sm:$0xf]
    %v3403 = vld [vmem:[#allocation8 + $0x118] sm:$0xff]
    %v3404 = vld [vmem:[#allocation8 + $0x120] sm:$0xff]
    %v3405 = vld [vmem:[#allocation8 + $0x128] sm:$0xff]
    %v3406 = vld [vmem:[#allocation8 + $0x130] sm:$0xf]
    %v3407 = vld [vmem:[#allocation8 + $0x134] sm:$0xff]
    %v3408 = vld [vmem:[#allocation8 + $0x13c] sm:$0xff]
    %v3409 = vld [vmem:[#allocation8 + $0x144] sm:$0xff]
    %v3410 = vld [vmem:[#allocation8 + $0x14c] sm:$0xf]
    %v3411 = vld [vmem:[#allocation8 + $0x150] sm:$0xff]
    %v3412 = vld [vmem:[#allocation8 + $0x158] sm:$0xff]
    %v3413 = vld [vmem:[#allocation8 + $0x160] sm:$0xff]
    %v3414 = vld [vmem:[#allocation8 + $0x168] sm:$0xf]
    %v3415 = vld [vmem:[#allocation8 + $0x16c] sm:$0xff]
    %v3416 = vld [vmem:[#allocation8 + $0x174] sm:$0xff]
    %v3417 = vld [vmem:[#allocation8 + $0x17c] sm:$0xff]
    %v3418 = vld [vmem:[#allocation8 + $0x184] sm:$0xf]
    %v3419 = vld [vmem:[#allocation8 + $0x188] sm:$0xff]
    %v3420 = vld [vmem:[#allocation8 + $0x190] sm:$0xff]
    %v3421 = vld [vmem:[#allocation8 + $0x198] sm:$0xff]
    %v3422 = vld [vmem:[#allocation8 + $0x1a0] sm:$0xf]
    %v3423 = vld [vmem:[#allocation8 + $0x1a4] sm:$0xff]
    %v3424 = vld [vmem:[#allocation8 + $0x1ac] sm:$0xff]
    %v3425 = vld [vmem:[#allocation8 + $0x1b4] sm:$0xff]
    %v3426 = vld [vmem:[#allocation8 + $0x1bc] sm:$0xf]
    %v3427 = vld [vmem:[#allocation8 + $0x1c0] sm:$0xff]
    %v3428 = vld [vmem:[#allocation8 + $0x1c8] sm:$0xff]
    %v3429 = vld [vmem:[#allocation8 + $0x1d0] sm:$0xff]
    %v3430 = vld [vmem:[#allocation8 + $0x1d8] sm:$0xf]
    %v3431 = vld [vmem:[#allocation8 + $0x1dc] sm:$0xff]
    %v3432 = vld [vmem:[#allocation8 + $0x1e4] sm:$0xff]
    %v3433 = vld [vmem:[#allocation8 + $0x1ec] sm:$0xff]
    %v3434 = vld [vmem:[#allocation8 + $0x1f4] sm:$0xf]
    %v3435 = vld [vmem:[#allocation8 + $0x1f8] sm:$0xff]
    %v3436 = vld [vmem:[#allocation8 + $0x200] sm:$0xff]
    %v3437 = vld [vmem:[#allocation8 + $0x208] sm:$0xff]
    %v3438 = vld [vmem:[#allocation8 + $0x210] sm:$0xf]
    %v3439 = vld [vmem:[#allocation8 + $0x214] sm:$0xff]
    %v3440 = vld [vmem:[#allocation8 + $0x21c] sm:$0xff]
    %v3441 = vld [vmem:[#allocation8 + $0x224] sm:$0xff]
    %v3442 = vld [vmem:[#allocation8 + $0x22c] sm:$0xf]
    %v3443 = vld [vmem:[#allocation8 + $0x230] sm:$0xff]
    %v3444 = vld [vmem:[#allocation8 + $0x238] sm:$0xff]
    %v3445 = vld [vmem:[#allocation8 + $0x240] sm:$0xff]
    %v3446 = vld [vmem:[#allocation8 + $0x248] sm:$0xf]
    %v3447 = vld [vmem:[#allocation8 + $0x24c] sm:$0xff]
    %v3448 = vld [vmem:[#allocation8 + $0x254] sm:$0xff]
    %v3449 = vld [vmem:[#allocation8 + $0x25c] sm:$0xff]
    %v3450 = vld [vmem:[#allocation8 + $0x264] sm:$0xf]
    %v3451 = vld [vmem:[#allocation8 + $0x268] sm:$0xff]
    %v3452 = vld [vmem:[#allocation8 + $0x270] sm:$0xff]
    %v3453 = vld [vmem:[#allocation8 + $0x278] sm:$0xff]
    %v3454 = vld [vmem:[#allocation8 + $0x280] sm:$0xf]
    %v3455 = vld [vmem:[#allocation8 + $0x284] sm:$0xff]
    %v3456 = vld [vmem:[#allocation8 + $0x28c] sm:$0xff]
    %v3457 = vld [vmem:[#allocation8 + $0x294] sm:$0xff]
    %v3458 = vld [vmem:[#allocation8 + $0x29c] sm:$0xf]
    %v3459 = vld [vmem:[#allocation8 + $0x2a0] sm:$0xff]
    %v3460 = vld [vmem:[#allocation8 + $0x2a8] sm:$0xff]
    %v3461 = vld [vmem:[#allocation8 + $0x2b0] sm:$0xff]
    %v3462 = vld [vmem:[#allocation8 + $0x2b8] sm:$0xf]
    %v3463 = vld [vmem:[#allocation8 + $0x2bc] sm:$0xff]
    %v3464 = vld [vmem:[#allocation8 + $0x2c4] sm:$0xff]
    %v3465 = vld [vmem:[#allocation8 + $0x2cc] sm:$0xff]
    %v3466 = vld [vmem:[#allocation8 + $0x2d4] sm:$0xf]
    %v3467 = vld [vmem:[#allocation8 + $0x2d8] sm:$0xff]
    %v3468 = vld [vmem:[#allocation8 + $0x2e0] sm:$0xff]
    %v3469 = vld [vmem:[#allocation8 + $0x2e8] sm:$0xff]
    %v3470 = vld [vmem:[#allocation8 + $0x2f0] sm:$0xf]
    %v3471 = vld [vmem:[#allocation8 + $0x2f4] sm:$0xff]
    %v3472 = vld [vmem:[#allocation8 + $0x2fc] sm:$0xff]
    %v3473 = vld [vmem:[#allocation8 + $0x304] sm:$0xff]
    %v3474 = vld [vmem:[#allocation8 + $0x30c] sm:$0xf]
    %v3475 = vld [vmem:[#allocation8 + $0x310] sm:$0xff]
    %v3476 = vld [vmem:[#allocation8 + $0x318] sm:$0xff]
    %v3477 = vld [vmem:[#allocation8 + $0x320] sm:$0xff]
    %v3478 = vld [vmem:[#allocation8 + $0x328] sm:$0xf]
    %v3479 = vld [vmem:[#allocation8 + $0x32c] sm:$0xff]
    %v3480 = vld [vmem:[#allocation8 + $0x334] sm:$0xff]
    %v3481 = vld [vmem:[#allocation8 + $0x33c] sm:$0xff]
    %v3482 = vld [vmem:[#allocation8 + $0x344] sm:$0xf]
    %v3483 = vld [vmem:[#allocation8 + $0x348] sm:$0xff]
    %v3484 = vld [vmem:[#allocation8 + $0x350] sm:$0xff]
    %v3485 = vld [vmem:[#allocation8 + $0x358] sm:$0xff]
    %v3486 = vld [vmem:[#allocation8 + $0x360] sm:$0xf]
    %v3487 = vld [vmem:[#allocation8 + $0x364] sm:$0xff]
    %v3488 = vld [vmem:[#allocation8 + $0x36c] sm:$0xff]
    %v3489 = vld [vmem:[#allocation8 + $0x374] sm:$0xff]
    %v3490 = vld [vmem:[#allocation8 + $0x37c] sm:$0xf]
    %v3491 = vld [vmem:[#allocation8 + $0x380] sm:$0xff]
    %v3492 = vld [vmem:[#allocation8 + $0x388] sm:$0xff]
    %v3493 = vld [vmem:[#allocation8 + $0x390] sm:$0xff]
    %v3494 = vld [vmem:[#allocation8 + $0x398] sm:$0xf]
    %v3495 = vld [vmem:[#allocation8 + $0x39c] sm:$0xff]
    %v3496 = vld [vmem:[#allocation8 + $0x3a4] sm:$0xff]
    %v3497 = vld [vmem:[#allocation8 + $0x3ac] sm:$0xff]
    %v3498 = vld [vmem:[#allocation8 + $0x3b4] sm:$0xf]
    %v3499 = vld [vmem:[#allocation8 + $0x3b8] sm:$0xff]
    %v3500 = vld [vmem:[#allocation8 + $0x3c0] sm:$0xff]
    %v3501 = vld [vmem:[#allocation8 + $0x3c8] sm:$0xff]
    %v3502 = vld [vmem:[#allocation8 + $0x3d0] sm:$0xf]
    %v3503 = vld [vmem:[#allocation8 + $0x3d4] sm:$0xff]
    %v3504 = vld [vmem:[#allocation8 + $0x3dc] sm:$0xff]
    %v3505 = vld [vmem:[#allocation8 + $0x3e4] sm:$0xff]
    %v3506 = vld [vmem:[#allocation8 + $0x3ec] sm:$0xf]
    %v3507 = vld [vmem:[#allocation8 + $0x3f0] sm:$0xff]
    %v3508 = vld [vmem:[#allocation8 + $0x3f8] sm:$0xff]
    %v3509 = vld [vmem:[#allocation8 + $0x400] sm:$0xff]
    %v3510 = vld [vmem:[#allocation8 + $0x408] sm:$0xf]
    %v3511 = vld [vmem:[#allocation8 + $0x40c] sm:$0xff]
    %v3512 = vld [vmem:[#allocation8 + $0x414] sm:$0xff]
    %v3513 = vld [vmem:[#allocation8 + $0x41c] sm:$0xff]
    %v3514 = vld [vmem:[#allocation8 + $0x424] sm:$0xf]
    %v3515 = vld [vmem:[#allocation8 + $0x428] sm:$0xff]
    %v3516 = vld [vmem:[#allocation8 + $0x430] sm:$0xff]
    %v3517 = vld [vmem:[#allocation8 + $0x438] sm:$0xff]
    %v3518 = vld [vmem:[#allocation8 + $0x440] sm:$0xf]
    %v3519 = vld [vmem:[#allocation8 + $0x444] sm:$0xff]
    %v3520 = vld [vmem:[#allocation8 + $0x44c] sm:$0xff]
    %v3521 = vld [vmem:[#allocation8 + $0x454] sm:$0xff]
    %v3522 = vld [vmem:[#allocation8 + $0x45c] sm:$0xf]
    %v3523 = vld [vmem:[#allocation8 + $0x460] sm:$0xff]
    %v3524 = vld [vmem:[#allocation8 + $0x468] sm:$0xff]
    %v3525 = vld [vmem:[#allocation8 + $0x470] sm:$0xff]
    %v3526 = vld [vmem:[#allocation8 + $0x478] sm:$0xf]
    %v3527 = vld [vmem:[#allocation8 + $0x47c] sm:$0xff]
    %v3528 = vld [vmem:[#allocation8 + $0x484] sm:$0xff]
    %v3529 = vld [vmem:[#allocation8 + $0x48c] sm:$0xff]
    %v3530 = vld [vmem:[#allocation8 + $0x494] sm:$0xf]
    %v3531 = vld [vmem:[#allocation8 + $0x498] sm:$0xff]
    %v3532 = vld [vmem:[#allocation8 + $0x4a0] sm:$0xff]
    %v3533 = vld [vmem:[#allocation8 + $0x4a8] sm:$0xff]
    %v3534 = vld [vmem:[#allocation8 + $0x4b0] sm:$0xf]
    %v3535 = vld [vmem:[#allocation8 + $0x4b4] sm:$0xff]
    %v3536 = vld [vmem:[#allocation8 + $0x4bc] sm:$0xff]
    %v3537 = vld [vmem:[#allocation8 + $0x4c4] sm:$0xff]
    %v3538 = vld [vmem:[#allocation8 + $0x4cc] sm:$0xf]
    %v3539 = vld [vmem:[#allocation8 + $0x4d0] sm:$0xff]
    %v3540 = vld [vmem:[#allocation8 + $0x4d8] sm:$0xff]
    %v3541 = vld [vmem:[#allocation8 + $0x4e0] sm:$0xff]
    %v3542 = vld [vmem:[#allocation8 + $0x4e8] sm:$0xf]
    %v3543 = vld [vmem:[#allocation8 + $0x4ec] sm:$0xff]
    %v3544 = vld [vmem:[#allocation8 + $0x4f4] sm:$0xff]
    %v3545 = vld [vmem:[#allocation8 + $0x4fc] sm:$0xff]
    %v3546 = vld [vmem:[#allocation8 + $0x504] sm:$0xf]
    %v3547 = vld [vmem:[#allocation8 + $0x508] sm:$0xff]
    %v3548 = vld [vmem:[#allocation8 + $0x510] sm:$0xff]
    %v3549 = vld [vmem:[#allocation8 + $0x518] sm:$0xff]
    %v3550 = vld [vmem:[#allocation8 + $0x520] sm:$0xf]
    %v3551 = vld [vmem:[#allocation8 + $0x524] sm:$0xff]
    %v3552 = vld [vmem:[#allocation8 + $0x52c] sm:$0xff]
    %v3553 = vld [vmem:[#allocation8 + $0x534] sm:$0xff]
    %v3554 = vld [vmem:[#allocation8 + $0x53c] sm:$0xf]
    %v3555 = vld [vmem:[#allocation8 + $0x540] sm:$0xff]
    %v3556 = vld [vmem:[#allocation8 + $0x548] sm:$0xff]
    %v3557 = vld [vmem:[#allocation8 + $0x550] sm:$0xff]
    %v3558 = vld [vmem:[#allocation8 + $0x558] sm:$0xf]
    %v3559 = vld [vmem:[#allocation8 + $0x55c] sm:$0xff]
    %v3560 = vld [vmem:[#allocation8 + $0x564] sm:$0xff]
    %v3561 = vld [vmem:[#allocation8 + $0x56c] sm:$0xff]
    %v3562 = vld [vmem:[#allocation8 + $0x574] sm:$0xf]
    %v3563 = vld [vmem:[#allocation8 + $0x578] sm:$0xff]
    %v3564 = vld [vmem:[#allocation8 + $0x580] sm:$0xff]
    %v3565 = vld [vmem:[#allocation8 + $0x588] sm:$0xff]
    %v3566 = vld [vmem:[#allocation8 + $0x590] sm:$0xf]
    %v3567 = vld [vmem:[#allocation8 + $0x594] sm:$0xff]
    %v3568 = vld [vmem:[#allocation8 + $0x59c] sm:$0xff]
    %v3569 = vld [vmem:[#allocation8 + $0x5a4] sm:$0xff]
    %v3570 = vld [vmem:[#allocation8 + $0x5ac] sm:$0xf]
    %v3571 = vld [vmem:[#allocation8 + $0x5b0] sm:$0xff]
    %v3572 = vld [vmem:[#allocation8 + $0x5b8] sm:$0xff]
    %v3573 = vld [vmem:[#allocation8 + $0x5c0] sm:$0xff]
    %v3574 = vld [vmem:[#allocation8 + $0x5c8] sm:$0xf]
    %v3575 = vld [vmem:[#allocation8 + $0x5cc] sm:$0xff]
    %v3576 = vld [vmem:[#allocation8 + $0x5d4] sm:$0xff]
    %v3577 = vld [vmem:[#allocation8 + $0x5dc] sm:$0xff]
    %v3578 = vld [vmem:[#allocation8 + $0x5e4] sm:$0xf]
    %v3579 = vld [vmem:[#allocation8 + $0x5e8] sm:$0xff]
    %v3580 = vld [vmem:[#allocation8 + $0x5f0] sm:$0xff]
    %v3581 = vld [vmem:[#allocation8 + $0x5f8] sm:$0xff]
    %v3582 = vld [vmem:[#allocation8 + $0x600] sm:$0xf]
    %v3583 = vld [vmem:[#allocation8 + $0x604] sm:$0xff]
    %v3584 = vld [vmem:[#allocation8 + $0x60c] sm:$0xff]
    %v3585 = vld [vmem:[#allocation8 + $0x614] sm:$0xff]
    %v3586 = vld [vmem:[#allocation8 + $0x61c] sm:$0xf]
    %v3587 = vld [vmem:[#allocation8 + $0x620] sm:$0xff]
    %v3588 = vld [vmem:[#allocation8 + $0x628] sm:$0xff]
    %v3589 = vld [vmem:[#allocation8 + $0x630] sm:$0xff]
    %v3590 = vld [vmem:[#allocation8 + $0x638] sm:$0xf]
    %v3591 = vld [vmem:[#allocation8 + $0x63c] sm:$0xff]
    %v3592 = vld [vmem:[#allocation8 + $0x644] sm:$0xff]
    %v3593 = vld [vmem:[#allocation8 + $0x64c] sm:$0xff]
    %v3594 = vld [vmem:[#allocation8 + $0x654] sm:$0xf]
    %v3595 = vld [vmem:[#allocation8 + $0x658] sm:$0xff]
    %v3596 = vld [vmem:[#allocation8 + $0x660] sm:$0xff]
    %v3597 = vld [vmem:[#allocation8 + $0x668] sm:$0xff]
    %v3598 = vld [vmem:[#allocation8 + $0x670] sm:$0xf]
    %v3599 = vld [vmem:[#allocation8 + $0x674] sm:$0xff]
    %v3600 = vld [vmem:[#allocation8 + $0x67c] sm:$0xff]
    %v3601 = vld [vmem:[#allocation8 + $0x684] sm:$0xff]
    %v3602 = vld [vmem:[#allocation8 + $0x68c] sm:$0xf]
    %v3603 = vld [vmem:[#allocation8 + $0x690] sm:$0xff]
    %v3604 = vld [vmem:[#allocation8 + $0x698] sm:$0xff]
    %v3605 = vld [vmem:[#allocation8 + $0x6a0] sm:$0xff]
    %v3606 = vld [vmem:[#allocation8 + $0x6a8] sm:$0xf]
    %v3607 = vld [vmem:[#allocation8 + $0x6ac] sm:$0xff]
    %v3608 = vld [vmem:[#allocation8 + $0x6b4] sm:$0xff]
    %v3609 = vld [vmem:[#allocation8 + $0x6bc] sm:$0xff]
    %v3610 = vld [vmem:[#allocation8 + $0x6c4] sm:$0xf]
    %v3611 = vld [vmem:[#allocation8 + $0x6c8] sm:$0xff]
    %v3612 = vld [vmem:[#allocation8 + $0x6d0] sm:$0xff]
    %v3613 = vld [vmem:[#allocation8 + $0x6d8] sm:$0xff]
    %v3614 = vld [vmem:[#allocation8 + $0x6e0] sm:$0xf]
    %v3615 = vld [vmem:[#allocation8 + $0x6e4] sm:$0xff]
    %v3616 = vld [vmem:[#allocation8 + $0x6ec] sm:$0xff]
    %v3617 = vld [vmem:[#allocation8 + $0x6f4] sm:$0xff]
    %v3618 = vld [vmem:[#allocation8 + $0x6fc] sm:$0xf]
    %v3619 = vld [vmem:[#allocation8 + $0x700] sm:$0xff]
    %v3620 = vld [vmem:[#allocation8 + $0x708] sm:$0xff]
    %v3621 = vld [vmem:[#allocation8 + $0x710] sm:$0xff]
    %v3622 = vld [vmem:[#allocation8 + $0x718] sm:$0xf]
    %v3623 = vld [vmem:[#allocation8 + $0x71c] sm:$0xff]
    %v3624 = vld [vmem:[#allocation8 + $0x724] sm:$0xff]
    %v3625 = vld [vmem:[#allocation8 + $0x72c] sm:$0xff]
    %v3626 = vld [vmem:[#allocation8 + $0x734] sm:$0xf]
    %v3627 = vld [vmem:[#allocation8 + $0x738] sm:$0xff]
    %v3628 = vld [vmem:[#allocation8 + $0x740] sm:$0xff]
    %v3629 = vld [vmem:[#allocation8 + $0x748] sm:$0xff]
    %v3630 = vld [vmem:[#allocation8 + $0x750] sm:$0xf]
    %v3631 = vld [vmem:[#allocation8 + $0x754] sm:$0xff]
    %v3632 = vld [vmem:[#allocation8 + $0x75c] sm:$0xff]
    %v3633 = vld [vmem:[#allocation8 + $0x764] sm:$0xff]
    %v3634 = vld [vmem:[#allocation8 + $0x76c] sm:$0xf]
    %v3635 = vld [vmem:[#allocation8 + $0x770] sm:$0xff]
    %v3636 = vld [vmem:[#allocation8 + $0x778] sm:$0xff]
    %v3637 = vld [vmem:[#allocation8 + $0x780] sm:$0xff]
    %v3638 = vld [vmem:[#allocation8 + $0x788] sm:$0xf]
    %v3639 = vld [vmem:[#allocation8 + $0x78c] sm:$0xff]
    %v3640 = vld [vmem:[#allocation8 + $0x794] sm:$0xff]
    %v3641 = vld [vmem:[#allocation8 + $0x79c] sm:$0xff]
    %v3642 = vld [vmem:[#allocation8 + $0x7a4] sm:$0xf]
    %v3643 = vld [vmem:[#allocation8 + $0x7a8] sm:$0xff]
    %v3644 = vld [vmem:[#allocation8 + $0x7b0] sm:$0xff]
    %v3645 = vld [vmem:[#allocation8 + $0x7b8] sm:$0xff]
    %v3646 = vld [vmem:[#allocation8 + $0x7c0] sm:$0xf]
    %v3647 = vld [vmem:[#allocation8 + $0x7c4] sm:$0xff]
    %v3648 = vld [vmem:[#allocation8 + $0x7cc] sm:$0xff]
    %v3649 = vld [vmem:[#allocation8 + $0x7d4] sm:$0xff]
    %v3650 = vld [vmem:[#allocation8 + $0x7dc] sm:$0xf]
    %v3651 = vld [vmem:[#allocation8 + $0x7e0] sm:$0xff]
    %v3652 = vld [vmem:[#allocation8 + $0x7e8] sm:$0xff]
    %v3653 = vld [vmem:[#allocation8 + $0x7f0] sm:$0xff]
    %v3654 = vld [vmem:[#allocation8 + $0x7f8] sm:$0xf]
    %v3655 = vld [vmem:[#allocation8 + $0x7fc] sm:$0xff]
    %v3656 = vld [vmem:[#allocation8 + $0x804] sm:$0xff]
    %v3657 = vld [vmem:[#allocation8 + $0x80c] sm:$0xff]
    %v3658 = vld [vmem:[#allocation8 + $0x814] sm:$0xf]
    %v3659 = vld [vmem:[#allocation8 + $0x818] sm:$0xff]
    %v3660 = vld [vmem:[#allocation8 + $0x820] sm:$0xff]
    %v3661 = vld [vmem:[#allocation8 + $0x828] sm:$0xff]
    %v3662 = vld [vmem:[#allocation8 + $0x830] sm:$0xf]
    %v3663 = vld [vmem:[#allocation8 + $0x834] sm:$0xff]
    %v3664 = vld [vmem:[#allocation8 + $0x83c] sm:$0xff]
    %v3665 = vld [vmem:[#allocation8 + $0x844] sm:$0xff]
    %v3666 = vld [vmem:[#allocation8 + $0x84c] sm:$0xf]
    %v3667 = vld [vmem:[#allocation8 + $0x850] sm:$0xff]
    %v3668 = vld [vmem:[#allocation8 + $0x858] sm:$0xff]
    %v3669 = vld [vmem:[#allocation8 + $0x860] sm:$0xff]
    %v3670 = vld [vmem:[#allocation8 + $0x868] sm:$0xf]
    %v3671 = vld [vmem:[#allocation8 + $0x86c] sm:$0xff]
    %v3672 = vld [vmem:[#allocation8 + $0x874] sm:$0xff]
    %v3673 = vld [vmem:[#allocation8 + $0x87c] sm:$0xff]
    %v3674 = vld [vmem:[#allocation8 + $0x884] sm:$0xf]
    %v3675 = vld [vmem:[#allocation8 + $0x888] sm:$0xff]
    %v3676 = vld [vmem:[#allocation8 + $0x890] sm:$0xff]
    %v3677 = vld [vmem:[#allocation8 + $0x898] sm:$0xff]
    %v3678 = vld [vmem:[#allocation8 + $0x8a0] sm:$0xf]
    %v3679 = vld [vmem:[#allocation8 + $0x8a4] sm:$0xff]
    %v3680 = vld [vmem:[#allocation8 + $0x8ac] sm:$0xff]
    %v3681 = vld [vmem:[#allocation8 + $0x8b4] sm:$0xff]
    %v3682 = vld [vmem:[#allocation8 + $0x8bc] sm:$0xf]
    %v3683 = vld [vmem:[#allocation8 + $0x8c0] sm:$0xff]
    %v3684 = vld [vmem:[#allocation8 + $0x8c8] sm:$0xff]
    %v3685 = vld [vmem:[#allocation8 + $0x8d0] sm:$0xff]
    %v3686 = vld [vmem:[#allocation8 + $0x8d8] sm:$0xf]
    %v3687 = vld [vmem:[#allocation8 + $0x8dc] sm:$0xff]
    %v3688 = vld [vmem:[#allocation8 + $0x8e4] sm:$0xff]
    %v3689 = vld [vmem:[#allocation8 + $0x8ec] sm:$0xff]
    %v3690 = vld [vmem:[#allocation8 + $0x8f4] sm:$0xf]
    %v3691 = vld [vmem:[#allocation8 + $0x8f8] sm:$0xff]
    %v3692 = vld [vmem:[#allocation8 + $0x900] sm:$0xff]
    %v3693 = vld [vmem:[#allocation8 + $0x908] sm:$0xff]
    %v3694 = vld [vmem:[#allocation8 + $0x910] sm:$0xf]
    %v3695 = vld [vmem:[#allocation8 + $0x914] sm:$0xff]
    %v3696 = vld [vmem:[#allocation8 + $0x91c] sm:$0xff]
    %v3697 = vld [vmem:[#allocation8 + $0x924] sm:$0xff]
    %v3698 = vld [vmem:[#allocation8 + $0x92c] sm:$0xf]
    %v3699 = vld [vmem:[#allocation8 + $0x930] sm:$0xff]
    %v3700 = vld [vmem:[#allocation8 + $0x938] sm:$0xff]
    %v3701 = vld [vmem:[#allocation8 + $0x940] sm:$0xff]
    %v3702 = vld [vmem:[#allocation8 + $0x948] sm:$0xf]
    %v3703 = vld [vmem:[#allocation8 + $0x94c] sm:$0xff]
    %v3704 = vld [vmem:[#allocation8 + $0x954] sm:$0xff]
    %v3705 = vld [vmem:[#allocation8 + $0x95c] sm:$0xff]
    %v3706 = vld [vmem:[#allocation8 + $0x964] sm:$0xf]
    %v3707 = vld [vmem:[#allocation8 + $0x968] sm:$0xff]
    %v3708 = vld [vmem:[#allocation8 + $0x970] sm:$0xff]
    %v3709 = vld [vmem:[#allocation8 + $0x978] sm:$0xff]
    %v3710 = vld [vmem:[#allocation8 + $0x980] sm:$0xf]
    %v3711 = vld [vmem:[#allocation8 + $0x984] sm:$0xff]
    %v3712 = vld [vmem:[#allocation8 + $0x98c] sm:$0xff]
    %v3713 = vld [vmem:[#allocation8 + $0x994] sm:$0xff]
    %v3714 = vld [vmem:[#allocation8 + $0x99c] sm:$0xf]
    %v3715 = vld [vmem:[#allocation8 + $0x9a0] sm:$0xff]
    %v3716 = vld [vmem:[#allocation8 + $0x9a8] sm:$0xff]
    %v3717 = vld [vmem:[#allocation8 + $0x9b0] sm:$0xff]
    %v3718 = vld [vmem:[#allocation8 + $0x9b8] sm:$0xf]
    %v3719 = vld [vmem:[#allocation8 + $0x9bc] sm:$0xff]
    %v3720 = vld [vmem:[#allocation8 + $0x9c4] sm:$0xff]
    %v3721 = vld [vmem:[#allocation8 + $0x9cc] sm:$0xff]
    %v3722 = vld [vmem:[#allocation8 + $0x9d4] sm:$0xf]
    %v3723 = vld [vmem:[#allocation8 + $0x9d8] sm:$0xff]
    %v3724 = vld [vmem:[#allocation8 + $0x9e0] sm:$0xff]
    %v3725 = vld [vmem:[#allocation8 + $0x9e8] sm:$0xff]
    %v3726 = vld [vmem:[#allocation8 + $0x9f0] sm:$0xf]
    %v3727 = vld [vmem:[#allocation8 + $0x9f4] sm:$0xff]
    %v3728 = vld [vmem:[#allocation8 + $0x9fc] sm:$0xff]
    %v3729 = vld [vmem:[#allocation8 + $0xa04] sm:$0xff]
    %v3730 = vld [vmem:[#allocation8 + $0xa0c] sm:$0xf]
    %v3731 = vld [vmem:[#allocation8 + $0xa10] sm:$0xff]
    %v3732 = vld [vmem:[#allocation8 + $0xa18] sm:$0xff]
    %v3733 = vld [vmem:[#allocation8 + $0xa20] sm:$0xff]
    %v3734 = vld [vmem:[#allocation8 + $0xa28] sm:$0xf]
    %v3735 = vld [vmem:[#allocation8 + $0xa2c] sm:$0xff]
    %v3736 = vld [vmem:[#allocation8 + $0xa34] sm:$0xff]
    %v3737 = vld [vmem:[#allocation8 + $0xa3c] sm:$0xff]
    %v3738 = vld [vmem:[#allocation8 + $0xa44] sm:$0xf]
    %v3739 = vld [vmem:[#allocation8 + $0xa48] sm:$0xff]
    %v3740 = vld [vmem:[#allocation8 + $0xa50] sm:$0xff]
    %v3741 = vld [vmem:[#allocation8 + $0xa58] sm:$0xff]
    %v3742 = vld [vmem:[#allocation8 + $0xa60] sm:$0xf]
    %v3743 = vld [vmem:[#allocation8 + $0xa64] sm:$0xff]
    %v3744 = vld [vmem:[#allocation8 + $0xa6c] sm:$0xff]
    %v3745 = vld [vmem:[#allocation8 + $0xa74] sm:$0xff]
    %v3746 = vld [vmem:[#allocation8 + $0xa7c] sm:$0xf]
    %v3747 = vld [vmem:[#allocation8 + $0xa80] sm:$0xff]
    %v3748 = vld [vmem:[#allocation8 + $0xa88] sm:$0xff]
    %v3749 = vld [vmem:[#allocation8 + $0xa90] sm:$0xff]
    %v3750 = vld [vmem:[#allocation8 + $0xa98] sm:$0xf]
    %v3751 = vld [vmem:[#allocation8 + $0xa9c] sm:$0xff]
    %v3752 = vld [vmem:[#allocation8 + $0xaa4] sm:$0xff]
    %v3753 = vld [vmem:[#allocation8 + $0xaac] sm:$0xff]
    %v3754 = vld [vmem:[#allocation8 + $0xab4] sm:$0xf]
    %v3755 = vld [vmem:[#allocation8 + $0xab8] sm:$0xff]
    %v3756 = vld [vmem:[#allocation8 + $0xac0] sm:$0xff]
    %v3757 = vld [vmem:[#allocation8 + $0xac8] sm:$0xff]
    %v3758 = vld [vmem:[#allocation8 + $0xad0] sm:$0xf]
    %v3759 = vld [vmem:[#allocation8 + $0xad4] sm:$0xff]
    %v3760 = vld [vmem:[#allocation8 + $0xadc] sm:$0xff]
    %v3761 = vld [vmem:[#allocation8 + $0xae4] sm:$0xff]
    %v3762 = vld [vmem:[#allocation8 + $0xaec] sm:$0xf]
    %v3763 = vld [vmem:[#allocation8 + $0xaf0] sm:$0xff]
    %v3764 = vld [vmem:[#allocation8 + $0xaf8] sm:$0xff]
    %v3765 = vld [vmem:[#allocation8 + $0xb00] sm:$0xff]
    %v3766 = vld [vmem:[#allocation8 + $0xb08] sm:$0xf]
    %v3767 = vld [vmem:[#allocation8 + $0xb0c] sm:$0xff]
    %v3768 = vld [vmem:[#allocation8 + $0xb14] sm:$0xff]
    %v3769 = vld [vmem:[#allocation8 + $0xb1c] sm:$0xff]
    %v3770 = vld [vmem:[#allocation8 + $0xb24] sm:$0xf]
    %v3771 = vld [vmem:[#allocation8 + $0xb28] sm:$0xff]
    %v3772 = vld [vmem:[#allocation8 + $0xb30] sm:$0xff]
    %v3773 = vld [vmem:[#allocation8 + $0xb38] sm:$0xff]
    %v3774 = vld [vmem:[#allocation8 + $0xb40] sm:$0xf]
    %v3775 = vld [vmem:[#allocation8 + $0xb44] sm:$0xff]
    %v3776 = vld [vmem:[#allocation8 + $0xb4c] sm:$0xff]
    %v3777 = vld [vmem:[#allocation8 + $0xb54] sm:$0xff]
    %v3778 = vld [vmem:[#allocation8 + $0xb5c] sm:$0xf]
    %v3779 = vld [vmem:[#allocation8 + $0xb60] sm:$0xff]
    %v3780 = vld [vmem:[#allocation8 + $0xb68] sm:$0xff]
    %v3781 = vld [vmem:[#allocation8 + $0xb70] sm:$0xff]
    %v3782 = vld [vmem:[#allocation8 + $0xb78] sm:$0xf]
    %v3783 = vld [vmem:[#allocation8 + $0xb7c] sm:$0xff]
    %v3784 = vld [vmem:[#allocation8 + $0xb84] sm:$0xff]
    %v3785 = vld [vmem:[#allocation8 + $0xb8c] sm:$0xff]
    %v3786 = vld [vmem:[#allocation8 + $0xb94] sm:$0xf]
    %v3787 = vld [vmem:[#allocation8 + $0xb98] sm:$0xff]
    %v3788 = vld [vmem:[#allocation8 + $0xba0] sm:$0xff]
    %v3789 = vld [vmem:[#allocation8 + $0xba8] sm:$0xff]
    %v3790 = vld [vmem:[#allocation8 + $0xbb0] sm:$0xf]
    %v3791 = vld [vmem:[#allocation8 + $0xbb4] sm:$0xff]
    %v3792 = vld [vmem:[#allocation8 + $0xbbc] sm:$0xff]
    %v3793 = vld [vmem:[#allocation8 + $0xbc4] sm:$0xff]
    %v3794 = vld [vmem:[#allocation8 + $0xbcc] sm:$0xf]
    %v3795 = vld [vmem:[#allocation8 + $0xbd0] sm:$0xff]
    %v3796 = vld [vmem:[#allocation8 + $0xbd8] sm:$0xff]
    %v3797 = vld [vmem:[#allocation8 + $0xbe0] sm:$0xff]
    %v3798 = vld [vmem:[#allocation8 + $0xbe8] sm:$0xf]
    %v3799 = vld [vmem:[#allocation8 + $0xbec] sm:$0xff]
    %v3800 = vld [vmem:[#allocation8 + $0xbf4] sm:$0xff]
    %v3801 = vld [vmem:[#allocation8 + $0xbfc] sm:$0xff]
    %v3802 = vld [vmem:[#allocation8 + $0xc04] sm:$0xf]
    %v3803 = vld [vmem:[#allocation8 + $0xc08] sm:$0xff]
    %v3804 = vld [vmem:[#allocation8 + $0xc10] sm:$0xff]
    %v3805 = vld [vmem:[#allocation8 + $0xc18] sm:$0xff]
    %v3806 = vld [vmem:[#allocation8 + $0xc20] sm:$0xf]
    %v3807 = vld [vmem:[#allocation8 + $0xc24] sm:$0xff]
    %v3808 = vld [vmem:[#allocation8 + $0xc2c] sm:$0xff]
    %v3809 = vld [vmem:[#allocation8 + $0xc34] sm:$0xff]
    %v3810 = vld [vmem:[#allocation8 + $0xc3c] sm:$0xf]
    %v3811 = vld [vmem:[#allocation10] sm:$0xff]
    %v3813 = vlaneseq
    %v3814 = vshrl.u32 %v3813, 7
    %v3815 = vsub.s32 0, %v3814
    %v3816 = vrot.slane %v3811, %v3815
    %v3817 = vlaneseq
    %v3818 = vshrl.u32 %v3817, 7
    %v3819 = vsub.s32 1, %v3818
    %v3820 = vrot.slane %v3811, %v3819
    %v3821 = vlaneseq
    %v3822 = vshrl.u32 %v3821, 7
    %v3823 = vsub.s32 2, %v3822
    %v3824 = vrot.slane %v3811, %v3823
    %v3825 = vlaneseq
    %v3826 = vshrl.u32 %v3825, 7
    %v3827 = vsub.s32 3, %v3826
    %v3828 = vrot.slane %v3811, %v3827
    %v3829 = vlaneseq
    %v3830 = vshrl.u32 %v3829, 7
    %v3831 = vsub.s32 4, %v3830
    %v3832 = vrot.slane %v3811, %v3831
    %v3833 = vlaneseq
    %v3834 = vshrl.u32 %v3833, 7
    %v3835 = vsub.s32 5, %v3834
    %v3836 = vrot.slane %v3811, %v3835
    %v3837 = vlaneseq
    %v3838 = vshrl.u32 %v3837, 7
    %v3839 = vsub.s32 6, %v3838
    %v3840 = vrot.slane %v3811, %v3839
    %v4296 = vunpack.c.l.b16 %v3363
    %v4297 = vunpack.c.h.b16 %v3363
    %v4298 = vunpack.c.l.b16 %v3364
    %v4299 = vunpack.c.h.b16 %v3364
    %v4300 = vunpack.c.l.b16 %v3365
    %v4301 = vunpack.c.h.b16 %v3365
    %v4302 = vunpack.c.l.b16 %v3366
    %v4303 = vunpack.c.l.b16 %v3367
    %v4304 = vunpack.c.h.b16 %v3367
    %v4305 = vunpack.c.l.b16 %v3368
    %v4306 = vunpack.c.h.b16 %v3368
    %v4307 = vunpack.c.l.b16 %v3369
    %v4308 = vunpack.c.h.b16 %v3369
    %v4309 = vunpack.c.l.b16 %v3370
    %v4310 = vunpack.c.l.b16 %v3371
    %v4311 = vunpack.c.h.b16 %v3371
    %v4312 = vunpack.c.l.b16 %v3372
    %v4313 = vunpack.c.h.b16 %v3372
    %v4314 = vunpack.c.l.b16 %v3373
    %v4315 = vunpack.c.h.b16 %v3373
    %v4316 = vunpack.c.l.b16 %v3374
    %v4317 = vunpack.c.l.b16 %v3375
    %v4318 = vunpack.c.h.b16 %v3375
    %v4319 = vunpack.c.l.b16 %v3376
    %v4320 = vunpack.c.h.b16 %v3376
    %v4321 = vunpack.c.l.b16 %v3377
    %v4322 = vunpack.c.h.b16 %v3377
    %v4323 = vunpack.c.l.b16 %v3378
    %v4324 = vunpack.c.l.b16 %v3379
    %v4325 = vunpack.c.h.b16 %v3379
    %v4326 = vunpack.c.l.b16 %v3380
    %v4327 = vunpack.c.h.b16 %v3380
    %v4328 = vunpack.c.l.b16 %v3381
    %v4329 = vunpack.c.h.b16 %v3381
    %v4330 = vunpack.c.l.b16 %v3382
    %v4331 = vunpack.c.l.b16 %v3383
    %v4332 = vunpack.c.h.b16 %v3383
    %v4333 = vunpack.c.l.b16 %v3384
    %v4334 = vunpack.c.h.b16 %v3384
    %v4335 = vunpack.c.l.b16 %v3385
    %v4336 = vunpack.c.h.b16 %v3385
    %v4337 = vunpack.c.l.b16 %v3386
    %v4338 = vunpack.c.l.b16 %v3387
    %v4339 = vunpack.c.h.b16 %v3387
    %v4340 = vunpack.c.l.b16 %v3388
    %v4341 = vunpack.c.h.b16 %v3388
    %v4342 = vunpack.c.l.b16 %v3389
    %v4343 = vunpack.c.h.b16 %v3389
    %v4344 = vunpack.c.l.b16 %v3390
    %v4345 = vunpack.c.l.b16 %v3391
    %v4346 = vunpack.c.h.b16 %v3391
    %v4347 = vunpack.c.l.b16 %v3392
    %v4348 = vunpack.c.h.b16 %v3392
    %v4349 = vunpack.c.l.b16 %v3393
    %v4350 = vunpack.c.h.b16 %v3393
    %v4351 = vunpack.c.l.b16 %v3394
    %v4352 = vunpack.c.l.b16 %v3395
    %v4353 = vunpack.c.h.b16 %v3395
    %v4354 = vunpack.c.l.b16 %v3396
    %v4355 = vunpack.c.h.b16 %v3396
    %v4356 = vunpack.c.l.b16 %v3397
    %v4357 = vunpack.c.h.b16 %v3397
    %v4358 = vunpack.c.l.b16 %v3398
    %v4359 = vunpack.c.l.b16 %v3399
    %v4360 = vunpack.c.h.b16 %v3399
    %v4361 = vunpack.c.l.b16 %v3400
    %v4362 = vunpack.c.h.b16 %v3400
    %v4363 = vunpack.c.l.b16 %v3401
    %v4364 = vunpack.c.h.b16 %v3401
    %v4365 = vunpack.c.l.b16 %v3402
    %v4366 = vunpack.c.l.b16 %v3403
    %v4367 = vunpack.c.h.b16 %v3403
    %v4368 = vunpack.c.l.b16 %v3404
    %v4369 = vunpack.c.h.b16 %v3404
    %v4370 = vunpack.c.l.b16 %v3405
    %v4371 = vunpack.c.h.b16 %v3405
    %v4372 = vunpack.c.l.b16 %v3406
    %v4373 = vunpack.c.l.b16 %v3407
    %v4374 = vunpack.c.h.b16 %v3407
    %v4375 = vunpack.c.l.b16 %v3408
    %v4376 = vunpack.c.h.b16 %v3408
    %v4377 = vunpack.c.l.b16 %v3409
    %v4378 = vunpack.c.h.b16 %v3409
    %v4379 = vunpack.c.l.b16 %v3410
    %v4380 = vunpack.c.l.b16 %v3411
    %v4381 = vunpack.c.h.b16 %v3411
    %v4382 = vunpack.c.l.b16 %v3412
    %v4383 = vunpack.c.h.b16 %v3412
    %v4384 = vunpack.c.l.b16 %v3413
    %v4385 = vunpack.c.h.b16 %v3413
    %v4386 = vunpack.c.l.b16 %v3414
    %v4387 = vunpack.c.l.b16 %v3415
    %v4388 = vunpack.c.h.b16 %v3415
    %v4389 = vunpack.c.l.b16 %v3416
    %v4390 = vunpack.c.h.b16 %v3416
    %v4391 = vunpack.c.l.b16 %v3417
    %v4392 = vunpack.c.h.b16 %v3417
    %v4393 = vunpack.c.l.b16 %v3418
    %v4394 = vunpack.c.l.b16 %v3419
    %v4395 = vunpack.c.h.b16 %v3419
    %v4396 = vunpack.c.l.b16 %v3420
    %v4397 = vunpack.c.h.b16 %v3420
    %v4398 = vunpack.c.l.b16 %v3421
    %v4399 = vunpack.c.h.b16 %v3421
    %v4400 = vunpack.c.l.b16 %v3422
    %v4401 = vunpack.c.l.b16 %v3423
    %v4402 = vunpack.c.h.b16 %v3423
    %v4403 = vunpack.c.l.b16 %v3424
    %v4404 = vunpack.c.h.b16 %v3424
    %v4405 = vunpack.c.l.b16 %v3425
    %v4406 = vunpack.c.h.b16 %v3425
    %v4407 = vunpack.c.l.b16 %v3426
    %v4408 = vunpack.c.l.b16 %v3427
    %v4409 = vunpack.c.h.b16 %v3427
    %v4410 = vunpack.c.l.b16 %v3428
    %v4411 = vunpack.c.h.b16 %v3428
    %v4412 = vunpack.c.l.b16 %v3429
    %v4413 = vunpack.c.h.b16 %v3429
    %v4414 = vunpack.c.l.b16 %v3430
    %v4415 = vunpack.c.l.b16 %v3431
    %v4416 = vunpack.c.h.b16 %v3431
    %v4417 = vunpack.c.l.b16 %v3432
    %v4418 = vunpack.c.h.b16 %v3432
    %v4419 = vunpack.c.l.b16 %v3433
    %v4420 = vunpack.c.h.b16 %v3433
    %v4421 = vunpack.c.l.b16 %v3434
    %v4422 = vunpack.c.l.b16 %v3435
    %v4423 = vunpack.c.h.b16 %v3435
    %v4424 = vunpack.c.l.b16 %v3436
    %v4425 = vunpack.c.h.b16 %v3436
    %v4426 = vunpack.c.l.b16 %v3437
    %v4427 = vunpack.c.h.b16 %v3437
    %v4428 = vunpack.c.l.b16 %v3438
    %v4429 = vunpack.c.l.b16 %v3439
    %v4430 = vunpack.c.h.b16 %v3439
    %v4431 = vunpack.c.l.b16 %v3440
    %v4432 = vunpack.c.h.b16 %v3440
    %v4433 = vunpack.c.l.b16 %v3441
    %v4434 = vunpack.c.h.b16 %v3441
    %v4435 = vunpack.c.l.b16 %v3442
    %v4436 = vunpack.c.l.b16 %v3443
    %v4437 = vunpack.c.h.b16 %v3443
    %v4438 = vunpack.c.l.b16 %v3444
    %v4439 = vunpack.c.h.b16 %v3444
    %v4440 = vunpack.c.l.b16 %v3445
    %v4441 = vunpack.c.h.b16 %v3445
    %v4442 = vunpack.c.l.b16 %v3446
    %v4443 = vunpack.c.l.b16 %v3447
    %v4444 = vunpack.c.h.b16 %v3447
    %v4445 = vunpack.c.l.b16 %v3448
    %v4446 = vunpack.c.h.b16 %v3448
    %v4447 = vunpack.c.l.b16 %v3449
    %v4448 = vunpack.c.h.b16 %v3449
    %v4449 = vunpack.c.l.b16 %v3450
    %v4450 = vunpack.c.l.b16 %v3451
    %v4451 = vunpack.c.h.b16 %v3451
    %v4452 = vunpack.c.l.b16 %v3452
    %v4453 = vunpack.c.h.b16 %v3452
    %v4454 = vunpack.c.l.b16 %v3453
    %v4455 = vunpack.c.h.b16 %v3453
    %v4456 = vunpack.c.l.b16 %v3454
    %v4457 = vunpack.c.l.b16 %v3455
    %v4458 = vunpack.c.h.b16 %v3455
    %v4459 = vunpack.c.l.b16 %v3456
    %v4460 = vunpack.c.h.b16 %v3456
    %v4461 = vunpack.c.l.b16 %v3457
    %v4462 = vunpack.c.h.b16 %v3457
    %v4463 = vunpack.c.l.b16 %v3458
    %v4464 = vunpack.c.l.b16 %v3459
    %v4465 = vunpack.c.h.b16 %v3459
    %v4466 = vunpack.c.l.b16 %v3460
    %v4467 = vunpack.c.h.b16 %v3460
    %v4468 = vunpack.c.l.b16 %v3461
    %v4469 = vunpack.c.h.b16 %v3461
    %v4470 = vunpack.c.l.b16 %v3462
    %v4471 = vunpack.c.l.b16 %v3463
    %v4472 = vunpack.c.h.b16 %v3463
    %v4473 = vunpack.c.l.b16 %v3464
    %v4474 = vunpack.c.h.b16 %v3464
    %v4475 = vunpack.c.l.b16 %v3465
    %v4476 = vunpack.c.h.b16 %v3465
    %v4477 = vunpack.c.l.b16 %v3466
    %v4478 = vunpack.c.l.b16 %v3467
    %v4479 = vunpack.c.h.b16 %v3467
    %v4480 = vunpack.c.l.b16 %v3468
    %v4481 = vunpack.c.h.b16 %v3468
    %v4482 = vunpack.c.l.b16 %v3469
    %v4483 = vunpack.c.h.b16 %v3469
    %v4484 = vunpack.c.l.b16 %v3470
    %v4485 = vunpack.c.l.b16 %v3471
    %v4486 = vunpack.c.h.b16 %v3471
    %v4487 = vunpack.c.l.b16 %v3472
    %v4488 = vunpack.c.h.b16 %v3472
    %v4489 = vunpack.c.l.b16 %v3473
    %v4490 = vunpack.c.h.b16 %v3473
    %v4491 = vunpack.c.l.b16 %v3474
    %v4492 = vunpack.c.l.b16 %v3475
    %v4493 = vunpack.c.h.b16 %v3475
    %v4494 = vunpack.c.l.b16 %v3476
    %v4495 = vunpack.c.h.b16 %v3476
    %v4496 = vunpack.c.l.b16 %v3477
    %v4497 = vunpack.c.h.b16 %v3477
    %v4498 = vunpack.c.l.b16 %v3478
    %v4499 = vunpack.c.l.b16 %v3479
    %v4500 = vunpack.c.h.b16 %v3479
    %v4501 = vunpack.c.l.b16 %v3480
    %v4502 = vunpack.c.h.b16 %v3480
    %v4503 = vunpack.c.l.b16 %v3481
    %v4504 = vunpack.c.h.b16 %v3481
    %v4505 = vunpack.c.l.b16 %v3482
    %v4506 = vunpack.c.l.b16 %v3483
    %v4507 = vunpack.c.h.b16 %v3483
    %v4508 = vunpack.c.l.b16 %v3484
    %v4509 = vunpack.c.h.b16 %v3484
    %v4510 = vunpack.c.l.b16 %v3485
    %v4511 = vunpack.c.h.b16 %v3485
    %v4512 = vunpack.c.l.b16 %v3486
    %v4513 = vunpack.c.l.b16 %v3487
    %v4514 = vunpack.c.h.b16 %v3487
    %v4515 = vunpack.c.l.b16 %v3488
    %v4516 = vunpack.c.h.b16 %v3488
    %v4517 = vunpack.c.l.b16 %v3489
    %v4518 = vunpack.c.h.b16 %v3489
    %v4519 = vunpack.c.l.b16 %v3490
    %v4520 = vunpack.c.l.b16 %v3491
    %v4521 = vunpack.c.h.b16 %v3491
    %v4522 = vunpack.c.l.b16 %v3492
    %v4523 = vunpack.c.h.b16 %v3492
    %v4524 = vunpack.c.l.b16 %v3493
    %v4525 = vunpack.c.h.b16 %v3493
    %v4526 = vunpack.c.l.b16 %v3494
    %v4527 = vunpack.c.l.b16 %v3495
    %v4528 = vunpack.c.h.b16 %v3495
    %v4529 = vunpack.c.l.b16 %v3496
    %v4530 = vunpack.c.h.b16 %v3496
    %v4531 = vunpack.c.l.b16 %v3497
    %v4532 = vunpack.c.h.b16 %v3497
    %v4533 = vunpack.c.l.b16 %v3498
    %v4534 = vunpack.c.l.b16 %v3499
    %v4535 = vunpack.c.h.b16 %v3499
    %v4536 = vunpack.c.l.b16 %v3500
    %v4537 = vunpack.c.h.b16 %v3500
    %v4538 = vunpack.c.l.b16 %v3501
    %v4539 = vunpack.c.h.b16 %v3501
    %v4540 = vunpack.c.l.b16 %v3502
    %v4541 = vunpack.c.l.b16 %v3503
    %v4542 = vunpack.c.h.b16 %v3503
    %v4543 = vunpack.c.l.b16 %v3504
    %v4544 = vunpack.c.h.b16 %v3504
    %v4545 = vunpack.c.l.b16 %v3505
    %v4546 = vunpack.c.h.b16 %v3505
    %v4547 = vunpack.c.l.b16 %v3506
    %v4548 = vunpack.c.l.b16 %v3507
    %v4549 = vunpack.c.h.b16 %v3507
    %v4550 = vunpack.c.l.b16 %v3508
    %v4551 = vunpack.c.h.b16 %v3508
    %v4552 = vunpack.c.l.b16 %v3509
    %v4553 = vunpack.c.h.b16 %v3509
    %v4554 = vunpack.c.l.b16 %v3510
    %v4555 = vunpack.c.l.b16 %v3511
    %v4556 = vunpack.c.h.b16 %v3511
    %v4557 = vunpack.c.l.b16 %v3512
    %v4558 = vunpack.c.h.b16 %v3512
    %v4559 = vunpack.c.l.b16 %v3513
    %v4560 = vunpack.c.h.b16 %v3513
    %v4561 = vunpack.c.l.b16 %v3514
    %v4562 = vunpack.c.l.b16 %v3515
    %v4563 = vunpack.c.h.b16 %v3515
    %v4564 = vunpack.c.l.b16 %v3516
    %v4565 = vunpack.c.h.b16 %v3516
    %v4566 = vunpack.c.l.b16 %v3517
    %v4567 = vunpack.c.h.b16 %v3517
    %v4568 = vunpack.c.l.b16 %v3518
    %v4569 = vunpack.c.l.b16 %v3519
    %v4570 = vunpack.c.h.b16 %v3519
    %v4571 = vunpack.c.l.b16 %v3520
    %v4572 = vunpack.c.h.b16 %v3520
    %v4573 = vunpack.c.l.b16 %v3521
    %v4574 = vunpack.c.h.b16 %v3521
    %v4575 = vunpack.c.l.b16 %v3522
    %v4576 = vunpack.c.l.b16 %v3523
    %v4577 = vunpack.c.h.b16 %v3523
    %v4578 = vunpack.c.l.b16 %v3524
    %v4579 = vunpack.c.h.b16 %v3524
    %v4580 = vunpack.c.l.b16 %v3525
    %v4581 = vunpack.c.h.b16 %v3525
    %v4582 = vunpack.c.l.b16 %v3526
    %v4583 = vunpack.c.l.b16 %v3527
    %v4584 = vunpack.c.h.b16 %v3527
    %v4585 = vunpack.c.l.b16 %v3528
    %v4586 = vunpack.c.h.b16 %v3528
    %v4587 = vunpack.c.l.b16 %v3529
    %v4588 = vunpack.c.h.b16 %v3529
    %v4589 = vunpack.c.l.b16 %v3530
    %v4590 = vunpack.c.l.b16 %v3531
    %v4591 = vunpack.c.h.b16 %v3531
    %v4592 = vunpack.c.l.b16 %v3532
    %v4593 = vunpack.c.h.b16 %v3532
    %v4594 = vunpack.c.l.b16 %v3533
    %v4595 = vunpack.c.h.b16 %v3533
    %v4596 = vunpack.c.l.b16 %v3534
    %v4597 = vunpack.c.l.b16 %v3535
    %v4598 = vunpack.c.h.b16 %v3535
    %v4599 = vunpack.c.l.b16 %v3536
    %v4600 = vunpack.c.h.b16 %v3536
    %v4601 = vunpack.c.l.b16 %v3537
    %v4602 = vunpack.c.h.b16 %v3537
    %v4603 = vunpack.c.l.b16 %v3538
    %v4604 = vunpack.c.l.b16 %v3539
    %v4605 = vunpack.c.h.b16 %v3539
    %v4606 = vunpack.c.l.b16 %v3540
    %v4607 = vunpack.c.h.b16 %v3540
    %v4608 = vunpack.c.l.b16 %v3541
    %v4609 = vunpack.c.h.b16 %v3541
    %v4610 = vunpack.c.l.b16 %v3542
    %v4611 = vunpack.c.l.b16 %v3543
    %v4612 = vunpack.c.h.b16 %v3543
    %v4613 = vunpack.c.l.b16 %v3544
    %v4614 = vunpack.c.h.b16 %v3544
    %v4615 = vunpack.c.l.b16 %v3545
    %v4616 = vunpack.c.h.b16 %v3545
    %v4617 = vunpack.c.l.b16 %v3546
    %v4618 = vunpack.c.l.b16 %v3547
    %v4619 = vunpack.c.h.b16 %v3547
    %v4620 = vunpack.c.l.b16 %v3548
    %v4621 = vunpack.c.h.b16 %v3548
    %v4622 = vunpack.c.l.b16 %v3549
    %v4623 = vunpack.c.h.b16 %v3549
    %v4624 = vunpack.c.l.b16 %v3550
    %v4625 = vunpack.c.l.b16 %v3551
    %v4626 = vunpack.c.h.b16 %v3551
    %v4627 = vunpack.c.l.b16 %v3552
    %v4628 = vunpack.c.h.b16 %v3552
    %v4629 = vunpack.c.l.b16 %v3553
    %v4630 = vunpack.c.h.b16 %v3553
    %v4631 = vunpack.c.l.b16 %v3554
    %v4632 = vunpack.c.l.b16 %v3555
    %v4633 = vunpack.c.h.b16 %v3555
    %v4634 = vunpack.c.l.b16 %v3556
    %v4635 = vunpack.c.h.b16 %v3556
    %v4636 = vunpack.c.l.b16 %v3557
    %v4637 = vunpack.c.h.b16 %v3557
    %v4638 = vunpack.c.l.b16 %v3558
    %v4639 = vunpack.c.l.b16 %v3559
    %v4640 = vunpack.c.h.b16 %v3559
    %v4641 = vunpack.c.l.b16 %v3560
    %v4642 = vunpack.c.h.b16 %v3560
    %v4643 = vunpack.c.l.b16 %v3561
    %v4644 = vunpack.c.h.b16 %v3561
    %v4645 = vunpack.c.l.b16 %v3562
    %v4646 = vunpack.c.l.b16 %v3563
    %v4647 = vunpack.c.h.b16 %v3563
    %v4648 = vunpack.c.l.b16 %v3564
    %v4649 = vunpack.c.h.b16 %v3564
    %v4650 = vunpack.c.l.b16 %v3565
    %v4651 = vunpack.c.h.b16 %v3565
    %v4652 = vunpack.c.l.b16 %v3566
    %v4653 = vunpack.c.l.b16 %v3567
    %v4654 = vunpack.c.h.b16 %v3567
    %v4655 = vunpack.c.l.b16 %v3568
    %v4656 = vunpack.c.h.b16 %v3568
    %v4657 = vunpack.c.l.b16 %v3569
    %v4658 = vunpack.c.h.b16 %v3569
    %v4659 = vunpack.c.l.b16 %v3570
    %v4660 = vunpack.c.l.b16 %v3571
    %v4661 = vunpack.c.h.b16 %v3571
    %v4662 = vunpack.c.l.b16 %v3572
    %v4663 = vunpack.c.h.b16 %v3572
    %v4664 = vunpack.c.l.b16 %v3573
    %v4665 = vunpack.c.h.b16 %v3573
    %v4666 = vunpack.c.l.b16 %v3574
    %v4667 = vunpack.c.l.b16 %v3575
    %v4668 = vunpack.c.h.b16 %v3575
    %v4669 = vunpack.c.l.b16 %v3576
    %v4670 = vunpack.c.h.b16 %v3576
    %v4671 = vunpack.c.l.b16 %v3577
    %v4672 = vunpack.c.h.b16 %v3577
    %v4673 = vunpack.c.l.b16 %v3578
    %v4674 = vunpack.c.l.b16 %v3579
    %v4675 = vunpack.c.h.b16 %v3579
    %v4676 = vunpack.c.l.b16 %v3580
    %v4677 = vunpack.c.h.b16 %v3580
    %v4678 = vunpack.c.l.b16 %v3581
    %v4679 = vunpack.c.h.b16 %v3581
    %v4680 = vunpack.c.l.b16 %v3582
    %v4681 = vunpack.c.l.b16 %v3583
    %v4682 = vunpack.c.h.b16 %v3583
    %v4683 = vunpack.c.l.b16 %v3584
    %v4684 = vunpack.c.h.b16 %v3584
    %v4685 = vunpack.c.l.b16 %v3585
    %v4686 = vunpack.c.h.b16 %v3585
    %v4687 = vunpack.c.l.b16 %v3586
    %v4688 = vunpack.c.l.b16 %v3587
    %v4689 = vunpack.c.h.b16 %v3587
    %v4690 = vunpack.c.l.b16 %v3588
    %v4691 = vunpack.c.h.b16 %v3588
    %v4692 = vunpack.c.l.b16 %v3589
    %v4693 = vunpack.c.h.b16 %v3589
    %v4694 = vunpack.c.l.b16 %v3590
    %v4695 = vunpack.c.l.b16 %v3591
    %v4696 = vunpack.c.h.b16 %v3591
    %v4697 = vunpack.c.l.b16 %v3592
    %v4698 = vunpack.c.h.b16 %v3592
    %v4699 = vunpack.c.l.b16 %v3593
    %v4700 = vunpack.c.h.b16 %v3593
    %v4701 = vunpack.c.l.b16 %v3594
    %v4702 = vunpack.c.l.b16 %v3595
    %v4703 = vunpack.c.h.b16 %v3595
    %v4704 = vunpack.c.l.b16 %v3596
    %v4705 = vunpack.c.h.b16 %v3596
    %v4706 = vunpack.c.l.b16 %v3597
    %v4707 = vunpack.c.h.b16 %v3597
    %v4708 = vunpack.c.l.b16 %v3598
    %v4709 = vunpack.c.l.b16 %v3599
    %v4710 = vunpack.c.h.b16 %v3599
    %v4711 = vunpack.c.l.b16 %v3600
    %v4712 = vunpack.c.h.b16 %v3600
    %v4713 = vunpack.c.l.b16 %v3601
    %v4714 = vunpack.c.h.b16 %v3601
    %v4715 = vunpack.c.l.b16 %v3602
    %v4716 = vunpack.c.l.b16 %v3603
    %v4717 = vunpack.c.h.b16 %v3603
    %v4718 = vunpack.c.l.b16 %v3604
    %v4719 = vunpack.c.h.b16 %v3604
    %v4720 = vunpack.c.l.b16 %v3605
    %v4721 = vunpack.c.h.b16 %v3605
    %v4722 = vunpack.c.l.b16 %v3606
    %v4723 = vunpack.c.l.b16 %v3607
    %v4724 = vunpack.c.h.b16 %v3607
    %v4725 = vunpack.c.l.b16 %v3608
    %v4726 = vunpack.c.h.b16 %v3608
    %v4727 = vunpack.c.l.b16 %v3609
    %v4728 = vunpack.c.h.b16 %v3609
    %v4729 = vunpack.c.l.b16 %v3610
    %v4730 = vunpack.c.l.b16 %v3611
    %v4731 = vunpack.c.h.b16 %v3611
    %v4732 = vunpack.c.l.b16 %v3612
    %v4733 = vunpack.c.h.b16 %v3612
    %v4734 = vunpack.c.l.b16 %v3613
    %v4735 = vunpack.c.h.b16 %v3613
    %v4736 = vunpack.c.l.b16 %v3614
    %v4737 = vunpack.c.l.b16 %v3615
    %v4738 = vunpack.c.h.b16 %v3615
    %v4739 = vunpack.c.l.b16 %v3616
    %v4740 = vunpack.c.h.b16 %v3616
    %v4741 = vunpack.c.l.b16 %v3617
    %v4742 = vunpack.c.h.b16 %v3617
    %v4743 = vunpack.c.l.b16 %v3618
    %v4744 = vunpack.c.l.b16 %v3619
    %v4745 = vunpack.c.h.b16 %v3619
    %v4746 = vunpack.c.l.b16 %v3620
    %v4747 = vunpack.c.h.b16 %v3620
    %v4748 = vunpack.c.l.b16 %v3621
    %v4749 = vunpack.c.h.b16 %v3621
    %v4750 = vunpack.c.l.b16 %v3622
    %v4751 = vunpack.c.l.b16 %v3623
    %v4752 = vunpack.c.h.b16 %v3623
    %v4753 = vunpack.c.l.b16 %v3624
    %v4754 = vunpack.c.h.b16 %v3624
    %v4755 = vunpack.c.l.b16 %v3625
    %v4756 = vunpack.c.h.b16 %v3625
    %v4757 = vunpack.c.l.b16 %v3626
    %v4758 = vunpack.c.l.b16 %v3627
    %v4759 = vunpack.c.h.b16 %v3627
    %v4760 = vunpack.c.l.b16 %v3628
    %v4761 = vunpack.c.h.b16 %v3628
    %v4762 = vunpack.c.l.b16 %v3629
    %v4763 = vunpack.c.h.b16 %v3629
    %v4764 = vunpack.c.l.b16 %v3630
    %v4765 = vunpack.c.l.b16 %v3631
    %v4766 = vunpack.c.h.b16 %v3631
    %v4767 = vunpack.c.l.b16 %v3632
    %v4768 = vunpack.c.h.b16 %v3632
    %v4769 = vunpack.c.l.b16 %v3633
    %v4770 = vunpack.c.h.b16 %v3633
    %v4771 = vunpack.c.l.b16 %v3634
    %v4772 = vunpack.c.l.b16 %v3635
    %v4773 = vunpack.c.h.b16 %v3635
    %v4774 = vunpack.c.l.b16 %v3636
    %v4775 = vunpack.c.h.b16 %v3636
    %v4776 = vunpack.c.l.b16 %v3637
    %v4777 = vunpack.c.h.b16 %v3637
    %v4778 = vunpack.c.l.b16 %v3638
    %v4779 = vunpack.c.l.b16 %v3639
    %v4780 = vunpack.c.h.b16 %v3639
    %v4781 = vunpack.c.l.b16 %v3640
    %v4782 = vunpack.c.h.b16 %v3640
    %v4783 = vunpack.c.l.b16 %v3641
    %v4784 = vunpack.c.h.b16 %v3641
    %v4785 = vunpack.c.l.b16 %v3642
    %v4786 = vunpack.c.l.b16 %v3643
    %v4787 = vunpack.c.h.b16 %v3643
    %v4788 = vunpack.c.l.b16 %v3644
    %v4789 = vunpack.c.h.b16 %v3644
    %v4790 = vunpack.c.l.b16 %v3645
    %v4791 = vunpack.c.h.b16 %v3645
    %v4792 = vunpack.c.l.b16 %v3646
    %v4793 = vunpack.c.l.b16 %v3647
    %v4794 = vunpack.c.h.b16 %v3647
    %v4795 = vunpack.c.l.b16 %v3648
    %v4796 = vunpack.c.h.b16 %v3648
    %v4797 = vunpack.c.l.b16 %v3649
    %v4798 = vunpack.c.h.b16 %v3649
    %v4799 = vunpack.c.l.b16 %v3650
    %v4800 = vunpack.c.l.b16 %v3651
    %v4801 = vunpack.c.h.b16 %v3651
    %v4802 = vunpack.c.l.b16 %v3652
    %v4803 = vunpack.c.h.b16 %v3652
    %v4804 = vunpack.c.l.b16 %v3653
    %v4805 = vunpack.c.h.b16 %v3653
    %v4806 = vunpack.c.l.b16 %v3654
    %v4807 = vunpack.c.l.b16 %v3655
    %v4808 = vunpack.c.h.b16 %v3655
    %v4809 = vunpack.c.l.b16 %v3656
    %v4810 = vunpack.c.h.b16 %v3656
    %v4811 = vunpack.c.l.b16 %v3657
    %v4812 = vunpack.c.h.b16 %v3657
    %v4813 = vunpack.c.l.b16 %v3658
    %v4814 = vunpack.c.l.b16 %v3659
    %v4815 = vunpack.c.h.b16 %v3659
    %v4816 = vunpack.c.l.b16 %v3660
    %v4817 = vunpack.c.h.b16 %v3660
    %v4818 = vunpack.c.l.b16 %v3661
    %v4819 = vunpack.c.h.b16 %v3661
    %v4820 = vunpack.c.l.b16 %v3662
    %v4821 = vunpack.c.l.b16 %v3663
    %v4822 = vunpack.c.h.b16 %v3663
    %v4823 = vunpack.c.l.b16 %v3664
    %v4824 = vunpack.c.h.b16 %v3664
    %v4825 = vunpack.c.l.b16 %v3665
    %v4826 = vunpack.c.h.b16 %v3665
    %v4827 = vunpack.c.l.b16 %v3666
    %v4828 = vunpack.c.l.b16 %v3667
    %v4829 = vunpack.c.h.b16 %v3667
    %v4830 = vunpack.c.l.b16 %v3668
    %v4831 = vunpack.c.h.b16 %v3668
    %v4832 = vunpack.c.l.b16 %v3669
    %v4833 = vunpack.c.h.b16 %v3669
    %v4834 = vunpack.c.l.b16 %v3670
    %v4835 = vunpack.c.l.b16 %v3671
    %v4836 = vunpack.c.h.b16 %v3671
    %v4837 = vunpack.c.l.b16 %v3672
    %v4838 = vunpack.c.h.b16 %v3672
    %v4839 = vunpack.c.l.b16 %v3673
    %v4840 = vunpack.c.h.b16 %v3673
    %v4841 = vunpack.c.l.b16 %v3674
    %v4842 = vunpack.c.l.b16 %v3675
    %v4843 = vunpack.c.h.b16 %v3675
    %v4844 = vunpack.c.l.b16 %v3676
    %v4845 = vunpack.c.h.b16 %v3676
    %v4846 = vunpack.c.l.b16 %v3677
    %v4847 = vunpack.c.h.b16 %v3677
    %v4848 = vunpack.c.l.b16 %v3678
    %v4849 = vunpack.c.l.b16 %v3679
    %v4850 = vunpack.c.h.b16 %v3679
    %v4851 = vunpack.c.l.b16 %v3680
    %v4852 = vunpack.c.h.b16 %v3680
    %v4853 = vunpack.c.l.b16 %v3681
    %v4854 = vunpack.c.h.b16 %v3681
    %v4855 = vunpack.c.l.b16 %v3682
    %v4856 = vunpack.c.l.b16 %v3683
    %v4857 = vunpack.c.h.b16 %v3683
    %v4858 = vunpack.c.l.b16 %v3684
    %v4859 = vunpack.c.h.b16 %v3684
    %v4860 = vunpack.c.l.b16 %v3685
    %v4861 = vunpack.c.h.b16 %v3685
    %v4862 = vunpack.c.l.b16 %v3686
    %v4863 = vunpack.c.l.b16 %v3687
    %v4864 = vunpack.c.h.b16 %v3687
    %v4865 = vunpack.c.l.b16 %v3688
    %v4866 = vunpack.c.h.b16 %v3688
    %v4867 = vunpack.c.l.b16 %v3689
    %v4868 = vunpack.c.h.b16 %v3689
    %v4869 = vunpack.c.l.b16 %v3690
    %v4870 = vunpack.c.l.b16 %v3691
    %v4871 = vunpack.c.h.b16 %v3691
    %v4872 = vunpack.c.l.b16 %v3692
    %v4873 = vunpack.c.h.b16 %v3692
    %v4874 = vunpack.c.l.b16 %v3693
    %v4875 = vunpack.c.h.b16 %v3693
    %v4876 = vunpack.c.l.b16 %v3694
    %v4877 = vunpack.c.l.b16 %v3695
    %v4878 = vunpack.c.h.b16 %v3695
    %v4879 = vunpack.c.l.b16 %v3696
    %v4880 = vunpack.c.h.b16 %v3696
    %v4881 = vunpack.c.l.b16 %v3697
    %v4882 = vunpack.c.h.b16 %v3697
    %v4883 = vunpack.c.l.b16 %v3698
    %v4884 = vunpack.c.l.b16 %v3699
    %v4885 = vunpack.c.h.b16 %v3699
    %v4886 = vunpack.c.l.b16 %v3700
    %v4887 = vunpack.c.h.b16 %v3700
    %v4888 = vunpack.c.l.b16 %v3701
    %v4889 = vunpack.c.h.b16 %v3701
    %v4890 = vunpack.c.l.b16 %v3702
    %v4891 = vunpack.c.l.b16 %v3703
    %v4892 = vunpack.c.h.b16 %v3703
    %v4893 = vunpack.c.l.b16 %v3704
    %v4894 = vunpack.c.h.b16 %v3704
    %v4895 = vunpack.c.l.b16 %v3705
    %v4896 = vunpack.c.h.b16 %v3705
    %v4897 = vunpack.c.l.b16 %v3706
    %v4898 = vunpack.c.l.b16 %v3707
    %v4899 = vunpack.c.h.b16 %v3707
    %v4900 = vunpack.c.l.b16 %v3708
    %v4901 = vunpack.c.h.b16 %v3708
    %v4902 = vunpack.c.l.b16 %v3709
    %v4903 = vunpack.c.h.b16 %v3709
    %v4904 = vunpack.c.l.b16 %v3710
    %v4905 = vunpack.c.l.b16 %v3711
    %v4906 = vunpack.c.h.b16 %v3711
    %v4907 = vunpack.c.l.b16 %v3712
    %v4908 = vunpack.c.h.b16 %v3712
    %v4909 = vunpack.c.l.b16 %v3713
    %v4910 = vunpack.c.h.b16 %v3713
    %v4911 = vunpack.c.l.b16 %v3714
    %v4912 = vunpack.c.l.b16 %v3715
    %v4913 = vunpack.c.h.b16 %v3715
    %v4914 = vunpack.c.l.b16 %v3716
    %v4915 = vunpack.c.h.b16 %v3716
    %v4916 = vunpack.c.l.b16 %v3717
    %v4917 = vunpack.c.h.b16 %v3717
    %v4918 = vunpack.c.l.b16 %v3718
    %v4919 = vunpack.c.l.b16 %v3719
    %v4920 = vunpack.c.h.b16 %v3719
    %v4921 = vunpack.c.l.b16 %v3720
    %v4922 = vunpack.c.h.b16 %v3720
    %v4923 = vunpack.c.l.b16 %v3721
    %v4924 = vunpack.c.h.b16 %v3721
    %v4925 = vunpack.c.l.b16 %v3722
    %v4926 = vunpack.c.l.b16 %v3723
    %v4927 = vunpack.c.h.b16 %v3723
    %v4928 = vunpack.c.l.b16 %v3724
    %v4929 = vunpack.c.h.b16 %v3724
    %v4930 = vunpack.c.l.b16 %v3725
    %v4931 = vunpack.c.h.b16 %v3725
    %v4932 = vunpack.c.l.b16 %v3726
    %v4933 = vunpack.c.l.b16 %v3727
    %v4934 = vunpack.c.h.b16 %v3727
    %v4935 = vunpack.c.l.b16 %v3728
    %v4936 = vunpack.c.h.b16 %v3728
    %v4937 = vunpack.c.l.b16 %v3729
    %v4938 = vunpack.c.h.b16 %v3729
    %v4939 = vunpack.c.l.b16 %v3730
    %v4940 = vunpack.c.l.b16 %v3731
    %v4941 = vunpack.c.h.b16 %v3731
    %v4942 = vunpack.c.l.b16 %v3732
    %v4943 = vunpack.c.h.b16 %v3732
    %v4944 = vunpack.c.l.b16 %v3733
    %v4945 = vunpack.c.h.b16 %v3733
    %v4946 = vunpack.c.l.b16 %v3734
    %v4947 = vunpack.c.l.b16 %v3735
    %v4948 = vunpack.c.h.b16 %v3735
    %v4949 = vunpack.c.l.b16 %v3736
    %v4950 = vunpack.c.h.b16 %v3736
    %v4951 = vunpack.c.l.b16 %v3737
    %v4952 = vunpack.c.h.b16 %v3737
    %v4953 = vunpack.c.l.b16 %v3738
    %v4954 = vunpack.c.l.b16 %v3739
    %v4955 = vunpack.c.h.b16 %v3739
    %v4956 = vunpack.c.l.b16 %v3740
    %v4957 = vunpack.c.h.b16 %v3740
    %v4958 = vunpack.c.l.b16 %v3741
    %v4959 = vunpack.c.h.b16 %v3741
    %v4960 = vunpack.c.l.b16 %v3742
    %v4961 = vunpack.c.l.b16 %v3743
    %v4962 = vunpack.c.h.b16 %v3743
    %v4963 = vunpack.c.l.b16 %v3744
    %v4964 = vunpack.c.h.b16 %v3744
    %v4965 = vunpack.c.l.b16 %v3745
    %v4966 = vunpack.c.h.b16 %v3745
    %v4967 = vunpack.c.l.b16 %v3746
    %v4968 = vunpack.c.l.b16 %v3747
    %v4969 = vunpack.c.h.b16 %v3747
    %v4970 = vunpack.c.l.b16 %v3748
    %v4971 = vunpack.c.h.b16 %v3748
    %v4972 = vunpack.c.l.b16 %v3749
    %v4973 = vunpack.c.h.b16 %v3749
    %v4974 = vunpack.c.l.b16 %v3750
    %v4975 = vunpack.c.l.b16 %v3751
    %v4976 = vunpack.c.h.b16 %v3751
    %v4977 = vunpack.c.l.b16 %v3752
    %v4978 = vunpack.c.h.b16 %v3752
    %v4979 = vunpack.c.l.b16 %v3753
    %v4980 = vunpack.c.h.b16 %v3753
    %v4981 = vunpack.c.l.b16 %v3754
    %v4982 = vunpack.c.l.b16 %v3755
    %v4983 = vunpack.c.h.b16 %v3755
    %v4984 = vunpack.c.l.b16 %v3756
    %v4985 = vunpack.c.h.b16 %v3756
    %v4986 = vunpack.c.l.b16 %v3757
    %v4987 = vunpack.c.h.b16 %v3757
    %v4988 = vunpack.c.l.b16 %v3758
    %v4989 = vunpack.c.l.b16 %v3759
    %v4990 = vunpack.c.h.b16 %v3759
    %v4991 = vunpack.c.l.b16 %v3760
    %v4992 = vunpack.c.h.b16 %v3760
    %v4993 = vunpack.c.l.b16 %v3761
    %v4994 = vunpack.c.h.b16 %v3761
    %v4995 = vunpack.c.l.b16 %v3762
    %v4996 = vunpack.c.l.b16 %v3763
    %v4997 = vunpack.c.h.b16 %v3763
    %v4998 = vunpack.c.l.b16 %v3764
    %v4999 = vunpack.c.h.b16 %v3764
    %v5000 = vunpack.c.l.b16 %v3765
    %v5001 = vunpack.c.h.b16 %v3765
    %v5002 = vunpack.c.l.b16 %v3766
    %v5003 = vunpack.c.l.b16 %v3767
    %v5004 = vunpack.c.h.b16 %v3767
    %v5005 = vunpack.c.l.b16 %v3768
    %v5006 = vunpack.c.h.b16 %v3768
    %v5007 = vunpack.c.l.b16 %v3769
    %v5008 = vunpack.c.h.b16 %v3769
    %v5009 = vunpack.c.l.b16 %v3770
    %v5010 = vunpack.c.l.b16 %v3771
    %v5011 = vunpack.c.h.b16 %v3771
    %v5012 = vunpack.c.l.b16 %v3772
    %v5013 = vunpack.c.h.b16 %v3772
    %v5014 = vunpack.c.l.b16 %v3773
    %v5015 = vunpack.c.h.b16 %v3773
    %v5016 = vunpack.c.l.b16 %v3774
    %v5017 = vunpack.c.l.b16 %v3775
    %v5018 = vunpack.c.h.b16 %v3775
    %v5019 = vunpack.c.l.b16 %v3776
    %v5020 = vunpack.c.h.b16 %v3776
    %v5021 = vunpack.c.l.b16 %v3777
    %v5022 = vunpack.c.h.b16 %v3777
    %v5023 = vunpack.c.l.b16 %v3778
    %v5024 = vunpack.c.l.b16 %v3779
    %v5025 = vunpack.c.h.b16 %v3779
    %v5026 = vunpack.c.l.b16 %v3780
    %v5027 = vunpack.c.h.b16 %v3780
    %v5028 = vunpack.c.l.b16 %v3781
    %v5029 = vunpack.c.h.b16 %v3781
    %v5030 = vunpack.c.l.b16 %v3782
    %v5031 = vunpack.c.l.b16 %v3783
    %v5032 = vunpack.c.h.b16 %v3783
    %v5033 = vunpack.c.l.b16 %v3784
    %v5034 = vunpack.c.h.b16 %v3784
    %v5035 = vunpack.c.l.b16 %v3785
    %v5036 = vunpack.c.h.b16 %v3785
    %v5037 = vunpack.c.l.b16 %v3786
    %v5038 = vunpack.c.l.b16 %v3787
    %v5039 = vunpack.c.h.b16 %v3787
    %v5040 = vunpack.c.l.b16 %v3788
    %v5041 = vunpack.c.h.b16 %v3788
    %v5042 = vunpack.c.l.b16 %v3789
    %v5043 = vunpack.c.h.b16 %v3789
    %v5044 = vunpack.c.l.b16 %v3790
    %v5045 = vunpack.c.l.b16 %v3791
    %v5046 = vunpack.c.h.b16 %v3791
    %v5047 = vunpack.c.l.b16 %v3792
    %v5048 = vunpack.c.h.b16 %v3792
    %v5049 = vunpack.c.l.b16 %v3793
    %v5050 = vunpack.c.h.b16 %v3793
    %v5051 = vunpack.c.l.b16 %v3794
    %v5052 = vunpack.c.l.b16 %v3795
    %v5053 = vunpack.c.h.b16 %v3795
    %v5054 = vunpack.c.l.b16 %v3796
    %v5055 = vunpack.c.h.b16 %v3796
    %v5056 = vunpack.c.l.b16 %v3797
    %v5057 = vunpack.c.h.b16 %v3797
    %v5058 = vunpack.c.l.b16 %v3798
    %v5059 = vunpack.c.l.b16 %v3799
    %v5060 = vunpack.c.h.b16 %v3799
    %v5061 = vunpack.c.l.b16 %v3800
    %v5062 = vunpack.c.h.b16 %v3800
    %v5063 = vunpack.c.l.b16 %v3801
    %v5064 = vunpack.c.h.b16 %v3801
    %v5065 = vunpack.c.l.b16 %v3802
    %v5066 = vunpack.c.l.b16 %v3803
    %v5067 = vunpack.c.h.b16 %v3803
    %v5068 = vunpack.c.l.b16 %v3804
    %v5069 = vunpack.c.h.b16 %v3804
    %v5070 = vunpack.c.l.b16 %v3805
    %v5071 = vunpack.c.h.b16 %v3805
    %v5072 = vunpack.c.l.b16 %v3806
    %v5073 = vunpack.c.l.b16 %v3807
    %v5074 = vunpack.c.h.b16 %v3807
    %v5075 = vunpack.c.l.b16 %v3808
    %v5076 = vunpack.c.h.b16 %v3808
    %v5077 = vunpack.c.l.b16 %v3809
    %v5078 = vunpack.c.h.b16 %v3809
    %v5079 = vunpack.c.l.b16 %v3810
    %v5080 = vpack.c.b16 %v4303, %v4296
    %v5081 = vpack.c.b16 %v4304, %v4297
    %v5082 = vpack.c.b16 %v4305, %v4298
    %v5083 = vpack.c.b16 %v4306, %v4299
    %v5084 = vpack.c.b16 %v4307, %v4300
    %v5085 = vpack.c.b16 %v4308, %v4301
    %v5086 = vpack.c.b16 %v4309, %v4302
    %v5087 = vpack.c.b16 %v4317, %v4310
    %v5088 = vpack.c.b16 %v4318, %v4311
    %v5089 = vpack.c.b16 %v4319, %v4312
    %v5090 = vpack.c.b16 %v4320, %v4313
    %v5091 = vpack.c.b16 %v4321, %v4314
    %v5092 = vpack.c.b16 %v4322, %v4315
    %v5093 = vpack.c.b16 %v4323, %v4316
    %v5094 = vpack.c.b16 %v4331, %v4324
    %v5095 = vpack.c.b16 %v4332, %v4325
    %v5096 = vpack.c.b16 %v4333, %v4326
    %v5097 = vpack.c.b16 %v4334, %v4327
    %v5098 = vpack.c.b16 %v4335, %v4328
    %v5099 = vpack.c.b16 %v4336, %v4329
    %v5100 = vpack.c.b16 %v4337, %v4330
    %v5101 = vpack.c.b16 %v4345, %v4338
    %v5102 = vpack.c.b16 %v4346, %v4339
    %v5103 = vpack.c.b16 %v4347, %v4340
    %v5104 = vpack.c.b16 %v4348, %v4341
    %v5105 = vpack.c.b16 %v4349, %v4342
    %v5106 = vpack.c.b16 %v4350, %v4343
    %v5107 = vpack.c.b16 %v4351, %v4344
    %v5108 = vpack.c.b16 %v4359, %v4352
    %v5109 = vpack.c.b16 %v4360, %v4353
    %v5110 = vpack.c.b16 %v4361, %v4354
    %v5111 = vpack.c.b16 %v4362, %v4355
    %v5112 = vpack.c.b16 %v4363, %v4356
    %v5113 = vpack.c.b16 %v4364, %v4357
    %v5114 = vpack.c.b16 %v4365, %v4358
    %v5115 = vpack.c.b16 %v4373, %v4366
    %v5116 = vpack.c.b16 %v4374, %v4367
    %v5117 = vpack.c.b16 %v4375, %v4368
    %v5118 = vpack.c.b16 %v4376, %v4369
    %v5119 = vpack.c.b16 %v4377, %v4370
    %v5120 = vpack.c.b16 %v4378, %v4371
    %v5121 = vpack.c.b16 %v4379, %v4372
    %v5122 = vpack.c.b16 %v4387, %v4380
    %v5123 = vpack.c.b16 %v4388, %v4381
    %v5124 = vpack.c.b16 %v4389, %v4382
    %v5125 = vpack.c.b16 %v4390, %v4383
    %v5126 = vpack.c.b16 %v4391, %v4384
    %v5127 = vpack.c.b16 %v4392, %v4385
    %v5128 = vpack.c.b16 %v4393, %v4386
    %v5129 = vpack.c.b16 %v4401, %v4394
    %v5130 = vpack.c.b16 %v4402, %v4395
    %v5131 = vpack.c.b16 %v4403, %v4396
    %v5132 = vpack.c.b16 %v4404, %v4397
    %v5133 = vpack.c.b16 %v4405, %v4398
    %v5134 = vpack.c.b16 %v4406, %v4399
    %v5135 = vpack.c.b16 %v4407, %v4400
    %v5136 = vpack.c.b16 %v4415, %v4408
    %v5137 = vpack.c.b16 %v4416, %v4409
    %v5138 = vpack.c.b16 %v4417, %v4410
    %v5139 = vpack.c.b16 %v4418, %v4411
    %v5140 = vpack.c.b16 %v4419, %v4412
    %v5141 = vpack.c.b16 %v4420, %v4413
    %v5142 = vpack.c.b16 %v4421, %v4414
    %v5143 = vpack.c.b16 %v4429, %v4422
    %v5144 = vpack.c.b16 %v4430, %v4423
    %v5145 = vpack.c.b16 %v4431, %v4424
    %v5146 = vpack.c.b16 %v4432, %v4425
    %v5147 = vpack.c.b16 %v4433, %v4426
    %v5148 = vpack.c.b16 %v4434, %v4427
    %v5149 = vpack.c.b16 %v4435, %v4428
    %v5150 = vpack.c.b16 %v4443, %v4436
    %v5151 = vpack.c.b16 %v4444, %v4437
    %v5152 = vpack.c.b16 %v4445, %v4438
    %v5153 = vpack.c.b16 %v4446, %v4439
    %v5154 = vpack.c.b16 %v4447, %v4440
    %v5155 = vpack.c.b16 %v4448, %v4441
    %v5156 = vpack.c.b16 %v4449, %v4442
    %v5157 = vpack.c.b16 %v4457, %v4450
    %v5158 = vpack.c.b16 %v4458, %v4451
    %v5159 = vpack.c.b16 %v4459, %v4452
    %v5160 = vpack.c.b16 %v4460, %v4453
    %v5161 = vpack.c.b16 %v4461, %v4454
    %v5162 = vpack.c.b16 %v4462, %v4455
    %v5163 = vpack.c.b16 %v4463, %v4456
    %v5164 = vpack.c.b16 %v4471, %v4464
    %v5165 = vpack.c.b16 %v4472, %v4465
    %v5166 = vpack.c.b16 %v4473, %v4466
    %v5167 = vpack.c.b16 %v4474, %v4467
    %v5168 = vpack.c.b16 %v4475, %v4468
    %v5169 = vpack.c.b16 %v4476, %v4469
    %v5170 = vpack.c.b16 %v4477, %v4470
    %v5171 = vpack.c.b16 %v4485, %v4478
    %v5172 = vpack.c.b16 %v4486, %v4479
    %v5173 = vpack.c.b16 %v4487, %v4480
    %v5174 = vpack.c.b16 %v4488, %v4481
    %v5175 = vpack.c.b16 %v4489, %v4482
    %v5176 = vpack.c.b16 %v4490, %v4483
    %v5177 = vpack.c.b16 %v4491, %v4484
    %v5178 = vpack.c.b16 %v4499, %v4492
    %v5179 = vpack.c.b16 %v4500, %v4493
    %v5180 = vpack.c.b16 %v4501, %v4494
    %v5181 = vpack.c.b16 %v4502, %v4495
    %v5182 = vpack.c.b16 %v4503, %v4496
    %v5183 = vpack.c.b16 %v4504, %v4497
    %v5184 = vpack.c.b16 %v4505, %v4498
    %v5185 = vpack.c.b16 %v4513, %v4506
    %v5186 = vpack.c.b16 %v4514, %v4507
    %v5187 = vpack.c.b16 %v4515, %v4508
    %v5188 = vpack.c.b16 %v4516, %v4509
    %v5189 = vpack.c.b16 %v4517, %v4510
    %v5190 = vpack.c.b16 %v4518, %v4511
    %v5191 = vpack.c.b16 %v4519, %v4512
    %v5192 = vpack.c.b16 %v4527, %v4520
    %v5193 = vpack.c.b16 %v4528, %v4521
    %v5194 = vpack.c.b16 %v4529, %v4522
    %v5195 = vpack.c.b16 %v4530, %v4523
    %v5196 = vpack.c.b16 %v4531, %v4524
    %v5197 = vpack.c.b16 %v4532, %v4525
    %v5198 = vpack.c.b16 %v4533, %v4526
    %v5199 = vpack.c.b16 %v4541, %v4534
    %v5200 = vpack.c.b16 %v4542, %v4535
    %v5201 = vpack.c.b16 %v4543, %v4536
    %v5202 = vpack.c.b16 %v4544, %v4537
    %v5203 = vpack.c.b16 %v4545, %v4538
    %v5204 = vpack.c.b16 %v4546, %v4539
    %v5205 = vpack.c.b16 %v4547, %v4540
    %v5206 = vpack.c.b16 %v4555, %v4548
    %v5207 = vpack.c.b16 %v4556, %v4549
    %v5208 = vpack.c.b16 %v4557, %v4550
    %v5209 = vpack.c.b16 %v4558, %v4551
    %v5210 = vpack.c.b16 %v4559, %v4552
    %v5211 = vpack.c.b16 %v4560, %v4553
    %v5212 = vpack.c.b16 %v4561, %v4554
    %v5213 = vpack.c.b16 %v4569, %v4562
    %v5214 = vpack.c.b16 %v4570, %v4563
    %v5215 = vpack.c.b16 %v4571, %v4564
    %v5216 = vpack.c.b16 %v4572, %v4565
    %v5217 = vpack.c.b16 %v4573, %v4566
    %v5218 = vpack.c.b16 %v4574, %v4567
    %v5219 = vpack.c.b16 %v4575, %v4568
    %v5220 = vpack.c.b16 %v4583, %v4576
    %v5221 = vpack.c.b16 %v4584, %v4577
    %v5222 = vpack.c.b16 %v4585, %v4578
    %v5223 = vpack.c.b16 %v4586, %v4579
    %v5224 = vpack.c.b16 %v4587, %v4580
    %v5225 = vpack.c.b16 %v4588, %v4581
    %v5226 = vpack.c.b16 %v4589, %v4582
    %v5227 = vpack.c.b16 %v4597, %v4590
    %v5228 = vpack.c.b16 %v4598, %v4591
    %v5229 = vpack.c.b16 %v4599, %v4592
    %v5230 = vpack.c.b16 %v4600, %v4593
    %v5231 = vpack.c.b16 %v4601, %v4594
    %v5232 = vpack.c.b16 %v4602, %v4595
    %v5233 = vpack.c.b16 %v4603, %v4596
    %v5234 = vpack.c.b16 %v4611, %v4604
    %v5235 = vpack.c.b16 %v4612, %v4605
    %v5236 = vpack.c.b16 %v4613, %v4606
    %v5237 = vpack.c.b16 %v4614, %v4607
    %v5238 = vpack.c.b16 %v4615, %v4608
    %v5239 = vpack.c.b16 %v4616, %v4609
    %v5240 = vpack.c.b16 %v4617, %v4610
    %v5241 = vpack.c.b16 %v4625, %v4618
    %v5242 = vpack.c.b16 %v4626, %v4619
    %v5243 = vpack.c.b16 %v4627, %v4620
    %v5244 = vpack.c.b16 %v4628, %v4621
    %v5245 = vpack.c.b16 %v4629, %v4622
    %v5246 = vpack.c.b16 %v4630, %v4623
    %v5247 = vpack.c.b16 %v4631, %v4624
    %v5248 = vpack.c.b16 %v4639, %v4632
    %v5249 = vpack.c.b16 %v4640, %v4633
    %v5250 = vpack.c.b16 %v4641, %v4634
    %v5251 = vpack.c.b16 %v4642, %v4635
    %v5252 = vpack.c.b16 %v4643, %v4636
    %v5253 = vpack.c.b16 %v4644, %v4637
    %v5254 = vpack.c.b16 %v4645, %v4638
    %v5255 = vpack.c.b16 %v4653, %v4646
    %v5256 = vpack.c.b16 %v4654, %v4647
    %v5257 = vpack.c.b16 %v4655, %v4648
    %v5258 = vpack.c.b16 %v4656, %v4649
    %v5259 = vpack.c.b16 %v4657, %v4650
    %v5260 = vpack.c.b16 %v4658, %v4651
    %v5261 = vpack.c.b16 %v4659, %v4652
    %v5262 = vpack.c.b16 %v4667, %v4660
    %v5263 = vpack.c.b16 %v4668, %v4661
    %v5264 = vpack.c.b16 %v4669, %v4662
    %v5265 = vpack.c.b16 %v4670, %v4663
    %v5266 = vpack.c.b16 %v4671, %v4664
    %v5267 = vpack.c.b16 %v4672, %v4665
    %v5268 = vpack.c.b16 %v4673, %v4666
    %v5269 = vpack.c.b16 %v4681, %v4674
    %v5270 = vpack.c.b16 %v4682, %v4675
    %v5271 = vpack.c.b16 %v4683, %v4676
    %v5272 = vpack.c.b16 %v4684, %v4677
    %v5273 = vpack.c.b16 %v4685, %v4678
    %v5274 = vpack.c.b16 %v4686, %v4679
    %v5275 = vpack.c.b16 %v4687, %v4680
    %v5276 = vpack.c.b16 %v4695, %v4688
    %v5277 = vpack.c.b16 %v4696, %v4689
    %v5278 = vpack.c.b16 %v4697, %v4690
    %v5279 = vpack.c.b16 %v4698, %v4691
    %v5280 = vpack.c.b16 %v4699, %v4692
    %v5281 = vpack.c.b16 %v4700, %v4693
    %v5282 = vpack.c.b16 %v4701, %v4694
    %v5283 = vpack.c.b16 %v4709, %v4702
    %v5284 = vpack.c.b16 %v4710, %v4703
    %v5285 = vpack.c.b16 %v4711, %v4704
    %v5286 = vpack.c.b16 %v4712, %v4705
    %v5287 = vpack.c.b16 %v4713, %v4706
    %v5288 = vpack.c.b16 %v4714, %v4707
    %v5289 = vpack.c.b16 %v4715, %v4708
    %v5290 = vpack.c.b16 %v4723, %v4716
    %v5291 = vpack.c.b16 %v4724, %v4717
    %v5292 = vpack.c.b16 %v4725, %v4718
    %v5293 = vpack.c.b16 %v4726, %v4719
    %v5294 = vpack.c.b16 %v4727, %v4720
    %v5295 = vpack.c.b16 %v4728, %v4721
    %v5296 = vpack.c.b16 %v4729, %v4722
    %v5297 = vpack.c.b16 %v4737, %v4730
    %v5298 = vpack.c.b16 %v4738, %v4731
    %v5299 = vpack.c.b16 %v4739, %v4732
    %v5300 = vpack.c.b16 %v4740, %v4733
    %v5301 = vpack.c.b16 %v4741, %v4734
    %v5302 = vpack.c.b16 %v4742, %v4735
    %v5303 = vpack.c.b16 %v4743, %v4736
    %v5304 = vpack.c.b16 %v4751, %v4744
    %v5305 = vpack.c.b16 %v4752, %v4745
    %v5306 = vpack.c.b16 %v4753, %v4746
    %v5307 = vpack.c.b16 %v4754, %v4747
    %v5308 = vpack.c.b16 %v4755, %v4748
    %v5309 = vpack.c.b16 %v4756, %v4749
    %v5310 = vpack.c.b16 %v4757, %v4750
    %v5311 = vpack.c.b16 %v4765, %v4758
    %v5312 = vpack.c.b16 %v4766, %v4759
    %v5313 = vpack.c.b16 %v4767, %v4760
    %v5314 = vpack.c.b16 %v4768, %v4761
    %v5315 = vpack.c.b16 %v4769, %v4762
    %v5316 = vpack.c.b16 %v4770, %v4763
    %v5317 = vpack.c.b16 %v4771, %v4764
    %v5318 = vpack.c.b16 %v4779, %v4772
    %v5319 = vpack.c.b16 %v4780, %v4773
    %v5320 = vpack.c.b16 %v4781, %v4774
    %v5321 = vpack.c.b16 %v4782, %v4775
    %v5322 = vpack.c.b16 %v4783, %v4776
    %v5323 = vpack.c.b16 %v4784, %v4777
    %v5324 = vpack.c.b16 %v4785, %v4778
    %v5325 = vpack.c.b16 %v4793, %v4786
    %v5326 = vpack.c.b16 %v4794, %v4787
    %v5327 = vpack.c.b16 %v4795, %v4788
    %v5328 = vpack.c.b16 %v4796, %v4789
    %v5329 = vpack.c.b16 %v4797, %v4790
    %v5330 = vpack.c.b16 %v4798, %v4791
    %v5331 = vpack.c.b16 %v4799, %v4792
    %v5332 = vpack.c.b16 %v4807, %v4800
    %v5333 = vpack.c.b16 %v4808, %v4801
    %v5334 = vpack.c.b16 %v4809, %v4802
    %v5335 = vpack.c.b16 %v4810, %v4803
    %v5336 = vpack.c.b16 %v4811, %v4804
    %v5337 = vpack.c.b16 %v4812, %v4805
    %v5338 = vpack.c.b16 %v4813, %v4806
    %v5339 = vpack.c.b16 %v4821, %v4814
    %v5340 = vpack.c.b16 %v4822, %v4815
    %v5341 = vpack.c.b16 %v4823, %v4816
    %v5342 = vpack.c.b16 %v4824, %v4817
    %v5343 = vpack.c.b16 %v4825, %v4818
    %v5344 = vpack.c.b16 %v4826, %v4819
    %v5345 = vpack.c.b16 %v4827, %v4820
    %v5346 = vpack.c.b16 %v4835, %v4828
    %v5347 = vpack.c.b16 %v4836, %v4829
    %v5348 = vpack.c.b16 %v4837, %v4830
    %v5349 = vpack.c.b16 %v4838, %v4831
    %v5350 = vpack.c.b16 %v4839, %v4832
    %v5351 = vpack.c.b16 %v4840, %v4833
    %v5352 = vpack.c.b16 %v4841, %v4834
    %v5353 = vpack.c.b16 %v4849, %v4842
    %v5354 = vpack.c.b16 %v4850, %v4843
    %v5355 = vpack.c.b16 %v4851, %v4844
    %v5356 = vpack.c.b16 %v4852, %v4845
    %v5357 = vpack.c.b16 %v4853, %v4846
    %v5358 = vpack.c.b16 %v4854, %v4847
    %v5359 = vpack.c.b16 %v4855, %v4848
    %v5360 = vpack.c.b16 %v4863, %v4856
    %v5361 = vpack.c.b16 %v4864, %v4857
    %v5362 = vpack.c.b16 %v4865, %v4858
    %v5363 = vpack.c.b16 %v4866, %v4859
    %v5364 = vpack.c.b16 %v4867, %v4860
    %v5365 = vpack.c.b16 %v4868, %v4861
    %v5366 = vpack.c.b16 %v4869, %v4862
    %v5367 = vpack.c.b16 %v4877, %v4870
    %v5368 = vpack.c.b16 %v4878, %v4871
    %v5369 = vpack.c.b16 %v4879, %v4872
    %v5370 = vpack.c.b16 %v4880, %v4873
    %v5371 = vpack.c.b16 %v4881, %v4874
    %v5372 = vpack.c.b16 %v4882, %v4875
    %v5373 = vpack.c.b16 %v4883, %v4876
    %v5374 = vpack.c.b16 %v4891, %v4884
    %v5375 = vpack.c.b16 %v4892, %v4885
    %v5376 = vpack.c.b16 %v4893, %v4886
    %v5377 = vpack.c.b16 %v4894, %v4887
    %v5378 = vpack.c.b16 %v4895, %v4888
    %v5379 = vpack.c.b16 %v4896, %v4889
    %v5380 = vpack.c.b16 %v4897, %v4890
    %v5381 = vpack.c.b16 %v4905, %v4898
    %v5382 = vpack.c.b16 %v4906, %v4899
    %v5383 = vpack.c.b16 %v4907, %v4900
    %v5384 = vpack.c.b16 %v4908, %v4901
    %v5385 = vpack.c.b16 %v4909, %v4902
    %v5386 = vpack.c.b16 %v4910, %v4903
    %v5387 = vpack.c.b16 %v4911, %v4904
    %v5388 = vpack.c.b16 %v4919, %v4912
    %v5389 = vpack.c.b16 %v4920, %v4913
    %v5390 = vpack.c.b16 %v4921, %v4914
    %v5391 = vpack.c.b16 %v4922, %v4915
    %v5392 = vpack.c.b16 %v4923, %v4916
    %v5393 = vpack.c.b16 %v4924, %v4917
    %v5394 = vpack.c.b16 %v4925, %v4918
    %v5395 = vpack.c.b16 %v4933, %v4926
    %v5396 = vpack.c.b16 %v4934, %v4927
    %v5397 = vpack.c.b16 %v4935, %v4928
    %v5398 = vpack.c.b16 %v4936, %v4929
    %v5399 = vpack.c.b16 %v4937, %v4930
    %v5400 = vpack.c.b16 %v4938, %v4931
    %v5401 = vpack.c.b16 %v4939, %v4932
    %v5402 = vpack.c.b16 %v4947, %v4940
    %v5403 = vpack.c.b16 %v4948, %v4941
    %v5404 = vpack.c.b16 %v4949, %v4942
    %v5405 = vpack.c.b16 %v4950, %v4943
    %v5406 = vpack.c.b16 %v4951, %v4944
    %v5407 = vpack.c.b16 %v4952, %v4945
    %v5408 = vpack.c.b16 %v4953, %v4946
    %v5409 = vpack.c.b16 %v4961, %v4954
    %v5410 = vpack.c.b16 %v4962, %v4955
    %v5411 = vpack.c.b16 %v4963, %v4956
    %v5412 = vpack.c.b16 %v4964, %v4957
    %v5413 = vpack.c.b16 %v4965, %v4958
    %v5414 = vpack.c.b16 %v4966, %v4959
    %v5415 = vpack.c.b16 %v4967, %v4960
    %v5416 = vpack.c.b16 %v4975, %v4968
    %v5417 = vpack.c.b16 %v4976, %v4969
    %v5418 = vpack.c.b16 %v4977, %v4970
    %v5419 = vpack.c.b16 %v4978, %v4971
    %v5420 = vpack.c.b16 %v4979, %v4972
    %v5421 = vpack.c.b16 %v4980, %v4973
    %v5422 = vpack.c.b16 %v4981, %v4974
    %v5423 = vpack.c.b16 %v4989, %v4982
    %v5424 = vpack.c.b16 %v4990, %v4983
    %v5425 = vpack.c.b16 %v4991, %v4984
    %v5426 = vpack.c.b16 %v4992, %v4985
    %v5427 = vpack.c.b16 %v4993, %v4986
    %v5428 = vpack.c.b16 %v4994, %v4987
    %v5429 = vpack.c.b16 %v4995, %v4988
    %v5430 = vpack.c.b16 %v5003, %v4996
    %v5431 = vpack.c.b16 %v5004, %v4997
    %v5432 = vpack.c.b16 %v5005, %v4998
    %v5433 = vpack.c.b16 %v5006, %v4999
    %v5434 = vpack.c.b16 %v5007, %v5000
    %v5435 = vpack.c.b16 %v5008, %v5001
    %v5436 = vpack.c.b16 %v5009, %v5002
    %v5437 = vpack.c.b16 %v5017, %v5010
    %v5438 = vpack.c.b16 %v5018, %v5011
    %v5439 = vpack.c.b16 %v5019, %v5012
    %v5440 = vpack.c.b16 %v5020, %v5013
    %v5441 = vpack.c.b16 %v5021, %v5014
    %v5442 = vpack.c.b16 %v5022, %v5015
    %v5443 = vpack.c.b16 %v5023, %v5016
    %v5444 = vpack.c.b16 %v5031, %v5024
    %v5445 = vpack.c.b16 %v5032, %v5025
    %v5446 = vpack.c.b16 %v5033, %v5026
    %v5447 = vpack.c.b16 %v5034, %v5027
    %v5448 = vpack.c.b16 %v5035, %v5028
    %v5449 = vpack.c.b16 %v5036, %v5029
    %v5450 = vpack.c.b16 %v5037, %v5030
    %v5451 = vpack.c.b16 %v5045, %v5038
    %v5452 = vpack.c.b16 %v5046, %v5039
    %v5453 = vpack.c.b16 %v5047, %v5040
    %v5454 = vpack.c.b16 %v5048, %v5041
    %v5455 = vpack.c.b16 %v5049, %v5042
    %v5456 = vpack.c.b16 %v5050, %v5043
    %v5457 = vpack.c.b16 %v5051, %v5044
    %v5458 = vpack.c.b16 %v5059, %v5052
    %v5459 = vpack.c.b16 %v5060, %v5053
    %v5460 = vpack.c.b16 %v5061, %v5054
    %v5461 = vpack.c.b16 %v5062, %v5055
    %v5462 = vpack.c.b16 %v5063, %v5056
    %v5463 = vpack.c.b16 %v5064, %v5057
    %v5464 = vpack.c.b16 %v5065, %v5058
    %v5465 = vpack.c.b16 %v5073, %v5066
    %v5466 = vpack.c.b16 %v5074, %v5067
    %v5467 = vpack.c.b16 %v5075, %v5068
    %v5468 = vpack.c.b16 %v5076, %v5069
    %v5469 = vpack.c.b16 %v5077, %v5070
    %v5470 = vpack.c.b16 %v5078, %v5071
    %v5471 = vpack.c.b16 %v5079, %v5072
    %5864 = vmatprep.subr.bf16.mxu0 %v5130
    %5865 = vmatpush1.bf16.msra.mxu0 %v5129
    %5866 = vmatprep.subr.bf16.mxu0 %v5123
    %5867 = vmatpush1.bf16.msra.mxu0 %v5122
    %5868 = vmatprep.subr.bf16.mxu0 %v5116
    %5869 = vmatpush1.bf16.msra.mxu0 %v5115
    %5870 = vmatprep.subr.bf16.mxu0 %v5109
    %5871 = vmatpush1.bf16.msra.mxu0 %v5108
    %5872 = vmatprep.subr.bf16.mxu0 %v5102
    %5873 = vmatpush1.bf16.msra.mxu0 %v5101
    %5874 = vmatprep.subr.bf16.mxu0 %v5095
    %5875 = vmatpush1.bf16.msra.mxu0 %v5094
    %5876 = vmatprep.subr.bf16.mxu0 %v5088
    %5877 = vmatpush1.bf16.msra.mxu0 %v5087
    %5878 = vmatprep.subr.bf16.mxu0 %v5081
    %5879 = vmatpush1.bf16.msra.mxu0 %v5080
    %5880 = vmatprep.subr.bf16.mxu0 %v5186
    %5881 = vmatpush2.bf16.msra.mxu0 %v5185
    %5882 = vmatprep.subr.bf16.mxu0 %v5179
    %5883 = vmatpush2.bf16.msra.mxu0 %v5178
    %5884 = vmatprep.subr.bf16.mxu0 %v5172
    %5885 = vmatpush2.bf16.msra.mxu0 %v5171
    %5886 = vmatprep.subr.bf16.mxu0 %v5165
    %5887 = vmatpush2.bf16.msra.mxu0 %v5164
    %5888 = vmatprep.subr.bf16.mxu0 %v5158
    %5889 = vmatpush2.bf16.msra.mxu0 %v5157
    %5890 = vmatprep.subr.bf16.mxu0 %v5151
    %5891 = vmatpush2.bf16.msra.mxu0 %v5150
    %5892 = vmatprep.subr.bf16.mxu0 %v5144
    %5893 = vmatpush2.bf16.msra.mxu0 %v5143
    %5894 = vmatprep.subr.bf16.mxu0 %v5137
    %5895 = vmatpush2.bf16.msra.mxu0 %v5136
    %5896 = vmatprep.mubr.bf16.mxu0 %v3357
    %5897 = vmatmul.mubr.bf16.gmra.mxu0 %v3356
    %v5898 = vpop.f32.mrf.mxu0
    %v5899 = vadd.f32 %v3816, %v5898
    %v5900 = vpop.f32.mrf.mxu0
    %v5901 = vadd.f32 %v3820, %v5900
    %v5902 = vpop.f32.mrf.mxu0
    %v5903 = vadd.f32 %v3816, %v5902
    %v5904 = vpop.f32.mrf.mxu0
    %v5905 = vadd.f32 %v3820, %v5904
    %5906 = vdwg.mxu0
    %5907 = vmatprep.subr.bf16.mxu0 %v5242
    %5908 = vmatpush1.bf16.msra.mxu0 %v5241
    %5909 = vmatprep.subr.bf16.mxu0 %v5235
    %5910 = vmatpush1.bf16.msra.mxu0 %v5234
    %5911 = vmatprep.subr.bf16.mxu0 %v5228
    %5912 = vmatpush1.bf16.msra.mxu0 %v5227
    %5913 = vmatprep.subr.bf16.mxu0 %v5221
    %5914 = vmatpush1.bf16.msra.mxu0 %v5220
    %5915 = vmatprep.subr.bf16.mxu0 %v5214
    %5916 = vmatpush1.bf16.msra.mxu0 %v5213
    %5917 = vmatprep.subr.bf16.mxu0 %v5207
    %5918 = vmatpush1.bf16.msra.mxu0 %v5206
    %5919 = vmatprep.subr.bf16.mxu0 %v5200
    %5920 = vmatpush1.bf16.msra.mxu0 %v5199
    %5921 = vmatprep.subr.bf16.mxu0 %v5193
    %5922 = vmatpush1.bf16.msra.mxu0 %v5192
    %5923 = vmatprep.subr.bf16.mxu0 %v5298
    %5924 = vmatpush2.bf16.msra.mxu0 %v5297
    %5925 = vmatprep.subr.bf16.mxu0 %v5291
    %5926 = vmatpush2.bf16.msra.mxu0 %v5290
    %5927 = vmatprep.subr.bf16.mxu0 %v5284
    %5928 = vmatpush2.bf16.msra.mxu0 %v5283
    %5929 = vmatprep.subr.bf16.mxu0 %v5277
    %5930 = vmatpush2.bf16.msra.mxu0 %v5276
    %5931 = vmatprep.subr.bf16.mxu0 %v5270
    %5932 = vmatpush2.bf16.msra.mxu0 %v5269
    %5933 = vmatprep.subr.bf16.mxu0 %v5263
    %5934 = vmatpush2.bf16.msra.mxu0 %v5262
    %5935 = vmatprep.subr.bf16.mxu0 %v5256
    %5936 = vmatpush2.bf16.msra.mxu0 %v5255
    %5937 = vmatprep.subr.bf16.mxu0 %v5249
    %5938 = vmatpush2.bf16.msra.mxu0 %v5248
    %5939 = vmatprep.mubr.bf16.mxu0 %v3359
    %5940 = vmatmul.mubr.bf16.gmra.mxu0 %v3358
    %v5941 = vpop.f32.mrf.mxu0
    %v5942 = vadd.f32 %v5899, %v5941
    %v5943 = vpop.f32.mrf.mxu0
    %v5944 = vadd.f32 %v5901, %v5943
    %v5945 = vpop.f32.mrf.mxu0
    %v5946 = vadd.f32 %v5903, %v5945
    %v5947 = vpop.f32.mrf.mxu0
    %v5948 = vadd.f32 %v5905, %v5947
    %5949 = vdwg.mxu0
    %5950 = vmatprep.subr.bf16.mxu0 %v5354
    %5951 = vmatpush1.bf16.msra.mxu0 %v5353
    %5952 = vmatprep.subr.bf16.mxu0 %v5347
    %5953 = vmatpush1.bf16.msra.mxu0 %v5346
    %5954 = vmatprep.subr.bf16.mxu0 %v5340
    %5955 = vmatpush1.bf16.msra.mxu0 %v5339
    %5956 = vmatprep.subr.bf16.mxu0 %v5333
    %5957 = vmatpush1.bf16.msra.mxu0 %v5332
    %5958 = vmatprep.subr.bf16.mxu0 %v5326
    %5959 = vmatpush1.bf16.msra.mxu0 %v5325
    %5960 = vmatprep.subr.bf16.mxu0 %v5319
    %5961 = vmatpush1.bf16.msra.mxu0 %v5318
    %5962 = vmatprep.subr.bf16.mxu0 %v5312
    %5963 = vmatpush1.bf16.msra.mxu0 %v5311
    %5964 = vmatprep.subr.bf16.mxu0 %v5305
    %5965 = vmatpush1.bf16.msra.mxu0 %v5304
    %5966 = vmatprep.subr.bf16.mxu0 %v5410
    %5967 = vmatpush2.bf16.msra.mxu0 %v5409
    %5968 = vmatprep.subr.bf16.mxu0 %v5403
    %5969 = vmatpush2.bf16.msra.mxu0 %v5402
    %5970 = vmatprep.subr.bf16.mxu0 %v5396
    %5971 = vmatpush2.bf16.msra.mxu0 %v5395
    %5972 = vmatprep.subr.bf16.mxu0 %v5389
    %5973 = vmatpush2.bf16.msra.mxu0 %v5388
    %5974 = vmatprep.subr.bf16.mxu0 %v5382
    %5975 = vmatpush2.bf16.msra.mxu0 %v5381
    %5976 = vmatprep.subr.bf16.mxu0 %v5375
    %5977 = vmatpush2.bf16.msra.mxu0 %v5374
    %5978 = vmatprep.subr.bf16.mxu0 %v5368
    %5979 = vmatpush2.bf16.msra.mxu0 %v5367
    %5980 = vmatprep.subr.bf16.mxu0 %v5361
    %5981 = vmatpush2.bf16.msra.mxu0 %v5360
    %5982 = vmatprep.mubr.bf16.mxu0 %v3361
    %5983 = vmatmul.mubr.bf16.gmra.mxu0 %v3360
    %v5984 = vpop.f32.mrf.mxu0
    %v5985 = vadd.f32 %v5942, %v5984
    %v5986 = vpop.f32.mrf.mxu0
    %v5987 = vadd.f32 %v5944, %v5986
    %v5988 = vpop.f32.mrf.mxu0
    %v5989 = vadd.f32 %v5946, %v5988
    %v5990 = vpop.f32.mrf.mxu0
    %v5991 = vadd.f32 %v5948, %v5990
    %5992 = vdwg.mxu0
    %5993 = vmatprep.subr.bf16.mxu0 %v5466
    %5994 = vmatpush1.bf16.msra.mxu0 %v5465
    %5995 = vmatprep.subr.bf16.mxu0 %v5459
    %5996 = vmatpush1.bf16.msra.mxu0 %v5458
    %5997 = vmatprep.subr.bf16.mxu0 %v5452
    %5998 = vmatpush1.bf16.msra.mxu0 %v5451
    %5999 = vmatprep.subr.bf16.mxu0 %v5445
    %6000 = vmatpush1.bf16.msra.mxu0 %v5444
    %6001 = vmatprep.subr.bf16.mxu0 %v5438
    %6002 = vmatpush1.bf16.msra.mxu0 %v5437
    %6003 = vmatprep.subr.bf16.mxu0 %v5431
    %6004 = vmatpush1.bf16.msra.mxu0 %v5430
    %6005 = vmatprep.subr.bf16.mxu0 %v5424
    %6006 = vmatpush1.bf16.msra.mxu0 %v5423
    %6007 = vmatprep.subr.bf16.mxu0 %v5417
    %6008 = vmatpush1.bf16.msra.mxu0 %v5416
    %6009 = vmatprep.subr.bf16.mxu0 0
    %6010 = vmatpush2.bf16.msra.mxu0 0
    %6011 = vmatprep.subr.bf16.mxu0 0
    %6012 = vmatpush2.bf16.msra.mxu0 0
    %6013 = vmatprep.subr.bf16.mxu0 0
    %6014 = vmatpush2.bf16.msra.mxu0 0
    %6015 = vmatprep.subr.bf16.mxu0 0
    %6016 = vmatpush2.bf16.msra.mxu0 0
    %6017 = vmatprep.subr.bf16.mxu0 0
    %6018 = vmatpush2.bf16.msra.mxu0 0
    %6019 = vmatprep.subr.bf16.mxu0 0
    %6020 = vmatpush2.bf16.msra.mxu0 0
    %6021 = vmatprep.subr.bf16.mxu0 0
    %6022 = vmatpush2.bf16.msra.mxu0 0
    %6023 = vmatprep.subr.bf16.mxu0 0
    %6024 = vmatpush2.bf16.msra.mxu0 0
    %6025 = vmatprep.mubr.bf16.mxu0 0
    %6026 = vmatmul.mubr.bf16.gmra.mxu0 %v3362
    %v6027 = vpop.f32.mrf.mxu0
    %v6028 = vadd.f32 %v5985, %v6027
    %v6029 = vpop.f32.mrf.mxu0
    %v6030 = vadd.f32 %v5987, %v6029
    %v6031 = vpop.f32.mrf.mxu0
    %v6032 = vadd.f32 %v5989, %v6031
    %v6033 = vpop.f32.mrf.mxu0
    %v6034 = vadd.f32 %v5991, %v6033
    %6035 = vdwg.mxu0
    %6036 = vmatprep.subr.bf16.mxu0 %v5132
    %6037 = vmatpush1.bf16.msra.mxu0 %v5131
    %6038 = vmatprep.subr.bf16.mxu0 %v5125
    %6039 = vmatpush1.bf16.msra.mxu0 %v5124
    %6040 = vmatprep.subr.bf16.mxu0 %v5118
    %6041 = vmatpush1.bf16.msra.mxu0 %v5117
    %6042 = vmatprep.subr.bf16.mxu0 %v5111
    %6043 = vmatpush1.bf16.msra.mxu0 %v5110
    %6044 = vmatprep.subr.bf16.mxu0 %v5104
    %6045 = vmatpush1.bf16.msra.mxu0 %v5103
    %6046 = vmatprep.subr.bf16.mxu0 %v5097
    %6047 = vmatpush1.bf16.msra.mxu0 %v5096
    %6048 = vmatprep.subr.bf16.mxu0 %v5090
    %6049 = vmatpush1.bf16.msra.mxu0 %v5089
    %6050 = vmatprep.subr.bf16.mxu0 %v5083
    %6051 = vmatpush1.bf16.msra.mxu0 %v5082
    %6052 = vmatprep.subr.bf16.mxu0 %v5188
    %6053 = vmatpush2.bf16.msra.mxu0 %v5187
    %6054 = vmatprep.subr.bf16.mxu0 %v5181
    %6055 = vmatpush2.bf16.msra.mxu0 %v5180
    %6056 = vmatprep.subr.bf16.mxu0 %v5174
    %6057 = vmatpush2.bf16.msra.mxu0 %v5173
    %6058 = vmatprep.subr.bf16.mxu0 %v5167
    %6059 = vmatpush2.bf16.msra.mxu0 %v5166
    %6060 = vmatprep.subr.bf16.mxu0 %v5160
    %6061 = vmatpush2.bf16.msra.mxu0 %v5159
    %6062 = vmatprep.subr.bf16.mxu0 %v5153
    %6063 = vmatpush2.bf16.msra.mxu0 %v5152
    %6064 = vmatprep.subr.bf16.mxu0 %v5146
    %6065 = vmatpush2.bf16.msra.mxu0 %v5145
    %6066 = vmatprep.subr.bf16.mxu0 %v5139
    %6067 = vmatpush2.bf16.msra.mxu0 %v5138
    %6068 = vmatprep.mubr.bf16.mxu0 %v3357
    %6069 = vmatmul.mubr.bf16.gmra.mxu0 %v3356
    %v6070 = vpop.f32.mrf.mxu0
    %v6071 = vadd.f32 %v3824, %v6070
    %v6072 = vpop.f32.mrf.mxu0
    %v6073 = vadd.f32 %v3828, %v6072
    %v6074 = vpop.f32.mrf.mxu0
    %v6075 = vadd.f32 %v3824, %v6074
    %v6076 = vpop.f32.mrf.mxu0
    %v6077 = vadd.f32 %v3828, %v6076
    %6078 = vdwg.mxu0
    %6079 = vmatprep.subr.bf16.mxu0 %v5244
    %6080 = vmatpush1.bf16.msra.mxu0 %v5243
    %6081 = vmatprep.subr.bf16.mxu0 %v5237
    %6082 = vmatpush1.bf16.msra.mxu0 %v5236
    %6083 = vmatprep.subr.bf16.mxu0 %v5230
    %6084 = vmatpush1.bf16.msra.mxu0 %v5229
    %6085 = vmatprep.subr.bf16.mxu0 %v5223
    %6086 = vmatpush1.bf16.msra.mxu0 %v5222
    %6087 = vmatprep.subr.bf16.mxu0 %v5216
    %6088 = vmatpush1.bf16.msra.mxu0 %v5215
    %6089 = vmatprep.subr.bf16.mxu0 %v5209
    %6090 = vmatpush1.bf16.msra.mxu0 %v5208
    %6091 = vmatprep.subr.bf16.mxu0 %v5202
    %6092 = vmatpush1.bf16.msra.mxu0 %v5201
    %6093 = vmatprep.subr.bf16.mxu0 %v5195
    %6094 = vmatpush1.bf16.msra.mxu0 %v5194
    %6095 = vmatprep.subr.bf16.mxu0 %v5300
    %6096 = vmatpush2.bf16.msra.mxu0 %v5299
    %6097 = vmatprep.subr.bf16.mxu0 %v5293
    %6098 = vmatpush2.bf16.msra.mxu0 %v5292
    %6099 = vmatprep.subr.bf16.mxu0 %v5286
    %6100 = vmatpush2.bf16.msra.mxu0 %v5285
    %6101 = vmatprep.subr.bf16.mxu0 %v5279
    %6102 = vmatpush2.bf16.msra.mxu0 %v5278
    %6103 = vmatprep.subr.bf16.mxu0 %v5272
    %6104 = vmatpush2.bf16.msra.mxu0 %v5271
    %6105 = vmatprep.subr.bf16.mxu0 %v5265
    %6106 = vmatpush2.bf16.msra.mxu0 %v5264
    %6107 = vmatprep.subr.bf16.mxu0 %v5258
    %6108 = vmatpush2.bf16.msra.mxu0 %v5257
    %6109 = vmatprep.subr.bf16.mxu0 %v5251
    %6110 = vmatpush2.bf16.msra.mxu0 %v5250
    %6111 = vmatprep.mubr.bf16.mxu0 %v3359
    %6112 = vmatmul.mubr.bf16.gmra.mxu0 %v3358
    %v6113 = vpop.f32.mrf.mxu0
    %v6114 = vadd.f32 %v6071, %v6113
    %v6115 = vpop.f32.mrf.mxu0
    %v6116 = vadd.f32 %v6073, %v6115
    %v6117 = vpop.f32.mrf.mxu0
    %v6118 = vadd.f32 %v6075, %v6117
    %v6119 = vpop.f32.mrf.mxu0
    %v6120 = vadd.f32 %v6077, %v6119
    %6121 = vdwg.mxu0
    %6122 = vmatprep.subr.bf16.mxu0 %v5356
    %6123 = vmatpush1.bf16.msra.mxu0 %v5355
    %6124 = vmatprep.subr.bf16.mxu0 %v5349
    %6125 = vmatpush1.bf16.msra.mxu0 %v5348
    %6126 = vmatprep.subr.bf16.mxu0 %v5342
    %6127 = vmatpush1.bf16.msra.mxu0 %v5341
    %6128 = vmatprep.subr.bf16.mxu0 %v5335
    %6129 = vmatpush1.bf16.msra.mxu0 %v5334
    %6130 = vmatprep.subr.bf16.mxu0 %v5328
    %6131 = vmatpush1.bf16.msra.mxu0 %v5327
    %6132 = vmatprep.subr.bf16.mxu0 %v5321
    %6133 = vmatpush1.bf16.msra.mxu0 %v5320
    %6134 = vmatprep.subr.bf16.mxu0 %v5314
    %6135 = vmatpush1.bf16.msra.mxu0 %v5313
    %6136 = vmatprep.subr.bf16.mxu0 %v5307
    %6137 = vmatpush1.bf16.msra.mxu0 %v5306
    %6138 = vmatprep.subr.bf16.mxu0 %v5412
    %6139 = vmatpush2.bf16.msra.mxu0 %v5411
    %6140 = vmatprep.subr.bf16.mxu0 %v5405
    %6141 = vmatpush2.bf16.msra.mxu0 %v5404
    %6142 = vmatprep.subr.bf16.mxu0 %v5398
    %6143 = vmatpush2.bf16.msra.mxu0 %v5397
    %6144 = vmatprep.subr.bf16.mxu0 %v5391
    %6145 = vmatpush2.bf16.msra.mxu0 %v5390
    %6146 = vmatprep.subr.bf16.mxu0 %v5384
    %6147 = vmatpush2.bf16.msra.mxu0 %v5383
    %6148 = vmatprep.subr.bf16.mxu0 %v5377
    %6149 = vmatpush2.bf16.msra.mxu0 %v5376
    %6150 = vmatprep.subr.bf16.mxu0 %v5370
    %6151 = vmatpush2.bf16.msra.mxu0 %v5369
    %6152 = vmatprep.subr.bf16.mxu0 %v5363
    %6153 = vmatpush2.bf16.msra.mxu0 %v5362
    %6154 = vmatprep.mubr.bf16.mxu0 %v3361
    %6155 = vmatmul.mubr.bf16.gmra.mxu0 %v3360
    %v6156 = vpop.f32.mrf.mxu0
    %v6157 = vadd.f32 %v6114, %v6156
    %v6158 = vpop.f32.mrf.mxu0
    %v6159 = vadd.f32 %v6116, %v6158
    %v6160 = vpop.f32.mrf.mxu0
    %v6161 = vadd.f32 %v6118, %v6160
    %v6162 = vpop.f32.mrf.mxu0
    %v6163 = vadd.f32 %v6120, %v6162
    %6164 = vdwg.mxu0
    %6165 = vmatprep.subr.bf16.mxu0 %v5468
    %6166 = vmatpush1.bf16.msra.mxu0 %v5467
    %6167 = vmatprep.subr.bf16.mxu0 %v5461
    %6168 = vmatpush1.bf16.msra.mxu0 %v5460
    %6169 = vmatprep.subr.bf16.mxu0 %v5454
    %6170 = vmatpush1.bf16.msra.mxu0 %v5453
    %6171 = vmatprep.subr.bf16.mxu0 %v5447
    %6172 = vmatpush1.bf16.msra.mxu0 %v5446
    %6173 = vmatprep.subr.bf16.mxu0 %v5440
    %6174 = vmatpush1.bf16.msra.mxu0 %v5439
    %6175 = vmatprep.subr.bf16.mxu0 %v5433
    %6176 = vmatpush1.bf16.msra.mxu0 %v5432
    %6177 = vmatprep.subr.bf16.mxu0 %v5426
    %6178 = vmatpush1.bf16.msra.mxu0 %v5425
    %6179 = vmatprep.subr.bf16.mxu0 %v5419
    %6180 = vmatpush1.bf16.msra.mxu0 %v5418
    %6181 = vmatprep.subr.bf16.mxu0 0
    %6182 = vmatpush2.bf16.msra.mxu0 0
    %6183 = vmatprep.subr.bf16.mxu0 0
    %6184 = vmatpush2.bf16.msra.mxu0 0
    %6185 = vmatprep.subr.bf16.mxu0 0
    %6186 = vmatpush2.bf16.msra.mxu0 0
    %6187 = vmatprep.subr.bf16.mxu0 0
    %6188 = vmatpush2.bf16.msra.mxu0 0
    %6189 = vmatprep.subr.bf16.mxu0 0
    %6190 = vmatpush2.bf16.msra.mxu0 0
    %6191 = vmatprep.subr.bf16.mxu0 0
    %6192 = vmatpush2.bf16.msra.mxu0 0
    %6193 = vmatprep.subr.bf16.mxu0 0
    %6194 = vmatpush2.bf16.msra.mxu0 0
    %6195 = vmatprep.subr.bf16.mxu0 0
    %6196 = vmatpush2.bf16.msra.mxu0 0
    %6197 = vmatprep.mubr.bf16.mxu0 0
    %6198 = vmatmul.mubr.bf16.gmra.mxu0 %v3362
    %v6199 = vpop.f32.mrf.mxu0
    %v6200 = vadd.f32 %v6157, %v6199
    %v6201 = vpop.f32.mrf.mxu0
    %v6202 = vadd.f32 %v6159, %v6201
    %v6203 = vpop.f32.mrf.mxu0
    %v6204 = vadd.f32 %v6161, %v6203
    %v6205 = vpop.f32.mrf.mxu0
    %v6206 = vadd.f32 %v6163, %v6205
    %6207 = vdwg.mxu0
    %6208 = vmatprep.subr.bf16.mxu0 %v5134
    %6209 = vmatpush1.bf16.msra.mxu0 %v5133
    %6210 = vmatprep.subr.bf16.mxu0 %v5127
    %6211 = vmatpush1.bf16.msra.mxu0 %v5126
    %6212 = vmatprep.subr.bf16.mxu0 %v5120
    %6213 = vmatpush1.bf16.msra.mxu0 %v5119
    %6214 = vmatprep.subr.bf16.mxu0 %v5113
    %6215 = vmatpush1.bf16.msra.mxu0 %v5112
    %6216 = vmatprep.subr.bf16.mxu0 %v5106
    %6217 = vmatpush1.bf16.msra.mxu0 %v5105
    %6218 = vmatprep.subr.bf16.mxu0 %v5099
    %6219 = vmatpush1.bf16.msra.mxu0 %v5098
    %6220 = vmatprep.subr.bf16.mxu0 %v5092
    %6221 = vmatpush1.bf16.msra.mxu0 %v5091
    %6222 = vmatprep.subr.bf16.mxu0 %v5085
    %6223 = vmatpush1.bf16.msra.mxu0 %v5084
    %6224 = vmatprep.subr.bf16.mxu0 %v5190
    %6225 = vmatpush2.bf16.msra.mxu0 %v5189
    %6226 = vmatprep.subr.bf16.mxu0 %v5183
    %6227 = vmatpush2.bf16.msra.mxu0 %v5182
    %6228 = vmatprep.subr.bf16.mxu0 %v5176
    %6229 = vmatpush2.bf16.msra.mxu0 %v5175
    %6230 = vmatprep.subr.bf16.mxu0 %v5169
    %6231 = vmatpush2.bf16.msra.mxu0 %v5168
    %6232 = vmatprep.subr.bf16.mxu0 %v5162
    %6233 = vmatpush2.bf16.msra.mxu0 %v5161
    %6234 = vmatprep.subr.bf16.mxu0 %v5155
    %6235 = vmatpush2.bf16.msra.mxu0 %v5154
    %6236 = vmatprep.subr.bf16.mxu0 %v5148
    %6237 = vmatpush2.bf16.msra.mxu0 %v5147
    %6238 = vmatprep.subr.bf16.mxu0 %v5141
    %6239 = vmatpush2.bf16.msra.mxu0 %v5140
    %6240 = vmatprep.mubr.bf16.mxu0 %v3357
    %6241 = vmatmul.mubr.bf16.gmra.mxu0 %v3356
    %v6242 = vpop.f32.mrf.mxu0
    %v6243 = vadd.f32 %v3832, %v6242
    %v6244 = vpop.f32.mrf.mxu0
    %v6245 = vadd.f32 %v3836, %v6244
    %v6246 = vpop.f32.mrf.mxu0
    %v6247 = vadd.f32 %v3832, %v6246
    %v6248 = vpop.f32.mrf.mxu0
    %v6249 = vadd.f32 %v3836, %v6248
    %6250 = vdwg.mxu0
    %6251 = vmatprep.subr.bf16.mxu0 %v5246
    %6252 = vmatpush1.bf16.msra.mxu0 %v5245
    %6253 = vmatprep.subr.bf16.mxu0 %v5239
    %6254 = vmatpush1.bf16.msra.mxu0 %v5238
    %6255 = vmatprep.subr.bf16.mxu0 %v5232
    %6256 = vmatpush1.bf16.msra.mxu0 %v5231
    %6257 = vmatprep.subr.bf16.mxu0 %v5225
    %6258 = vmatpush1.bf16.msra.mxu0 %v5224
    %6259 = vmatprep.subr.bf16.mxu0 %v5218
    %6260 = vmatpush1.bf16.msra.mxu0 %v5217
    %6261 = vmatprep.subr.bf16.mxu0 %v5211
    %6262 = vmatpush1.bf16.msra.mxu0 %v5210
    %6263 = vmatprep.subr.bf16.mxu0 %v5204
    %6264 = vmatpush1.bf16.msra.mxu0 %v5203
    %6265 = vmatprep.subr.bf16.mxu0 %v5197
    %6266 = vmatpush1.bf16.msra.mxu0 %v5196
    %6267 = vmatprep.subr.bf16.mxu0 %v5302
    %6268 = vmatpush2.bf16.msra.mxu0 %v5301
    %6269 = vmatprep.subr.bf16.mxu0 %v5295
    %6270 = vmatpush2.bf16.msra.mxu0 %v5294
    %6271 = vmatprep.subr.bf16.mxu0 %v5288
    %6272 = vmatpush2.bf16.msra.mxu0 %v5287
    %6273 = vmatprep.subr.bf16.mxu0 %v5281
    %6274 = vmatpush2.bf16.msra.mxu0 %v5280
    %6275 = vmatprep.subr.bf16.mxu0 %v5274
    %6276 = vmatpush2.bf16.msra.mxu0 %v5273
    %6277 = vmatprep.subr.bf16.mxu0 %v5267
    %6278 = vmatpush2.bf16.msra.mxu0 %v5266
    %6279 = vmatprep.subr.bf16.mxu0 %v5260
    %6280 = vmatpush2.bf16.msra.mxu0 %v5259
    %6281 = vmatprep.subr.bf16.mxu0 %v5253
    %6282 = vmatpush2.bf16.msra.mxu0 %v5252
    %6283 = vmatprep.mubr.bf16.mxu0 %v3359
    %6284 = vmatmul.mubr.bf16.gmra.mxu0 %v3358
    %v6285 = vpop.f32.mrf.mxu0
    %v6286 = vadd.f32 %v6243, %v6285
    %v6287 = vpop.f32.mrf.mxu0
    %v6288 = vadd.f32 %v6245, %v6287
    %v6289 = vpop.f32.mrf.mxu0
    %v6290 = vadd.f32 %v6247, %v6289
    %v6291 = vpop.f32.mrf.mxu0
    %v6292 = vadd.f32 %v6249, %v6291
    %6293 = vdwg.mxu0
    %6294 = vmatprep.subr.bf16.mxu0 %v5358
    %6295 = vmatpush1.bf16.msra.mxu0 %v5357
    %6296 = vmatprep.subr.bf16.mxu0 %v5351
    %6297 = vmatpush1.bf16.msra.mxu0 %v5350
    %6298 = vmatprep.subr.bf16.mxu0 %v5344
    %6299 = vmatpush1.bf16.msra.mxu0 %v5343
    %6300 = vmatprep.subr.bf16.mxu0 %v5337
    %6301 = vmatpush1.bf16.msra.mxu0 %v5336
    %6302 = vmatprep.subr.bf16.mxu0 %v5330
    %6303 = vmatpush1.bf16.msra.mxu0 %v5329
    %6304 = vmatprep.subr.bf16.mxu0 %v5323
    %6305 = vmatpush1.bf16.msra.mxu0 %v5322
    %6306 = vmatprep.subr.bf16.mxu0 %v5316
    %6307 = vmatpush1.bf16.msra.mxu0 %v5315
    %6308 = vmatprep.subr.bf16.mxu0 %v5309
    %6309 = vmatpush1.bf16.msra.mxu0 %v5308
    %6310 = vmatprep.subr.bf16.mxu0 %v5414
    %6311 = vmatpush2.bf16.msra.mxu0 %v5413
    %6312 = vmatprep.subr.bf16.mxu0 %v5407
    %6313 = vmatpush2.bf16.msra.mxu0 %v5406
    %6314 = vmatprep.subr.bf16.mxu0 %v5400
    %6315 = vmatpush2.bf16.msra.mxu0 %v5399
    %6316 = vmatprep.subr.bf16.mxu0 %v5393
    %6317 = vmatpush2.bf16.msra.mxu0 %v5392
    %6318 = vmatprep.subr.bf16.mxu0 %v5386
    %6319 = vmatpush2.bf16.msra.mxu0 %v5385
    %6320 = vmatprep.subr.bf16.mxu0 %v5379
    %6321 = vmatpush2.bf16.msra.mxu0 %v5378
    %6322 = vmatprep.subr.bf16.mxu0 %v5372
    %6323 = vmatpush2.bf16.msra.mxu0 %v5371
    %6324 = vmatprep.subr.bf16.mxu0 %v5365
    %6325 = vmatpush2.bf16.msra.mxu0 %v5364
    %6326 = vmatprep.mubr.bf16.mxu0 %v3361
    %6327 = vmatmul.mubr.bf16.gmra.mxu0 %v3360
    %v6328 = vpop.f32.mrf.mxu0
    %v6329 = vadd.f32 %v6286, %v6328
    %v6330 = vpop.f32.mrf.mxu0
    %v6331 = vadd.f32 %v6288, %v6330
    %v6332 = vpop.f32.mrf.mxu0
    %v6333 = vadd.f32 %v6290, %v6332
    %v6334 = vpop.f32.mrf.mxu0
    %v6335 = vadd.f32 %v6292, %v6334
    %6336 = vdwg.mxu0
    %6337 = vmatprep.subr.bf16.mxu0 %v5470
    %6338 = vmatpush1.bf16.msra.mxu0 %v5469
    %6339 = vmatprep.subr.bf16.mxu0 %v5463
    %6340 = vmatpush1.bf16.msra.mxu0 %v5462
    %6341 = vmatprep.subr.bf16.mxu0 %v5456
    %6342 = vmatpush1.bf16.msra.mxu0 %v5455
    %6343 = vmatprep.subr.bf16.mxu0 %v5449
    %6344 = vmatpush1.bf16.msra.mxu0 %v5448
    %6345 = vmatprep.subr.bf16.mxu0 %v5442
    %6346 = vmatpush1.bf16.msra.mxu0 %v5441
    %6347 = vmatprep.subr.bf16.mxu0 %v5435
    %6348 = vmatpush1.bf16.msra.mxu0 %v5434
    %6349 = vmatprep.subr.bf16.mxu0 %v5428
    %6350 = vmatpush1.bf16.msra.mxu0 %v5427
    %6351 = vmatprep.subr.bf16.mxu0 %v5421
    %6352 = vmatpush1.bf16.msra.mxu0 %v5420
    %6353 = vmatprep.subr.bf16.mxu0 0
    %6354 = vmatpush2.bf16.msra.mxu0 0
    %6355 = vmatprep.subr.bf16.mxu0 0
    %6356 = vmatpush2.bf16.msra.mxu0 0
    %6357 = vmatprep.subr.bf16.mxu0 0
    %6358 = vmatpush2.bf16.msra.mxu0 0
    %6359 = vmatprep.subr.bf16.mxu0 0
    %6360 = vmatpush2.bf16.msra.mxu0 0
    %6361 = vmatprep.subr.bf16.mxu0 0
    %6362 = vmatpush2.bf16.msra.mxu0 0
    %6363 = vmatprep.subr.bf16.mxu0 0
    %6364 = vmatpush2.bf16.msra.mxu0 0
    %6365 = vmatprep.subr.bf16.mxu0 0
    %6366 = vmatpush2.bf16.msra.mxu0 0
    %6367 = vmatprep.subr.bf16.mxu0 0
    %6368 = vmatpush2.bf16.msra.mxu0 0
    %6369 = vmatprep.mubr.bf16.mxu0 0
    %6370 = vmatmul.mubr.bf16.gmra.mxu0 %v3362
    %v6371 = vpop.f32.mrf.mxu0
    %v6372 = vadd.f32 %v6329, %v6371
    %v6373 = vpop.f32.mrf.mxu0
    %v6374 = vadd.f32 %v6331, %v6373
    %v6375 = vpop.f32.mrf.mxu0
    %v6376 = vadd.f32 %v6333, %v6375
    %v6377 = vpop.f32.mrf.mxu0
    %v6378 = vadd.f32 %v6335, %v6377
    %6379 = vdwg.mxu0
    %6380 = vmatprep.subr.bf16.mxu0 0
    %6381 = vmatpush1.bf16.msra.mxu0 %v5135
    %6382 = vmatprep.subr.bf16.mxu0 0
    %6383 = vmatpush1.bf16.msra.mxu0 %v5128
    %6384 = vmatprep.subr.bf16.mxu0 0
    %6385 = vmatpush1.bf16.msra.mxu0 %v5121
    %6386 = vmatprep.subr.bf16.mxu0 0
    %6387 = vmatpush1.bf16.msra.mxu0 %v5114
    %6388 = vmatprep.subr.bf16.mxu0 0
    %6389 = vmatpush1.bf16.msra.mxu0 %v5107
    %6390 = vmatprep.subr.bf16.mxu0 0
    %6391 = vmatpush1.bf16.msra.mxu0 %v5100
    %6392 = vmatprep.subr.bf16.mxu0 0
    %6393 = vmatpush1.bf16.msra.mxu0 %v5093
    %6394 = vmatprep.subr.bf16.mxu0 0
    %6395 = vmatpush1.bf16.msra.mxu0 %v5086
    %6396 = vmatprep.subr.bf16.mxu0 0
    %6397 = vmatpush2.bf16.msra.mxu0 %v5191
    %6398 = vmatprep.subr.bf16.mxu0 0
    %6399 = vmatpush2.bf16.msra.mxu0 %v5184
    %6400 = vmatprep.subr.bf16.mxu0 0
    %6401 = vmatpush2.bf16.msra.mxu0 %v5177
    %6402 = vmatprep.subr.bf16.mxu0 0
    %6403 = vmatpush2.bf16.msra.mxu0 %v5170
    %6404 = vmatprep.subr.bf16.mxu0 0
    %6405 = vmatpush2.bf16.msra.mxu0 %v5163
    %6406 = vmatprep.subr.bf16.mxu0 0
    %6407 = vmatpush2.bf16.msra.mxu0 %v5156
    %6408 = vmatprep.subr.bf16.mxu0 0
    %6409 = vmatpush2.bf16.msra.mxu0 %v5149
    %6410 = vmatprep.subr.bf16.mxu0 0
    %6411 = vmatpush2.bf16.msra.mxu0 %v5142
    %6412 = vmatprep.mubr.bf16.mxu0 %v3357
    %6413 = vmatmul.mubr.bf16.gmra.mxu0 %v3356
    %v6414 = vpop.f32.mrf.mxu0
    %v6415 = vadd.f32 %v3840, %v6414
    %v6416 = vpop.f32.mrf.mxu0
    %v6417 = vpop.f32.mrf.mxu0
    %v6418 = vadd.f32 %v3840, %v6417
    %v6419 = vpop.f32.mrf.mxu0
    %6420 = vdwg.mxu0
    %6421 = vmatprep.subr.bf16.mxu0 0
    %6422 = vmatpush1.bf16.msra.mxu0 %v5247
    %6423 = vmatprep.subr.bf16.mxu0 0
    %6424 = vmatpush1.bf16.msra.mxu0 %v5240
    %6425 = vmatprep.subr.bf16.mxu0 0
    %6426 = vmatpush1.bf16.msra.mxu0 %v5233
    %6427 = vmatprep.subr.bf16.mxu0 0
    %6428 = vmatpush1.bf16.msra.mxu0 %v5226
    %6429 = vmatprep.subr.bf16.mxu0 0
    %6430 = vmatpush1.bf16.msra.mxu0 %v5219
    %6431 = vmatprep.subr.bf16.mxu0 0
    %6432 = vmatpush1.bf16.msra.mxu0 %v5212
    %6433 = vmatprep.subr.bf16.mxu0 0
    %6434 = vmatpush1.bf16.msra.mxu0 %v5205
    %6435 = vmatprep.subr.bf16.mxu0 0
    %6436 = vmatpush1.bf16.msra.mxu0 %v5198
    %6437 = vmatprep.subr.bf16.mxu0 0
    %6438 = vmatpush2.bf16.msra.mxu0 %v5303
    %6439 = vmatprep.subr.bf16.mxu0 0
    %6440 = vmatpush2.bf16.msra.mxu0 %v5296
    %6441 = vmatprep.subr.bf16.mxu0 0
    %6442 = vmatpush2.bf16.msra.mxu0 %v5289
    %6443 = vmatprep.subr.bf16.mxu0 0
    %6444 = vmatpush2.bf16.msra.mxu0 %v5282
    %6445 = vmatprep.subr.bf16.mxu0 0
    %6446 = vmatpush2.bf16.msra.mxu0 %v5275
    %6447 = vmatprep.subr.bf16.mxu0 0
    %6448 = vmatpush2.bf16.msra.mxu0 %v5268
    %6449 = vmatprep.subr.bf16.mxu0 0
    %6450 = vmatpush2.bf16.msra.mxu0 %v5261
    %6451 = vmatprep.subr.bf16.mxu0 0
    %6452 = vmatpush2.bf16.msra.mxu0 %v5254
    %6453 = vmatprep.mubr.bf16.mxu0 %v3359
    %6454 = vmatmul.mubr.bf16.gmra.mxu0 %v3358
    %v6455 = vpop.f32.mrf.mxu0
    %v6456 = vadd.f32 %v6415, %v6455
    %v6457 = vpop.f32.mrf.mxu0
    %v6458 = vpop.f32.mrf.mxu0
    %v6459 = vadd.f32 %v6418, %v6458
    %v6460 = vpop.f32.mrf.mxu0
    %6461 = vdwg.mxu0
    %6462 = vmatprep.subr.bf16.mxu0 0
    %6463 = vmatpush1.bf16.msra.mxu0 %v5359
    %6464 = vmatprep.subr.bf16.mxu0 0
    %6465 = vmatpush1.bf16.msra.mxu0 %v5352
    %6466 = vmatprep.subr.bf16.mxu0 0
    %6467 = vmatpush1.bf16.msra.mxu0 %v5345
    %6468 = vmatprep.subr.bf16.mxu0 0
    %6469 = vmatpush1.bf16.msra.mxu0 %v5338
    %6470 = vmatprep.subr.bf16.mxu0 0
    %6471 = vmatpush1.bf16.msra.mxu0 %v5331
    %6472 = vmatprep.subr.bf16.mxu0 0
    %6473 = vmatpush1.bf16.msra.mxu0 %v5324
    %6474 = vmatprep.subr.bf16.mxu0 0
    %6475 = vmatpush1.bf16.msra.mxu0 %v5317
    %6476 = vmatprep.subr.bf16.mxu0 0
    %6477 = vmatpush1.bf16.msra.mxu0 %v5310
    %6478 = vmatprep.subr.bf16.mxu0 0
    %6479 = vmatpush2.bf16.msra.mxu0 %v5415
    %6480 = vmatprep.subr.bf16.mxu0 0
    %6481 = vmatpush2.bf16.msra.mxu0 %v5408
    %6482 = vmatprep.subr.bf16.mxu0 0
    %6483 = vmatpush2.bf16.msra.mxu0 %v5401
    %6484 = vmatprep.subr.bf16.mxu0 0
    %6485 = vmatpush2.bf16.msra.mxu0 %v5394
    %6486 = vmatprep.subr.bf16.mxu0 0
    %6487 = vmatpush2.bf16.msra.mxu0 %v5387
    %6488 = vmatprep.subr.bf16.mxu0 0
    %6489 = vmatpush2.bf16.msra.mxu0 %v5380
    %6490 = vmatprep.subr.bf16.mxu0 0
    %6491 = vmatpush2.bf16.msra.mxu0 %v5373
    %6492 = vmatprep.subr.bf16.mxu0 0
    %6493 = vmatpush2.bf16.msra.mxu0 %v5366
    %6494 = vmatprep.mubr.bf16.mxu0 %v3361
    %6495 = vmatmul.mubr.bf16.gmra.mxu0 %v3360
    %v6496 = vpop.f32.mrf.mxu0
    %v6497 = vadd.f32 %v6456, %v6496
    %v6498 = vpop.f32.mrf.mxu0
    %v6499 = vpop.f32.mrf.mxu0
    %v6500 = vadd.f32 %v6459, %v6499
    %v6501 = vpop.f32.mrf.mxu0
    %6502 = vdwg.mxu0
    %6503 = vmatprep.subr.bf16.mxu0 0
    %6504 = vmatpush1.bf16.msra.mxu0 %v5471
    %6505 = vmatprep.subr.bf16.mxu0 0
    %6506 = vmatpush1.bf16.msra.mxu0 %v5464
    %6507 = vmatprep.subr.bf16.mxu0 0
    %6508 = vmatpush1.bf16.msra.mxu0 %v5457
    %6509 = vmatprep.subr.bf16.mxu0 0
    %6510 = vmatpush1.bf16.msra.mxu0 %v5450
    %6511 = vmatprep.subr.bf16.mxu0 0
    %6512 = vmatpush1.bf16.msra.mxu0 %v5443
    %6513 = vmatprep.subr.bf16.mxu0 0
    %6514 = vmatpush1.bf16.msra.mxu0 %v5436
    %6515 = vmatprep.subr.bf16.mxu0 0
    %6516 = vmatpush1.bf16.msra.mxu0 %v5429
    %6517 = vmatprep.subr.bf16.mxu0 0
    %6518 = vmatpush1.bf16.msra.mxu0 %v5422
    %6519 = vmatprep.subr.bf16.mxu0 0
    %6520 = vmatpush2.bf16.msra.mxu0 0
    %6521 = vmatprep.subr.bf16.mxu0 0
    %6522 = vmatpush2.bf16.msra.mxu0 0
    %6523 = vmatprep.subr.bf16.mxu0 0
    %6524 = vmatpush2.bf16.msra.mxu0 0
    %6525 = vmatprep.subr.bf16.mxu0 0
    %6526 = vmatpush2.bf16.msra.mxu0 0
    %6527 = vmatprep.subr.bf16.mxu0 0
    %6528 = vmatpush2.bf16.msra.mxu0 0
    %6529 = vmatprep.subr.bf16.mxu0 0
    %6530 = vmatpush2.bf16.msra.mxu0 0
    %6531 = vmatprep.subr.bf16.mxu0 0
    %6532 = vmatpush2.bf16.msra.mxu0 0
    %6533 = vmatprep.subr.bf16.mxu0 0
    %6534 = vmatpush2.bf16.msra.mxu0 0
    %6535 = vmatprep.mubr.bf16.mxu0 0
    %6536 = vmatmul.mubr.bf16.gmra.mxu0 %v3362
    %v6537 = vpop.f32.mrf.mxu0
    %v6538 = vadd.f32 %v6497, %v6537
    %v6539 = vpop.f32.mrf.mxu0
    %v6540 = vpop.f32.mrf.mxu0
    %v6541 = vadd.f32 %v6500, %v6540
    %v6542 = vpop.f32.mrf.mxu0
    %6543 = vdwg.mxu0
    %v6544 = vtanh.pop %v6028
    %v6545 = vtanh.pop %v6030
    %v6546 = vtanh.pop %v6200
    %v6547 = vtanh.pop %v6202
    %v6548 = vtanh.pop %v6372
    %v6549 = vtanh.pop %v6374
    %v6550 = vtanh.pop %v6538
    %v6551 = vtanh.pop %v6032
    %v6552 = vtanh.pop %v6034
    %v6553 = vtanh.pop %v6204
    %v6554 = vtanh.pop %v6206
    %v6555 = vtanh.pop %v6376
    %v6556 = vtanh.pop %v6378
    %v6557 = vtanh.pop %v6541
    %v6558 = vpack.c.bf16 %v6551, %v6544
    %v6559 = vpack.c.bf16 %v6552, %v6545
    %v6560 = vpack.c.bf16 %v6553, %v6546
    %v6561 = vpack.c.bf16 %v6554, %v6547
    %v6562 = vpack.c.bf16 %v6555, %v6548
    %v6563 = vpack.c.bf16 %v6556, %v6549
    %v6564 = vpack.c.bf16 %v6557, %v6550
    %v6565 = vld [vmem:[#allocation11] sm:$0xf]
    %v6566 = vld [vmem:[#allocation11 + $0x4] sm:$0xf]
    %v6567 = vld [vmem:[#allocation11 + $0x8] sm:$0xf]
    %v6568 = vld [vmem:[#allocation11 + $0xc] sm:$0xf]
    %v6569 = vld [vmem:[#allocation11 + $0x10] sm:$0xf]
    %v6570 = vld [vmem:[#allocation11 + $0x14] sm:$0xf]
    %v6571 = vld [vmem:[#allocation11 + $0x18] sm:$0xf]
    %v6572 = vld [vmem:[#allocation11 + $0x1c] sm:$0xf]
    %v6573 = vld [vmem:[#allocation11 + $0x20] sm:$0xf]
    %v6574 = vld [vmem:[#allocation11 + $0x24] sm:$0xf]
    %v6575 = vld [vmem:[#allocation11 + $0x28] sm:$0xf]
    %v6576 = vld [vmem:[#allocation11 + $0x2c] sm:$0xf]
    %v6577 = vld [vmem:[#allocation11 + $0x30] sm:$0xf]
    %v6578 = vld [vmem:[#allocation11 + $0x34] sm:$0xf]
    %v6579 = vld [vmem:[#allocation11 + $0x38] sm:$0xf]
    %v6580 = vld [vmem:[#allocation11 + $0x3c] sm:$0xf]
    %v6581 = vld [vmem:[#allocation11 + $0x40] sm:$0xf]
    %v6582 = vld [vmem:[#allocation11 + $0x44] sm:$0xf]
    %v6583 = vld [vmem:[#allocation11 + $0x48] sm:$0xf]
    %v6584 = vld [vmem:[#allocation11 + $0x4c] sm:$0xf]
    %v6585 = vld [vmem:[#allocation11 + $0x50] sm:$0xf]
    %v6586 = vld [vmem:[#allocation11 + $0x54] sm:$0xf]
    %v6587 = vld [vmem:[#allocation11 + $0x58] sm:$0xf]
    %v6588 = vld [vmem:[#allocation11 + $0x5c] sm:$0xf]
    %v6589 = vld [vmem:[#allocation11 + $0x60] sm:$0xf]
    %v6590 = vld [vmem:[#allocation11 + $0x64] sm:$0xf]
    %v6591 = vld [vmem:[#allocation11 + $0x68] sm:$0xf]
    %v6592 = vld [vmem:[#allocation11 + $0x6c] sm:$0xf]
    %v6593 = vld [vmem:[#allocation11 + $0x70] sm:$0xf]
    %v6594 = vld [vmem:[#allocation11 + $0x74] sm:$0xf]
    %v6595 = vld [vmem:[#allocation11 + $0x78] sm:$0xf]
    %v6596 = vld [vmem:[#allocation11 + $0x7c] sm:$0xf]
    %v6597 = vld [vmem:[#allocation11 + $0x80] sm:$0xf]
    %v6598 = vld [vmem:[#allocation11 + $0x84] sm:$0xf]
    %v6599 = vld [vmem:[#allocation11 + $0x88] sm:$0xf]
    %v6600 = vld [vmem:[#allocation11 + $0x8c] sm:$0xf]
    %v6601 = vld [vmem:[#allocation11 + $0x90] sm:$0xf]
    %v6602 = vld [vmem:[#allocation11 + $0x94] sm:$0xf]
    %v6603 = vld [vmem:[#allocation11 + $0x98] sm:$0xf]
    %v6604 = vld [vmem:[#allocation11 + $0x9c] sm:$0xf]
    %v6605 = vld [vmem:[#allocation11 + $0xa0] sm:$0xf]
    %v6606 = vld [vmem:[#allocation11 + $0xa4] sm:$0xf]
    %v6607 = vld [vmem:[#allocation11 + $0xa8] sm:$0xf]
    %v6608 = vld [vmem:[#allocation11 + $0xac] sm:$0xf]
    %v6609 = vld [vmem:[#allocation11 + $0xb0] sm:$0xf]
    %v6610 = vld [vmem:[#allocation11 + $0xb4] sm:$0xf]
    %v6611 = vld [vmem:[#allocation11 + $0xb8] sm:$0xf]
    %v6612 = vld [vmem:[#allocation11 + $0xbc] sm:$0xf]
    %v6613 = vld [vmem:[#allocation11 + $0xc0] sm:$0xf]
    %v6614 = vld [vmem:[#allocation11 + $0xc4] sm:$0xf]
    %v6615 = vld [vmem:[#allocation11 + $0xc8] sm:$0xf]
    %v6616 = vld [vmem:[#allocation11 + $0xcc] sm:$0xf]
    %v6617 = vld [vmem:[#allocation11 + $0xd0] sm:$0xf]
    %v6618 = vld [vmem:[#allocation11 + $0xd4] sm:$0xf]
    %v6619 = vld [vmem:[#allocation11 + $0xd8] sm:$0xf]
    %v6620 = vld [vmem:[#allocation11 + $0xdc] sm:$0xf]
    %v6621 = vld [vmem:[#allocation11 + $0xe0] sm:$0xf]
    %v6622 = vld [vmem:[#allocation11 + $0xe4] sm:$0xf]
    %v6623 = vld [vmem:[#allocation11 + $0xe8] sm:$0xf]
    %v6624 = vld [vmem:[#allocation11 + $0xec] sm:$0xf]
    %v6625 = vld [vmem:[#allocation11 + $0xf0] sm:$0xf]
    %v6626 = vld [vmem:[#allocation11 + $0xf4] sm:$0xf]
    %v6627 = vld [vmem:[#allocation11 + $0xf8] sm:$0xf]
    %v6628 = vld [vmem:[#allocation11 + $0xfc] sm:$0xf]
    %v6629 = vld [vmem:[#allocation11 + $0x100] sm:$0xf]
    %v6630 = vld [vmem:[#allocation11 + $0x104] sm:$0xf]
    %v6631 = vld [vmem:[#allocation11 + $0x108] sm:$0xf]
    %v6632 = vld [vmem:[#allocation11 + $0x10c] sm:$0xf]
    %v6633 = vld [vmem:[#allocation11 + $0x110] sm:$0xf]
    %v6634 = vld [vmem:[#allocation11 + $0x114] sm:$0xf]
    %v6635 = vld [vmem:[#allocation11 + $0x118] sm:$0xf]
    %v6636 = vld [vmem:[#allocation11 + $0x11c] sm:$0xf]
    %v6637 = vld [vmem:[#allocation11 + $0x120] sm:$0xf]
    %v6638 = vld [vmem:[#allocation11 + $0x124] sm:$0xf]
    %v6639 = vld [vmem:[#allocation11 + $0x128] sm:$0xf]
    %v6640 = vld [vmem:[#allocation11 + $0x12c] sm:$0xf]
    %v6641 = vld [vmem:[#allocation11 + $0x130] sm:$0xf]
    %v6642 = vld [vmem:[#allocation11 + $0x134] sm:$0xf]
    %v6643 = vld [vmem:[#allocation11 + $0x138] sm:$0xf]
    %v6644 = vld [vmem:[#allocation11 + $0x13c] sm:$0xf]
    %v6645 = vld [vmem:[#allocation11 + $0x140] sm:$0xf]
    %v6646 = vld [vmem:[#allocation11 + $0x144] sm:$0xf]
    %v6647 = vld [vmem:[#allocation11 + $0x148] sm:$0xf]
    %v6648 = vld [vmem:[#allocation11 + $0x14c] sm:$0xf]
    %v6649 = vld [vmem:[#allocation11 + $0x150] sm:$0xf]
    %v6650 = vld [vmem:[#allocation11 + $0x154] sm:$0xf]
    %v6651 = vld [vmem:[#allocation11 + $0x158] sm:$0xf]
    %v6652 = vld [vmem:[#allocation11 + $0x15c] sm:$0xf]
    %v6653 = vld [vmem:[#allocation11 + $0x160] sm:$0xf]
    %v6654 = vld [vmem:[#allocation11 + $0x164] sm:$0xf]
    %v6655 = vld [vmem:[#allocation11 + $0x168] sm:$0xf]
    %v6656 = vld [vmem:[#allocation11 + $0x16c] sm:$0xf]
    %v6657 = vld [vmem:[#allocation11 + $0x170] sm:$0xf]
    %v6658 = vld [vmem:[#allocation11 + $0x174] sm:$0xf]
    %v6659 = vld [vmem:[#allocation11 + $0x178] sm:$0xf]
    %v6660 = vld [vmem:[#allocation11 + $0x17c] sm:$0xf]
    %v6661 = vld [vmem:[#allocation11 + $0x180] sm:$0xf]
    %v6662 = vld [vmem:[#allocation11 + $0x184] sm:$0xf]
    %v6663 = vld [vmem:[#allocation11 + $0x188] sm:$0xf]
    %v6664 = vld [vmem:[#allocation11 + $0x18c] sm:$0xf]
    %v6665 = vld [vmem:[#allocation11 + $0x190] sm:$0xf]
    %v6666 = vld [vmem:[#allocation11 + $0x194] sm:$0xf]
    %v6667 = vld [vmem:[#allocation11 + $0x198] sm:$0xf]
    %v6668 = vld [vmem:[#allocation11 + $0x19c] sm:$0xf]
    %v6669 = vld [vmem:[#allocation11 + $0x1a0] sm:$0xf]
    %v6670 = vld [vmem:[#allocation11 + $0x1a4] sm:$0xf]
    %v6671 = vld [vmem:[#allocation11 + $0x1a8] sm:$0xf]
    %v6672 = vld [vmem:[#allocation11 + $0x1ac] sm:$0xf]
    %v6673 = vld [vmem:[#allocation11 + $0x1b0] sm:$0xf]
    %v6674 = vld [vmem:[#allocation11 + $0x1b4] sm:$0xf]
    %v6675 = vld [vmem:[#allocation11 + $0x1b8] sm:$0xf]
    %v6676 = vld [vmem:[#allocation11 + $0x1bc] sm:$0xf]
    %v6677 = vld [vmem:[#allocation13] sm:$0x1]
    %v6679 = vlaneseq
    %v6680 = vshrl.u32 %v6679, 7
    %v6681 = vsub.s32 0, %v6680
    %v6682 = vrot.slane %v6677, %v6681
    %v6796 = vunpack.c.l.b16 %v6565
    %v6797 = vunpack.c.l.b16 %v6566
    %v6798 = vunpack.c.l.b16 %v6567
    %v6799 = vunpack.c.l.b16 %v6568
    %v6800 = vunpack.c.l.b16 %v6569
    %v6801 = vunpack.c.l.b16 %v6570
    %v6802 = vunpack.c.l.b16 %v6571
    %v6803 = vunpack.c.l.b16 %v6572
    %v6804 = vunpack.c.l.b16 %v6573
    %v6805 = vunpack.c.l.b16 %v6574
    %v6806 = vunpack.c.l.b16 %v6575
    %v6807 = vunpack.c.l.b16 %v6576
    %v6808 = vunpack.c.l.b16 %v6577
    %v6809 = vunpack.c.l.b16 %v6578
    %v6810 = vunpack.c.l.b16 %v6579
    %v6811 = vunpack.c.l.b16 %v6580
    %v6812 = vunpack.c.l.b16 %v6581
    %v6813 = vunpack.c.l.b16 %v6582
    %v6814 = vunpack.c.l.b16 %v6583
    %v6815 = vunpack.c.l.b16 %v6584
    %v6816 = vunpack.c.l.b16 %v6585
    %v6817 = vunpack.c.l.b16 %v6586
    %v6818 = vunpack.c.l.b16 %v6587
    %v6819 = vunpack.c.l.b16 %v6588
    %v6820 = vunpack.c.l.b16 %v6589
    %v6821 = vunpack.c.l.b16 %v6590
    %v6822 = vunpack.c.l.b16 %v6591
    %v6823 = vunpack.c.l.b16 %v6592
    %v6824 = vunpack.c.l.b16 %v6593
    %v6825 = vunpack.c.l.b16 %v6594
    %v6826 = vunpack.c.l.b16 %v6595
    %v6827 = vunpack.c.l.b16 %v6596
    %v6828 = vunpack.c.l.b16 %v6597
    %v6829 = vunpack.c.l.b16 %v6598
    %v6830 = vunpack.c.l.b16 %v6599
    %v6831 = vunpack.c.l.b16 %v6600
    %v6832 = vunpack.c.l.b16 %v6601
    %v6833 = vunpack.c.l.b16 %v6602
    %v6834 = vunpack.c.l.b16 %v6603
    %v6835 = vunpack.c.l.b16 %v6604
    %v6836 = vunpack.c.l.b16 %v6605
    %v6837 = vunpack.c.l.b16 %v6606
    %v6838 = vunpack.c.l.b16 %v6607
    %v6839 = vunpack.c.l.b16 %v6608
    %v6840 = vunpack.c.l.b16 %v6609
    %v6841 = vunpack.c.l.b16 %v6610
    %v6842 = vunpack.c.l.b16 %v6611
    %v6843 = vunpack.c.l.b16 %v6612
    %v6844 = vunpack.c.l.b16 %v6613
    %v6845 = vunpack.c.l.b16 %v6614
    %v6846 = vunpack.c.l.b16 %v6615
    %v6847 = vunpack.c.l.b16 %v6616
    %v6848 = vunpack.c.l.b16 %v6617
    %v6849 = vunpack.c.l.b16 %v6618
    %v6850 = vunpack.c.l.b16 %v6619
    %v6851 = vunpack.c.l.b16 %v6620
    %v6852 = vunpack.c.l.b16 %v6621
    %v6853 = vunpack.c.l.b16 %v6622
    %v6854 = vunpack.c.l.b16 %v6623
    %v6855 = vunpack.c.l.b16 %v6624
    %v6856 = vunpack.c.l.b16 %v6625
    %v6857 = vunpack.c.l.b16 %v6626
    %v6858 = vunpack.c.l.b16 %v6627
    %v6859 = vunpack.c.l.b16 %v6628
    %v6860 = vunpack.c.l.b16 %v6629
    %v6861 = vunpack.c.l.b16 %v6630
    %v6862 = vunpack.c.l.b16 %v6631
    %v6863 = vunpack.c.l.b16 %v6632
    %v6864 = vunpack.c.l.b16 %v6633
    %v6865 = vunpack.c.l.b16 %v6634
    %v6866 = vunpack.c.l.b16 %v6635
    %v6867 = vunpack.c.l.b16 %v6636
    %v6868 = vunpack.c.l.b16 %v6637
    %v6869 = vunpack.c.l.b16 %v6638
    %v6870 = vunpack.c.l.b16 %v6639
    %v6871 = vunpack.c.l.b16 %v6640
    %v6872 = vunpack.c.l.b16 %v6641
    %v6873 = vunpack.c.l.b16 %v6642
    %v6874 = vunpack.c.l.b16 %v6643
    %v6875 = vunpack.c.l.b16 %v6644
    %v6876 = vunpack.c.l.b16 %v6645
    %v6877 = vunpack.c.l.b16 %v6646
    %v6878 = vunpack.c.l.b16 %v6647
    %v6879 = vunpack.c.l.b16 %v6648
    %v6880 = vunpack.c.l.b16 %v6649
    %v6881 = vunpack.c.l.b16 %v6650
    %v6882 = vunpack.c.l.b16 %v6651
    %v6883 = vunpack.c.l.b16 %v6652
    %v6884 = vunpack.c.l.b16 %v6653
    %v6885 = vunpack.c.l.b16 %v6654
    %v6886 = vunpack.c.l.b16 %v6655
    %v6887 = vunpack.c.l.b16 %v6656
    %v6888 = vunpack.c.l.b16 %v6657
    %v6889 = vunpack.c.l.b16 %v6658
    %v6890 = vunpack.c.l.b16 %v6659
    %v6891 = vunpack.c.l.b16 %v6660
    %v6892 = vunpack.c.l.b16 %v6661
    %v6893 = vunpack.c.l.b16 %v6662
    %v6894 = vunpack.c.l.b16 %v6663
    %v6895 = vunpack.c.l.b16 %v6664
    %v6896 = vunpack.c.l.b16 %v6665
    %v6897 = vunpack.c.l.b16 %v6666
    %v6898 = vunpack.c.l.b16 %v6667
    %v6899 = vunpack.c.l.b16 %v6668
    %v6900 = vunpack.c.l.b16 %v6669
    %v6901 = vunpack.c.l.b16 %v6670
    %v6902 = vunpack.c.l.b16 %v6671
    %v6903 = vunpack.c.l.b16 %v6672
    %v6904 = vunpack.c.l.b16 %v6673
    %v6905 = vunpack.c.l.b16 %v6674
    %v6906 = vunpack.c.l.b16 %v6675
    %v6907 = vunpack.c.l.b16 %v6676
    %v6908 = vpack.c.b16 %v6797, %v6796
    %v6909 = vpack.c.b16 %v6799, %v6798
    %v6910 = vpack.c.b16 %v6801, %v6800
    %v6911 = vpack.c.b16 %v6803, %v6802
    %v6912 = vpack.c.b16 %v6805, %v6804
    %v6913 = vpack.c.b16 %v6807, %v6806
    %v6914 = vpack.c.b16 %v6809, %v6808
    %v6915 = vpack.c.b16 %v6811, %v6810
    %v6916 = vpack.c.b16 %v6813, %v6812
    %v6917 = vpack.c.b16 %v6815, %v6814
    %v6918 = vpack.c.b16 %v6817, %v6816
    %v6919 = vpack.c.b16 %v6819, %v6818
    %v6920 = vpack.c.b16 %v6821, %v6820
    %v6921 = vpack.c.b16 %v6823, %v6822
    %v6922 = vpack.c.b16 %v6825, %v6824
    %v6923 = vpack.c.b16 %v6827, %v6826
    %v6924 = vpack.c.b16 %v6829, %v6828
    %v6925 = vpack.c.b16 %v6831, %v6830
    %v6926 = vpack.c.b16 %v6833, %v6832
    %v6927 = vpack.c.b16 %v6835, %v6834
    %v6928 = vpack.c.b16 %v6837, %v6836
    %v6929 = vpack.c.b16 %v6839, %v6838
    %v6930 = vpack.c.b16 %v6841, %v6840
    %v6931 = vpack.c.b16 %v6843, %v6842
    %v6932 = vpack.c.b16 %v6845, %v6844
    %v6933 = vpack.c.b16 %v6847, %v6846
    %v6934 = vpack.c.b16 %v6849, %v6848
    %v6935 = vpack.c.b16 %v6851, %v6850
    %v6936 = vpack.c.b16 %v6853, %v6852
    %v6937 = vpack.c.b16 %v6855, %v6854
    %v6938 = vpack.c.b16 %v6857, %v6856
    %v6939 = vpack.c.b16 %v6859, %v6858
    %v6940 = vpack.c.b16 %v6861, %v6860
    %v6941 = vpack.c.b16 %v6863, %v6862
    %v6942 = vpack.c.b16 %v6865, %v6864
    %v6943 = vpack.c.b16 %v6867, %v6866
    %v6944 = vpack.c.b16 %v6869, %v6868
    %v6945 = vpack.c.b16 %v6871, %v6870
    %v6946 = vpack.c.b16 %v6873, %v6872
    %v6947 = vpack.c.b16 %v6875, %v6874
    %v6948 = vpack.c.b16 %v6877, %v6876
    %v6949 = vpack.c.b16 %v6879, %v6878
    %v6950 = vpack.c.b16 %v6881, %v6880
    %v6951 = vpack.c.b16 %v6883, %v6882
    %v6952 = vpack.c.b16 %v6885, %v6884
    %v6953 = vpack.c.b16 %v6887, %v6886
    %v6954 = vpack.c.b16 %v6889, %v6888
    %v6955 = vpack.c.b16 %v6891, %v6890
    %v6956 = vpack.c.b16 %v6893, %v6892
    %v6957 = vpack.c.b16 %v6895, %v6894
    %v6958 = vpack.c.b16 %v6897, %v6896
    %v6959 = vpack.c.b16 %v6899, %v6898
    %v6960 = vpack.c.b16 %v6901, %v6900
    %v6961 = vpack.c.b16 %v6903, %v6902
    %v6962 = vpack.c.b16 %v6905, %v6904
    %v6963 = vpack.c.b16 %v6907, %v6906
    %7020 = vmatprep.subr.bf16.mxu0 0
    %7021 = vmatpush1.bf16.msra.mxu0 %v6915
    %7022 = vmatprep.subr.bf16.mxu0 0
    %7023 = vmatpush1.bf16.msra.mxu0 %v6914
    %7024 = vmatprep.subr.bf16.mxu0 0
    %7025 = vmatpush1.bf16.msra.mxu0 %v6913
    %7026 = vmatprep.subr.bf16.mxu0 0
    %7027 = vmatpush1.bf16.msra.mxu0 %v6912
    %7028 = vmatprep.subr.bf16.mxu0 0
    %7029 = vmatpush1.bf16.msra.mxu0 %v6911
    %7030 = vmatprep.subr.bf16.mxu0 0
    %7031 = vmatpush1.bf16.msra.mxu0 %v6910
    %7032 = vmatprep.subr.bf16.mxu0 0
    %7033 = vmatpush1.bf16.msra.mxu0 %v6909
    %7034 = vmatprep.subr.bf16.mxu0 0
    %7035 = vmatpush1.bf16.msra.mxu0 %v6908
    %7036 = vmatprep.subr.bf16.mxu0 0
    %7037 = vmatpush2.bf16.msra.mxu0 %v6923
    %7038 = vmatprep.subr.bf16.mxu0 0
    %7039 = vmatpush2.bf16.msra.mxu0 %v6922
    %7040 = vmatprep.subr.bf16.mxu0 0
    %7041 = vmatpush2.bf16.msra.mxu0 %v6921
    %7042 = vmatprep.subr.bf16.mxu0 0
    %7043 = vmatpush2.bf16.msra.mxu0 %v6920
    %7044 = vmatprep.subr.bf16.mxu0 0
    %7045 = vmatpush2.bf16.msra.mxu0 %v6919
    %7046 = vmatprep.subr.bf16.mxu0 0
    %7047 = vmatpush2.bf16.msra.mxu0 %v6918
    %7048 = vmatprep.subr.bf16.mxu0 0
    %7049 = vmatpush2.bf16.msra.mxu0 %v6917
    %7050 = vmatprep.subr.bf16.mxu0 0
    %7051 = vmatpush2.bf16.msra.mxu0 %v6916
    %7052 = vmatprep.mubr.bf16.mxu0 %v6559
    %7053 = vmatmul.mubr.bf16.gmra.mxu0 %v6558
    %v7054 = vpop.f32.mrf.mxu0
    %v7055 = vadd.f32 %v6682, %v7054
    %v7056 = vpop.f32.mrf.mxu0
    %v7057 = vpop.f32.mrf.mxu0
    %v7058 = vadd.f32 %v6682, %v7057
    %v7059 = vpop.f32.mrf.mxu0
    %7060 = vdwg.mxu0
    %7061 = vmatprep.subr.bf16.mxu0 0
    %7062 = vmatpush1.bf16.msra.mxu0 %v6931
    %7063 = vmatprep.subr.bf16.mxu0 0
    %7064 = vmatpush1.bf16.msra.mxu0 %v6930
    %7065 = vmatprep.subr.bf16.mxu0 0
    %7066 = vmatpush1.bf16.msra.mxu0 %v6929
    %7067 = vmatprep.subr.bf16.mxu0 0
    %7068 = vmatpush1.bf16.msra.mxu0 %v6928
    %7069 = vmatprep.subr.bf16.mxu0 0
    %7070 = vmatpush1.bf16.msra.mxu0 %v6927
    %7071 = vmatprep.subr.bf16.mxu0 0
    %7072 = vmatpush1.bf16.msra.mxu0 %v6926
    %7073 = vmatprep.subr.bf16.mxu0 0
    %7074 = vmatpush1.bf16.msra.mxu0 %v6925
    %7075 = vmatprep.subr.bf16.mxu0 0
    %7076 = vmatpush1.bf16.msra.mxu0 %v6924
    %7077 = vmatprep.subr.bf16.mxu0 0
    %7078 = vmatpush2.bf16.msra.mxu0 %v6939
    %7079 = vmatprep.subr.bf16.mxu0 0
    %7080 = vmatpush2.bf16.msra.mxu0 %v6938
    %7081 = vmatprep.subr.bf16.mxu0 0
    %7082 = vmatpush2.bf16.msra.mxu0 %v6937
    %7083 = vmatprep.subr.bf16.mxu0 0
    %7084 = vmatpush2.bf16.msra.mxu0 %v6936
    %7085 = vmatprep.subr.bf16.mxu0 0
    %7086 = vmatpush2.bf16.msra.mxu0 %v6935
    %7087 = vmatprep.subr.bf16.mxu0 0
    %7088 = vmatpush2.bf16.msra.mxu0 %v6934
    %7089 = vmatprep.subr.bf16.mxu0 0
    %7090 = vmatpush2.bf16.msra.mxu0 %v6933
    %7091 = vmatprep.subr.bf16.mxu0 0
    %7092 = vmatpush2.bf16.msra.mxu0 %v6932
    %7093 = vmatprep.mubr.bf16.mxu0 %v6561
    %7094 = vmatmul.mubr.bf16.gmra.mxu0 %v6560
    %v7095 = vpop.f32.mrf.mxu0
    %v7096 = vadd.f32 %v7055, %v7095
    %v7097 = vpop.f32.mrf.mxu0
    %v7098 = vpop.f32.mrf.mxu0
    %v7099 = vadd.f32 %v7058, %v7098
    %v7100 = vpop.f32.mrf.mxu0
    %7101 = vdwg.mxu0
    %7102 = vmatprep.subr.bf16.mxu0 0
    %7103 = vmatpush1.bf16.msra.mxu0 %v6947
    %7104 = vmatprep.subr.bf16.mxu0 0
    %7105 = vmatpush1.bf16.msra.mxu0 %v6946
    %7106 = vmatprep.subr.bf16.mxu0 0
    %7107 = vmatpush1.bf16.msra.mxu0 %v6945
    %7108 = vmatprep.subr.bf16.mxu0 0
    %7109 = vmatpush1.bf16.msra.mxu0 %v6944
    %7110 = vmatprep.subr.bf16.mxu0 0
    %7111 = vmatpush1.bf16.msra.mxu0 %v6943
    %7112 = vmatprep.subr.bf16.mxu0 0
    %7113 = vmatpush1.bf16.msra.mxu0 %v6942
    %7114 = vmatprep.subr.bf16.mxu0 0
    %7115 = vmatpush1.bf16.msra.mxu0 %v6941
    %7116 = vmatprep.subr.bf16.mxu0 0
    %7117 = vmatpush1.bf16.msra.mxu0 %v6940
    %7118 = vmatprep.subr.bf16.mxu0 0
    %7119 = vmatpush2.bf16.msra.mxu0 %v6955
    %7120 = vmatprep.subr.bf16.mxu0 0
    %7121 = vmatpush2.bf16.msra.mxu0 %v6954
    %7122 = vmatprep.subr.bf16.mxu0 0
    %7123 = vmatpush2.bf16.msra.mxu0 %v6953
    %7124 = vmatprep.subr.bf16.mxu0 0
    %7125 = vmatpush2.bf16.msra.mxu0 %v6952
    %7126 = vmatprep.subr.bf16.mxu0 0
    %7127 = vmatpush2.bf16.msra.mxu0 %v6951
    %7128 = vmatprep.subr.bf16.mxu0 0
    %7129 = vmatpush2.bf16.msra.mxu0 %v6950
    %7130 = vmatprep.subr.bf16.mxu0 0
    %7131 = vmatpush2.bf16.msra.mxu0 %v6949
    %7132 = vmatprep.subr.bf16.mxu0 0
    %7133 = vmatpush2.bf16.msra.mxu0 %v6948
    %7134 = vmatprep.mubr.bf16.mxu0 %v6563
    %7135 = vmatmul.mubr.bf16.gmra.mxu0 %v6562
    %v7136 = vpop.f32.mrf.mxu0
    %v7137 = vadd.f32 %v7096, %v7136
    %v7138 = vpop.f32.mrf.mxu0
    %v7139 = vpop.f32.mrf.mxu0
    %v7140 = vadd.f32 %v7099, %v7139
    %v7141 = vpop.f32.mrf.mxu0
    %7142 = vdwg.mxu0
    %7143 = vmatprep.subr.bf16.mxu0 0
    %7144 = vmatpush1.bf16.msra.mxu0 %v6963
    %7145 = vmatprep.subr.bf16.mxu0 0
    %7146 = vmatpush1.bf16.msra.mxu0 %v6962
    %7147 = vmatprep.subr.bf16.mxu0 0
    %7148 = vmatpush1.bf16.msra.mxu0 %v6961
    %7149 = vmatprep.subr.bf16.mxu0 0
    %7150 = vmatpush1.bf16.msra.mxu0 %v6960
    %7151 = vmatprep.subr.bf16.mxu0 0
    %7152 = vmatpush1.bf16.msra.mxu0 %v6959
    %7153 = vmatprep.subr.bf16.mxu0 0
    %7154 = vmatpush1.bf16.msra.mxu0 %v6958
    %7155 = vmatprep.subr.bf16.mxu0 0
    %7156 = vmatpush1.bf16.msra.mxu0 %v6957
    %7157 = vmatprep.subr.bf16.mxu0 0
    %7158 = vmatpush1.bf16.msra.mxu0 %v6956
    %7159 = vmatprep.subr.bf16.mxu0 0
    %7160 = vmatpush2.bf16.msra.mxu0 0
    %7161 = vmatprep.subr.bf16.mxu0 0
    %7162 = vmatpush2.bf16.msra.mxu0 0
    %7163 = vmatprep.subr.bf16.mxu0 0
    %7164 = vmatpush2.bf16.msra.mxu0 0
    %7165 = vmatprep.subr.bf16.mxu0 0
    %7166 = vmatpush2.bf16.msra.mxu0 0
    %7167 = vmatprep.subr.bf16.mxu0 0
    %7168 = vmatpush2.bf16.msra.mxu0 0
    %7169 = vmatprep.subr.bf16.mxu0 0
    %7170 = vmatpush2.bf16.msra.mxu0 0
    %7171 = vmatprep.subr.bf16.mxu0 0
    %7172 = vmatpush2.bf16.msra.mxu0 0
    %7173 = vmatprep.subr.bf16.mxu0 0
    %7174 = vmatpush2.bf16.msra.mxu0 0
    %7175 = vmatprep.mubr.bf16.mxu0 0
    %7176 = vmatmul.mubr.bf16.gmra.mxu0 %v6564
    %v7177 = vpop.f32.mrf.mxu0
    %v7178 = vadd.f32 %v7137, %v7177
    %v7179 = vpop.f32.mrf.mxu0
    %v7180 = vpop.f32.mrf.mxu0
    %v7181 = vadd.f32 %v7140, %v7180
    %v7182 = vpop.f32.mrf.mxu0
    %7183 = vdwg.mxu0
    %7184 = vst [vmem:[#allocation14] sm:$0xff] %v7178
    %7185 = vst [vmem:[#allocation14 + $0x8] sm:$0xff] %v7181
    // Predicated region
    $region58: #{tpu_custom_call.1} parent=1 // pred_check
      _
    $region59: #{tpu_custom_call.1} parent=1 // pred_check_branch
      %7187 = sbr.rel (0) target = $region61
    $region60: #{tpu_custom_call.1} parent=1 // pred_region
      %s7189 = ssub.s32 256, 256
      %7190 = vsyncadd [#allocation4], %s7189
      %s7191 = sshll.u32 [#allocation14], 4
      %s7192 = int_to_ptr.vmem [resolvable:$true] %s7191
      %7197 = dma.vmem_to_hbm [thread:$0]  %s7192, 256, %s7, [#allocation4], 128, 128, 8
    $region61: #{tpu_custom_call.1} parent=1 // pred_fallthru
      _
    // Predicated region
    $region62: #{tpu_custom_call.1} parent=1 // pred_check
      _
    $region63: #{tpu_custom_call.1} parent=1 // pred_check_branch
      %7199 = sbr.rel (0) target = $region65
    $region64: #{tpu_custom_call.1} parent=1 // pred_region
      %7200 = dma.done [#allocation4], 256
    $region65: #{tpu_custom_call.1} parent=1 // pred_fallthru
      _
    %7201 = vsyncpa [#allocation3], 1
    %7202 = vsyncpa [#allocation6], 1
    %7203 = vsyncpa [#allocation9], 1
    %7204 = vsyncpa [#allocation12], 1
    %7205 = vsyncpa [#allocation4], 1

// kernel: tpu_custom_call.1
$region0: #{tpu_custom_call.1}
  #allocation0 [shape = 'u32[]', space=smem, size = 0x4, offset = 0x4, fixed_abs, tag = 'smem constant byte address 0x4 - core index']
  #allocation1 [shape = 'u32[144,128]{1,0:T(1,128)}', space=vmem, size = 0x12000, scoped, tag = 'internal scratch']
  %s0 = inlined_call_operand.hbm [shape: bf16[16,896], index: 0, kind: input, shape index: {}]
  %s1 = inlined_call_operand.hbm [shape: bf16[896,896], index: 1, kind: input, shape index: {}]
  %s2 = inlined_call_operand.hbm [shape: f32[1,896], index: 2, kind: input, shape index: {}]
  %s3 = inlined_call_operand.hbm [shape: bf16[896,896], index: 3, kind: input, shape index: {}]
  %s4 = inlined_call_operand.hbm [shape: f32[1,896], index: 4, kind: input, shape index: {}]
  %s5 = inlined_call_operand.hbm [shape: bf16[896,128], index: 5, kind: input, shape index: {}]
  %s6 = inlined_call_operand.hbm [shape: f32[1,128], index: 6, kind: input, shape index: {}]
  %s7 = inlined_call_operand.hbm [shape: f32[16,128], index: 7, kind: output, shape index: {}]
  %s8 = sld [smem:[#allocation0]]
  $region66: #{tpu_custom_call.1} parent=0
    _
  %s10 = ssub.s32 1, %s8
  %s11 = scalar_select 0, %s10, %s8
  $region1: #{tpu_custom_call.1} parent=0
    #allocation2 [shape = 'u8[28672]{0}', space=vmem, size = 0x7000, scoped, tag = 'input window, operand 0, single buffered']
    #allocation3 [shape = 's32[1]{0}', space=sflag, size = 0x4, scoped, tag = 'scoped memory for tpu_custom_call.1']
    #allocation4 [shape = 's32[1]{0}', space=sflag, size = 0x4, scoped, tag = 'scoped memory for tpu_custom_call.1']
    #allocation5 [shape = 'u8[1605632]{0}', space=vmem, size = 0x188000, scoped, tag = 'input window, operand 1, single buffered']
    #allocation6 [shape = 's32[1]{0}', space=sflag, size = 0x4, scoped, tag = 'scoped memory for tpu_custom_call.1']
    #allocation7 [shape = 'u8[3584]{0}', space=vmem, size = 0x1000, scoped, tag = 'input window, operand 2, single buffered']
    #allocation8 [shape = 'u8[1605632]{0}', space=vmem, size = 0x188000, scoped, tag = 'input window, operand 3, single buffered']
    #allocation9 [shape = 's32[1]{0}', space=sflag, size = 0x4, scoped, tag = 'scoped memory for tpu_custom_call.1']
    #allocation10 [shape = 'u8[3584]{0}', space=vmem, size = 0x1000, scoped, tag = 'input window, operand 4, single buffered']
    #allocation11 [shape = 'u8[229376]{0}', space=vmem, size = 0x38000, scoped, tag = 'input window, operand 5, single buffered']
    #allocation12 [shape = 's32[1]{0}', space=sflag, size = 0x4, scoped, tag = 'scoped memory for tpu_custom_call.1']
    #allocation13 [shape = 'u8[512]{0}', space=vmem, size = 0x400, scoped, tag = 'input window, operand 6, single buffered']
    #allocation14 [shape = 'u8[8192]{0}', space=vmem, size = 0x2000, scoped, tag = 'output window, operand 0, single buffered']
    %12 = vsyncpa [#allocation3], 0
    %13 = vsyncpa [#allocation6], 0
    %14 = vsyncpa [#allocation9], 0
    %15 = vsyncpa [#allocation12], 0
    %16 = vsyncpa [#allocation4], 0
    // Predicated region
    $region2: #{tpu_custom_call.1} parent=1 // pred_check
      _
    $region3: #{tpu_custom_call.1} parent=1 // pred_check_branch
      %18 = sbr.rel (0) target = $region5
    $region4: #{tpu_custom_call.1} parent=1 // pred_region
      %s20 = ssub.s32 896, 896
      %21 = vsyncadd [#allocation3], %s20
      %s22 = sshll.u32 [#allocation2], 4
      %s23 = int_to_ptr.vmem [resolvable:$true] %s22
      %28 = dma.hbm_to_vmem [thread:$0]  %s0, 896, %s23, [#allocation3], 448, 448, 28
    $region5: #{tpu_custom_call.1} parent=1 // pred_fallthru
      _
    // Predicated region
    $region6: #{tpu_custom_call.1} parent=1 // pred_check
      _
    $region7: #{tpu_custom_call.1} parent=1 // pred_check_branch
      %30 = sbr.rel (0) target = $region9
    $region8: #{tpu_custom_call.1} parent=1 // pred_region
      %s32 = ssub.s32 50176, 50176
      %33 = vsyncadd [#allocation6], %s32
      %s34 = sshll.u32 [#allocation5], 4
      %s35 = int_to_ptr.vmem [resolvable:$true] %s34
      %40 = dma.hbm_to_vmem [thread:$0]  %s1, 50176, %s35, [#allocation6], 448, 448, 28
    $region9: #{tpu_custom_call.1} parent=1 // pred_fallthru
      _
    // Predicated region
    $region10: #{tpu_custom_call.1} parent=1 // pred_check
      _
    $region11: #{tpu_custom_call.1} parent=1 // pred_check_branch
      %42 = sbr.rel (0) target = $region13
    $region12: #{tpu_custom_call.1} parent=1 // pred_region
      %s44 = ssub.s32 112, 112
      %45 = vsyncadd [#allocation6], %s44
      %s47 = sshll.u32 [#allocation7], 4
      %s48 = int_to_ptr.vmem [resolvable:$true] %s47
      %50 = dma.hbm_to_vmem [thread:$0]  %s2, 112, %s48, [#allocation6]
    $region13: #{tpu_custom_call.1} parent=1 // pred_fallthru
      _
    // Predicated region
    $region14: #{tpu_custom_call.1} parent=1 // pred_check
      _
    $region15: #{tpu_custom_call.1} parent=1 // pred_check_branch
      %52 = sbr.rel (0) target = $region17
    $region16: #{tpu_custom_call.1} parent=1 // pred_region
      %s54 = ssub.s32 50176, 50176
      %55 = vsyncadd [#allocation9], %s54
      %s56 = sshll.u32 [#allocation8], 4
      %s57 = int_to_ptr.vmem [resolvable:$true] %s56
      %62 = dma.hbm_to_vmem [thread:$0]  %s3, 50176, %s57, [#allocation9], 448, 448, 28
    $region17: #{tpu_custom_call.1} parent=1 // pred_fallthru
      _
    // Predicated region
    $region18: #{tpu_custom_call.1} parent=1 // pred_check
      _
    $region19: #{tpu_custom_call.1} parent=1 // pred_check_branch
      %64 = sbr.rel (0) target = $region21
    $region20: #{tpu_custom_call.1} parent=1 // pred_region
      %s66 = ssub.s32 112, 112
      %67 = vsyncadd [#allocation9], %s66
      %s69 = sshll.u32 [#allocation10], 4
      %s70 = int_to_ptr.vmem [resolvable:$true] %s69
      %72 = dma.hbm_to_vmem [thread:$0]  %s4, 112, %s70, [#allocation9]
    $region21: #{tpu_custom_call.1} parent=1 // pred_fallthru
      _
    // Predicated region
    $region22: #{tpu_custom_call.1} parent=1 // pred_check
      _
    $region23: #{tpu_custom_call.1} parent=1 // pred_check_branch
      %74 = sbr.rel (0) target = $region25
    $region24: #{tpu_custom_call.1} parent=1 // pred_region
      %s76 = ssub.s32 7168, 7168
      %77 = vsyncadd [#allocation12], %s76
      %s78 = sshll.u32 [#allocation11], 4
      %s79 = int_to_ptr.vmem [resolvable:$true] %s78
      %84 = dma.hbm_to_vmem [thread:$0]  %s5, 7168, %s79, [#allocation12], 64, 64, 4
    $region25: #{tpu_custom_call.1} parent=1 // pred_fallthru
      _
    // Predicated region
    $region26: #{tpu_custom_call.1} parent=1 // pred_check
      _
    $region27: #{tpu_custom_call.1} parent=1 // pred_check_branch
      %86 = sbr.rel (0) target = $region29
    $region28: #{tpu_custom_call.1} parent=1 // pred_region
      %s88 = ssub.s32 16, 16
      %89 = vsyncadd [#allocation12], %s88
      %s91 = sshll.u32 [#allocation13], 4
      %s92 = int_to_ptr.vmem [resolvable:$true] %s91
      %94 = dma.hbm_to_vmem [thread:$0]  %s6, 16, %s92, [#allocation12]
    $region29: #{tpu_custom_call.1} parent=1 // pred_fallthru
      _
    // Predicated region
    $region30: #{tpu_custom_call.1} parent=1 // pred_check
      _
    $region31: #{tpu_custom_call.1} parent=1 // pred_check_branch
      %96 = sbr.rel (0) target = $region33
    $region32: #{tpu_custom_call.1} parent=1 // pred_region
      %97 = dma.done [#allocation3], 896
    $region33: #{tpu_custom_call.1} parent=1 // pred_fallthru
      _
    // Predicated region
    $region34: #{tpu_custom_call.1} parent=1 // pred_check
      _
    $region35: #{tpu_custom_call.1} parent=1 // pred_check_branch
      %99 = sbr.rel (0) target = $region37
    $region36: #{tpu_custom_call.1} parent=1 // pred_region
      %100 = dma.done [#allocation6], 50176
    $region37: #{tpu_custom_call.1} parent=1 // pred_fallthru
      _
    // Predicated region
    $region38: #{tpu_custom_call.1} parent=1 // pred_check
      _
    $region39: #{tpu_custom_call.1} parent=1 // pred_check_branch
      %102 = sbr.rel (0) target = $region41
    $region40: #{tpu_custom_call.1} parent=1 // pred_region
      %103 = dma.done [#allocation6], 112
    $region41: #{tpu_custom_call.1} parent=1 // pred_fallthru
      _
    // Predicated region
    $region42: #{tpu_custom_call.1} parent=1 // pred_check
      _
    $region43: #{tpu_custom_call.1} parent=1 // pred_check_branch
      %105 = sbr.rel (0) target = $region45
    $region44: #{tpu_custom_call.1} parent=1 // pred_region
      %106 = dma.done [#allocation9], 50176
    $region45: #{tpu_custom_call.1} parent=1 // pred_fallthru
      _
    // Predicated region
    $region46: #{tpu_custom_call.1} parent=1 // pred_check
      _
    $region47: #{tpu_custom_call.1} parent=1 // pred_check_branch
      %108 = sbr.rel (0) target = $region49
    $region48: #{tpu_custom_call.1} parent=1 // pred_region
      %109 = dma.done [#allocation9], 112
    $region49: #{tpu_custom_call.1} parent=1 // pred_fallthru
      _
    // Predicated region
    $region50: #{tpu_custom_call.1} parent=1 // pred_check
      _
    $region51: #{tpu_custom_call.1} parent=1 // pred_check_branch
      %111 = sbr.rel (0) target = $region53
    $region52: #{tpu_custom_call.1} parent=1 // pred_region
      %112 = dma.done [#allocation12], 7168
    $region53: #{tpu_custom_call.1} parent=1 // pred_fallthru
      _
    // Predicated region
    $region54: #{tpu_custom_call.1} parent=1 // pred_check
      _
    $region55: #{tpu_custom_call.1} parent=1 // pred_check_branch
      %114 = sbr.rel (0) target = $region57
    $region56: #{tpu_custom_call.1} parent=1 // pred_region
      %115 = dma.done [#allocation12], 16
    $region57: #{tpu_custom_call.1} parent=1 // pred_fallthru
      _
    %v117 = vld [vmem:[#allocation2] sm:$0xff]
    %v118 = vld [vmem:[#allocation2 + $0x8] sm:$0xff]
    %v119 = vld [vmem:[#allocation2 + $0x10] sm:$0xff]
    %v120 = vld [vmem:[#allocation2 + $0x18] sm:$0xf]
    %v121 = vld [vmem:[#allocation2 + $0x1c] sm:$0xff]
    %v122 = vld [vmem:[#allocation2 + $0x24] sm:$0xff]
    %v123 = vld [vmem:[#allocation2 + $0x2c] sm:$0xff]
    %v124 = vld [vmem:[#allocation2 + $0x34] sm:$0xf]
    %v125 = vld [vmem:[#allocation5] sm:$0xff]
    %v126 = vld [vmem:[#allocation5 + $0x8] sm:$0xff]
    %v127 = vld [vmem:[#allocation5 + $0x10] sm:$0xff]
    %v128 = vld [vmem:[#allocation5 + $0x18] sm:$0xf]
    %v129 = vld [vmem:[#allocation5 + $0x1c] sm:$0xff]
    %v130 = vld [vmem:[#allocation5 + $0x24] sm:$0xff]
    %v131 = vld [vmem:[#allocation5 + $0x2c] sm:$0xff]
    %v132 = vld [vmem:[#allocation5 + $0x34] sm:$0xf]
    %v133 = vld [vmem:[#allocation5 + $0x38] sm:$0xff]
    %v134 = vld [vmem:[#allocation5 + $0x40] sm:$0xff]
    %v135 = vld [vmem:[#allocation5 + $0x48] sm:$0xff]
    %v136 = vld [vmem:[#allocation5 + $0x50] sm:$0xf]
    %v137 = vld [vmem:[#allocation5 + $0x54] sm:$0xff]
    %v138 = vld [vmem:[#allocation5 + $0x5c] sm:$0xff]
    %v139 = vld [vmem:[#allocation5 + $0x64] sm:$0xff]
    %v140 = vld [vmem:[#allocation5 + $0x6c] sm:$0xf]
    %v141 = vld [vmem:[#allocation5 + $0x70] sm:$0xff]
    %v142 = vld [vmem:[#allocation5 + $0x78] sm:$0xff]
    %v143 = vld [vmem:[#allocation5 + $0x80] sm:$0xff]
    %v144 = vld [vmem:[#allocation5 + $0x88] sm:$0xf]
    %v145 = vld [vmem:[#allocation5 + $0x8c] sm:$0xff]
    %v146 = vld [vmem:[#allocation5 + $0x94] sm:$0xff]
    %v147 = vld [vmem:[#allocation5 + $0x9c] sm:$0xff]
    %v148 = vld [vmem:[#allocation5 + $0xa4] sm:$0xf]
    %v149 = vld [vmem:[#allocation5 + $0xa8] sm:$0xff]
    %v150 = vld [vmem:[#allocation5 + $0xb0] sm:$0xff]
    %v151 = vld [vmem:[#allocation5 + $0xb8] sm:$0xff]
    %v152 = vld [vmem:[#allocation5 + $0xc0] sm:$0xf]
    %v153 = vld [vmem:[#allocation5 + $0xc4] sm:$0xff]
    %v154 = vld [vmem:[#allocation5 + $0xcc] sm:$0xff]
    %v155 = vld [vmem:[#allocation5 + $0xd4] sm:$0xff]
    %v156 = vld [vmem:[#allocation5 + $0xdc] sm:$0xf]
    %v157 = vld [vmem:[#allocation5 + $0xe0] sm:$0xff]
    %v158 = vld [vmem:[#allocation5 + $0xe8] sm:$0xff]
    %v159 = vld [vmem:[#allocation5 + $0xf0] sm:$0xff]
    %v160 = vld [vmem:[#allocation5 + $0xf8] sm:$0xf]
    %v161 = vld [vmem:[#allocation5 + $0xfc] sm:$0xff]
    %v162 = vld [vmem:[#allocation5 + $0x104] sm:$0xff]
    %v163 = vld [vmem:[#allocation5 + $0x10c] sm:$0xff]
    %v164 = vld [vmem:[#allocation5 + $0x114] sm:$0xf]
    %v165 = vld [vmem:[#allocation5 + $0x118] sm:$0xff]
    %v166 = vld [vmem:[#allocation5 + $0x120] sm:$0xff]
    %v167 = vld [vmem:[#allocation5 + $0x128] sm:$0xff]
    %v168 = vld [vmem:[#allocation5 + $0x130] sm:$0xf]
    %v169 = vld [vmem:[#allocation5 + $0x134] sm:$0xff]
    %v170 = vld [vmem:[#allocation5 + $0x13c] sm:$0xff]
    %v171 = vld [vmem:[#allocation5 + $0x144] sm:$0xff]
    %v172 = vld [vmem:[#allocation5 + $0x14c] sm:$0xf]
    %v173 = vld [vmem:[#allocation5 + $0x150] sm:$0xff]
    %v174 = vld [vmem:[#allocation5 + $0x158] sm:$0xff]
    %v175 = vld [vmem:[#allocation5 + $0x160] sm:$0xff]
    %v176 = vld [vmem:[#allocation5 + $0x168] sm:$0xf]
    %v177 = vld [vmem:[#allocation5 + $0x16c] sm:$0xff]
    %v178 = vld [vmem:[#allocation5 + $0x174] sm:$0xff]
    %v179 = vld [vmem:[#allocation5 + $0x17c] sm:$0xff]
    %v180 = vld [vmem:[#allocation5 + $0x184] sm:$0xf]
    %v181 = vld [vmem:[#allocation5 + $0x188] sm:$0xff]
    %v182 = vld [vmem:[#allocation5 + $0x190] sm:$0xff]
    %v183 = vld [vmem:[#allocation5 + $0x198] sm:$0xff]
    %v184 = vld [vmem:[#allocation5 + $0x1a0] sm:$0xf]
    %v185 = vld [vmem:[#allocation5 + $0x1a4] sm:$0xff]
    %v186 = vld [vmem:[#allocation5 + $0x1ac] sm:$0xff]
    %v187 = vld [vmem:[#allocation5 + $0x1b4] sm:$0xff]
    %v188 = vld [vmem:[#allocation5 + $0x1bc] sm:$0xf]
    %v189 = vld [vmem:[#allocation5 + $0x1c0] sm:$0xff]
    %v190 = vld [vmem:[#allocation5 + $0x1c8] sm:$0xff]
    %v191 = vld [vmem:[#allocation5 + $0x1d0] sm:$0xff]
    %v192 = vld [vmem:[#allocation5 + $0x1d8] sm:$0xf]
    %v193 = vld [vmem:[#allocation5 + $0x1dc] sm:$0xff]
    %v194 = vld [vmem:[#allocation5 + $0x1e4] sm:$0xff]
    %v195 = vld [vmem:[#allocation5 + $0x1ec] sm:$0xff]
    %v196 = vld [vmem:[#allocation5 + $0x1f4] sm:$0xf]
    %v197 = vld [vmem:[#allocation5 + $0x1f8] sm:$0xff]
    %v198 = vld [vmem:[#allocation5 + $0x200] sm:$0xff]
    %v199 = vld [vmem:[#allocation5 + $0x208] sm:$0xff]
    %v200 = vld [vmem:[#allocation5 + $0x210] sm:$0xf]
    %v201 = vld [vmem:[#allocation5 + $0x214] sm:$0xff]
    %v202 = vld [vmem:[#allocation5 + $0x21c] sm:$0xff]
    %v203 = vld [vmem:[#allocation5 + $0x224] sm:$0xff]
    %v204 = vld [vmem:[#allocation5 + $0x22c] sm:$0xf]
    %v205 = vld [vmem:[#allocation5 + $0x230] sm:$0xff]
    %v206 = vld [vmem:[#allocation5 + $0x238] sm:$0xff]
    %v207 = vld [vmem:[#allocation5 + $0x240] sm:$0xff]
    %v208 = vld [vmem:[#allocation5 + $0x248] sm:$0xf]
    %v209 = vld [vmem:[#allocation5 + $0x24c] sm:$0xff]
    %v210 = vld [vmem:[#allocation5 + $0x254] sm:$0xff]
    %v211 = vld [vmem:[#allocation5 + $0x25c] sm:$0xff]
    %v212 = vld [vmem:[#allocation5 + $0x264] sm:$0xf]
    %v213 = vld [vmem:[#allocation5 + $0x268] sm:$0xff]
    %v214 = vld [vmem:[#allocation5 + $0x270] sm:$0xff]
    %v215 = vld [vmem:[#allocation5 + $0x278] sm:$0xff]
    %v216 = vld [vmem:[#allocation5 + $0x280] sm:$0xf]
    %v217 = vld [vmem:[#allocation5 + $0x284] sm:$0xff]
    %v218 = vld [vmem:[#allocation5 + $0x28c] sm:$0xff]
    %v219 = vld [vmem:[#allocation5 + $0x294] sm:$0xff]
    %v220 = vld [vmem:[#allocation5 + $0x29c] sm:$0xf]
    %v221 = vld [vmem:[#allocation5 + $0x2a0] sm:$0xff]
    %v222 = vld [vmem:[#allocation5 + $0x2a8] sm:$0xff]
    %v223 = vld [vmem:[#allocation5 + $0x2b0] sm:$0xff]
    %v224 = vld [vmem:[#allocation5 + $0x2b8] sm:$0xf]
    %v225 = vld [vmem:[#allocation5 + $0x2bc] sm:$0xff]
    %v226 = vld [vmem:[#allocation5 + $0x2c4] sm:$0xff]
    %v227 = vld [vmem:[#allocation5 + $0x2cc] sm:$0xff]
    %v228 = vld [vmem:[#allocation5 + $0x2d4] sm:$0xf]
    %v229 = vld [vmem:[#allocation5 + $0x2d8] sm:$0xff]
    %v230 = vld [vmem:[#allocation5 + $0x2e0] sm:$0xff]
    %v231 = vld [vmem:[#allocation5 + $0x2e8] sm:$0xff]
    %v232 = vld [vmem:[#allocation5 + $0x2f0] sm:$0xf]
    %v233 = vld [vmem:[#allocation5 + $0x2f4] sm:$0xff]
    %v234 = vld [vmem:[#allocation5 + $0x2fc] sm:$0xff]
    %v235 = vld [vmem:[#allocation5 + $0x304] sm:$0xff]
    %v236 = vld [vmem:[#allocation5 + $0x30c] sm:$0xf]
    %v237 = vld [vmem:[#allocation5 + $0x310] sm:$0xff]
    %v238 = vld [vmem:[#allocation5 + $0x318] sm:$0xff]
    %v239 = vld [vmem:[#allocation5 + $0x320] sm:$0xff]
    %v240 = vld [vmem:[#allocation5 + $0x328] sm:$0xf]
    %v241 = vld [vmem:[#allocation5 + $0x32c] sm:$0xff]
    %v242 = vld [vmem:[#allocation5 + $0x334] sm:$0xff]
    %v243 = vld [vmem:[#allocation5 + $0x33c] sm:$0xff]
    %v244 = vld [vmem:[#allocation5 + $0x344] sm:$0xf]
    %v245 = vld [vmem:[#allocation5 + $0x348] sm:$0xff]
    %v246 = vld [vmem:[#allocation5 + $0x350] sm:$0xff]
    %v247 = vld [vmem:[#allocation5 + $0x358] sm:$0xff]
    %v248 = vld [vmem:[#allocation5 + $0x360] sm:$0xf]
    %v249 = vld [vmem:[#allocation5 + $0x364] sm:$0xff]
    %v250 = vld [vmem:[#allocation5 + $0x36c] sm:$0xff]
    %v251 = vld [vmem:[#allocation5 + $0x374] sm:$0xff]
    %v252 = vld [vmem:[#allocation5 + $0x37c] sm:$0xf]
    %v253 = vld [vmem:[#allocation5 + $0x380] sm:$0xff]
    %v254 = vld [vmem:[#allocation5 + $0x388] sm:$0xff]
    %v255 = vld [vmem:[#allocation5 + $0x390] sm:$0xff]
    %v256 = vld [vmem:[#allocation5 + $0x398] sm:$0xf]
    %v257 = vld [vmem:[#allocation5 + $0x39c] sm:$0xff]
    %v258 = vld [vmem:[#allocation5 + $0x3a4] sm:$0xff]
    %v259 = vld [vmem:[#allocation5 + $0x3ac] sm:$0xff]
    %v260 = vld [vmem:[#allocation5 + $0x3b4] sm:$0xf]
    %v261 = vld [vmem:[#allocation5 + $0x3b8] sm:$0xff]
    %v262 = vld [vmem:[#allocation5 + $0x3c0] sm:$0xff]
    %v263 = vld [vmem:[#allocation5 + $0x3c8] sm:$0xff]
    %v264 = vld [vmem:[#allocation5 + $0x3d0] sm:$0xf]
    %v265 = vld [vmem:[#allocation5 + $0x3d4] sm:$0xff]
    %v266 = vld [vmem:[#allocation5 + $0x3dc] sm:$0xff]
    %v267 = vld [vmem:[#allocation5 + $0x3e4] sm:$0xff]
    %v268 = vld [vmem:[#allocation5 + $0x3ec] sm:$0xf]
    %v269 = vld [vmem:[#allocation5 + $0x3f0] sm:$0xff]
    %v270 = vld [vmem:[#allocation5 + $0x3f8] sm:$0xff]
    %v271 = vld [vmem:[#allocation5 + $0x400] sm:$0xff]
    %v272 = vld [vmem:[#allocation5 + $0x408] sm:$0xf]
    %v273 = vld [vmem:[#allocation5 + $0x40c] sm:$0xff]
    %v274 = vld [vmem:[#allocation5 + $0x414] sm:$0xff]
    %v275 = vld [vmem:[#allocation5 + $0x41c] sm:$0xff]
    %v276 = vld [vmem:[#allocation5 + $0x424] sm:$0xf]
    %v277 = vld [vmem:[#allocation5 + $0x428] sm:$0xff]
    %v278 = vld [vmem:[#allocation5 + $0x430] sm:$0xff]
    %v279 = vld [vmem:[#allocation5 + $0x438] sm:$0xff]
    %v280 = vld [vmem:[#allocation5 + $0x440] sm:$0xf]
    %v281 = vld [vmem:[#allocation5 + $0x444] sm:$0xff]
    %v282 = vld [vmem:[#allocation5 + $0x44c] sm:$0xff]
    %v283 = vld [vmem:[#allocation5 + $0x454] sm:$0xff]
    %v284 = vld [vmem:[#allocation5 + $0x45c] sm:$0xf]
    %v285 = vld [vmem:[#allocation5 + $0x460] sm:$0xff]
    %v286 = vld [vmem:[#allocation5 + $0x468] sm:$0xff]
    %v287 = vld [vmem:[#allocation5 + $0x470] sm:$0xff]
    %v288 = vld [vmem:[#allocation5 + $0x478] sm:$0xf]
    %v289 = vld [vmem:[#allocation5 + $0x47c] sm:$0xff]
    %v290 = vld [vmem:[#allocation5 + $0x484] sm:$0xff]
    %v291 = vld [vmem:[#allocation5 + $0x48c] sm:$0xff]
    %v292 = vld [vmem:[#allocation5 + $0x494] sm:$0xf]
    %v293 = vld [vmem:[#allocation5 + $0x498] sm:$0xff]
    %v294 = vld [vmem:[#allocation5 + $0x4a0] sm:$0xff]
    %v295 = vld [vmem:[#allocation5 + $0x4a8] sm:$0xff]
    %v296 = vld [vmem:[#allocation5 + $0x4b0] sm:$0xf]
    %v297 = vld [vmem:[#allocation5 + $0x4b4] sm:$0xff]
    %v298 = vld [vmem:[#allocation5 + $0x4bc] sm:$0xff]
    %v299 = vld [vmem:[#allocation5 + $0x4c4] sm:$0xff]
    %v300 = vld [vmem:[#allocation5 + $0x4cc] sm:$0xf]
    %v301 = vld [vmem:[#allocation5 + $0x4d0] sm:$0xff]
    %v302 = vld [vmem:[#allocation5 + $0x4d8] sm:$0xff]
    %v303 = vld [vmem:[#allocation5 + $0x4e0] sm:$0xff]
    %v304 = vld [vmem:[#allocation5 + $0x4e8] sm:$0xf]
    %v305 = vld [vmem:[#allocation5 + $0x4ec] sm:$0xff]
    %v306 = vld [vmem:[#allocation5 + $0x4f4] sm:$0xff]
    %v307 = vld [vmem:[#allocation5 + $0x4fc] sm:$0xff]
    %v308 = vld [vmem:[#allocation5 + $0x504] sm:$0xf]
    %v309 = vld [vmem:[#allocation5 + $0x508] sm:$0xff]
    %v310 = vld [vmem:[#allocation5 + $0x510] sm:$0xff]
    %v311 = vld [vmem:[#allocation5 + $0x518] sm:$0xff]
    %v312 = vld [vmem:[#allocation5 + $0x520] sm:$0xf]
    %v313 = vld [vmem:[#allocation5 + $0x524] sm:$0xff]
    %v314 = vld [vmem:[#allocation5 + $0x52c] sm:$0xff]
    %v315 = vld [vmem:[#allocation5 + $0x534] sm:$0xff]
    %v316 = vld [vmem:[#allocation5 + $0x53c] sm:$0xf]
    %v317 = vld [vmem:[#allocation5 + $0x540] sm:$0xff]
    %v318 = vld [vmem:[#allocation5 + $0x548] sm:$0xff]
    %v319 = vld [vmem:[#allocation5 + $0x550] sm:$0xff]
    %v320 = vld [vmem:[#allocation5 + $0x558] sm:$0xf]
    %v321 = vld [vmem:[#allocation5 + $0x55c] sm:$0xff]
    %v322 = vld [vmem:[#allocation5 + $0x564] sm:$0xff]
    %v323 = vld [vmem:[#allocation5 + $0x56c] sm:$0xff]
    %v324 = vld [vmem:[#allocation5 + $0x574] sm:$0xf]
    %v325 = vld [vmem:[#allocation5 + $0x578] sm:$0xff]
    %v326 = vld [vmem:[#allocation5 + $0x580] sm:$0xff]
    %v327 = vld [vmem:[#allocation5 + $0x588] sm:$0xff]
    %v328 = vld [vmem:[#allocation5 + $0x590] sm:$0xf]
    %v329 = vld [vmem:[#allocation5 + $0x594] sm:$0xff]
    %v330 = vld [vmem:[#allocation5 + $0x59c] sm:$0xff]
    %v331 = vld [vmem:[#allocation5 + $0x5a4] sm:$0xff]
    %v332 = vld [vmem:[#allocation5 + $0x5ac] sm:$0xf]
    %v333 = vld [vmem:[#allocation5 + $0x5b0] sm:$0xff]
    %v334 = vld [vmem:[#allocation5 + $0x5b8] sm:$0xff]
    %v335 = vld [vmem:[#allocation5 + $0x5c0] sm:$0xff]
    %v336 = vld [vmem:[#allocation5 + $0x5c8] sm:$0xf]
    %v337 = vld [vmem:[#allocation5 + $0x5cc] sm:$0xff]
    %v338 = vld [vmem:[#allocation5 + $0x5d4] sm:$0xff]
    %v339 = vld [vmem:[#allocation5 + $0x5dc] sm:$0xff]
    %v340 = vld [vmem:[#allocation5 + $0x5e4] sm:$0xf]
    %v341 = vld [vmem:[#allocation5 + $0x5e8] sm:$0xff]
    %v342 = vld [vmem:[#allocation5 + $0x5f0] sm:$0xff]
    %v343 = vld [vmem:[#allocation5 + $0x5f8] sm:$0xff]
    %v344 = vld [vmem:[#allocation5 + $0x600] sm:$0xf]
    %v345 = vld [vmem:[#allocation5 + $0x604] sm:$0xff]
    %v346 = vld [vmem:[#allocation5 + $0x60c] sm:$0xff]
    %v347 = vld [vmem:[#allocation5 + $0x614] sm:$0xff]
    %v348 = vld [vmem:[#allocation5 + $0x61c] sm:$0xf]
    %v349 = vld [vmem:[#allocation5 + $0x620] sm:$0xff]
    %v350 = vld [vmem:[#allocation5 + $0x628] sm:$0xff]
    %v351 = vld [vmem:[#allocation5 + $0x630] sm:$0xff]
    %v352 = vld [vmem:[#allocation5 + $0x638] sm:$0xf]
    %v353 = vld [vmem:[#allocation5 + $0x63c] sm:$0xff]
    %v354 = vld [vmem:[#allocation5 + $0x644] sm:$0xff]
    %v355 = vld [vmem:[#allocation5 + $0x64c] sm:$0xff]
    %v356 = vld [vmem:[#allocation5 + $0x654] sm:$0xf]
    %v357 = vld [vmem:[#allocation5 + $0x658] sm:$0xff]
    %v358 = vld [vmem:[#allocation5 + $0x660] sm:$0xff]
    %v359 = vld [vmem:[#allocation5 + $0x668] sm:$0xff]
    %v360 = vld [vmem:[#allocation5 + $0x670] sm:$0xf]
    %v361 = vld [vmem:[#allocation5 + $0x674] sm:$0xff]
    %v362 = vld [vmem:[#allocation5 + $0x67c] sm:$0xff]
    %v363 = vld [vmem:[#allocation5 + $0x684] sm:$0xff]
    %v364 = vld [vmem:[#allocation5 + $0x68c] sm:$0xf]
    %v365 = vld [vmem:[#allocation5 + $0x690] sm:$0xff]
    %v366 = vld [vmem:[#allocation5 + $0x698] sm:$0xff]
    %v367 = vld [vmem:[#allocation5 + $0x6a0] sm:$0xff]
    %v368 = vld [vmem:[#allocation5 + $0x6a8] sm:$0xf]
    %v369 = vld [vmem:[#allocation5 + $0x6ac] sm:$0xff]
    %v370 = vld [vmem:[#allocation5 + $0x6b4] sm:$0xff]
    %v371 = vld [vmem:[#allocation5 + $0x6bc] sm:$0xff]
    %v372 = vld [vmem:[#allocation5 + $0x6c4] sm:$0xf]
    %v373 = vld [vmem:[#allocation5 + $0x6c8] sm:$0xff]
    %v374 = vld [vmem:[#allocation5 + $0x6d0] sm:$0xff]
    %v375 = vld [vmem:[#allocation5 + $0x6d8] sm:$0xff]
    %v376 = vld [vmem:[#allocation5 + $0x6e0] sm:$0xf]
    %v377 = vld [vmem:[#allocation5 + $0x6e4] sm:$0xff]
    %v378 = vld [vmem:[#allocation5 + $0x6ec] sm:$0xff]
    %v379 = vld [vmem:[#allocation5 + $0x6f4] sm:$0xff]
    %v380 = vld [vmem:[#allocation5 + $0x6fc] sm:$0xf]
    %v381 = vld [vmem:[#allocation5 + $0x700] sm:$0xff]
    %v382 = vld [vmem:[#allocation5 + $0x708] sm:$0xff]
    %v383 = vld [vmem:[#allocation5 + $0x710] sm:$0xff]
    %v384 = vld [vmem:[#allocation5 + $0x718] sm:$0xf]
    %v385 = vld [vmem:[#allocation5 + $0x71c] sm:$0xff]
    %v386 = vld [vmem:[#allocation5 + $0x724] sm:$0xff]
    %v387 = vld [vmem:[#allocation5 + $0x72c] sm:$0xff]
    %v388 = vld [vmem:[#allocation5 + $0x734] sm:$0xf]
    %v389 = vld [vmem:[#allocation5 + $0x738] sm:$0xff]
    %v390 = vld [vmem:[#allocation5 + $0x740] sm:$0xff]
    %v391 = vld [vmem:[#allocation5 + $0x748] sm:$0xff]
    %v392 = vld [vmem:[#allocation5 + $0x750] sm:$0xf]
    %v393 = vld [vmem:[#allocation5 + $0x754] sm:$0xff]
    %v394 = vld [vmem:[#allocation5 + $0x75c] sm:$0xff]
    %v395 = vld [vmem:[#allocation5 + $0x764] sm:$0xff]
    %v396 = vld [vmem:[#allocation5 + $0x76c] sm:$0xf]
    %v397 = vld [vmem:[#allocation5 + $0x770] sm:$0xff]
    %v398 = vld [vmem:[#allocation5 + $0x778] sm:$0xff]
    %v399 = vld [vmem:[#allocation5 + $0x780] sm:$0xff]
    %v400 = vld [vmem:[#allocation5 + $0x788] sm:$0xf]
    %v401 = vld [vmem:[#allocation5 + $0x78c] sm:$0xff]
    %v402 = vld [vmem:[#allocation5 + $0x794] sm:$0xff]
    %v403 = vld [vmem:[#allocation5 + $0x79c] sm:$0xff]
    %v404 = vld [vmem:[#allocation5 + $0x7a4] sm:$0xf]
    %v405 = vld [vmem:[#allocation5 + $0x7a8] sm:$0xff]
    %v406 = vld [vmem:[#allocation5 + $0x7b0] sm:$0xff]
    %v407 = vld [vmem:[#allocation5 + $0x7b8] sm:$0xff]
    %v408 = vld [vmem:[#allocation5 + $0x7c0] sm:$0xf]
    %v409 = vld [vmem:[#allocation5 + $0x7c4] sm:$0xff]
    %v410 = vld [vmem:[#allocation5 + $0x7cc] sm:$0xff]
    %v411 = vld [vmem:[#allocation5 + $0x7d4] sm:$0xff]
    %v412 = vld [vmem:[#allocation5 + $0x7dc] sm:$0xf]
    %v413 = vld [vmem:[#allocation5 + $0x7e0] sm:$0xff]
    %v414 = vld [vmem:[#allocation5 + $0x7e8] sm:$0xff]
    %v415 = vld [vmem:[#allocation5 + $0x7f0] sm:$0xff]
    %v416 = vld [vmem:[#allocation5 + $0x7f8] sm:$0xf]
    %v417 = vld [vmem:[#allocation5 + $0x7fc] sm:$0xff]
    %v418 = vld [vmem:[#allocation5 + $0x804] sm:$0xff]
    %v419 = vld [vmem:[#allocation5 + $0x80c] sm:$0xff]
    %v420 = vld [vmem:[#allocation5 + $0x814] sm:$0xf]
    %v421 = vld [vmem:[#allocation5 + $0x818] sm:$0xff]
    %v422 = vld [vmem:[#allocation5 + $0x820] sm:$0xff]
    %v423 = vld [vmem:[#allocation5 + $0x828] sm:$0xff]
    %v424 = vld [vmem:[#allocation5 + $0x830] sm:$0xf]
    %v425 = vld [vmem:[#allocation5 + $0x834] sm:$0xff]
    %v426 = vld [vmem:[#allocation5 + $0x83c] sm:$0xff]
    %v427 = vld [vmem:[#allocation5 + $0x844] sm:$0xff]
    %v428 = vld [vmem:[#allocation5 + $0x84c] sm:$0xf]
    %v429 = vld [vmem:[#allocation5 + $0x850] sm:$0xff]
    %v430 = vld [vmem:[#allocation5 + $0x858] sm:$0xff]
    %v431 = vld [vmem:[#allocation5 + $0x860] sm:$0xff]
    %v432 = vld [vmem:[#allocation5 + $0x868] sm:$0xf]
    %v433 = vld [vmem:[#allocation5 + $0x86c] sm:$0xff]
    %v434 = vld [vmem:[#allocation5 + $0x874] sm:$0xff]
    %v435 = vld [vmem:[#allocation5 + $0x87c] sm:$0xff]
    %v436 = vld [vmem:[#allocation5 + $0x884] sm:$0xf]
    %v437 = vld [vmem:[#allocation5 + $0x888] sm:$0xff]
    %v438 = vld [vmem:[#allocation5 + $0x890] sm:$0xff]
    %v439 = vld [vmem:[#allocation5 + $0x898] sm:$0xff]
    %v440 = vld [vmem:[#allocation5 + $0x8a0] sm:$0xf]
    %v441 = vld [vmem:[#allocation5 + $0x8a4] sm:$0xff]
    %v442 = vld [vmem:[#allocation5 + $0x8ac] sm:$0xff]
    %v443 = vld [vmem:[#allocation5 + $0x8b4] sm:$0xff]
    %v444 = vld [vmem:[#allocation5 + $0x8bc] sm:$0xf]
    %v445 = vld [vmem:[#allocation5 + $0x8c0] sm:$0xff]
    %v446 = vld [vmem:[#allocation5 + $0x8c8] sm:$0xff]
    %v447 = vld [vmem:[#allocation5 + $0x8d0] sm:$0xff]
    %v448 = vld [vmem:[#allocation5 + $0x8d8] sm:$0xf]
    %v449 = vld [vmem:[#allocation5 + $0x8dc] sm:$0xff]
    %v450 = vld [vmem:[#allocation5 + $0x8e4] sm:$0xff]
    %v451 = vld [vmem:[#allocation5 + $0x8ec] sm:$0xff]
    %v452 = vld [vmem:[#allocation5 + $0x8f4] sm:$0xf]
    %v453 = vld [vmem:[#allocation5 + $0x8f8] sm:$0xff]
    %v454 = vld [vmem:[#allocation5 + $0x900] sm:$0xff]
    %v455 = vld [vmem:[#allocation5 + $0x908] sm:$0xff]
    %v456 = vld [vmem:[#allocation5 + $0x910] sm:$0xf]
    %v457 = vld [vmem:[#allocation5 + $0x914] sm:$0xff]
    %v458 = vld [vmem:[#allocation5 + $0x91c] sm:$0xff]
    %v459 = vld [vmem:[#allocation5 + $0x924] sm:$0xff]
    %v460 = vld [vmem:[#allocation5 + $0x92c] sm:$0xf]
    %v461 = vld [vmem:[#allocation5 + $0x930] sm:$0xff]
    %v462 = vld [vmem:[#allocation5 + $0x938] sm:$0xff]
    %v463 = vld [vmem:[#allocation5 + $0x940] sm:$0xff]
    %v464 = vld [vmem:[#allocation5 + $0x948] sm:$0xf]
    %v465 = vld [vmem:[#allocation5 + $0x94c] sm:$0xff]
    %v466 = vld [vmem:[#allocation5 + $0x954] sm:$0xff]
    %v467 = vld [vmem:[#allocation5 + $0x95c] sm:$0xff]
    %v468 = vld [vmem:[#allocation5 + $0x964] sm:$0xf]
    %v469 = vld [vmem:[#allocation5 + $0x968] sm:$0xff]
    %v470 = vld [vmem:[#allocation5 + $0x970] sm:$0xff]
    %v471 = vld [vmem:[#allocation5 + $0x978] sm:$0xff]
    %v472 = vld [vmem:[#allocation5 + $0x980] sm:$0xf]
    %v473 = vld [vmem:[#allocation5 + $0x984] sm:$0xff]
    %v474 = vld [vmem:[#allocation5 + $0x98c] sm:$0xff]
    %v475 = vld [vmem:[#allocation5 + $0x994] sm:$0xff]
    %v476 = vld [vmem:[#allocation5 + $0x99c] sm:$0xf]
    %v477 = vld [vmem:[#allocation5 + $0x9a0] sm:$0xff]
    %v478 = vld [vmem:[#allocation5 + $0x9a8] sm:$0xff]
    %v479 = vld [vmem:[#allocation5 + $0x9b0] sm:$0xff]
    %v480 = vld [vmem:[#allocation5 + $0x9b8] sm:$0xf]
    %v481 = vld [vmem:[#allocation5 + $0x9bc] sm:$0xff]
    %v482 = vld [vmem:[#allocation5 + $0x9c4] sm:$0xff]
    %v483 = vld [vmem:[#allocation5 + $0x9cc] sm:$0xff]
    %v484 = vld [vmem:[#allocation5 + $0x9d4] sm:$0xf]
    %v485 = vld [vmem:[#allocation5 + $0x9d8] sm:$0xff]
    %v486 = vld [vmem:[#allocation5 + $0x9e0] sm:$0xff]
    %v487 = vld [vmem:[#allocation5 + $0x9e8] sm:$0xff]
    %v488 = vld [vmem:[#allocation5 + $0x9f0] sm:$0xf]
    %v489 = vld [vmem:[#allocation5 + $0x9f4] sm:$0xff]
    %v490 = vld [vmem:[#allocation5 + $0x9fc] sm:$0xff]
    %v491 = vld [vmem:[#allocation5 + $0xa04] sm:$0xff]
    %v492 = vld [vmem:[#allocation5 + $0xa0c] sm:$0xf]
    %v493 = vld [vmem:[#allocation5 + $0xa10] sm:$0xff]
    %v494 = vld [vmem:[#allocation5 + $0xa18] sm:$0xff]
    %v495 = vld [vmem:[#allocation5 + $0xa20] sm:$0xff]
    %v496 = vld [vmem:[#allocation5 + $0xa28] sm:$0xf]
    %v497 = vld [vmem:[#allocation5 + $0xa2c] sm:$0xff]
    %v498 = vld [vmem:[#allocation5 + $0xa34] sm:$0xff]
    %v499 = vld [vmem:[#allocation5 + $0xa3c] sm:$0xff]
    %v500 = vld [vmem:[#allocation5 + $0xa44] sm:$0xf]
    %v501 = vld [vmem:[#allocation5 + $0xa48] sm:$0xff]
    %v502 = vld [vmem:[#allocation5 + $0xa50] sm:$0xff]
    %v503 = vld [vmem:[#allocation5 + $0xa58] sm:$0xff]
    %v504 = vld [vmem:[#allocation5 + $0xa60] sm:$0xf]
    %v505 = vld [vmem:[#allocation5 + $0xa64] sm:$0xff]
    %v506 = vld [vmem:[#allocation5 + $0xa6c] sm:$0xff]
    %v507 = vld [vmem:[#allocation5 + $0xa74] sm:$0xff]
    %v508 = vld [vmem:[#allocation5 + $0xa7c] sm:$0xf]
    %v509 = vld [vmem:[#allocation5 + $0xa80] sm:$0xff]
    %v510 = vld [vmem:[#allocation5 + $0xa88] sm:$0xff]
    %v511 = vld [vmem:[#allocation5 + $0xa90] sm:$0xff]
    %v512 = vld [vmem:[#allocation5 + $0xa98] sm:$0xf]
    %v513 = vld [vmem:[#allocation5 + $0xa9c] sm:$0xff]
    %v514 = vld [vmem:[#allocation5 + $0xaa4] sm:$0xff]
    %v515 = vld [vmem:[#allocation5 + $0xaac] sm:$0xff]
    %v516 = vld [vmem:[#allocation5 + $0xab4] sm:$0xf]
    %v517 = vld [vmem:[#allocation5 + $0xab8] sm:$0xff]
    %v518 = vld [vmem:[#allocation5 + $0xac0] sm:$0xff]
    %v519 = vld [vmem:[#allocation5 + $0xac8] sm:$0xff]
    %v520 = vld [vmem:[#allocation5 + $0xad0] sm:$0xf]
    %v521 = vld [vmem:[#allocation5 + $0xad4] sm:$0xff]
    %v522 = vld [vmem:[#allocation5 + $0xadc] sm:$0xff]
    %v523 = vld [vmem:[#allocation5 + $0xae4] sm:$0xff]
    %v524 = vld [vmem:[#allocation5 + $0xaec] sm:$0xf]
    %v525 = vld [vmem:[#allocation5 + $0xaf0] sm:$0xff]
    %v526 = vld [vmem:[#allocation5 + $0xaf8] sm:$0xff]
    %v527 = vld [vmem:[#allocation5 + $0xb00] sm:$0xff]
    %v528 = vld [vmem:[#allocation5 + $0xb08] sm:$0xf]
    %v529 = vld [vmem:[#allocation5 + $0xb0c] sm:$0xff]
    %v530 = vld [vmem:[#allocation5 + $0xb14] sm:$0xff]
    %v531 = vld [vmem:[#allocation5 + $0xb1c] sm:$0xff]
    %v532 = vld [vmem:[#allocation5 + $0xb24] sm:$0xf]
    %v533 = vld [vmem:[#allocation5 + $0xb28] sm:$0xff]
    %v534 = vld [vmem:[#allocation5 + $0xb30] sm:$0xff]
    %v535 = vld [vmem:[#allocation5 + $0xb38] sm:$0xff]
    %v536 = vld [vmem:[#allocation5 + $0xb40] sm:$0xf]
    %v537 = vld [vmem:[#allocation5 + $0xb44] sm:$0xff]
    %v538 = vld [vmem:[#allocation5 + $0xb4c] sm:$0xff]
    %v539 = vld [vmem:[#allocation5 + $0xb54] sm:$0xff]
    %v540 = vld [vmem:[#allocation5 + $0xb5c] sm:$0xf]
    %v541 = vld [vmem:[#allocation5 + $0xb60] sm:$0xff]
    %v542 = vld [vmem:[#allocation5 + $0xb68] sm:$0xff]
    %v543 = vld [vmem:[#allocation5 + $0xb70] sm:$0xff]
    %v544 = vld [vmem:[#allocation5 + $0xb78] sm:$0xf]
    %v545 = vld [vmem:[#allocation5 + $0xb7c] sm:$0xff]
    %v546 = vld [vmem:[#allocation5 + $0xb84] sm:$0xff]
    %v547 = vld [vmem:[#allocation5 + $0xb8c] sm:$0xff]
    %v548 = vld [vmem:[#allocation5 + $0xb94] sm:$0xf]
    %v549 = vld [vmem:[#allocation5 + $0xb98] sm:$0xff]
    %v550 = vld [vmem:[#allocation5 + $0xba0] sm:$0xff]
    %v551 = vld [vmem:[#allocation5 + $0xba8] sm:$0xff]
    %v552 = vld [vmem:[#allocation5 + $0xbb0] sm:$0xf]
    %v553 = vld [vmem:[#allocation5 + $0xbb4] sm:$0xff]
    %v554 = vld [vmem:[#allocation5 + $0xbbc] sm:$0xff]
    %v555 = vld [vmem:[#allocation5 + $0xbc4] sm:$0xff]
    %v556 = vld [vmem:[#allocation5 + $0xbcc] sm:$0xf]
    %v557 = vld [vmem:[#allocation5 + $0xbd0] sm:$0xff]
    %v558 = vld [vmem:[#allocation5 + $0xbd8] sm:$0xff]
    %v559 = vld [vmem:[#allocation5 + $0xbe0] sm:$0xff]
    %v560 = vld [vmem:[#allocation5 + $0xbe8] sm:$0xf]
    %v561 = vld [vmem:[#allocation5 + $0xbec] sm:$0xff]
    %v562 = vld [vmem:[#allocation5 + $0xbf4] sm:$0xff]
    %v563 = vld [vmem:[#allocation5 + $0xbfc] sm:$0xff]
    %v564 = vld [vmem:[#allocation5 + $0xc04] sm:$0xf]
    %v565 = vld [vmem:[#allocation5 + $0xc08] sm:$0xff]
    %v566 = vld [vmem:[#allocation5 + $0xc10] sm:$0xff]
    %v567 = vld [vmem:[#allocation5 + $0xc18] sm:$0xff]
    %v568 = vld [vmem:[#allocation5 + $0xc20] sm:$0xf]
    %v569 = vld [vmem:[#allocation5 + $0xc24] sm:$0xff]
    %v570 = vld [vmem:[#allocation5 + $0xc2c] sm:$0xff]
    %v571 = vld [vmem:[#allocation5 + $0xc34] sm:$0xff]
    %v572 = vld [vmem:[#allocation5 + $0xc3c] sm:$0xf]
    %v573 = vld [vmem:[#allocation7] sm:$0xff]
    %v575 = vlaneseq
    %v576 = vshrl.u32 %v575, 7
    %v577 = vsub.s32 0, %v576
    %v578 = vrot.slane %v573, %v577
    %v579 = vlaneseq
    %v580 = vshrl.u32 %v579, 7
    %v581 = vsub.s32 1, %v580
    %v582 = vrot.slane %v573, %v581
    %v583 = vlaneseq
    %v584 = vshrl.u32 %v583, 7
    %v585 = vsub.s32 2, %v584
    %v586 = vrot.slane %v573, %v585
    %v587 = vlaneseq
    %v588 = vshrl.u32 %v587, 7
    %v589 = vsub.s32 3, %v588
    %v590 = vrot.slane %v573, %v589
    %v591 = vlaneseq
    %v592 = vshrl.u32 %v591, 7
    %v593 = vsub.s32 4, %v592
    %v594 = vrot.slane %v573, %v593
    %v595 = vlaneseq
    %v596 = vshrl.u32 %v595, 7
    %v597 = vsub.s32 5, %v596
    %v598 = vrot.slane %v573, %v597
    %v599 = vlaneseq
    %v600 = vshrl.u32 %v599, 7
    %v601 = vsub.s32 6, %v600
    %v602 = vrot.slane %v573, %v601
    %v618 = vunpack.c.l.b16 %v117
    %v619 = vunpack.c.h.b16 %v117
    %v620 = vunpack.c.l.b16 %v118
    %v621 = vunpack.c.h.b16 %v118
    %v622 = vunpack.c.l.b16 %v119
    %v623 = vunpack.c.h.b16 %v119
    %v624 = vunpack.c.l.b16 %v120
    %v625 = vunpack.c.l.b16 %v121
    %v626 = vunpack.c.h.b16 %v121
    %v627 = vunpack.c.l.b16 %v122
    %v628 = vunpack.c.h.b16 %v122
    %v629 = vunpack.c.l.b16 %v123
    %v630 = vunpack.c.h.b16 %v123
    %v631 = vunpack.c.l.b16 %v124
    %v632 = vpack.c.b16 %v625, %v618
    %v633 = vpack.c.b16 %v626, %v619
    %v634 = vpack.c.b16 %v627, %v620
    %v635 = vpack.c.b16 %v628, %v621
    %v636 = vpack.c.b16 %v629, %v622
    %v637 = vpack.c.b16 %v630, %v623
    %v638 = vpack.c.b16 %v631, %v624
    %v1094 = vunpack.c.l.b16 %v125
    %v1095 = vunpack.c.h.b16 %v125
    %v1096 = vunpack.c.l.b16 %v126
    %v1097 = vunpack.c.h.b16 %v126
    %v1098 = vunpack.c.l.b16 %v127
    %v1099 = vunpack.c.h.b16 %v127
    %v1100 = vunpack.c.l.b16 %v128
    %v1101 = vunpack.c.l.b16 %v129
    %v1102 = vunpack.c.h.b16 %v129
    %v1103 = vunpack.c.l.b16 %v130
    %v1104 = vunpack.c.h.b16 %v130
    %v1105 = vunpack.c.l.b16 %v131
    %v1106 = vunpack.c.h.b16 %v131
    %v1107 = vunpack.c.l.b16 %v132
    %v1108 = vunpack.c.l.b16 %v133
    %v1109 = vunpack.c.h.b16 %v133
    %v1110 = vunpack.c.l.b16 %v134
    %v1111 = vunpack.c.h.b16 %v134
    %v1112 = vunpack.c.l.b16 %v135
    %v1113 = vunpack.c.h.b16 %v135
    %v1114 = vunpack.c.l.b16 %v136
    %v1115 = vunpack.c.l.b16 %v137
    %v1116 = vunpack.c.h.b16 %v137
    %v1117 = vunpack.c.l.b16 %v138
    %v1118 = vunpack.c.h.b16 %v138
    %v1119 = vunpack.c.l.b16 %v139
    %v1120 = vunpack.c.h.b16 %v139
    %v1121 = vunpack.c.l.b16 %v140
    %v1122 = vunpack.c.l.b16 %v141
    %v1123 = vunpack.c.h.b16 %v141
    %v1124 = vunpack.c.l.b16 %v142
    %v1125 = vunpack.c.h.b16 %v142
    %v1126 = vunpack.c.l.b16 %v143
    %v1127 = vunpack.c.h.b16 %v143
    %v1128 = vunpack.c.l.b16 %v144
    %v1129 = vunpack.c.l.b16 %v145
    %v1130 = vunpack.c.h.b16 %v145
    %v1131 = vunpack.c.l.b16 %v146
    %v1132 = vunpack.c.h.b16 %v146
    %v1133 = vunpack.c.l.b16 %v147
    %v1134 = vunpack.c.h.b16 %v147
    %v1135 = vunpack.c.l.b16 %v148
    %v1136 = vunpack.c.l.b16 %v149
    %v1137 = vunpack.c.h.b16 %v149
    %v1138 = vunpack.c.l.b16 %v150
    %v1139 = vunpack.c.h.b16 %v150
    %v1140 = vunpack.c.l.b16 %v151
    %v1141 = vunpack.c.h.b16 %v151
    %v1142 = vunpack.c.l.b16 %v152
    %v1143 = vunpack.c.l.b16 %v153
    %v1144 = vunpack.c.h.b16 %v153
    %v1145 = vunpack.c.l.b16 %v154
    %v1146 = vunpack.c.h.b16 %v154
    %v1147 = vunpack.c.l.b16 %v155
    %v1148 = vunpack.c.h.b16 %v155
    %v1149 = vunpack.c.l.b16 %v156
    %v1150 = vunpack.c.l.b16 %v157
    %v1151 = vunpack.c.h.b16 %v157
    %v1152 = vunpack.c.l.b16 %v158
    %v1153 = vunpack.c.h.b16 %v158
    %v1154 = vunpack.c.l.b16 %v159
    %v1155 = vunpack.c.h.b16 %v159
    %v1156 = vunpack.c.l.b16 %v160
    %v1157 = vunpack.c.l.b16 %v161
    %v1158 = vunpack.c.h.b16 %v161
    %v1159 = vunpack.c.l.b16 %v162
    %v1160 = vunpack.c.h.b16 %v162
    %v1161 = vunpack.c.l.b16 %v163
    %v1162 = vunpack.c.h.b16 %v163
    %v1163 = vunpack.c.l.b16 %v164
    %v1164 = vunpack.c.l.b16 %v165
    %v1165 = vunpack.c.h.b16 %v165
    %v1166 = vunpack.c.l.b16 %v166
    %v1167 = vunpack.c.h.b16 %v166
    %v1168 = vunpack.c.l.b16 %v167
    %v1169 = vunpack.c.h.b16 %v167
    %v1170 = vunpack.c.l.b16 %v168
    %v1171 = vunpack.c.l.b16 %v169
    %v1172 = vunpack.c.h.b16 %v169
    %v1173 = vunpack.c.l.b16 %v170
    %v1174 = vunpack.c.h.b16 %v170
    %v1175 = vunpack.c.l.b16 %v171
    %v1176 = vunpack.c.h.b16 %v171
    %v1177 = vunpack.c.l.b16 %v172
    %v1178 = vunpack.c.l.b16 %v173
    %v1179 = vunpack.c.h.b16 %v173
    %v1180 = vunpack.c.l.b16 %v174
    %v1181 = vunpack.c.h.b16 %v174
    %v1182 = vunpack.c.l.b16 %v175
    %v1183 = vunpack.c.h.b16 %v175
    %v1184 = vunpack.c.l.b16 %v176
    %v1185 = vunpack.c.l.b16 %v177
    %v1186 = vunpack.c.h.b16 %v177
    %v1187 = vunpack.c.l.b16 %v178
    %v1188 = vunpack.c.h.b16 %v178
    %v1189 = vunpack.c.l.b16 %v179
    %v1190 = vunpack.c.h.b16 %v179
    %v1191 = vunpack.c.l.b16 %v180
    %v1192 = vunpack.c.l.b16 %v181
    %v1193 = vunpack.c.h.b16 %v181
    %v1194 = vunpack.c.l.b16 %v182
    %v1195 = vunpack.c.h.b16 %v182
    %v1196 = vunpack.c.l.b16 %v183
    %v1197 = vunpack.c.h.b16 %v183
    %v1198 = vunpack.c.l.b16 %v184
    %v1199 = vunpack.c.l.b16 %v185
    %v1200 = vunpack.c.h.b16 %v185
    %v1201 = vunpack.c.l.b16 %v186
    %v1202 = vunpack.c.h.b16 %v186
    %v1203 = vunpack.c.l.b16 %v187
    %v1204 = vunpack.c.h.b16 %v187
    %v1205 = vunpack.c.l.b16 %v188
    %v1206 = vunpack.c.l.b16 %v189
    %v1207 = vunpack.c.h.b16 %v189
    %v1208 = vunpack.c.l.b16 %v190
    %v1209 = vunpack.c.h.b16 %v190
    %v1210 = vunpack.c.l.b16 %v191
    %v1211 = vunpack.c.h.b16 %v191
    %v1212 = vunpack.c.l.b16 %v192
    %v1213 = vunpack.c.l.b16 %v193
    %v1214 = vunpack.c.h.b16 %v193
    %v1215 = vunpack.c.l.b16 %v194
    %v1216 = vunpack.c.h.b16 %v194
    %v1217 = vunpack.c.l.b16 %v195
    %v1218 = vunpack.c.h.b16 %v195
    %v1219 = vunpack.c.l.b16 %v196
    %v1220 = vunpack.c.l.b16 %v197
    %v1221 = vunpack.c.h.b16 %v197
    %v1222 = vunpack.c.l.b16 %v198
    %v1223 = vunpack.c.h.b16 %v198
    %v1224 = vunpack.c.l.b16 %v199
    %v1225 = vunpack.c.h.b16 %v199
    %v1226 = vunpack.c.l.b16 %v200
    %v1227 = vunpack.c.l.b16 %v201
    %v1228 = vunpack.c.h.b16 %v201
    %v1229 = vunpack.c.l.b16 %v202
    %v1230 = vunpack.c.h.b16 %v202
    %v1231 = vunpack.c.l.b16 %v203
    %v1232 = vunpack.c.h.b16 %v203
    %v1233 = vunpack.c.l.b16 %v204
    %v1234 = vunpack.c.l.b16 %v205
    %v1235 = vunpack.c.h.b16 %v205
    %v1236 = vunpack.c.l.b16 %v206
    %v1237 = vunpack.c.h.b16 %v206
    %v1238 = vunpack.c.l.b16 %v207
    %v1239 = vunpack.c.h.b16 %v207
    %v1240 = vunpack.c.l.b16 %v208
    %v1241 = vunpack.c.l.b16 %v209
    %v1242 = vunpack.c.h.b16 %v209
    %v1243 = vunpack.c.l.b16 %v210
    %v1244 = vunpack.c.h.b16 %v210
    %v1245 = vunpack.c.l.b16 %v211
    %v1246 = vunpack.c.h.b16 %v211
    %v1247 = vunpack.c.l.b16 %v212
    %v1248 = vunpack.c.l.b16 %v213
    %v1249 = vunpack.c.h.b16 %v213
    %v1250 = vunpack.c.l.b16 %v214
    %v1251 = vunpack.c.h.b16 %v214
    %v1252 = vunpack.c.l.b16 %v215
    %v1253 = vunpack.c.h.b16 %v215
    %v1254 = vunpack.c.l.b16 %v216
    %v1255 = vunpack.c.l.b16 %v217
    %v1256 = vunpack.c.h.b16 %v217
    %v1257 = vunpack.c.l.b16 %v218
    %v1258 = vunpack.c.h.b16 %v218
    %v1259 = vunpack.c.l.b16 %v219
    %v1260 = vunpack.c.h.b16 %v219
    %v1261 = vunpack.c.l.b16 %v220
    %v1262 = vunpack.c.l.b16 %v221
    %v1263 = vunpack.c.h.b16 %v221
    %v1264 = vunpack.c.l.b16 %v222
    %v1265 = vunpack.c.h.b16 %v222
    %v1266 = vunpack.c.l.b16 %v223
    %v1267 = vunpack.c.h.b16 %v223
    %v1268 = vunpack.c.l.b16 %v224
    %v1269 = vunpack.c.l.b16 %v225
    %v1270 = vunpack.c.h.b16 %v225
    %v1271 = vunpack.c.l.b16 %v226
    %v1272 = vunpack.c.h.b16 %v226
    %v1273 = vunpack.c.l.b16 %v227
    %v1274 = vunpack.c.h.b16 %v227
    %v1275 = vunpack.c.l.b16 %v228
    %v1276 = vunpack.c.l.b16 %v229
    %v1277 = vunpack.c.h.b16 %v229
    %v1278 = vunpack.c.l.b16 %v230
    %v1279 = vunpack.c.h.b16 %v230
    %v1280 = vunpack.c.l.b16 %v231
    %v1281 = vunpack.c.h.b16 %v231
    %v1282 = vunpack.c.l.b16 %v232
    %v1283 = vunpack.c.l.b16 %v233
    %v1284 = vunpack.c.h.b16 %v233
    %v1285 = vunpack.c.l.b16 %v234
    %v1286 = vunpack.c.h.b16 %v234
    %v1287 = vunpack.c.l.b16 %v235
    %v1288 = vunpack.c.h.b16 %v235
    %v1289 = vunpack.c.l.b16 %v236
    %v1290 = vunpack.c.l.b16 %v237
    %v1291 = vunpack.c.h.b16 %v237
    %v1292 = vunpack.c.l.b16 %v238
    %v1293 = vunpack.c.h.b16 %v238
    %v1294 = vunpack.c.l.b16 %v239
    %v1295 = vunpack.c.h.b16 %v239
    %v1296 = vunpack.c.l.b16 %v240
    %v1297 = vunpack.c.l.b16 %v241
    %v1298 = vunpack.c.h.b16 %v241
    %v1299 = vunpack.c.l.b16 %v242
    %v1300 = vunpack.c.h.b16 %v242
    %v1301 = vunpack.c.l.b16 %v243
    %v1302 = vunpack.c.h.b16 %v243
    %v1303 = vunpack.c.l.b16 %v244
    %v1304 = vunpack.c.l.b16 %v245
    %v1305 = vunpack.c.h.b16 %v245
    %v1306 = vunpack.c.l.b16 %v246
    %v1307 = vunpack.c.h.b16 %v246
    %v1308 = vunpack.c.l.b16 %v247
    %v1309 = vunpack.c.h.b16 %v247
    %v1310 = vunpack.c.l.b16 %v248
    %v1311 = vunpack.c.l.b16 %v249
    %v1312 = vunpack.c.h.b16 %v249
    %v1313 = vunpack.c.l.b16 %v250
    %v1314 = vunpack.c.h.b16 %v250
    %v1315 = vunpack.c.l.b16 %v251
    %v1316 = vunpack.c.h.b16 %v251
    %v1317 = vunpack.c.l.b16 %v252
    %v1318 = vunpack.c.l.b16 %v253
    %v1319 = vunpack.c.h.b16 %v253
    %v1320 = vunpack.c.l.b16 %v254
    %v1321 = vunpack.c.h.b16 %v254
    %v1322 = vunpack.c.l.b16 %v255
    %v1323 = vunpack.c.h.b16 %v255
    %v1324 = vunpack.c.l.b16 %v256
    %v1325 = vunpack.c.l.b16 %v257
    %v1326 = vunpack.c.h.b16 %v257
    %v1327 = vunpack.c.l.b16 %v258
    %v1328 = vunpack.c.h.b16 %v258
    %v1329 = vunpack.c.l.b16 %v259
    %v1330 = vunpack.c.h.b16 %v259
    %v1331 = vunpack.c.l.b16 %v260
    %v1332 = vunpack.c.l.b16 %v261
    %v1333 = vunpack.c.h.b16 %v261
    %v1334 = vunpack.c.l.b16 %v262
    %v1335 = vunpack.c.h.b16 %v262
    %v1336 = vunpack.c.l.b16 %v263
    %v1337 = vunpack.c.h.b16 %v263
    %v1338 = vunpack.c.l.b16 %v264
    %v1339 = vunpack.c.l.b16 %v265
    %v1340 = vunpack.c.h.b16 %v265
    %v1341 = vunpack.c.l.b16 %v266
    %v1342 = vunpack.c.h.b16 %v266
    %v1343 = vunpack.c.l.b16 %v267
    %v1344 = vunpack.c.h.b16 %v267
    %v1345 = vunpack.c.l.b16 %v268
    %v1346 = vunpack.c.l.b16 %v269
    %v1347 = vunpack.c.h.b16 %v269
    %v1348 = vunpack.c.l.b16 %v270
    %v1349 = vunpack.c.h.b16 %v270
    %v1350 = vunpack.c.l.b16 %v271
    %v1351 = vunpack.c.h.b16 %v271
    %v1352 = vunpack.c.l.b16 %v272
    %v1353 = vunpack.c.l.b16 %v273
    %v1354 = vunpack.c.h.b16 %v273
    %v1355 = vunpack.c.l.b16 %v274
    %v1356 = vunpack.c.h.b16 %v274
    %v1357 = vunpack.c.l.b16 %v275
    %v1358 = vunpack.c.h.b16 %v275
    %v1359 = vunpack.c.l.b16 %v276
    %v1360 = vunpack.c.l.b16 %v277
    %v1361 = vunpack.c.h.b16 %v277
    %v1362 = vunpack.c.l.b16 %v278
    %v1363 = vunpack.c.h.b16 %v278
    %v1364 = vunpack.c.l.b16 %v279
    %v1365 = vunpack.c.h.b16 %v279
    %v1366 = vunpack.c.l.b16 %v280
    %v1367 = vunpack.c.l.b16 %v281
    %v1368 = vunpack.c.h.b16 %v281
    %v1369 = vunpack.c.l.b16 %v282
    %v1370 = vunpack.c.h.b16 %v282
    %v1371 = vunpack.c.l.b16 %v283
    %v1372 = vunpack.c.h.b16 %v283
    %v1373 = vunpack.c.l.b16 %v284
    %v1374 = vunpack.c.l.b16 %v285
    %v1375 = vunpack.c.h.b16 %v285
    %v1376 = vunpack.c.l.b16 %v286
    %v1377 = vunpack.c.h.b16 %v286
    %v1378 = vunpack.c.l.b16 %v287
    %v1379 = vunpack.c.h.b16 %v287
    %v1380 = vunpack.c.l.b16 %v288
    %v1381 = vunpack.c.l.b16 %v289
    %v1382 = vunpack.c.h.b16 %v289
    %v1383 = vunpack.c.l.b16 %v290
    %v1384 = vunpack.c.h.b16 %v290
    %v1385 = vunpack.c.l.b16 %v291
    %v1386 = vunpack.c.h.b16 %v291
    %v1387 = vunpack.c.l.b16 %v292
    %v1388 = vunpack.c.l.b16 %v293
    %v1389 = vunpack.c.h.b16 %v293
    %v1390 = vunpack.c.l.b16 %v294
    %v1391 = vunpack.c.h.b16 %v294
    %v1392 = vunpack.c.l.b16 %v295
    %v1393 = vunpack.c.h.b16 %v295
    %v1394 = vunpack.c.l.b16 %v296
    %v1395 = vunpack.c.l.b16 %v297
    %v1396 = vunpack.c.h.b16 %v297
    %v1397 = vunpack.c.l.b16 %v298
    %v1398 = vunpack.c.h.b16 %v298
    %v1399 = vunpack.c.l.b16 %v299
    %v1400 = vunpack.c.h.b16 %v299
    %v1401 = vunpack.c.l.b16 %v300
    %v1402 = vunpack.c.l.b16 %v301
    %v1403 = vunpack.c.h.b16 %v301
    %v1404 = vunpack.c.l.b16 %v302
    %v1405 = vunpack.c.h.b16 %v302
    %v1406 = vunpack.c.l.b16 %v303
    %v1407 = vunpack.c.h.b16 %v303
    %v1408 = vunpack.c.l.b16 %v304
    %v1409 = vunpack.c.l.b16 %v305
    %v1410 = vunpack.c.h.b16 %v305
    %v1411 = vunpack.c.l.b16 %v306
    %v1412 = vunpack.c.h.b16 %v306
    %v1413 = vunpack.c.l.b16 %v307
    %v1414 = vunpack.c.h.b16 %v307
    %v1415 = vunpack.c.l.b16 %v308
    %v1416 = vunpack.c.l.b16 %v309
    %v1417 = vunpack.c.h.b16 %v309
    %v1418 = vunpack.c.l.b16 %v310
    %v1419 = vunpack.c.h.b16 %v310
    %v1420 = vunpack.c.l.b16 %v311
    %v1421 = vunpack.c.h.b16 %v311
    %v1422 = vunpack.c.l.b16 %v312
    %v1423 = vunpack.c.l.b16 %v313
    %v1424 = vunpack.c.h.b16 %v313
    %v1425 = vunpack.c.l.b16 %v314
    %v1426 = vunpack.c.h.b16 %v314
    %v1427 = vunpack.c.l.b16 %v315
    %v1428 = vunpack.c.h.b16 %v315
    %v1429 = vunpack.c.l.b16 %v316
    %v1430 = vunpack.c.l.b16 %v317
    %v1431 = vunpack.c.h.b16 %v317
    %v1432 = vunpack.c.l.b16 %v318
    %v1433 = vunpack.c.h.b16 %v318
    %v1434 = vunpack.c.l.b16 %v319
    %v1435 = vunpack.c.h.b16 %v319
    %v1436 = vunpack.c.l.b16 %v320
    %v1437 = vunpack.c.l.b16 %v321
    %v1438 = vunpack.c.h.b16 %v321
    %v1439 = vunpack.c.l.b16 %v322
    %v1440 = vunpack.c.h.b16 %v322
    %v1441 = vunpack.c.l.b16 %v323
    %v1442 = vunpack.c.h.b16 %v323
    %v1443 = vunpack.c.l.b16 %v324
    %v1444 = vunpack.c.l.b16 %v325
    %v1445 = vunpack.c.h.b16 %v325
    %v1446 = vunpack.c.l.b16 %v326
    %v1447 = vunpack.c.h.b16 %v326
    %v1448 = vunpack.c.l.b16 %v327
    %v1449 = vunpack.c.h.b16 %v327
    %v1450 = vunpack.c.l.b16 %v328
    %v1451 = vunpack.c.l.b16 %v329
    %v1452 = vunpack.c.h.b16 %v329
    %v1453 = vunpack.c.l.b16 %v330
    %v1454 = vunpack.c.h.b16 %v330
    %v1455 = vunpack.c.l.b16 %v331
    %v1456 = vunpack.c.h.b16 %v331
    %v1457 = vunpack.c.l.b16 %v332
    %v1458 = vunpack.c.l.b16 %v333
    %v1459 = vunpack.c.h.b16 %v333
    %v1460 = vunpack.c.l.b16 %v334
    %v1461 = vunpack.c.h.b16 %v334
    %v1462 = vunpack.c.l.b16 %v335
    %v1463 = vunpack.c.h.b16 %v335
    %v1464 = vunpack.c.l.b16 %v336
    %v1465 = vunpack.c.l.b16 %v337
    %v1466 = vunpack.c.h.b16 %v337
    %v1467 = vunpack.c.l.b16 %v338
    %v1468 = vunpack.c.h.b16 %v338
    %v1469 = vunpack.c.l.b16 %v339
    %v1470 = vunpack.c.h.b16 %v339
    %v1471 = vunpack.c.l.b16 %v340
    %v1472 = vunpack.c.l.b16 %v341
    %v1473 = vunpack.c.h.b16 %v341
    %v1474 = vunpack.c.l.b16 %v342
    %v1475 = vunpack.c.h.b16 %v342
    %v1476 = vunpack.c.l.b16 %v343
    %v1477 = vunpack.c.h.b16 %v343
    %v1478 = vunpack.c.l.b16 %v344
    %v1479 = vunpack.c.l.b16 %v345
    %v1480 = vunpack.c.h.b16 %v345
    %v1481 = vunpack.c.l.b16 %v346
    %v1482 = vunpack.c.h.b16 %v346
    %v1483 = vunpack.c.l.b16 %v347
    %v1484 = vunpack.c.h.b16 %v347
    %v1485 = vunpack.c.l.b16 %v348
    %v1486 = vunpack.c.l.b16 %v349
    %v1487 = vunpack.c.h.b16 %v349
    %v1488 = vunpack.c.l.b16 %v350
    %v1489 = vunpack.c.h.b16 %v350
    %v1490 = vunpack.c.l.b16 %v351
    %v1491 = vunpack.c.h.b16 %v351
    %v1492 = vunpack.c.l.b16 %v352
    %v1493 = vunpack.c.l.b16 %v353
    %v1494 = vunpack.c.h.b16 %v353
    %v1495 = vunpack.c.l.b16 %v354
    %v1496 = vunpack.c.h.b16 %v354
    %v1497 = vunpack.c.l.b16 %v355
    %v1498 = vunpack.c.h.b16 %v355
    %v1499 = vunpack.c.l.b16 %v356
    %v1500 = vunpack.c.l.b16 %v357
    %v1501 = vunpack.c.h.b16 %v357
    %v1502 = vunpack.c.l.b16 %v358
    %v1503 = vunpack.c.h.b16 %v358
    %v1504 = vunpack.c.l.b16 %v359
    %v1505 = vunpack.c.h.b16 %v359
    %v1506 = vunpack.c.l.b16 %v360
    %v1507 = vunpack.c.l.b16 %v361
    %v1508 = vunpack.c.h.b16 %v361
    %v1509 = vunpack.c.l.b16 %v362
    %v1510 = vunpack.c.h.b16 %v362
    %v1511 = vunpack.c.l.b16 %v363
    %v1512 = vunpack.c.h.b16 %v363
    %v1513 = vunpack.c.l.b16 %v364
    %v1514 = vunpack.c.l.b16 %v365
    %v1515 = vunpack.c.h.b16 %v365
    %v1516 = vunpack.c.l.b16 %v366
    %v1517 = vunpack.c.h.b16 %v366
    %v1518 = vunpack.c.l.b16 %v367
    %v1519 = vunpack.c.h.b16 %v367
    %v1520 = vunpack.c.l.b16 %v368
    %v1521 = vunpack.c.l.b16 %v369
    %v1522 = vunpack.c.h.b16 %v369
    %v1523 = vunpack.c.l.b16 %v370
    %v1524 = vunpack.c.h.b16 %v370
    %v1525 = vunpack.c.l.b16 %v371
    %v1526 = vunpack.c.h.b16 %v371
    %v1527 = vunpack.c.l.b16 %v372
    %v1528 = vunpack.c.l.b16 %v373
    %v1529 = vunpack.c.h.b16 %v373
    %v1530 = vunpack.c.l.b16 %v374
    %v1531 = vunpack.c.h.b16 %v374
    %v1532 = vunpack.c.l.b16 %v375
    %v1533 = vunpack.c.h.b16 %v375
    %v1534 = vunpack.c.l.b16 %v376
    %v1535 = vunpack.c.l.b16 %v377
    %v1536 = vunpack.c.h.b16 %v377
    %v1537 = vunpack.c.l.b16 %v378
    %v1538 = vunpack.c.h.b16 %v378
    %v1539 = vunpack.c.l.b16 %v379
    %v1540 = vunpack.c.h.b16 %v379
    %v1541 = vunpack.c.l.b16 %v380
    %v1542 = vunpack.c.l.b16 %v381
    %v1543 = vunpack.c.h.b16 %v381
    %v1544 = vunpack.c.l.b16 %v382
    %v1545 = vunpack.c.h.b16 %v382
    %v1546 = vunpack.c.l.b16 %v383
    %v1547 = vunpack.c.h.b16 %v383
    %v1548 = vunpack.c.l.b16 %v384
    %v1549 = vunpack.c.l.b16 %v385
    %v1550 = vunpack.c.h.b16 %v385
    %v1551 = vunpack.c.l.b16 %v386
    %v1552 = vunpack.c.h.b16 %v386
    %v1553 = vunpack.c.l.b16 %v387
    %v1554 = vunpack.c.h.b16 %v387
    %v1555 = vunpack.c.l.b16 %v388
    %v1556 = vunpack.c.l.b16 %v389
    %v1557 = vunpack.c.h.b16 %v389
    %v1558 = vunpack.c.l.b16 %v390
    %v1559 = vunpack.c.h.b16 %v390
    %v1560 = vunpack.c.l.b16 %v391
    %v1561 = vunpack.c.h.b16 %v391
    %v1562 = vunpack.c.l.b16 %v392
    %v1563 = vunpack.c.l.b16 %v393
    %v1564 = vunpack.c.h.b16 %v393
    %v1565 = vunpack.c.l.b16 %v394
    %v1566 = vunpack.c.h.b16 %v394
    %v1567 = vunpack.c.l.b16 %v395
    %v1568 = vunpack.c.h.b16 %v395
    %v1569 = vunpack.c.l.b16 %v396
    %v1570 = vunpack.c.l.b16 %v397
    %v1571 = vunpack.c.h.b16 %v397
    %v1572 = vunpack.c.l.b16 %v398
    %v1573 = vunpack.c.h.b16 %v398
    %v1574 = vunpack.c.l.b16 %v399
    %v1575 = vunpack.c.h.b16 %v399
    %v1576 = vunpack.c.l.b16 %v400
    %v1577 = vunpack.c.l.b16 %v401
    %v1578 = vunpack.c.h.b16 %v401
    %v1579 = vunpack.c.l.b16 %v402
    %v1580 = vunpack.c.h.b16 %v402
    %v1581 = vunpack.c.l.b16 %v403
    %v1582 = vunpack.c.h.b16 %v403
    %v1583 = vunpack.c.l.b16 %v404
    %v1584 = vunpack.c.l.b16 %v405
    %v1585 = vunpack.c.h.b16 %v405
    %v1586 = vunpack.c.l.b16 %v406
    %v1587 = vunpack.c.h.b16 %v406
    %v1588 = vunpack.c.l.b16 %v407
    %v1589 = vunpack.c.h.b16 %v407
    %v1590 = vunpack.c.l.b16 %v408
    %v1591 = vunpack.c.l.b16 %v409
    %v1592 = vunpack.c.h.b16 %v409
    %v1593 = vunpack.c.l.b16 %v410
    %v1594 = vunpack.c.h.b16 %v410
    %v1595 = vunpack.c.l.b16 %v411
    %v1596 = vunpack.c.h.b16 %v411
    %v1597 = vunpack.c.l.b16 %v412
    %v1598 = vunpack.c.l.b16 %v413
    %v1599 = vunpack.c.h.b16 %v413
    %v1600 = vunpack.c.l.b16 %v414
    %v1601 = vunpack.c.h.b16 %v414
    %v1602 = vunpack.c.l.b16 %v415
    %v1603 = vunpack.c.h.b16 %v415
    %v1604 = vunpack.c.l.b16 %v416
    %v1605 = vunpack.c.l.b16 %v417
    %v1606 = vunpack.c.h.b16 %v417
    %v1607 = vunpack.c.l.b16 %v418
    %v1608 = vunpack.c.h.b16 %v418
    %v1609 = vunpack.c.l.b16 %v419
    %v1610 = vunpack.c.h.b16 %v419
    %v1611 = vunpack.c.l.b16 %v420
    %v1612 = vunpack.c.l.b16 %v421
    %v1613 = vunpack.c.h.b16 %v421
    %v1614 = vunpack.c.l.b16 %v422
    %v1615 = vunpack.c.h.b16 %v422
    %v1616 = vunpack.c.l.b16 %v423
    %v1617 = vunpack.c.h.b16 %v423
    %v1618 = vunpack.c.l.b16 %v424
    %v1619 = vunpack.c.l.b16 %v425
    %v1620 = vunpack.c.h.b16 %v425
    %v1621 = vunpack.c.l.b16 %v426
    %v1622 = vunpack.c.h.b16 %v426
    %v1623 = vunpack.c.l.b16 %v427
    %v1624 = vunpack.c.h.b16 %v427
    %v1625 = vunpack.c.l.b16 %v428
    %v1626 = vunpack.c.l.b16 %v429
    %v1627 = vunpack.c.h.b16 %v429
    %v1628 = vunpack.c.l.b16 %v430
    %v1629 = vunpack.c.h.b16 %v430
    %v1630 = vunpack.c.l.b16 %v431
    %v1631 = vunpack.c.h.b16 %v431
    %v1632 = vunpack.c.l.b16 %v432
    %v1633 = vunpack.c.l.b16 %v433
    %v1634 = vunpack.c.h.b16 %v433
    %v1635 = vunpack.c.l.b16 %v434
    %v1636 = vunpack.c.h.b16 %v434
    %v1637 = vunpack.c.l.b16 %v435
    %v1638 = vunpack.c.h.b16 %v435
    %v1639 = vunpack.c.l.b16 %v436
    %v1640 = vunpack.c.l.b16 %v437
    %v1641 = vunpack.c.h.b16 %v437
    %v1642 = vunpack.c.l.b16 %v438
    %v1643 = vunpack.c.h.b16 %v438
    %v1644 = vunpack.c.l.b16 %v439
    %v1645 = vunpack.c.h.b16 %v439
    %v1646 = vunpack.c.l.b16 %v440
    %v1647 = vunpack.c.l.b16 %v441
    %v1648 = vunpack.c.h.b16 %v441
    %v1649 = vunpack.c.l.b16 %v442
    %v1650 = vunpack.c.h.b16 %v442
    %v1651 = vunpack.c.l.b16 %v443
    %v1652 = vunpack.c.h.b16 %v443
    %v1653 = vunpack.c.l.b16 %v444
    %v1654 = vunpack.c.l.b16 %v445
    %v1655 = vunpack.c.h.b16 %v445
    %v1656 = vunpack.c.l.b16 %v446
    %v1657 = vunpack.c.h.b16 %v446
    %v1658 = vunpack.c.l.b16 %v447
    %v1659 = vunpack.c.h.b16 %v447
    %v1660 = vunpack.c.l.b16 %v448
    %v1661 = vunpack.c.l.b16 %v449
    %v1662 = vunpack.c.h.b16 %v449
    %v1663 = vunpack.c.l.b16 %v450
    %v1664 = vunpack.c.h.b16 %v450
    %v1665 = vunpack.c.l.b16 %v451
    %v1666 = vunpack.c.h.b16 %v451
    %v1667 = vunpack.c.l.b16 %v452
    %v1668 = vunpack.c.l.b16 %v453
    %v1669 = vunpack.c.h.b16 %v453
    %v1670 = vunpack.c.l.b16 %v454
    %v1671 = vunpack.c.h.b16 %v454
    %v1672 = vunpack.c.l.b16 %v455
    %v1673 = vunpack.c.h.b16 %v455
    %v1674 = vunpack.c.l.b16 %v456
    %v1675 = vunpack.c.l.b16 %v457
    %v1676 = vunpack.c.h.b16 %v457
    %v1677 = vunpack.c.l.b16 %v458
    %v1678 = vunpack.c.h.b16 %v458
    %v1679 = vunpack.c.l.b16 %v459
    %v1680 = vunpack.c.h.b16 %v459
    %v1681 = vunpack.c.l.b16 %v460
    %v1682 = vunpack.c.l.b16 %v461
    %v1683 = vunpack.c.h.b16 %v461
    %v1684 = vunpack.c.l.b16 %v462
    %v1685 = vunpack.c.h.b16 %v462
    %v1686 = vunpack.c.l.b16 %v463
    %v1687 = vunpack.c.h.b16 %v463
    %v1688 = vunpack.c.l.b16 %v464
    %v1689 = vunpack.c.l.b16 %v465
    %v1690 = vunpack.c.h.b16 %v465
    %v1691 = vunpack.c.l.b16 %v466
    %v1692 = vunpack.c.h.b16 %v466
    %v1693 = vunpack.c.l.b16 %v467
    %v1694 = vunpack.c.h.b16 %v467
    %v1695 = vunpack.c.l.b16 %v468
    %v1696 = vunpack.c.l.b16 %v469
    %v1697 = vunpack.c.h.b16 %v469
    %v1698 = vunpack.c.l.b16 %v470
    %v1699 = vunpack.c.h.b16 %v470
    %v1700 = vunpack.c.l.b16 %v471
    %v1701 = vunpack.c.h.b16 %v471
    %v1702 = vunpack.c.l.b16 %v472
    %v1703 = vunpack.c.l.b16 %v473
    %v1704 = vunpack.c.h.b16 %v473
    %v1705 = vunpack.c.l.b16 %v474
    %v1706 = vunpack.c.h.b16 %v474
    %v1707 = vunpack.c.l.b16 %v475
    %v1708 = vunpack.c.h.b16 %v475
    %v1709 = vunpack.c.l.b16 %v476
    %v1710 = vunpack.c.l.b16 %v477
    %v1711 = vunpack.c.h.b16 %v477
    %v1712 = vunpack.c.l.b16 %v478
    %v1713 = vunpack.c.h.b16 %v478
    %v1714 = vunpack.c.l.b16 %v479
    %v1715 = vunpack.c.h.b16 %v479
    %v1716 = vunpack.c.l.b16 %v480
    %v1717 = vunpack.c.l.b16 %v481
    %v1718 = vunpack.c.h.b16 %v481
    %v1719 = vunpack.c.l.b16 %v482
    %v1720 = vunpack.c.h.b16 %v482
    %v1721 = vunpack.c.l.b16 %v483
    %v1722 = vunpack.c.h.b16 %v483
    %v1723 = vunpack.c.l.b16 %v484
    %v1724 = vunpack.c.l.b16 %v485
    %v1725 = vunpack.c.h.b16 %v485
    %v1726 = vunpack.c.l.b16 %v486
    %v1727 = vunpack.c.h.b16 %v486
    %v1728 = vunpack.c.l.b16 %v487
    %v1729 = vunpack.c.h.b16 %v487
    %v1730 = vunpack.c.l.b16 %v488
    %v1731 = vunpack.c.l.b16 %v489
    %v1732 = vunpack.c.h.b16 %v489
    %v1733 = vunpack.c.l.b16 %v490
    %v1734 = vunpack.c.h.b16 %v490
    %v1735 = vunpack.c.l.b16 %v491
    %v1736 = vunpack.c.h.b16 %v491
    %v1737 = vunpack.c.l.b16 %v492
    %v1738 = vunpack.c.l.b16 %v493
    %v1739 = vunpack.c.h.b16 %v493
    %v1740 = vunpack.c.l.b16 %v494
    %v1741 = vunpack.c.h.b16 %v494
    %v1742 = vunpack.c.l.b16 %v495
    %v1743 = vunpack.c.h.b16 %v495
    %v1744 = vunpack.c.l.b16 %v496
    %v1745 = vunpack.c.l.b16 %v497
    %v1746 = vunpack.c.h.b16 %v497
    %v1747 = vunpack.c.l.b16 %v498
    %v1748 = vunpack.c.h.b16 %v498
    %v1749 = vunpack.c.l.b16 %v499
    %v1750 = vunpack.c.h.b16 %v499
    %v1751 = vunpack.c.l.b16 %v500
    %v1752 = vunpack.c.l.b16 %v501
    %v1753 = vunpack.c.h.b16 %v501
    %v1754 = vunpack.c.l.b16 %v502
    %v1755 = vunpack.c.h.b16 %v502
    %v1756 = vunpack.c.l.b16 %v503
    %v1757 = vunpack.c.h.b16 %v503
    %v1758 = vunpack.c.l.b16 %v504
    %v1759 = vunpack.c.l.b16 %v505
    %v1760 = vunpack.c.h.b16 %v505
    %v1761 = vunpack.c.l.b16 %v506
    %v1762 = vunpack.c.h.b16 %v506
    %v1763 = vunpack.c.l.b16 %v507
    %v1764 = vunpack.c.h.b16 %v507
    %v1765 = vunpack.c.l.b16 %v508
    %v1766 = vunpack.c.l.b16 %v509
    %v1767 = vunpack.c.h.b16 %v509
    %v1768 = vunpack.c.l.b16 %v510
    %v1769 = vunpack.c.h.b16 %v510
    %v1770 = vunpack.c.l.b16 %v511
    %v1771 = vunpack.c.h.b16 %v511
    %v1772 = vunpack.c.l.b16 %v512
    %v1773 = vunpack.c.l.b16 %v513
    %v1774 = vunpack.c.h.b16 %v513
    %v1775 = vunpack.c.l.b16 %v514
    %v1776 = vunpack.c.h.b16 %v514
    %v1777 = vunpack.c.l.b16 %v515
    %v1778 = vunpack.c.h.b16 %v515
    %v1779 = vunpack.c.l.b16 %v516
    %v1780 = vunpack.c.l.b16 %v517
    %v1781 = vunpack.c.h.b16 %v517
    %v1782 = vunpack.c.l.b16 %v518
    %v1783 = vunpack.c.h.b16 %v518
    %v1784 = vunpack.c.l.b16 %v519
    %v1785 = vunpack.c.h.b16 %v519
    %v1786 = vunpack.c.l.b16 %v520
    %v1787 = vunpack.c.l.b16 %v521
    %v1788 = vunpack.c.h.b16 %v521
    %v1789 = vunpack.c.l.b16 %v522
    %v1790 = vunpack.c.h.b16 %v522
    %v1791 = vunpack.c.l.b16 %v523
    %v1792 = vunpack.c.h.b16 %v523
    %v1793 = vunpack.c.l.b16 %v524
    %v1794 = vunpack.c.l.b16 %v525
    %v1795 = vunpack.c.h.b16 %v525
    %v1796 = vunpack.c.l.b16 %v526
    %v1797 = vunpack.c.h.b16 %v526
    %v1798 = vunpack.c.l.b16 %v527
    %v1799 = vunpack.c.h.b16 %v527
    %v1800 = vunpack.c.l.b16 %v528
    %v1801 = vunpack.c.l.b16 %v529
    %v1802 = vunpack.c.h.b16 %v529
    %v1803 = vunpack.c.l.b16 %v530
    %v1804 = vunpack.c.h.b16 %v530
    %v1805 = vunpack.c.l.b16 %v531
    %v1806 = vunpack.c.h.b16 %v531
    %v1807 = vunpack.c.l.b16 %v532
    %v1808 = vunpack.c.l.b16 %v533
    %v1809 = vunpack.c.h.b16 %v533
    %v1810 = vunpack.c.l.b16 %v534
    %v1811 = vunpack.c.h.b16 %v534
    %v1812 = vunpack.c.l.b16 %v535
    %v1813 = vunpack.c.h.b16 %v535
    %v1814 = vunpack.c.l.b16 %v536
    %v1815 = vunpack.c.l.b16 %v537
    %v1816 = vunpack.c.h.b16 %v537
    %v1817 = vunpack.c.l.b16 %v538
    %v1818 = vunpack.c.h.b16 %v538
    %v1819 = vunpack.c.l.b16 %v539
    %v1820 = vunpack.c.h.b16 %v539
    %v1821 = vunpack.c.l.b16 %v540
    %v1822 = vunpack.c.l.b16 %v541
    %v1823 = vunpack.c.h.b16 %v541
    %v1824 = vunpack.c.l.b16 %v542
    %v1825 = vunpack.c.h.b16 %v542
    %v1826 = vunpack.c.l.b16 %v543
    %v1827 = vunpack.c.h.b16 %v543
    %v1828 = vunpack.c.l.b16 %v544
    %v1829 = vunpack.c.l.b16 %v545
    %v1830 = vunpack.c.h.b16 %v545
    %v1831 = vunpack.c.l.b16 %v546
    %v1832 = vunpack.c.h.b16 %v546
    %v1833 = vunpack.c.l.b16 %v547
    %v1834 = vunpack.c.h.b16 %v547
    %v1835 = vunpack.c.l.b16 %v548
    %v1836 = vunpack.c.l.b16 %v549
    %v1837 = vunpack.c.h.b16 %v549
    %v1838 = vunpack.c.l.b16 %v550
    %v1839 = vunpack.c.h.b16 %v550
    %v1840 = vunpack.c.l.b16 %v551
    %v1841 = vunpack.c.h.b16 %v551
    %v1842 = vunpack.c.l.b16 %v552
    %v1843 = vunpack.c.l.b16 %v553
    %v1844 = vunpack.c.h.b16 %v553
    %v1845 = vunpack.c.l.b16 %v554
    %v1846 = vunpack.c.h.b16 %v554
    %v1847 = vunpack.c.l.b16 %v555
    %v1848 = vunpack.c.h.b16 %v555
    %v1849 = vunpack.c.l.b16 %v556
    %v1850 = vunpack.c.l.b16 %v557
    %v1851 = vunpack.c.h.b16 %v557
    %v1852 = vunpack.c.l.b16 %v558
    %v1853 = vunpack.c.h.b16 %v558
    %v1854 = vunpack.c.l.b16 %v559
    %v1855 = vunpack.c.h.b16 %v559
    %v1856 = vunpack.c.l.b16 %v560
    %v1857 = vunpack.c.l.b16 %v561
    %v1858 = vunpack.c.h.b16 %v561
    %v1859 = vunpack.c.l.b16 %v562
    %v1860 = vunpack.c.h.b16 %v562
    %v1861 = vunpack.c.l.b16 %v563
    %v1862 = vunpack.c.h.b16 %v563
    %v1863 = vunpack.c.l.b16 %v564
    %v1864 = vunpack.c.l.b16 %v565
    %v1865 = vunpack.c.h.b16 %v565
    %v1866 = vunpack.c.l.b16 %v566
    %v1867 = vunpack.c.h.b16 %v566
    %v1868 = vunpack.c.l.b16 %v567
    %v1869 = vunpack.c.h.b16 %v567
    %v1870 = vunpack.c.l.b16 %v568
    %v1871 = vunpack.c.l.b16 %v569
    %v1872 = vunpack.c.h.b16 %v569
    %v1873 = vunpack.c.l.b16 %v570
    %v1874 = vunpack.c.h.b16 %v570
    %v1875 = vunpack.c.l.b16 %v571
    %v1876 = vunpack.c.h.b16 %v571
    %v1877 = vunpack.c.l.b16 %v572
    %v1878 = vpack.c.b16 %v1101, %v1094
    %v1879 = vpack.c.b16 %v1102, %v1095
    %v1880 = vpack.c.b16 %v1103, %v1096
    %v1881 = vpack.c.b16 %v1104, %v1097
    %v1882 = vpack.c.b16 %v1105, %v1098
    %v1883 = vpack.c.b16 %v1106, %v1099
    %v1884 = vpack.c.b16 %v1107, %v1100
    %v1885 = vpack.c.b16 %v1115, %v1108
    %v1886 = vpack.c.b16 %v1116, %v1109
    %v1887 = vpack.c.b16 %v1117, %v1110
    %v1888 = vpack.c.b16 %v1118, %v1111
    %v1889 = vpack.c.b16 %v1119, %v1112
    %v1890 = vpack.c.b16 %v1120, %v1113
    %v1891 = vpack.c.b16 %v1121, %v1114
    %v1892 = vpack.c.b16 %v1129, %v1122
    %v1893 = vpack.c.b16 %v1130, %v1123
    %v1894 = vpack.c.b16 %v1131, %v1124
    %v1895 = vpack.c.b16 %v1132, %v1125
    %v1896 = vpack.c.b16 %v1133, %v1126
    %v1897 = vpack.c.b16 %v1134, %v1127
    %v1898 = vpack.c.b16 %v1135, %v1128
    %v1899 = vpack.c.b16 %v1143, %v1136
    %v1900 = vpack.c.b16 %v1144, %v1137
    %v1901 = vpack.c.b16 %v1145, %v1138
    %v1902 = vpack.c.b16 %v1146, %v1139
    %v1903 = vpack.c.b16 %v1147, %v1140
    %v1904 = vpack.c.b16 %v1148, %v1141
    %v1905 = vpack.c.b16 %v1149, %v1142
    %v1906 = vpack.c.b16 %v1157, %v1150
    %v1907 = vpack.c.b16 %v1158, %v1151
    %v1908 = vpack.c.b16 %v1159, %v1152
    %v1909 = vpack.c.b16 %v1160, %v1153
    %v1910 = vpack.c.b16 %v1161, %v1154
    %v1911 = vpack.c.b16 %v1162, %v1155
    %v1912 = vpack.c.b16 %v1163, %v1156
    %v1913 = vpack.c.b16 %v1171, %v1164
    %v1914 = vpack.c.b16 %v1172, %v1165
    %v1915 = vpack.c.b16 %v1173, %v1166
    %v1916 = vpack.c.b16 %v1174, %v1167
    %v1917 = vpack.c.b16 %v1175, %v1168
    %v1918 = vpack.c.b16 %v1176, %v1169
    %v1919 = vpack.c.b16 %v1177, %v1170
    %v1920 = vpack.c.b16 %v1185, %v1178
    %v1921 = vpack.c.b16 %v1186, %v1179
    %v1922 = vpack.c.b16 %v1187, %v1180
    %v1923 = vpack.c.b16 %v1188, %v1181
    %v1924 = vpack.c.b16 %v1189, %v1182
    %v1925 = vpack.c.b16 %v1190, %v1183
    %v1926 = vpack.c.b16 %v1191, %v1184
    %v1927 = vpack.c.b16 %v1199, %v1192
    %v1928 = vpack.c.b16 %v1200, %v1193
    %v1929 = vpack.c.b16 %v1201, %v1194
    %v1930 = vpack.c.b16 %v1202, %v1195
    %v1931 = vpack.c.b16 %v1203, %v1196
    %v1932 = vpack.c.b16 %v1204, %v1197
    %v1933 = vpack.c.b16 %v1205, %v1198
    %v1934 = vpack.c.b16 %v1213, %v1206
    %v1935 = vpack.c.b16 %v1214, %v1207
    %v1936 = vpack.c.b16 %v1215, %v1208
    %v1937 = vpack.c.b16 %v1216, %v1209
    %v1938 = vpack.c.b16 %v1217, %v1210
    %v1939 = vpack.c.b16 %v1218, %v1211
    %v1940 = vpack.c.b16 %v1219, %v1212
    %v1941 = vpack.c.b16 %v1227, %v1220
    %v1942 = vpack.c.b16 %v1228, %v1221
    %v1943 = vpack.c.b16 %v1229, %v1222
    %v1944 = vpack.c.b16 %v1230, %v1223
    %v1945 = vpack.c.b16 %v1231, %v1224
    %v1946 = vpack.c.b16 %v1232, %v1225
    %v1947 = vpack.c.b16 %v1233, %v1226
    %v1948 = vpack.c.b16 %v1241, %v1234
    %v1949 = vpack.c.b16 %v1242, %v1235
    %v1950 = vpack.c.b16 %v1243, %v1236
    %v1951 = vpack.c.b16 %v1244, %v1237
    %v1952 = vpack.c.b16 %v1245, %v1238
    %v1953 = vpack.c.b16 %v1246, %v1239
    %v1954 = vpack.c.b16 %v1247, %v1240
    %v1955 = vpack.c.b16 %v1255, %v1248
    %v1956 = vpack.c.b16 %v1256, %v1249
    %v1957 = vpack.c.b16 %v1257, %v1250
    %v1958 = vpack.c.b16 %v1258, %v1251
    %v1959 = vpack.c.b16 %v1259, %v1252
    %v1960 = vpack.c.b16 %v1260, %v1253
    %v1961 = vpack.c.b16 %v1261, %v1254
    %v1962 = vpack.c.b16 %v1269, %v1262
    %v1963 = vpack.c.b16 %v1270, %v1263
    %v1964 = vpack.c.b16 %v1271, %v1264
    %v1965 = vpack.c.b16 %v1272, %v1265
    %v1966 = vpack.c.b16 %v1273, %v1266
    %v1967 = vpack.c.b16 %v1274, %v1267
    %v1968 = vpack.c.b16 %v1275, %v1268
    %v1969 = vpack.c.b16 %v1283, %v1276
    %v1970 = vpack.c.b16 %v1284, %v1277
    %v1971 = vpack.c.b16 %v1285, %v1278
    %v1972 = vpack.c.b16 %v1286, %v1279
    %v1973 = vpack.c.b16 %v1287, %v1280
    %v1974 = vpack.c.b16 %v1288, %v1281
    %v1975 = vpack.c.b16 %v1289, %v1282
    %v1976 = vpack.c.b16 %v1297, %v1290
    %v1977 = vpack.c.b16 %v1298, %v1291
    %v1978 = vpack.c.b16 %v1299, %v1292
    %v1979 = vpack.c.b16 %v1300, %v1293
    %v1980 = vpack.c.b16 %v1301, %v1294
    %v1981 = vpack.c.b16 %v1302, %v1295
    %v1982 = vpack.c.b16 %v1303, %v1296
    %v1983 = vpack.c.b16 %v1311, %v1304
    %v1984 = vpack.c.b16 %v1312, %v1305
    %v1985 = vpack.c.b16 %v1313, %v1306
    %v1986 = vpack.c.b16 %v1314, %v1307
    %v1987 = vpack.c.b16 %v1315, %v1308
    %v1988 = vpack.c.b16 %v1316, %v1309
    %v1989 = vpack.c.b16 %v1317, %v1310
    %v1990 = vpack.c.b16 %v1325, %v1318
    %v1991 = vpack.c.b16 %v1326, %v1319
    %v1992 = vpack.c.b16 %v1327, %v1320
    %v1993 = vpack.c.b16 %v1328, %v1321
    %v1994 = vpack.c.b16 %v1329, %v1322
    %v1995 = vpack.c.b16 %v1330, %v1323
    %v1996 = vpack.c.b16 %v1331, %v1324
    %v1997 = vpack.c.b16 %v1339, %v1332
    %v1998 = vpack.c.b16 %v1340, %v1333
    %v1999 = vpack.c.b16 %v1341, %v1334
    %v2000 = vpack.c.b16 %v1342, %v1335
    %v2001 = vpack.c.b16 %v1343, %v1336
    %v2002 = vpack.c.b16 %v1344, %v1337
    %v2003 = vpack.c.b16 %v1345, %v1338
    %v2004 = vpack.c.b16 %v1353, %v1346
    %v2005 = vpack.c.b16 %v1354, %v1347
    %v2006 = vpack.c.b16 %v1355, %v1348
    %v2007 = vpack.c.b16 %v1356, %v1349
    %v2008 = vpack.c.b16 %v1357, %v1350
    %v2009 = vpack.c.b16 %v1358, %v1351
    %v2010 = vpack.c.b16 %v1359, %v1352
    %v2011 = vpack.c.b16 %v1367, %v1360
    %v2012 = vpack.c.b16 %v1368, %v1361
    %v2013 = vpack.c.b16 %v1369, %v1362
    %v2014 = vpack.c.b16 %v1370, %v1363
    %v2015 = vpack.c.b16 %v1371, %v1364
    %v2016 = vpack.c.b16 %v1372, %v1365
    %v2017 = vpack.c.b16 %v1373, %v1366
    %v2018 = vpack.c.b16 %v1381, %v1374
    %v2019 = vpack.c.b16 %v1382, %v1375
    %v2020 = vpack.c.b16 %v1383, %v1376
    %v2021 = vpack.c.b16 %v1384, %v1377
    %v2022 = vpack.c.b16 %v1385, %v1378
    %v2023 = vpack.c.b16 %v1386, %v1379
    %v2024 = vpack.c.b16 %v1387, %v1380
    %v2025 = vpack.c.b16 %v1395, %v1388
    %v2026 = vpack.c.b16 %v1396, %v1389
    %v2027 = vpack.c.b16 %v1397, %v1390
    %v2028 = vpack.c.b16 %v1398, %v1391
    %v2029 = vpack.c.b16 %v1399, %v1392
    %v2030 = vpack.c.b16 %v1400, %v1393
    %v2031 = vpack.c.b16 %v1401, %v1394
    %v2032 = vpack.c.b16 %v1409, %v1402
    %v2033 = vpack.c.b16 %v1410, %v1403
    %v2034 = vpack.c.b16 %v1411, %v1404
    %v2035 = vpack.c.b16 %v1412, %v1405
    %v2036 = vpack.c.b16 %v1413, %v1406
    %v2037 = vpack.c.b16 %v1414, %v1407
    %v2038 = vpack.c.b16 %v1415, %v1408
    %v2039 = vpack.c.b16 %v1423, %v1416
    %v2040 = vpack.c.b16 %v1424, %v1417
    %v2041 = vpack.c.b16 %v1425, %v1418
    %v2042 = vpack.c.b16 %v1426, %v1419
    %v2043 = vpack.c.b16 %v1427, %v1420
    %v2044 = vpack.c.b16 %v1428, %v1421
    %v2045 = vpack.c.b16 %v1429, %v1422
    %v2046 = vpack.c.b16 %v1437, %v1430
    %v2047 = vpack.c.b16 %v1438, %v1431
    %v2048 = vpack.c.b16 %v1439, %v1432
    %v2049 = vpack.c.b16 %v1440, %v1433
    %v2050 = vpack.c.b16 %v1441, %v1434
    %v2051 = vpack.c.b16 %v1442, %v1435
    %v2052 = vpack.c.b16 %v1443, %v1436
    %v2053 = vpack.c.b16 %v1451, %v1444
    %v2054 = vpack.c.b16 %v1452, %v1445
    %v2055 = vpack.c.b16 %v1453, %v1446
    %v2056 = vpack.c.b16 %v1454, %v1447
    %v2057 = vpack.c.b16 %v1455, %v1448
    %v2058 = vpack.c.b16 %v1456, %v1449
    %v2059 = vpack.c.b16 %v1457, %v1450
    %v2060 = vpack.c.b16 %v1465, %v1458
    %v2061 = vpack.c.b16 %v1466, %v1459
    %v2062 = vpack.c.b16 %v1467, %v1460
    %v2063 = vpack.c.b16 %v1468, %v1461
    %v2064 = vpack.c.b16 %v1469, %v1462
    %v2065 = vpack.c.b16 %v1470, %v1463
    %v2066 = vpack.c.b16 %v1471, %v1464
    %v2067 = vpack.c.b16 %v1479, %v1472
    %v2068 = vpack.c.b16 %v1480, %v1473
    %v2069 = vpack.c.b16 %v1481, %v1474
    %v2070 = vpack.c.b16 %v1482, %v1475
    %v2071 = vpack.c.b16 %v1483, %v1476
    %v2072 = vpack.c.b16 %v1484, %v1477
    %v2073 = vpack.c.b16 %v1485, %v1478
    %v2074 = vpack.c.b16 %v1493, %v1486
    %v2075 = vpack.c.b16 %v1494, %v1487
    %v2076 = vpack.c.b16 %v1495, %v1488
    %v2077 = vpack.c.b16 %v1496, %v1489
    %v2078 = vpack.c.b16 %v1497, %v1490
    %v2079 = vpack.c.b16 %v1498, %v1491
    %v2080 = vpack.c.b16 %v1499, %v1492
    %v2081 = vpack.c.b16 %v1507, %v1500
    %v2082 = vpack.c.b16 %v1508, %v1501
    %v2083 = vpack.c.b16 %v1509, %v1502
    %v2084 = vpack.c.b16 %v1510, %v1503
    %v2085 = vpack.c.b16 %v1511, %v1504
    %v2086 = vpack.c.b16 %v1512, %v1505
    %v2087 = vpack.c.b16 %v1513, %v1506
    %v2088 = vpack.c.b16 %v1521, %v1514
    %v2089 = vpack.c.b16 %v1522, %v1515
    %v2090 = vpack.c.b16 %v1523, %v1516
    %v2091 = vpack.c.b16 %v1524, %v1517
    %v2092 = vpack.c.b16 %v1525, %v1518
    %v2093 = vpack.c.b16 %v1526, %v1519
    %v2094 = vpack.c.b16 %v1527, %v1520
    %v2095 = vpack.c.b16 %v1535, %v1528
    %v2096 = vpack.c.b16 %v1536, %v1529
    %v2097 = vpack.c.b16 %v1537, %v1530
    %v2098 = vpack.c.b16 %v1538, %v1531
    %v2099 = vpack.c.b16 %v1539, %v1532
    %v2100 = vpack.c.b16 %v1540, %v1533
    %v2101 = vpack.c.b16 %v1541, %v1534
    %v2102 = vpack.c.b16 %v1549, %v1542
    %v2103 = vpack.c.b16 %v1550, %v1543
    %v2104 = vpack.c.b16 %v1551, %v1544
    %v2105 = vpack.c.b16 %v1552, %v1545
    %v2106 = vpack.c.b16 %v1553, %v1546
    %v2107 = vpack.c.b16 %v1554, %v1547
    %v2108 = vpack.c.b16 %v1555, %v1548
    %v2109 = vpack.c.b16 %v1563, %v1556
    %v2110 = vpack.c.b16 %v1564, %v1557
    %v2111 = vpack.c.b16 %v1565, %v1558
    %v2112 = vpack.c.b16 %v1566, %v1559
    %v2113 = vpack.c.b16 %v1567, %v1560
    %v2114 = vpack.c.b16 %v1568, %v1561
    %v2115 = vpack.c.b16 %v1569, %v1562
    %v2116 = vpack.c.b16 %v1577, %v1570
    %v2117 = vpack.c.b16 %v1578, %v1571
    %v2118 = vpack.c.b16 %v1579, %v1572
    %v2119 = vpack.c.b16 %v1580, %v1573
    %v2120 = vpack.c.b16 %v1581, %v1574
    %v2121 = vpack.c.b16 %v1582, %v1575
    %v2122 = vpack.c.b16 %v1583, %v1576
    %v2123 = vpack.c.b16 %v1591, %v1584
    %v2124 = vpack.c.b16 %v1592, %v1585
    %v2125 = vpack.c.b16 %v1593, %v1586
    %v2126 = vpack.c.b16 %v1594, %v1587
    %v2127 = vpack.c.b16 %v1595, %v1588
    %v2128 = vpack.c.b16 %v1596, %v1589
    %v2129 = vpack.c.b16 %v1597, %v1590
    %v2130 = vpack.c.b16 %v1605, %v1598
    %v2131 = vpack.c.b16 %v1606, %v1599
    %v2132 = vpack.c.b16 %v1607, %v1600
    %v2133 = vpack.c.b16 %v1608, %v1601
    %v2134 = vpack.c.b16 %v1609, %v1602
    %v2135 = vpack.c.b16 %v1610, %v1603
    %v2136 = vpack.c.b16 %v1611, %v1604
    %v2137 = vpack.c.b16 %v1619, %v1612
    %v2138 = vpack.c.b16 %v1620, %v1613
    %v2139 = vpack.c.b16 %v1621, %v1614
    %v2140 = vpack.c.b16 %v1622, %v1615
    %v2141 = vpack.c.b16 %v1623, %v1616
    %v2142 = vpack.c.b16 %v1624, %v1617
    %v2143 = vpack.c.b16 %v1625, %v1618
    %v2144 = vpack.c.b16 %v1633, %v1626
    %v2145 = vpack.c.b16 %v1634, %v1627
    %v2146 = vpack.c.b16 %v1635, %v1628
    %v2147 = vpack.c.b16 %v1636, %v1629
    %v2148 = vpack.c.b16 %v1637, %v1630
    %v2149 = vpack.c.b16 %v1638, %v1631
    %v2150 = vpack.c.b16 %v1639, %v1632
    %v2151 = vpack.c.b16 %v1647, %v1640
    %v2152 = vpack.c.b16 %v1648, %v1641
    %v2153 = vpack.c.b16 %v1649, %v1642
    %v2154 = vpack.c.b16 %v1650, %v1643
    %v2155 = vpack.c.b16 %v1651, %v1644
    %v2156 = vpack.c.b16 %v1652, %v1645
    %v2157 = vpack.c.b16 %v1653, %v1646
    %v2158 = vpack.c.b16 %v1661, %v1654
    %v2159 = vpack.c.b16 %v1662, %v1655
    %v2160 = vpack.c.b16 %v1663, %v1656
    %v2161 = vpack.c.b16 %v1664, %v1657
    %v2162 = vpack.c.b16 %v1665, %v1658
    %v2163 = vpack.c.b16 %v1666, %v1659
    %v2164 = vpack.c.b16 %v1667, %v1660
    %v2165 = vpack.c.b16 %v1675, %v1668
    %v2166 = vpack.c.b16 %v1676, %v1669
    %v2167 = vpack.c.b16 %v1677, %v1670
    %v2168 = vpack.c.b16 %v1678, %v1671
    %v2169 = vpack.c.b16 %v1679, %v1672
    %v2170 = vpack.c.b16 %v1680, %v1673
    %v2171 = vpack.c.b16 %v1681, %v1674
    %v2172 = vpack.c.b16 %v1689, %v1682
    %v2173 = vpack.c.b16 %v1690, %v1683
    %v2174 = vpack.c.b16 %v1691, %v1684
    %v2175 = vpack.c.b16 %v1692, %v1685
    %v2176 = vpack.c.b16 %v1693, %v1686
    %v2177 = vpack.c.b16 %v1694, %v1687
    %v2178 = vpack.c.b16 %v1695, %v1688
    %v2179 = vpack.c.b16 %v1703, %v1696
    %v2180 = vpack.c.b16 %v1704, %v1697
    %v2181 = vpack.c.b16 %v1705, %v1698
    %v2182 = vpack.c.b16 %v1706, %v1699
    %v2183 = vpack.c.b16 %v1707, %v1700
    %v2184 = vpack.c.b16 %v1708, %v1701
    %v2185 = vpack.c.b16 %v1709, %v1702
    %v2186 = vpack.c.b16 %v1717, %v1710
    %v2187 = vpack.c.b16 %v1718, %v1711
    %v2188 = vpack.c.b16 %v1719, %v1712
    %v2189 = vpack.c.b16 %v1720, %v1713
    %v2190 = vpack.c.b16 %v1721, %v1714
    %v2191 = vpack.c.b16 %v1722, %v1715
    %v2192 = vpack.c.b16 %v1723, %v1716
    %v2193 = vpack.c.b16 %v1731, %v1724
    %v2194 = vpack.c.b16 %v1732, %v1725
    %v2195 = vpack.c.b16 %v1733, %v1726
    %v2196 = vpack.c.b16 %v1734, %v1727
    %v2197 = vpack.c.b16 %v1735, %v1728
    %v2198 = vpack.c.b16 %v1736, %v1729
    %v2199 = vpack.c.b16 %v1737, %v1730
    %v2200 = vpack.c.b16 %v1745, %v1738
    %v2201 = vpack.c.b16 %v1746, %v1739
    %v2202 = vpack.c.b16 %v1747, %v1740
    %v2203 = vpack.c.b16 %v1748, %v1741
    %v2204 = vpack.c.b16 %v1749, %v1742
    %v2205 = vpack.c.b16 %v1750, %v1743
    %v2206 = vpack.c.b16 %v1751, %v1744
    %v2207 = vpack.c.b16 %v1759, %v1752
    %v2208 = vpack.c.b16 %v1760, %v1753
    %v2209 = vpack.c.b16 %v1761, %v1754
    %v2210 = vpack.c.b16 %v1762, %v1755
    %v2211 = vpack.c.b16 %v1763, %v1756
    %v2212 = vpack.c.b16 %v1764, %v1757
    %v2213 = vpack.c.b16 %v1765, %v1758
    %v2214 = vpack.c.b16 %v1773, %v1766
    %v2215 = vpack.c.b16 %v1774, %v1767
    %v2216 = vpack.c.b16 %v1775, %v1768
    %v2217 = vpack.c.b16 %v1776, %v1769
    %v2218 = vpack.c.b16 %v1777, %v1770
    %v2219 = vpack.c.b16 %v1778, %v1771
    %v2220 = vpack.c.b16 %v1779, %v1772
    %v2221 = vpack.c.b16 %v1787, %v1780
    %v2222 = vpack.c.b16 %v1788, %v1781
    %v2223 = vpack.c.b16 %v1789, %v1782
    %v2224 = vpack.c.b16 %v1790, %v1783
    %v2225 = vpack.c.b16 %v1791, %v1784
    %v2226 = vpack.c.b16 %v1792, %v1785
    %v2227 = vpack.c.b16 %v1793, %v1786
    %v2228 = vpack.c.b16 %v1801, %v1794
    %v2229 = vpack.c.b16 %v1802, %v1795
    %v2230 = vpack.c.b16 %v1803, %v1796
    %v2231 = vpack.c.b16 %v1804, %v1797
    %v2232 = vpack.c.b16 %v1805, %v1798
    %v2233 = vpack.c.b16 %v1806, %v1799
    %v2234 = vpack.c.b16 %v1807, %v1800
    %v2235 = vpack.c.b16 %v1815, %v1808
    %v2236 = vpack.c.b16 %v1816, %v1809
    %v2237 = vpack.c.b16 %v1817, %v1810
    %v2238 = vpack.c.b16 %v1818, %v1811
    %v2239 = vpack.c.b16 %v1819, %v1812
    %v2240 = vpack.c.b16 %v1820, %v1813
    %v2241 = vpack.c.b16 %v1821, %v1814
    %v2242 = vpack.c.b16 %v1829, %v1822
    %v2243 = vpack.c.b16 %v1830, %v1823
    %v2244 = vpack.c.b16 %v1831, %v1824
    %v2245 = vpack.c.b16 %v1832, %v1825
    %v2246 = vpack.c.b16 %v1833, %v1826
    %v2247 = vpack.c.b16 %v1834, %v1827
    %v2248 = vpack.c.b16 %v1835, %v1828
    %v2249 = vpack.c.b16 %v1843, %v1836
    %v2250 = vpack.c.b16 %v1844, %v1837
    %v2251 = vpack.c.b16 %v1845, %v1838
    %v2252 = vpack.c.b16 %v1846, %v1839
    %v2253 = vpack.c.b16 %v1847, %v1840
    %v2254 = vpack.c.b16 %v1848, %v1841
    %v2255 = vpack.c.b16 %v1849, %v1842
    %v2256 = vpack.c.b16 %v1857, %v1850
    %v2257 = vpack.c.b16 %v1858, %v1851
    %v2258 = vpack.c.b16 %v1859, %v1852
    %v2259 = vpack.c.b16 %v1860, %v1853
    %v2260 = vpack.c.b16 %v1861, %v1854
    %v2261 = vpack.c.b16 %v1862, %v1855
    %v2262 = vpack.c.b16 %v1863, %v1856
    %v2263 = vpack.c.b16 %v1871, %v1864
    %v2264 = vpack.c.b16 %v1872, %v1865
    %v2265 = vpack.c.b16 %v1873, %v1866
    %v2266 = vpack.c.b16 %v1874, %v1867
    %v2267 = vpack.c.b16 %v1875, %v1868
    %v2268 = vpack.c.b16 %v1876, %v1869
    %v2269 = vpack.c.b16 %v1877, %v1870
    %2662 = vmatprep.subr.bf16.mxu0 %v1928
    %2663 = vmatpush1.bf16.msra.mxu0 %v1927
    %2664 = vmatprep.subr.bf16.mxu0 %v1921
    %2665 = vmatpush1.bf16.msra.mxu0 %v1920
    %2666 = vmatprep.subr.bf16.mxu0 %v1914
    %2667 = vmatpush1.bf16.msra.mxu0 %v1913
    %2668 = vmatprep.subr.bf16.mxu0 %v1907
    %2669 = vmatpush1.bf16.msra.mxu0 %v1906
    %2670 = vmatprep.subr.bf16.mxu0 %v1900
    %2671 = vmatpush1.bf16.msra.mxu0 %v1899
    %2672 = vmatprep.subr.bf16.mxu0 %v1893
    %2673 = vmatpush1.bf16.msra.mxu0 %v1892
    %2674 = vmatprep.subr.bf16.mxu0 %v1886
    %2675 = vmatpush1.bf16.msra.mxu0 %v1885
    %2676 = vmatprep.subr.bf16.mxu0 %v1879
    %2677 = vmatpush1.bf16.msra.mxu0 %v1878
    %2678 = vmatprep.subr.bf16.mxu0 %v1984
    %2679 = vmatpush2.bf16.msra.mxu0 %v1983
    %2680 = vmatprep.subr.bf16.mxu0 %v1977
    %2681 = vmatpush2.bf16.msra.mxu0 %v1976
    %2682 = vmatprep.subr.bf16.mxu0 %v1970
    %2683 = vmatpush2.bf16.msra.mxu0 %v1969
    %2684 = vmatprep.subr.bf16.mxu0 %v1963
    %2685 = vmatpush2.bf16.msra.mxu0 %v1962
    %2686 = vmatprep.subr.bf16.mxu0 %v1956
    %2687 = vmatpush2.bf16.msra.mxu0 %v1955
    %2688 = vmatprep.subr.bf16.mxu0 %v1949
    %2689 = vmatpush2.bf16.msra.mxu0 %v1948
    %2690 = vmatprep.subr.bf16.mxu0 %v1942
    %2691 = vmatpush2.bf16.msra.mxu0 %v1941
    %2692 = vmatprep.subr.bf16.mxu0 %v1935
    %2693 = vmatpush2.bf16.msra.mxu0 %v1934
    %2694 = vmatprep.mubr.bf16.mxu0 %v633
    %2695 = vmatmul.mubr.bf16.gmra.mxu0 %v632
    %v2696 = vpop.f32.mrf.mxu0
    %v2697 = vadd.f32 %v578, %v2696
    %v2698 = vpop.f32.mrf.mxu0
    %v2699 = vadd.f32 %v582, %v2698
    %v2700 = vpop.f32.mrf.mxu0
    %v2701 = vadd.f32 %v578, %v2700
    %v2702 = vpop.f32.mrf.mxu0
    %v2703 = vadd.f32 %v582, %v2702
    %2704 = vdwg.mxu0
    %2705 = vmatprep.subr.bf16.mxu0 %v2040
    %2706 = vmatpush1.bf16.msra.mxu0 %v2039
    %2707 = vmatprep.subr.bf16.mxu0 %v2033
    %2708 = vmatpush1.bf16.msra.mxu0 %v2032
    %2709 = vmatprep.subr.bf16.mxu0 %v2026
    %2710 = vmatpush1.bf16.msra.mxu0 %v2025
    %2711 = vmatprep.subr.bf16.mxu0 %v2019
    %2712 = vmatpush1.bf16.msra.mxu0 %v2018
    %2713 = vmatprep.subr.bf16.mxu0 %v2012
    %2714 = vmatpush1.bf16.msra.mxu0 %v2011
    %2715 = vmatprep.subr.bf16.mxu0 %v2005
    %2716 = vmatpush1.bf16.msra.mxu0 %v2004
    %2717 = vmatprep.subr.bf16.mxu0 %v1998
    %2718 = vmatpush1.bf16.msra.mxu0 %v1997
    %2719 = vmatprep.subr.bf16.mxu0 %v1991
    %2720 = vmatpush1.bf16.msra.mxu0 %v1990
    %2721 = vmatprep.subr.bf16.mxu0 %v2096
    %2722 = vmatpush2.bf16.msra.mxu0 %v2095
    %2723 = vmatprep.subr.bf16.mxu0 %v2089
    %2724 = vmatpush2.bf16.msra.mxu0 %v2088
    %2725 = vmatprep.subr.bf16.mxu0 %v2082
    %2726 = vmatpush2.bf16.msra.mxu0 %v2081
    %2727 = vmatprep.subr.bf16.mxu0 %v2075
    %2728 = vmatpush2.bf16.msra.mxu0 %v2074
    %2729 = vmatprep.subr.bf16.mxu0 %v2068
    %2730 = vmatpush2.bf16.msra.mxu0 %v2067
    %2731 = vmatprep.subr.bf16.mxu0 %v2061
    %2732 = vmatpush2.bf16.msra.mxu0 %v2060
    %2733 = vmatprep.subr.bf16.mxu0 %v2054
    %2734 = vmatpush2.bf16.msra.mxu0 %v2053
    %2735 = vmatprep.subr.bf16.mxu0 %v2047
    %2736 = vmatpush2.bf16.msra.mxu0 %v2046
    %2737 = vmatprep.mubr.bf16.mxu0 %v635
    %2738 = vmatmul.mubr.bf16.gmra.mxu0 %v634
    %v2739 = vpop.f32.mrf.mxu0
    %v2740 = vadd.f32 %v2697, %v2739
    %v2741 = vpop.f32.mrf.mxu0
    %v2742 = vadd.f32 %v2699, %v2741
    %v2743 = vpop.f32.mrf.mxu0
    %v2744 = vadd.f32 %v2701, %v2743
    %v2745 = vpop.f32.mrf.mxu0
    %v2746 = vadd.f32 %v2703, %v2745
    %2747 = vdwg.mxu0
    %2748 = vmatprep.subr.bf16.mxu0 %v2152
    %2749 = vmatpush1.bf16.msra.mxu0 %v2151
    %2750 = vmatprep.subr.bf16.mxu0 %v2145
    %2751 = vmatpush1.bf16.msra.mxu0 %v2144
    %2752 = vmatprep.subr.bf16.mxu0 %v2138
    %2753 = vmatpush1.bf16.msra.mxu0 %v2137
    %2754 = vmatprep.subr.bf16.mxu0 %v2131
    %2755 = vmatpush1.bf16.msra.mxu0 %v2130
    %2756 = vmatprep.subr.bf16.mxu0 %v2124
    %2757 = vmatpush1.bf16.msra.mxu0 %v2123
    %2758 = vmatprep.subr.bf16.mxu0 %v2117
    %2759 = vmatpush1.bf16.msra.mxu0 %v2116
    %2760 = vmatprep.subr.bf16.mxu0 %v2110
    %2761 = vmatpush1.bf16.msra.mxu0 %v2109
    %2762 = vmatprep.subr.bf16.mxu0 %v2103
    %2763 = vmatpush1.bf16.msra.mxu0 %v2102
    %2764 = vmatprep.subr.bf16.mxu0 %v2208
    %2765 = vmatpush2.bf16.msra.mxu0 %v2207
    %2766 = vmatprep.subr.bf16.mxu0 %v2201
    %2767 = vmatpush2.bf16.msra.mxu0 %v2200
    %2768 = vmatprep.subr.bf16.mxu0 %v2194
    %2769 = vmatpush2.bf16.msra.mxu0 %v2193
    %2770 = vmatprep.subr.bf16.mxu0 %v2187
    %2771 = vmatpush2.bf16.msra.mxu0 %v2186
    %2772 = vmatprep.subr.bf16.mxu0 %v2180
    %2773 = vmatpush2.bf16.msra.mxu0 %v2179
    %2774 = vmatprep.subr.bf16.mxu0 %v2173
    %2775 = vmatpush2.bf16.msra.mxu0 %v2172
    %2776 = vmatprep.subr.bf16.mxu0 %v2166
    %2777 = vmatpush2.bf16.msra.mxu0 %v2165
    %2778 = vmatprep.subr.bf16.mxu0 %v2159
    %2779 = vmatpush2.bf16.msra.mxu0 %v2158
    %2780 = vmatprep.mubr.bf16.mxu0 %v637
    %2781 = vmatmul.mubr.bf16.gmra.mxu0 %v636
    %v2782 = vpop.f32.mrf.mxu0
    %v2783 = vadd.f32 %v2740, %v2782
    %v2784 = vpop.f32.mrf.mxu0
    %v2785 = vadd.f32 %v2742, %v2784
    %v2786 = vpop.f32.mrf.mxu0
    %v2787 = vadd.f32 %v2744, %v2786
    %v2788 = vpop.f32.mrf.mxu0
    %v2789 = vadd.f32 %v2746, %v2788
    %2790 = vdwg.mxu0
    %2791 = vmatprep.subr.bf16.mxu0 %v2264
    %2792 = vmatpush1.bf16.msra.mxu0 %v2263
    %2793 = vmatprep.subr.bf16.mxu0 %v2257
    %2794 = vmatpush1.bf16.msra.mxu0 %v2256
    %2795 = vmatprep.subr.bf16.mxu0 %v2250
    %2796 = vmatpush1.bf16.msra.mxu0 %v2249
    %2797 = vmatprep.subr.bf16.mxu0 %v2243
    %2798 = vmatpush1.bf16.msra.mxu0 %v2242
    %2799 = vmatprep.subr.bf16.mxu0 %v2236
    %2800 = vmatpush1.bf16.msra.mxu0 %v2235
    %2801 = vmatprep.subr.bf16.mxu0 %v2229
    %2802 = vmatpush1.bf16.msra.mxu0 %v2228
    %2803 = vmatprep.subr.bf16.mxu0 %v2222
    %2804 = vmatpush1.bf16.msra.mxu0 %v2221
    %2805 = vmatprep.subr.bf16.mxu0 %v2215
    %2806 = vmatpush1.bf16.msra.mxu0 %v2214
    %2807 = vmatprep.subr.bf16.mxu0 0
    %2808 = vmatpush2.bf16.msra.mxu0 0
    %2809 = vmatprep.subr.bf16.mxu0 0
    %2810 = vmatpush2.bf16.msra.mxu0 0
    %2811 = vmatprep.subr.bf16.mxu0 0
    %2812 = vmatpush2.bf16.msra.mxu0 0
    %2813 = vmatprep.subr.bf16.mxu0 0
    %2814 = vmatpush2.bf16.msra.mxu0 0
    %2815 = vmatprep.subr.bf16.mxu0 0
    %2816 = vmatpush2.bf16.msra.mxu0 0
    %2817 = vmatprep.subr.bf16.mxu0 0
    %2818 = vmatpush2.bf16.msra.mxu0 0
    %2819 = vmatprep.subr.bf16.mxu0 0
    %2820 = vmatpush2.bf16.msra.mxu0 0
    %2821 = vmatprep.subr.bf16.mxu0 0
    %2822 = vmatpush2.bf16.msra.mxu0 0
    %2823 = vmatprep.mubr.bf16.mxu0 0
    %2824 = vmatmul.mubr.bf16.gmra.mxu0 %v638
    %v2825 = vpop.f32.mrf.mxu0
    %v2826 = vadd.f32 %v2783, %v2825
    %v2827 = vpop.f32.mrf.mxu0
    %v2828 = vadd.f32 %v2785, %v2827
    %v2829 = vpop.f32.mrf.mxu0
    %v2830 = vadd.f32 %v2787, %v2829
    %v2831 = vpop.f32.mrf.mxu0
    %v2832 = vadd.f32 %v2789, %v2831
    %2833 = vdwg.mxu0
    %2834 = vmatprep.subr.bf16.mxu0 %v1930
    %2835 = vmatpush1.bf16.msra.mxu0 %v1929
    %2836 = vmatprep.subr.bf16.mxu0 %v1923
    %2837 = vmatpush1.bf16.msra.mxu0 %v1922
    %2838 = vmatprep.subr.bf16.mxu0 %v1916
    %2839 = vmatpush1.bf16.msra.mxu0 %v1915
    %2840 = vmatprep.subr.bf16.mxu0 %v1909
    %2841 = vmatpush1.bf16.msra.mxu0 %v1908
    %2842 = vmatprep.subr.bf16.mxu0 %v1902
    %2843 = vmatpush1.bf16.msra.mxu0 %v1901
    %2844 = vmatprep.subr.bf16.mxu0 %v1895
    %2845 = vmatpush1.bf16.msra.mxu0 %v1894
    %2846 = vmatprep.subr.bf16.mxu0 %v1888
    %2847 = vmatpush1.bf16.msra.mxu0 %v1887
    %2848 = vmatprep.subr.bf16.mxu0 %v1881
    %2849 = vmatpush1.bf16.msra.mxu0 %v1880
    %2850 = vmatprep.subr.bf16.mxu0 %v1986
    %2851 = vmatpush2.bf16.msra.mxu0 %v1985
    %2852 = vmatprep.subr.bf16.mxu0 %v1979
    %2853 = vmatpush2.bf16.msra.mxu0 %v1978
    %2854 = vmatprep.subr.bf16.mxu0 %v1972
    %2855 = vmatpush2.bf16.msra.mxu0 %v1971
    %2856 = vmatprep.subr.bf16.mxu0 %v1965
    %2857 = vmatpush2.bf16.msra.mxu0 %v1964
    %2858 = vmatprep.subr.bf16.mxu0 %v1958
    %2859 = vmatpush2.bf16.msra.mxu0 %v1957
    %2860 = vmatprep.subr.bf16.mxu0 %v1951
    %2861 = vmatpush2.bf16.msra.mxu0 %v1950
    %2862 = vmatprep.subr.bf16.mxu0 %v1944
    %2863 = vmatpush2.bf16.msra.mxu0 %v1943
    %2864 = vmatprep.subr.bf16.mxu0 %v1937
    %2865 = vmatpush2.bf16.msra.mxu0 %v1936
    %2866 = vmatprep.mubr.bf16.mxu0 %v633
    %2867 = vmatmul.mubr.bf16.gmra.mxu0 %v632
    %v2868 = vpop.f32.mrf.mxu0
    %v2869 = vadd.f32 %v586, %v2868
    %v2870 = vpop.f32.mrf.mxu0
    %v2871 = vadd.f32 %v590, %v2870
    %v2872 = vpop.f32.mrf.mxu0
    %v2873 = vadd.f32 %v586, %v2872
    %v2874 = vpop.f32.mrf.mxu0
    %v2875 = vadd.f32 %v590, %v2874
    %2876 = vdwg.mxu0
    %2877 = vmatprep.subr.bf16.mxu0 %v2042
    %2878 = vmatpush1.bf16.msra.mxu0 %v2041
    %2879 = vmatprep.subr.bf16.mxu0 %v2035
    %2880 = vmatpush1.bf16.msra.mxu0 %v2034
    %2881 = vmatprep.subr.bf16.mxu0 %v2028
    %2882 = vmatpush1.bf16.msra.mxu0 %v2027
    %2883 = vmatprep.subr.bf16.mxu0 %v2021
    %2884 = vmatpush1.bf16.msra.mxu0 %v2020
    %2885 = vmatprep.subr.bf16.mxu0 %v2014
    %2886 = vmatpush1.bf16.msra.mxu0 %v2013
    %2887 = vmatprep.subr.bf16.mxu0 %v2007
    %2888 = vmatpush1.bf16.msra.mxu0 %v2006
    %2889 = vmatprep.subr.bf16.mxu0 %v2000
    %2890 = vmatpush1.bf16.msra.mxu0 %v1999
    %2891 = vmatprep.subr.bf16.mxu0 %v1993
    %2892 = vmatpush1.bf16.msra.mxu0 %v1992
    %2893 = vmatprep.subr.bf16.mxu0 %v2098
    %2894 = vmatpush2.bf16.msra.mxu0 %v2097
    %2895 = vmatprep.subr.bf16.mxu0 %v2091
    %2896 = vmatpush2.bf16.msra.mxu0 %v2090
    %2897 = vmatprep.subr.bf16.mxu0 %v2084
    %2898 = vmatpush2.bf16.msra.mxu0 %v2083
    %2899 = vmatprep.subr.bf16.mxu0 %v2077
    %2900 = vmatpush2.bf16.msra.mxu0 %v2076
    %2901 = vmatprep.subr.bf16.mxu0 %v2070
    %2902 = vmatpush2.bf16.msra.mxu0 %v2069
    %2903 = vmatprep.subr.bf16.mxu0 %v2063
    %2904 = vmatpush2.bf16.msra.mxu0 %v2062
    %2905 = vmatprep.subr.bf16.mxu0 %v2056
    %2906 = vmatpush2.bf16.msra.mxu0 %v2055
    %2907 = vmatprep.subr.bf16.mxu0 %v2049
    %2908 = vmatpush2.bf16.msra.mxu0 %v2048
    %2909 = vmatprep.mubr.bf16.mxu0 %v635
    %2910 = vmatmul.mubr.bf16.gmra.mxu0 %v634
    %v2911 = vpop.f32.mrf.mxu0
    %v2912 = vadd.f32 %v2869, %v2911
    %v2913 = vpop.f32.mrf.mxu0
    %v2914 = vadd.f32 %v2871, %v2913
    %v2915 = vpop.f32.mrf.mxu0
    %v2916 = vadd.f32 %v2873, %v2915
    %v2917 = vpop.f32.mrf.mxu0
    %v2918 = vadd.f32 %v2875, %v2917
    %2919 = vdwg.mxu0
    %2920 = vmatprep.subr.bf16.mxu0 %v2154
    %2921 = vmatpush1.bf16.msra.mxu0 %v2153
    %2922 = vmatprep.subr.bf16.mxu0 %v2147
    %2923 = vmatpush1.bf16.msra.mxu0 %v2146
    %2924 = vmatprep.subr.bf16.mxu0 %v2140
    %2925 = vmatpush1.bf16.msra.mxu0 %v2139
    %2926 = vmatprep.subr.bf16.mxu0 %v2133
    %2927 = vmatpush1.bf16.msra.mxu0 %v2132
    %2928 = vmatprep.subr.bf16.mxu0 %v2126
    %2929 = vmatpush1.bf16.msra.mxu0 %v2125
    %2930 = vmatprep.subr.bf16.mxu0 %v2119
    %2931 = vmatpush1.bf16.msra.mxu0 %v2118
    %2932 = vmatprep.subr.bf16.mxu0 %v2112
    %2933 = vmatpush1.bf16.msra.mxu0 %v2111
    %2934 = vmatprep.subr.bf16.mxu0 %v2105
    %2935 = vmatpush1.bf16.msra.mxu0 %v2104
    %2936 = vmatprep.subr.bf16.mxu0 %v2210
    %2937 = vmatpush2.bf16.msra.mxu0 %v2209
    %2938 = vmatprep.subr.bf16.mxu0 %v2203
    %2939 = vmatpush2.bf16.msra.mxu0 %v2202
    %2940 = vmatprep.subr.bf16.mxu0 %v2196
    %2941 = vmatpush2.bf16.msra.mxu0 %v2195
    %2942 = vmatprep.subr.bf16.mxu0 %v2189
    %2943 = vmatpush2.bf16.msra.mxu0 %v2188
    %2944 = vmatprep.subr.bf16.mxu0 %v2182
    %2945 = vmatpush2.bf16.msra.mxu0 %v2181
    %2946 = vmatprep.subr.bf16.mxu0 %v2175
    %2947 = vmatpush2.bf16.msra.mxu0 %v2174
    %2948 = vmatprep.subr.bf16.mxu0 %v2168
    %2949 = vmatpush2.bf16.msra.mxu0 %v2167
    %2950 = vmatprep.subr.bf16.mxu0 %v2161
    %2951 = vmatpush2.bf16.msra.mxu0 %v2160
    %2952 = vmatprep.mubr.bf16.mxu0 %v637
    %2953 = vmatmul.mubr.bf16.gmra.mxu0 %v636
    %v2954 = vpop.f32.mrf.mxu0
    %v2955 = vadd.f32 %v2912, %v2954
    %v2956 = vpop.f32.mrf.mxu0
    %v2957 = vadd.f32 %v2914, %v2956
    %v2958 = vpop.f32.mrf.mxu0
    %v2959 = vadd.f32 %v2916, %v2958
    %v2960 = vpop.f32.mrf.mxu0
    %v2961 = vadd.f32 %v2918, %v2960
    %2962 = vdwg.mxu0
    %2963 = vmatprep.subr.bf16.mxu0 %v2266
    %2964 = vmatpush1.bf16.msra.mxu0 %v2265
    %2965 = vmatprep.subr.bf16.mxu0 %v2259
    %2966 = vmatpush1.bf16.msra.mxu0 %v2258
    %2967 = vmatprep.subr.bf16.mxu0 %v2252
    %2968 = vmatpush1.bf16.msra.mxu0 %v2251
    %2969 = vmatprep.subr.bf16.mxu0 %v2245
    %2970 = vmatpush1.bf16.msra.mxu0 %v2244
    %2971 = vmatprep.subr.bf16.mxu0 %v2238
    %2972 = vmatpush1.bf16.msra.mxu0 %v2237
    %2973 = vmatprep.subr.bf16.mxu0 %v2231
    %2974 = vmatpush1.bf16.msra.mxu0 %v2230
    %2975 = vmatprep.subr.bf16.mxu0 %v2224
    %2976 = vmatpush1.bf16.msra.mxu0 %v2223
    %2977 = vmatprep.subr.bf16.mxu0 %v2217
    %2978 = vmatpush1.bf16.msra.mxu0 %v2216
    %2979 = vmatprep.subr.bf16.mxu0 0
    %2980 = vmatpush2.bf16.msra.mxu0 0
    %2981 = vmatprep.subr.bf16.mxu0 0
    %2982 = vmatpush2.bf16.msra.mxu0 0
    %2983 = vmatprep.subr.bf16.mxu0 0
    %2984 = vmatpush2.bf16.msra.mxu0 0
    %2985 = vmatprep.subr.bf16.mxu0 0
    %2986 = vmatpush2.bf16.msra.mxu0 0
    %2987 = vmatprep.subr.bf16.mxu0 0
    %2988 = vmatpush2.bf16.msra.mxu0 0
    %2989 = vmatprep.subr.bf16.mxu0 0
    %2990 = vmatpush2.bf16.msra.mxu0 0
    %2991 = vmatprep.subr.bf16.mxu0 0
    %2992 = vmatpush2.bf16.msra.mxu0 0
    %2993 = vmatprep.subr.bf16.mxu0 0
    %2994 = vmatpush2.bf16.msra.mxu0 0
    %2995 = vmatprep.mubr.bf16.mxu0 0
    %2996 = vmatmul.mubr.bf16.gmra.mxu0 %v638
    %v2997 = vpop.f32.mrf.mxu0
    %v2998 = vadd.f32 %v2955, %v2997
    %v2999 = vpop.f32.mrf.mxu0
    %v3000 = vadd.f32 %v2957, %v2999
    %v3001 = vpop.f32.mrf.mxu0
    %v3002 = vadd.f32 %v2959, %v3001
    %v3003 = vpop.f32.mrf.mxu0
    %v3004 = vadd.f32 %v2961, %v3003
    %3005 = vdwg.mxu0
    %3006 = vmatprep.subr.bf16.mxu0 %v1932
    %3007 = vmatpush1.bf16.msra.mxu0 %v1931
    %3008 = vmatprep.subr.bf16.mxu0 %v1925
    %3009 = vmatpush1.bf16.msra.mxu0 %v1924
    %3010 = vmatprep.subr.bf16.mxu0 %v1918
    %3011 = vmatpush1.bf16.msra.mxu0 %v1917
    %3012 = vmatprep.subr.bf16.mxu0 %v1911
    %3013 = vmatpush1.bf16.msra.mxu0 %v1910
    %3014 = vmatprep.subr.bf16.mxu0 %v1904
    %3015 = vmatpush1.bf16.msra.mxu0 %v1903
    %3016 = vmatprep.subr.bf16.mxu0 %v1897
    %3017 = vmatpush1.bf16.msra.mxu0 %v1896
    %3018 = vmatprep.subr.bf16.mxu0 %v1890
    %3019 = vmatpush1.bf16.msra.mxu0 %v1889
    %3020 = vmatprep.subr.bf16.mxu0 %v1883
    %3021 = vmatpush1.bf16.msra.mxu0 %v1882
    %3022 = vmatprep.subr.bf16.mxu0 %v1988
    %3023 = vmatpush2.bf16.msra.mxu0 %v1987
    %3024 = vmatprep.subr.bf16.mxu0 %v1981
    %3025 = vmatpush2.bf16.msra.mxu0 %v1980
    %3026 = vmatprep.subr.bf16.mxu0 %v1974
    %3027 = vmatpush2.bf16.msra.mxu0 %v1973
    %3028 = vmatprep.subr.bf16.mxu0 %v1967
    %3029 = vmatpush2.bf16.msra.mxu0 %v1966
    %3030 = vmatprep.subr.bf16.mxu0 %v1960
    %3031 = vmatpush2.bf16.msra.mxu0 %v1959
    %3032 = vmatprep.subr.bf16.mxu0 %v1953
    %3033 = vmatpush2.bf16.msra.mxu0 %v1952
    %3034 = vmatprep.subr.bf16.mxu0 %v1946
    %3035 = vmatpush2.bf16.msra.mxu0 %v1945
    %3036 = vmatprep.subr.bf16.mxu0 %v1939
    %3037 = vmatpush2.bf16.msra.mxu0 %v1938
    %3038 = vmatprep.mubr.bf16.mxu0 %v633
    %3039 = vmatmul.mubr.bf16.gmra.mxu0 %v632
    %v3040 = vpop.f32.mrf.mxu0
    %v3041 = vadd.f32 %v594, %v3040
    %v3042 = vpop.f32.mrf.mxu0
    %v3043 = vadd.f32 %v598, %v3042
    %v3044 = vpop.f32.mrf.mxu0
    %v3045 = vadd.f32 %v594, %v3044
    %v3046 = vpop.f32.mrf.mxu0
    %v3047 = vadd.f32 %v598, %v3046
    %3048 = vdwg.mxu0
    %3049 = vmatprep.subr.bf16.mxu0 %v2044
    %3050 = vmatpush1.bf16.msra.mxu0 %v2043
    %3051 = vmatprep.subr.bf16.mxu0 %v2037
    %3052 = vmatpush1.bf16.msra.mxu0 %v2036
    %3053 = vmatprep.subr.bf16.mxu0 %v2030
    %3054 = vmatpush1.bf16.msra.mxu0 %v2029
    %3055 = vmatprep.subr.bf16.mxu0 %v2023
    %3056 = vmatpush1.bf16.msra.mxu0 %v2022
    %3057 = vmatprep.subr.bf16.mxu0 %v2016
    %3058 = vmatpush1.bf16.msra.mxu0 %v2015
    %3059 = vmatprep.subr.bf16.mxu0 %v2009
    %3060 = vmatpush1.bf16.msra.mxu0 %v2008
    %3061 = vmatprep.subr.bf16.mxu0 %v2002
    %3062 = vmatpush1.bf16.msra.mxu0 %v2001
    %3063 = vmatprep.subr.bf16.mxu0 %v1995
    %3064 = vmatpush1.bf16.msra.mxu0 %v1994
    %3065 = vmatprep.subr.bf16.mxu0 %v2100
    %3066 = vmatpush2.bf16.msra.mxu0 %v2099
    %3067 = vmatprep.subr.bf16.mxu0 %v2093
    %3068 = vmatpush2.bf16.msra.mxu0 %v2092
    %3069 = vmatprep.subr.bf16.mxu0 %v2086
    %3070 = vmatpush2.bf16.msra.mxu0 %v2085
    %3071 = vmatprep.subr.bf16.mxu0 %v2079
    %3072 = vmatpush2.bf16.msra.mxu0 %v2078
    %3073 = vmatprep.subr.bf16.mxu0 %v2072
    %3074 = vmatpush2.bf16.msra.mxu0 %v2071
    %3075 = vmatprep.subr.bf16.mxu0 %v2065
    %3076 = vmatpush2.bf16.msra.mxu0 %v2064
    %3077 = vmatprep.subr.bf16.mxu0 %v2058
    %3078 = vmatpush2.bf16.msra.mxu0 %v2057
    %3079 = vmatprep.subr.bf16.mxu0 %v2051
    %3080 = vmatpush2.bf16.msra.mxu0 %v2050
    %3081 = vmatprep.mubr.bf16.mxu0 %v635
    %3082 = vmatmul.mubr.bf16.gmra.mxu0 %v634
    %v3083 = vpop.f32.mrf.mxu0
    %v3084 = vadd.f32 %v3041, %v3083
    %v3085 = vpop.f32.mrf.mxu0
    %v3086 = vadd.f32 %v3043, %v3085
    %v3087 = vpop.f32.mrf.mxu0
    %v3088 = vadd.f32 %v3045, %v3087
    %v3089 = vpop.f32.mrf.mxu0
    %v3090 = vadd.f32 %v3047, %v3089
    %3091 = vdwg.mxu0
    %3092 = vmatprep.subr.bf16.mxu0 %v2156
    %3093 = vmatpush1.bf16.msra.mxu0 %v2155
    %3094 = vmatprep.subr.bf16.mxu0 %v2149
    %3095 = vmatpush1.bf16.msra.mxu0 %v2148
    %3096 = vmatprep.subr.bf16.mxu0 %v2142
    %3097 = vmatpush1.bf16.msra.mxu0 %v2141
    %3098 = vmatprep.subr.bf16.mxu0 %v2135
    %3099 = vmatpush1.bf16.msra.mxu0 %v2134
    %3100 = vmatprep.subr.bf16.mxu0 %v2128
    %3101 = vmatpush1.bf16.msra.mxu0 %v2127
    %3102 = vmatprep.subr.bf16.mxu0 %v2121
    %3103 = vmatpush1.bf16.msra.mxu0 %v2120
    %3104 = vmatprep.subr.bf16.mxu0 %v2114
    %3105 = vmatpush1.bf16.msra.mxu0 %v2113
    %3106 = vmatprep.subr.bf16.mxu0 %v2107
    %3107 = vmatpush1.bf16.msra.mxu0 %v2106
    %3108 = vmatprep.subr.bf16.mxu0 %v2212
    %3109 = vmatpush2.bf16.msra.mxu0 %v2211
    %3110 = vmatprep.subr.bf16.mxu0 %v2205
    %3111 = vmatpush2.bf16.msra.mxu0 %v2204
    %3112 = vmatprep.subr.bf16.mxu0 %v2198
    %3113 = vmatpush2.bf16.msra.mxu0 %v2197
    %3114 = vmatprep.subr.bf16.mxu0 %v2191
    %3115 = vmatpush2.bf16.msra.mxu0 %v2190
    %3116 = vmatprep.subr.bf16.mxu0 %v2184
    %3117 = vmatpush2.bf16.msra.mxu0 %v2183
    %3118 = vmatprep.subr.bf16.mxu0 %v2177
    %3119 = vmatpush2.bf16.msra.mxu0 %v2176
    %3120 = vmatprep.subr.bf16.mxu0 %v2170
    %3121 = vmatpush2.bf16.msra.mxu0 %v2169
    %3122 = vmatprep.subr.bf16.mxu0 %v2163
    %3123 = vmatpush2.bf16.msra.mxu0 %v2162
    %3124 = vmatprep.mubr.bf16.mxu0 %v637
    %3125 = vmatmul.mubr.bf16.gmra.mxu0 %v636
    %v3126 = vpop.f32.mrf.mxu0
    %v3127 = vadd.f32 %v3084, %v3126
    %v3128 = vpop.f32.mrf.mxu0
    %v3129 = vadd.f32 %v3086, %v3128
    %v3130 = vpop.f32.mrf.mxu0
    %v3131 = vadd.f32 %v3088, %v3130
    %v3132 = vpop.f32.mrf.mxu0
    %v3133 = vadd.f32 %v3090, %v3132
    %3134 = vdwg.mxu0
    %3135 = vmatprep.subr.bf16.mxu0 %v2268
    %3136 = vmatpush1.bf16.msra.mxu0 %v2267
    %3137 = vmatprep.subr.bf16.mxu0 %v2261
    %3138 = vmatpush1.bf16.msra.mxu0 %v2260
    %3139 = vmatprep.subr.bf16.mxu0 %v2254
    %3140 = vmatpush1.bf16.msra.mxu0 %v2253
    %3141 = vmatprep.subr.bf16.mxu0 %v2247
    %3142 = vmatpush1.bf16.msra.mxu0 %v2246
    %3143 = vmatprep.subr.bf16.mxu0 %v2240
    %3144 = vmatpush1.bf16.msra.mxu0 %v2239
    %3145 = vmatprep.subr.bf16.mxu0 %v2233
    %3146 = vmatpush1.bf16.msra.mxu0 %v2232
    %3147 = vmatprep.subr.bf16.mxu0 %v2226
    %3148 = vmatpush1.bf16.msra.mxu0 %v2225
    %3149 = vmatprep.subr.bf16.mxu0 %v2219
    %3150 = vmatpush1.bf16.msra.mxu0 %v2218
    %3151 = vmatprep.subr.bf16.mxu0 0
    %3152 = vmatpush2.bf16.msra.mxu0 0
    %3153 = vmatprep.subr.bf16.mxu0 0
    %3154 = vmatpush2.bf16.msra.mxu0 0
    %3155 = vmatprep.subr.bf16.mxu0 0
    %3156 = vmatpush2.bf16.msra.mxu0 0
    %3157 = vmatprep.subr.bf16.mxu0 0
    %3158 = vmatpush2.bf16.msra.mxu0 0
    %3159 = vmatprep.subr.bf16.mxu0 0
    %3160 = vmatpush2.bf16.msra.mxu0 0
    %3161 = vmatprep.subr.bf16.mxu0 0
    %3162 = vmatpush2.bf16.msra.mxu0 0
    %3163 = vmatprep.subr.bf16.mxu0 0
    %3164 = vmatpush2.bf16.msra.mxu0 0
    %3165 = vmatprep.subr.bf16.mxu0 0
    %3166 = vmatpush2.bf16.msra.mxu0 0
    %3167 = vmatprep.mubr.bf16.mxu0 0
    %3168 = vmatmul.mubr.bf16.gmra.mxu0 %v638
    %v3169 = vpop.f32.mrf.mxu0
    %v3170 = vadd.f32 %v3127, %v3169
    %v3171 = vpop.f32.mrf.mxu0
    %v3172 = vadd.f32 %v3129, %v3171
    %v3173 = vpop.f32.mrf.mxu0
    %v3174 = vadd.f32 %v3131, %v3173
    %v3175 = vpop.f32.mrf.mxu0
    %v3176 = vadd.f32 %v3133, %v3175
    %3177 = vdwg.mxu0
    %3178 = vmatprep.subr.bf16.mxu0 0
    %3179 = vmatpush1.bf16.msra.mxu0 %v1933
    %3180 = vmatprep.subr.bf16.mxu0 0
    %3181 = vmatpush1.bf16.msra.mxu0 %v1926
    %3182 = vmatprep.subr.bf16.mxu0 0
    %3183 = vmatpush1.bf16.msra.mxu0 %v1919
    %3184 = vmatprep.subr.bf16.mxu0 0
    %3185 = vmatpush1.bf16.msra.mxu0 %v1912
    %3186 = vmatprep.subr.bf16.mxu0 0
    %3187 = vmatpush1.bf16.msra.mxu0 %v1905
    %3188 = vmatprep.subr.bf16.mxu0 0
    %3189 = vmatpush1.bf16.msra.mxu0 %v1898
    %3190 = vmatprep.subr.bf16.mxu0 0
    %3191 = vmatpush1.bf16.msra.mxu0 %v1891
    %3192 = vmatprep.subr.bf16.mxu0 0
    %3193 = vmatpush1.bf16.msra.mxu0 %v1884
    %3194 = vmatprep.subr.bf16.mxu0 0
    %3195 = vmatpush2.bf16.msra.mxu0 %v1989
    %3196 = vmatprep.subr.bf16.mxu0 0
    %3197 = vmatpush2.bf16.msra.mxu0 %v1982
    %3198 = vmatprep.subr.bf16.mxu0 0
    %3199 = vmatpush2.bf16.msra.mxu0 %v1975
    %3200 = vmatprep.subr.bf16.mxu0 0
    %3201 = vmatpush2.bf16.msra.mxu0 %v1968
    %3202 = vmatprep.subr.bf16.mxu0 0
    %3203 = vmatpush2.bf16.msra.mxu0 %v1961
    %3204 = vmatprep.subr.bf16.mxu0 0
    %3205 = vmatpush2.bf16.msra.mxu0 %v1954
    %3206 = vmatprep.subr.bf16.mxu0 0
    %3207 = vmatpush2.bf16.msra.mxu0 %v1947
    %3208 = vmatprep.subr.bf16.mxu0 0
    %3209 = vmatpush2.bf16.msra.mxu0 %v1940
    %3210 = vmatprep.mubr.bf16.mxu0 %v633
    %3211 = vmatmul.mubr.bf16.gmra.mxu0 %v632
    %v3212 = vpop.f32.mrf.mxu0
    %v3213 = vadd.f32 %v602, %v3212
    %v3214 = vpop.f32.mrf.mxu0
    %v3215 = vpop.f32.mrf.mxu0
    %v3216 = vadd.f32 %v602, %v3215
    %v3217 = vpop.f32.mrf.mxu0
    %3218 = vdwg.mxu0
    %3219 = vmatprep.subr.bf16.mxu0 0
    %3220 = vmatpush1.bf16.msra.mxu0 %v2045
    %3221 = vmatprep.subr.bf16.mxu0 0
    %3222 = vmatpush1.bf16.msra.mxu0 %v2038
    %3223 = vmatprep.subr.bf16.mxu0 0
    %3224 = vmatpush1.bf16.msra.mxu0 %v2031
    %3225 = vmatprep.subr.bf16.mxu0 0
    %3226 = vmatpush1.bf16.msra.mxu0 %v2024
    %3227 = vmatprep.subr.bf16.mxu0 0
    %3228 = vmatpush1.bf16.msra.mxu0 %v2017
    %3229 = vmatprep.subr.bf16.mxu0 0
    %3230 = vmatpush1.bf16.msra.mxu0 %v2010
    %3231 = vmatprep.subr.bf16.mxu0 0
    %3232 = vmatpush1.bf16.msra.mxu0 %v2003
    %3233 = vmatprep.subr.bf16.mxu0 0
    %3234 = vmatpush1.bf16.msra.mxu0 %v1996
    %3235 = vmatprep.subr.bf16.mxu0 0
    %3236 = vmatpush2.bf16.msra.mxu0 %v2101
    %3237 = vmatprep.subr.bf16.mxu0 0
    %3238 = vmatpush2.bf16.msra.mxu0 %v2094
    %3239 = vmatprep.subr.bf16.mxu0 0
    %3240 = vmatpush2.bf16.msra.mxu0 %v2087
    %3241 = vmatprep.subr.bf16.mxu0 0
    %3242 = vmatpush2.bf16.msra.mxu0 %v2080
    %3243 = vmatprep.subr.bf16.mxu0 0
    %3244 = vmatpush2.bf16.msra.mxu0 %v2073
    %3245 = vmatprep.subr.bf16.mxu0 0
    %3246 = vmatpush2.bf16.msra.mxu0 %v2066
    %3247 = vmatprep.subr.bf16.mxu0 0
    %3248 = vmatpush2.bf16.msra.mxu0 %v2059
    %3249 = vmatprep.subr.bf16.mxu0 0
    %3250 = vmatpush2.bf16.msra.mxu0 %v2052
    %3251 = vmatprep.mubr.bf16.mxu0 %v635
    %3252 = vmatmul.mubr.bf16.gmra.mxu0 %v634
    %v3253 = vpop.f32.mrf.mxu0
    %v3254 = vadd.f32 %v3213, %v3253
    %v3255 = vpop.f32.mrf.mxu0
    %v3256 = vpop.f32.mrf.mxu0
    %v3257 = vadd.f32 %v3216, %v3256
    %v3258 = vpop.f32.mrf.mxu0
    %3259 = vdwg.mxu0
    %3260 = vmatprep.subr.bf16.mxu0 0
    %3261 = vmatpush1.bf16.msra.mxu0 %v2157
    %3262 = vmatprep.subr.bf16.mxu0 0
    %3263 = vmatpush1.bf16.msra.mxu0 %v2150
    %3264 = vmatprep.subr.bf16.mxu0 0
    %3265 = vmatpush1.bf16.msra.mxu0 %v2143
    %3266 = vmatprep.subr.bf16.mxu0 0
    %3267 = vmatpush1.bf16.msra.mxu0 %v2136
    %3268 = vmatprep.subr.bf16.mxu0 0
    %3269 = vmatpush1.bf16.msra.mxu0 %v2129
    %3270 = vmatprep.subr.bf16.mxu0 0
    %3271 = vmatpush1.bf16.msra.mxu0 %v2122
    %3272 = vmatprep.subr.bf16.mxu0 0
    %3273 = vmatpush1.bf16.msra.mxu0 %v2115
    %3274 = vmatprep.subr.bf16.mxu0 0
    %3275 = vmatpush1.bf16.msra.mxu0 %v2108
    %3276 = vmatprep.subr.bf16.mxu0 0
    %3277 = vmatpush2.bf16.msra.mxu0 %v2213
    %3278 = vmatprep.subr.bf16.mxu0 0
    %3279 = vmatpush2.bf16.msra.mxu0 %v2206
    %3280 = vmatprep.subr.bf16.mxu0 0
    %3281 = vmatpush2.bf16.msra.mxu0 %v2199
    %3282 = vmatprep.subr.bf16.mxu0 0
    %3283 = vmatpush2.bf16.msra.mxu0 %v2192
    %3284 = vmatprep.subr.bf16.mxu0 0
    %3285 = vmatpush2.bf16.msra.mxu0 %v2185
    %3286 = vmatprep.subr.bf16.mxu0 0
    %3287 = vmatpush2.bf16.msra.mxu0 %v2178
    %3288 = vmatprep.subr.bf16.mxu0 0
    %3289 = vmatpush2.bf16.msra.mxu0 %v2171
    %3290 = vmatprep.subr.bf16.mxu0 0
    %3291 = vmatpush2.bf16.msra.mxu0 %v2164
    %3292 = vmatprep.mubr.bf16.mxu0 %v637
    %3293 = vmatmul.mubr.bf16.gmra.mxu0 %v636
    %v3294 = vpop.f32.mrf.mxu0
    %v3295 = vadd.f32 %v3254, %v3294
    %v3296 = vpop.f32.mrf.mxu0
    %v3297 = vpop.f32.mrf.mxu0
    %v3298 = vadd.f32 %v3257, %v3297
    %v3299 = vpop.f32.mrf.mxu0
    %3300 = vdwg.mxu0
    %3301 = vmatprep.subr.bf16.mxu0 0
    %3302 = vmatpush1.bf16.msra.mxu0 %v2269
    %3303 = vmatprep.subr.bf16.mxu0 0
    %3304 = vmatpush1.bf16.msra.mxu0 %v2262
    %3305 = vmatprep.subr.bf16.mxu0 0
    %3306 = vmatpush1.bf16.msra.mxu0 %v2255
    %3307 = vmatprep.subr.bf16.mxu0 0
    %3308 = vmatpush1.bf16.msra.mxu0 %v2248
    %3309 = vmatprep.subr.bf16.mxu0 0
    %3310 = vmatpush1.bf16.msra.mxu0 %v2241
    %3311 = vmatprep.subr.bf16.mxu0 0
    %3312 = vmatpush1.bf16.msra.mxu0 %v2234
    %3313 = vmatprep.subr.bf16.mxu0 0
    %3314 = vmatpush1.bf16.msra.mxu0 %v2227
    %3315 = vmatprep.subr.bf16.mxu0 0
    %3316 = vmatpush1.bf16.msra.mxu0 %v2220
    %3317 = vmatprep.subr.bf16.mxu0 0
    %3318 = vmatpush2.bf16.msra.mxu0 0
    %3319 = vmatprep.subr.bf16.mxu0 0
    %3320 = vmatpush2.bf16.msra.mxu0 0
    %3321 = vmatprep.subr.bf16.mxu0 0
    %3322 = vmatpush2.bf16.msra.mxu0 0
    %3323 = vmatprep.subr.bf16.mxu0 0
    %3324 = vmatpush2.bf16.msra.mxu0 0
    %3325 = vmatprep.subr.bf16.mxu0 0
    %3326 = vmatpush2.bf16.msra.mxu0 0
    %3327 = vmatprep.subr.bf16.mxu0 0
    %3328 = vmatpush2.bf16.msra.mxu0 0
    %3329 = vmatprep.subr.bf16.mxu0 0
    %3330 = vmatpush2.bf16.msra.mxu0 0
    %3331 = vmatprep.subr.bf16.mxu0 0
    %3332 = vmatpush2.bf16.msra.mxu0 0
    %3333 = vmatprep.mubr.bf16.mxu0 0
    %3334 = vmatmul.mubr.bf16.gmra.mxu0 %v638
    %v3335 = vpop.f32.mrf.mxu0
    %v3336 = vadd.f32 %v3295, %v3335
    %v3337 = vpop.f32.mrf.mxu0
    %v3338 = vpop.f32.mrf.mxu0
    %v3339 = vadd.f32 %v3298, %v3338
    %v3340 = vpop.f32.mrf.mxu0
    %3341 = vdwg.mxu0
    %v3342 = vtanh.pop %v2826
    %v3343 = vtanh.pop %v2828
    %v3344 = vtanh.pop %v2998
    %v3345 = vtanh.pop %v3000
    %v3346 = vtanh.pop %v3170
    %v3347 = vtanh.pop %v3172
    %v3348 = vtanh.pop %v3336
    %v3349 = vtanh.pop %v2830
    %v3350 = vtanh.pop %v2832
    %v3351 = vtanh.pop %v3002
    %v3352 = vtanh.pop %v3004
    %v3353 = vtanh.pop %v3174
    %v3354 = vtanh.pop %v3176
    %v3355 = vtanh.pop %v3339
    %v3356 = vpack.c.bf16 %v3349, %v3342
    %v3357 = vpack.c.bf16 %v3350, %v3343
    %v3358 = vpack.c.bf16 %v3351, %v3344
    %v3359 = vpack.c.bf16 %v3352, %v3345
    %v3360 = vpack.c.bf16 %v3353, %v3346
    %v3361 = vpack.c.bf16 %v3354, %v3347
    %v3362 = vpack.c.bf16 %v3355, %v3348
    %v3363 = vld [vmem:[#allocation8] sm:$0xff]
    %v3364 = vld [vmem:[#allocation8 + $0x8] sm:$0xff]
    %v3365 = vld [vmem:[#allocation8 + $0x10] sm:$0xff]
    %v3366 = vld [vmem:[#allocation8 + $0x18] sm:$0xf]
    %v3367 = vld [vmem:[#allocation8 + $0x1c] sm:$0xff]
    %v3368 = vld [vmem:[#allocation8 + $0x24] sm:$0xff]
    %v3369 = vld [vmem:[#allocation8 + $0x2c] sm:$0xff]
    %v3370 = vld [vmem:[#allocation8 + $0x34] sm:$0xf]
    %v3371 = vld [vmem:[#allocation8 + $0x38] sm:$0xff]
    %v3372 = vld [vmem:[#allocation8 + $0x40] sm:$0xff]
    %v3373 = vld [vmem:[#allocation8 + $0x48] sm:$0xff]
    %v3374 = vld [vmem:[#allocation8 + $0x50] sm:$0xf]
    %v3375 = vld [vmem:[#allocation8 + $0x54] sm:$0xff]
    %v3376 = vld [vmem:[#allocation8 + $0x5c] sm:$0xff]
    %v3377 = vld [vmem:[#allocation8 + $0x64] sm:$0xff]
    %v3378 = vld [vmem:[#allocation8 + $0x6c] sm:$0xf]
    %v3379 = vld [vmem:[#allocation8 + $0x70] sm:$0xff]
    %v3380 = vld [vmem:[#allocation8 + $0x78] sm:$0xff]
    %v3381 = vld [vmem:[#allocation8 + $0x80] sm:$0xff]
    %v3382 = vld [vmem:[#allocation8 + $0x88] sm:$0xf]
    %v3383 = vld [vmem:[#allocation8 + $0x8c] sm:$0xff]
    %v3384 = vld [vmem:[#allocation8 + $0x94] sm:$0xff]
    %v3385 = vld [vmem:[#allocation8 + $0x9c] sm:$0xff]
    %v3386 = vld [vmem:[#allocation8 + $0xa4] sm:$0xf]
    %v3387 = vld [vmem:[#allocation8 + $0xa8] sm:$0xff]
    %v3388 = vld [vmem:[#allocation8 + $0xb0] sm:$0xff]
    %v3389 = vld [vmem:[#allocation8 + $0xb8] sm:$0xff]
    %v3390 = vld [vmem:[#allocation8 + $0xc0] sm:$0xf]
    %v3391 = vld [vmem:[#allocation8 + $0xc4] sm:$0xff]
    %v3392 = vld [vmem:[#allocation8 + $0xcc] sm:$0xff]
    %v3393 = vld [vmem:[#allocation8 + $0xd4] sm:$0xff]
    %v3394 = vld [vmem:[#allocation8 + $0xdc] sm:$0xf]
    %v3395 = vld [vmem:[#allocation8 + $0xe0] sm:$0xff]
    %v3396 = vld [vmem:[#allocation8 + $0xe8] sm:$0xff]
    %v3397 = vld [vmem:[#allocation8 + $0xf0] sm:$0xff]
    %v3398 = vld [vmem:[#allocation8 + $0xf8] sm:$0xf]
    %v3399 = vld [vmem:[#allocation8 + $0xfc] sm:$0xff]
    %v3400 = vld [vmem:[#allocation8 + $0x104] sm:$0xff]
    %v3401 = vld [vmem:[#allocation8 + $0x10c] sm:$0xff]
    %v3402 = vld [vmem:[#allocation8 + $0x114] sm:$0xf]
    %v3403 = vld [vmem:[#allocation8 + $0x118] sm:$0xff]
    %v3404 = vld [vmem:[#allocation8 + $0x120] sm:$0xff]
    %v3405 = vld [vmem:[#allocation8 + $0x128] sm:$0xff]
    %v3406 = vld [vmem:[#allocation8 + $0x130] sm:$0xf]
    %v3407 = vld [vmem:[#allocation8 + $0x134] sm:$0xff]
    %v3408 = vld [vmem:[#allocation8 + $0x13c] sm:$0xff]
    %v3409 = vld [vmem:[#allocation8 + $0x144] sm:$0xff]
    %v3410 = vld [vmem:[#allocation8 + $0x14c] sm:$0xf]
    %v3411 = vld [vmem:[#allocation8 + $0x150] sm:$0xff]
    %v3412 = vld [vmem:[#allocation8 + $0x158] sm:$0xff]
    %v3413 = vld [vmem:[#allocation8 + $0x160] sm:$0xff]
    %v3414 = vld [vmem:[#allocation8 + $0x168] sm:$0xf]
    %v3415 = vld [vmem:[#allocation8 + $0x16c] sm:$0xff]
    %v3416 = vld [vmem:[#allocation8 + $0x174] sm:$0xff]
    %v3417 = vld [vmem:[#allocation8 + $0x17c] sm:$0xff]
    %v3418 = vld [vmem:[#allocation8 + $0x184] sm:$0xf]
    %v3419 = vld [vmem:[#allocation8 + $0x188] sm:$0xff]
    %v3420 = vld [vmem:[#allocation8 + $0x190] sm:$0xff]
    %v3421 = vld [vmem:[#allocation8 + $0x198] sm:$0xff]
    %v3422 = vld [vmem:[#allocation8 + $0x1a0] sm:$0xf]
    %v3423 = vld [vmem:[#allocation8 + $0x1a4] sm:$0xff]
    %v3424 = vld [vmem:[#allocation8 + $0x1ac] sm:$0xff]
    %v3425 = vld [vmem:[#allocation8 + $0x1b4] sm:$0xff]
    %v3426 = vld [vmem:[#allocation8 + $0x1bc] sm:$0xf]
    %v3427 = vld [vmem:[#allocation8 + $0x1c0] sm:$0xff]
    %v3428 = vld [vmem:[#allocation8 + $0x1c8] sm:$0xff]
    %v3429 = vld [vmem:[#allocation8 + $0x1d0] sm:$0xff]
    %v3430 = vld [vmem:[#allocation8 + $0x1d8] sm:$0xf]
    %v3431 = vld [vmem:[#allocation8 + $0x1dc] sm:$0xff]
    %v3432 = vld [vmem:[#allocation8 + $0x1e4] sm:$0xff]
    %v3433 = vld [vmem:[#allocation8 + $0x1ec] sm:$0xff]
    %v3434 = vld [vmem:[#allocation8 + $0x1f4] sm:$0xf]
    %v3435 = vld [vmem:[#allocation8 + $0x1f8] sm:$0xff]
    %v3436 = vld [vmem:[#allocation8 + $0x200] sm:$0xff]
    %v3437 = vld [vmem:[#allocation8 + $0x208] sm:$0xff]
    %v3438 = vld [vmem:[#allocation8 + $0x210] sm:$0xf]
    %v3439 = vld [vmem:[#allocation8 + $0x214] sm:$0xff]
    %v3440 = vld [vmem:[#allocation8 + $0x21c] sm:$0xff]
    %v3441 = vld [vmem:[#allocation8 + $0x224] sm:$0xff]
    %v3442 = vld [vmem:[#allocation8 + $0x22c] sm:$0xf]
    %v3443 = vld [vmem:[#allocation8 + $0x230] sm:$0xff]
    %v3444 = vld [vmem:[#allocation8 + $0x238] sm:$0xff]
    %v3445 = vld [vmem:[#allocation8 + $0x240] sm:$0xff]
    %v3446 = vld [vmem:[#allocation8 + $0x248] sm:$0xf]
    %v3447 = vld [vmem:[#allocation8 + $0x24c] sm:$0xff]
    %v3448 = vld [vmem:[#allocation8 + $0x254] sm:$0xff]
    %v3449 = vld [vmem:[#allocation8 + $0x25c] sm:$0xff]
    %v3450 = vld [vmem:[#allocation8 + $0x264] sm:$0xf]
    %v3451 = vld [vmem:[#allocation8 + $0x268] sm:$0xff]
    %v3452 = vld [vmem:[#allocation8 + $0x270] sm:$0xff]
    %v3453 = vld [vmem:[#allocation8 + $0x278] sm:$0xff]
    %v3454 = vld [vmem:[#allocation8 + $0x280] sm:$0xf]
    %v3455 = vld [vmem:[#allocation8 + $0x284] sm:$0xff]
    %v3456 = vld [vmem:[#allocation8 + $0x28c] sm:$0xff]
    %v3457 = vld [vmem:[#allocation8 + $0x294] sm:$0xff]
    %v3458 = vld [vmem:[#allocation8 + $0x29c] sm:$0xf]
    %v3459 = vld [vmem:[#allocation8 + $0x2a0] sm:$0xff]
    %v3460 = vld [vmem:[#allocation8 + $0x2a8] sm:$0xff]
    %v3461 = vld [vmem:[#allocation8 + $0x2b0] sm:$0xff]
    %v3462 = vld [vmem:[#allocation8 + $0x2b8] sm:$0xf]
    %v3463 = vld [vmem:[#allocation8 + $0x2bc] sm:$0xff]
    %v3464 = vld [vmem:[#allocation8 + $0x2c4] sm:$0xff]
    %v3465 = vld [vmem:[#allocation8 + $0x2cc] sm:$0xff]
    %v3466 = vld [vmem:[#allocation8 + $0x2d4] sm:$0xf]
    %v3467 = vld [vmem:[#allocation8 + $0x2d8] sm:$0xff]
    %v3468 = vld [vmem:[#allocation8 + $0x2e0] sm:$0xff]
    %v3469 = vld [vmem:[#allocation8 + $0x2e8] sm:$0xff]
    %v3470 = vld [vmem:[#allocation8 + $0x2f0] sm:$0xf]
    %v3471 = vld [vmem:[#allocation8 + $0x2f4] sm:$0xff]
    %v3472 = vld [vmem:[#allocation8 + $0x2fc] sm:$0xff]
    %v3473 = vld [vmem:[#allocation8 + $0x304] sm:$0xff]
    %v3474 = vld [vmem:[#allocation8 + $0x30c] sm:$0xf]
    %v3475 = vld [vmem:[#allocation8 + $0x310] sm:$0xff]
    %v3476 = vld [vmem:[#allocation8 + $0x318] sm:$0xff]
    %v3477 = vld [vmem:[#allocation8 + $0x320] sm:$0xff]
    %v3478 = vld [vmem:[#allocation8 + $0x328] sm:$0xf]
    %v3479 = vld [vmem:[#allocation8 + $0x32c] sm:$0xff]
    %v3480 = vld [vmem:[#allocation8 + $0x334] sm:$0xff]
    %v3481 = vld [vmem:[#allocation8 + $0x33c] sm:$0xff]
    %v3482 = vld [vmem:[#allocation8 + $0x344] sm:$0xf]
    %v3483 = vld [vmem:[#allocation8 + $0x348] sm:$0xff]
    %v3484 = vld [vmem:[#allocation8 + $0x350] sm:$0xff]
    %v3485 = vld [vmem:[#allocation8 + $0x358] sm:$0xff]
    %v3486 = vld [vmem:[#allocation8 + $0x360] sm:$0xf]
    %v3487 = vld [vmem:[#allocation8 + $0x364] sm:$0xff]
    %v3488 = vld [vmem:[#allocation8 + $0x36c] sm:$0xff]
    %v3489 = vld [vmem:[#allocation8 + $0x374] sm:$0xff]
    %v3490 = vld [vmem:[#allocation8 + $0x37c] sm:$0xf]
    %v3491 = vld [vmem:[#allocation8 + $0x380] sm:$0xff]
    %v3492 = vld [vmem:[#allocation8 + $0x388] sm:$0xff]
    %v3493 = vld [vmem:[#allocation8 + $0x390] sm:$0xff]
    %v3494 = vld [vmem:[#allocation8 + $0x398] sm:$0xf]
    %v3495 = vld [vmem:[#allocation8 + $0x39c] sm:$0xff]
    %v3496 = vld [vmem:[#allocation8 + $0x3a4] sm:$0xff]
    %v3497 = vld [vmem:[#allocation8 + $0x3ac] sm:$0xff]
    %v3498 = vld [vmem:[#allocation8 + $0x3b4] sm:$0xf]
    %v3499 = vld [vmem:[#allocation8 + $0x3b8] sm:$0xff]
    %v3500 = vld [vmem:[#allocation8 + $0x3c0] sm:$0xff]
    %v3501 = vld [vmem:[#allocation8 + $0x3c8] sm:$0xff]
    %v3502 = vld [vmem:[#allocation8 + $0x3d0] sm:$0xf]
    %v3503 = vld [vmem:[#allocation8 + $0x3d4] sm:$0xff]
    %v3504 = vld [vmem:[#allocation8 + $0x3dc] sm:$0xff]
    %v3505 = vld [vmem:[#allocation8 + $0x3e4] sm:$0xff]
    %v3506 = vld [vmem:[#allocation8 + $0x3ec] sm:$0xf]
    %v3507 = vld [vmem:[#allocation8 + $0x3f0] sm:$0xff]
    %v3508 = vld [vmem:[#allocation8 + $0x3f8] sm:$0xff]
    %v3509 = vld [vmem:[#allocation8 + $0x400] sm:$0xff]
    %v3510 = vld [vmem:[#allocation8 + $0x408] sm:$0xf]
    %v3511 = vld [vmem:[#allocation8 + $0x40c] sm:$0xff]
    %v3512 = vld [vmem:[#allocation8 + $0x414] sm:$0xff]
    %v3513 = vld [vmem:[#allocation8 + $0x41c] sm:$0xff]
    %v3514 = vld [vmem:[#allocation8 + $0x424] sm:$0xf]
    %v3515 = vld [vmem:[#allocation8 + $0x428] sm:$0xff]
    %v3516 = vld [vmem:[#allocation8 + $0x430] sm:$0xff]
    %v3517 = vld [vmem:[#allocation8 + $0x438] sm:$0xff]
    %v3518 = vld [vmem:[#allocation8 + $0x440] sm:$0xf]
    %v3519 = vld [vmem:[#allocation8 + $0x444] sm:$0xff]
    %v3520 = vld [vmem:[#allocation8 + $0x44c] sm:$0xff]
    %v3521 = vld [vmem:[#allocation8 + $0x454] sm:$0xff]
    %v3522 = vld [vmem:[#allocation8 + $0x45c] sm:$0xf]
    %v3523 = vld [vmem:[#allocation8 + $0x460] sm:$0xff]
    %v3524 = vld [vmem:[#allocation8 + $0x468] sm:$0xff]
    %v3525 = vld [vmem:[#allocation8 + $0x470] sm:$0xff]
    %v3526 = vld [vmem:[#allocation8 + $0x478] sm:$0xf]
    %v3527 = vld [vmem:[#allocation8 + $0x47c] sm:$0xff]
    %v3528 = vld [vmem:[#allocation8 + $0x484] sm:$0xff]
    %v3529 = vld [vmem:[#allocation8 + $0x48c] sm:$0xff]
    %v3530 = vld [vmem:[#allocation8 + $0x494] sm:$0xf]
    %v3531 = vld [vmem:[#allocation8 + $0x498] sm:$0xff]
    %v3532 = vld [vmem:[#allocation8 + $0x4a0] sm:$0xff]
    %v3533 = vld [vmem:[#allocation8 + $0x4a8] sm:$0xff]
    %v3534 = vld [vmem:[#allocation8 + $0x4b0] sm:$0xf]
    %v3535 = vld [vmem:[#allocation8 + $0x4b4] sm:$0xff]
    %v3536 = vld [vmem:[#allocation8 + $0x4bc] sm:$0xff]
    %v3537 = vld [vmem:[#allocation8 + $0x4c4] sm:$0xff]
    %v3538 = vld [vmem:[#allocation8 + $0x4cc] sm:$0xf]
    %v3539 = vld [vmem:[#allocation8 + $0x4d0] sm:$0xff]
    %v3540 = vld [vmem:[#allocation8 + $0x4d8] sm:$0xff]
    %v3541 = vld [vmem:[#allocation8 + $0x4e0] sm:$0xff]
    %v3542 = vld [vmem:[#allocation8 + $0x4e8] sm:$0xf]
    %v3543 = vld [vmem:[#allocation8 + $0x4ec] sm:$0xff]
    %v3544 = vld [vmem:[#allocation8 + $0x4f4] sm:$0xff]
    %v3545 = vld [vmem:[#allocation8 + $0x4fc] sm:$0xff]
    %v3546 = vld [vmem:[#allocation8 + $0x504] sm:$0xf]
    %v3547 = vld [vmem:[#allocation8 + $0x508] sm:$0xff]
    %v3548 = vld [vmem:[#allocation8 + $0x510] sm:$0xff]
    %v3549 = vld [vmem:[#allocation8 + $0x518] sm:$0xff]
    %v3550 = vld [vmem:[#allocation8 + $0x520] sm:$0xf]
    %v3551 = vld [vmem:[#allocation8 + $0x524] sm:$0xff]
    %v3552 = vld [vmem:[#allocation8 + $0x52c] sm:$0xff]
    %v3553 = vld [vmem:[#allocation8 + $0x534] sm:$0xff]
    %v3554 = vld [vmem:[#allocation8 + $0x53c] sm:$0xf]
    %v3555 = vld [vmem:[#allocation8 + $0x540] sm:$0xff]
    %v3556 = vld [vmem:[#allocation8 + $0x548] sm:$0xff]
    %v3557 = vld [vmem:[#allocation8 + $0x550] sm:$0xff]
    %v3558 = vld [vmem:[#allocation8 + $0x558] sm:$0xf]
    %v3559 = vld [vmem:[#allocation8 + $0x55c] sm:$0xff]
    %v3560 = vld [vmem:[#allocation8 + $0x564] sm:$0xff]
    %v3561 = vld [vmem:[#allocation8 + $0x56c] sm:$0xff]
    %v3562 = vld [vmem:[#allocation8 + $0x574] sm:$0xf]
    %v3563 = vld [vmem:[#allocation8 + $0x578] sm:$0xff]
    %v3564 = vld [vmem:[#allocation8 + $0x580] sm:$0xff]
    %v3565 = vld [vmem:[#allocation8 + $0x588] sm:$0xff]
    %v3566 = vld [vmem:[#allocation8 + $0x590] sm:$0xf]
    %v3567 = vld [vmem:[#allocation8 + $0x594] sm:$0xff]
    %v3568 = vld [vmem:[#allocation8 + $0x59c] sm:$0xff]
    %v3569 = vld [vmem:[#allocation8 + $0x5a4] sm:$0xff]
    %v3570 = vld [vmem:[#allocation8 + $0x5ac] sm:$0xf]
    %v3571 = vld [vmem:[#allocation8 + $0x5b0] sm:$0xff]
    %v3572 = vld [vmem:[#allocation8 + $0x5b8] sm:$0xff]
    %v3573 = vld [vmem:[#allocation8 + $0x5c0] sm:$0xff]
    %v3574 = vld [vmem:[#allocation8 + $0x5c8] sm:$0xf]
    %v3575 = vld [vmem:[#allocation8 + $0x5cc] sm:$0xff]
    %v3576 = vld [vmem:[#allocation8 + $0x5d4] sm:$0xff]
    %v3577 = vld [vmem:[#allocation8 + $0x5dc] sm:$0xff]
    %v3578 = vld [vmem:[#allocation8 + $0x5e4] sm:$0xf]
    %v3579 = vld [vmem:[#allocation8 + $0x5e8] sm:$0xff]
    %v3580 = vld [vmem:[#allocation8 + $0x5f0] sm:$0xff]
    %v3581 = vld [vmem:[#allocation8 + $0x5f8] sm:$0xff]
    %v3582 = vld [vmem:[#allocation8 + $0x600] sm:$0xf]
    %v3583 = vld [vmem:[#allocation8 + $0x604] sm:$0xff]
    %v3584 = vld [vmem:[#allocation8 + $0x60c] sm:$0xff]
    %v3585 = vld [vmem:[#allocation8 + $0x614] sm:$0xff]
    %v3586 = vld [vmem:[#allocation8 + $0x61c] sm:$0xf]
    %v3587 = vld [vmem:[#allocation8 + $0x620] sm:$0xff]
    %v3588 = vld [vmem:[#allocation8 + $0x628] sm:$0xff]
    %v3589 = vld [vmem:[#allocation8 + $0x630] sm:$0xff]
    %v3590 = vld [vmem:[#allocation8 + $0x638] sm:$0xf]
    %v3591 = vld [vmem:[#allocation8 + $0x63c] sm:$0xff]
    %v3592 = vld [vmem:[#allocation8 + $0x644] sm:$0xff]
    %v3593 = vld [vmem:[#allocation8 + $0x64c] sm:$0xff]
    %v3594 = vld [vmem:[#allocation8 + $0x654] sm:$0xf]
    %v3595 = vld [vmem:[#allocation8 + $0x658] sm:$0xff]
    %v3596 = vld [vmem:[#allocation8 + $0x660] sm:$0xff]
    %v3597 = vld [vmem:[#allocation8 + $0x668] sm:$0xff]
    %v3598 = vld [vmem:[#allocation8 + $0x670] sm:$0xf]
    %v3599 = vld [vmem:[#allocation8 + $0x674] sm:$0xff]
    %v3600 = vld [vmem:[#allocation8 + $0x67c] sm:$0xff]
    %v3601 = vld [vmem:[#allocation8 + $0x684] sm:$0xff]
    %v3602 = vld [vmem:[#allocation8 + $0x68c] sm:$0xf]
    %v3603 = vld [vmem:[#allocation8 + $0x690] sm:$0xff]
    %v3604 = vld [vmem:[#allocation8 + $0x698] sm:$0xff]
    %v3605 = vld [vmem:[#allocation8 + $0x6a0] sm:$0xff]
    %v3606 = vld [vmem:[#allocation8 + $0x6a8] sm:$0xf]
    %v3607 = vld [vmem:[#allocation8 + $0x6ac] sm:$0xff]
    %v3608 = vld [vmem:[#allocation8 + $0x6b4] sm:$0xff]
    %v3609 = vld [vmem:[#allocation8 + $0x6bc] sm:$0xff]
    %v3610 = vld [vmem:[#allocation8 + $0x6c4] sm:$0xf]
    %v3611 = vld [vmem:[#allocation8 + $0x6c8] sm:$0xff]
    %v3612 = vld [vmem:[#allocation8 + $0x6d0] sm:$0xff]
    %v3613 = vld [vmem:[#allocation8 + $0x6d8] sm:$0xff]
    %v3614 = vld [vmem:[#allocation8 + $0x6e0] sm:$0xf]
    %v3615 = vld [vmem:[#allocation8 + $0x6e4] sm:$0xff]
    %v3616 = vld [vmem:[#allocation8 + $0x6ec] sm:$0xff]
    %v3617 = vld [vmem:[#allocation8 + $0x6f4] sm:$0xff]
    %v3618 = vld [vmem:[#allocation8 + $0x6fc] sm:$0xf]
    %v3619 = vld [vmem:[#allocation8 + $0x700] sm:$0xff]
    %v3620 = vld [vmem:[#allocation8 + $0x708] sm:$0xff]
    %v3621 = vld [vmem:[#allocation8 + $0x710] sm:$0xff]
    %v3622 = vld [vmem:[#allocation8 + $0x718] sm:$0xf]
    %v3623 = vld [vmem:[#allocation8 + $0x71c] sm:$0xff]
    %v3624 = vld [vmem:[#allocation8 + $0x724] sm:$0xff]
    %v3625 = vld [vmem:[#allocation8 + $0x72c] sm:$0xff]
    %v3626 = vld [vmem:[#allocation8 + $0x734] sm:$0xf]
    %v3627 = vld [vmem:[#allocation8 + $0x738] sm:$0xff]
    %v3628 = vld [vmem:[#allocation8 + $0x740] sm:$0xff]
    %v3629 = vld [vmem:[#allocation8 + $0x748] sm:$0xff]
    %v3630 = vld [vmem:[#allocation8 + $0x750] sm:$0xf]
    %v3631 = vld [vmem:[#allocation8 + $0x754] sm:$0xff]
    %v3632 = vld [vmem:[#allocation8 + $0x75c] sm:$0xff]
    %v3633 = vld [vmem:[#allocation8 + $0x764] sm:$0xff]
    %v3634 = vld [vmem:[#allocation8 + $0x76c] sm:$0xf]
    %v3635 = vld [vmem:[#allocation8 + $0x770] sm:$0xff]
    %v3636 = vld [vmem:[#allocation8 + $0x778] sm:$0xff]
    %v3637 = vld [vmem:[#allocation8 + $0x780] sm:$0xff]
    %v3638 = vld [vmem:[#allocation8 + $0x788] sm:$0xf]
    %v3639 = vld [vmem:[#allocation8 + $0x78c] sm:$0xff]
    %v3640 = vld [vmem:[#allocation8 + $0x794] sm:$0xff]
    %v3641 = vld [vmem:[#allocation8 + $0x79c] sm:$0xff]
    %v3642 = vld [vmem:[#allocation8 + $0x7a4] sm:$0xf]
    %v3643 = vld [vmem:[#allocation8 + $0x7a8] sm:$0xff]
    %v3644 = vld [vmem:[#allocation8 + $0x7b0] sm:$0xff]
    %v3645 = vld [vmem:[#allocation8 + $0x7b8] sm:$0xff]
    %v3646 = vld [vmem:[#allocation8 + $0x7c0] sm:$0xf]
    %v3647 = vld [vmem:[#allocation8 + $0x7c4] sm:$0xff]
    %v3648 = vld [vmem:[#allocation8 + $0x7cc] sm:$0xff]
    %v3649 = vld [vmem:[#allocation8 + $0x7d4] sm:$0xff]
    %v3650 = vld [vmem:[#allocation8 + $0x7dc] sm:$0xf]
    %v3651 = vld [vmem:[#allocation8 + $0x7e0] sm:$0xff]
    %v3652 = vld [vmem:[#allocation8 + $0x7e8] sm:$0xff]
    %v3653 = vld [vmem:[#allocation8 + $0x7f0] sm:$0xff]
    %v3654 = vld [vmem:[#allocation8 + $0x7f8] sm:$0xf]
    %v3655 = vld [vmem:[#allocation8 + $0x7fc] sm:$0xff]
    %v3656 = vld [vmem:[#allocation8 + $0x804] sm:$0xff]
    %v3657 = vld [vmem:[#allocation8 + $0x80c] sm:$0xff]
    %v3658 = vld [vmem:[#allocation8 + $0x814] sm:$0xf]
    %v3659 = vld [vmem:[#allocation8 + $0x818] sm:$0xff]
    %v3660 = vld [vmem:[#allocation8 + $0x820] sm:$0xff]
    %v3661 = vld [vmem:[#allocation8 + $0x828] sm:$0xff]
    %v3662 = vld [vmem:[#allocation8 + $0x830] sm:$0xf]
    %v3663 = vld [vmem:[#allocation8 + $0x834] sm:$0xff]
    %v3664 = vld [vmem:[#allocation8 + $0x83c] sm:$0xff]
    %v3665 = vld [vmem:[#allocation8 + $0x844] sm:$0xff]
    %v3666 = vld [vmem:[#allocation8 + $0x84c] sm:$0xf]
    %v3667 = vld [vmem:[#allocation8 + $0x850] sm:$0xff]
    %v3668 = vld [vmem:[#allocation8 + $0x858] sm:$0xff]
    %v3669 = vld [vmem:[#allocation8 + $0x860] sm:$0xff]
    %v3670 = vld [vmem:[#allocation8 + $0x868] sm:$0xf]
    %v3671 = vld [vmem:[#allocation8 + $0x86c] sm:$0xff]
    %v3672 = vld [vmem:[#allocation8 + $0x874] sm:$0xff]
    %v3673 = vld [vmem:[#allocation8 + $0x87c] sm:$0xff]
    %v3674 = vld [vmem:[#allocation8 + $0x884] sm:$0xf]
    %v3675 = vld [vmem:[#allocation8 + $0x888] sm:$0xff]
    %v3676 = vld [vmem:[#allocation8 + $0x890] sm:$0xff]
    %v3677 = vld [vmem:[#allocation8 + $0x898] sm:$0xff]
    %v3678 = vld [vmem:[#allocation8 + $0x8a0] sm:$0xf]
    %v3679 = vld [vmem:[#allocation8 + $0x8a4] sm:$0xff]
    %v3680 = vld [vmem:[#allocation8 + $0x8ac] sm:$0xff]
    %v3681 = vld [vmem:[#allocation8 + $0x8b4] sm:$0xff]
    %v3682 = vld [vmem:[#allocation8 + $0x8bc] sm:$0xf]
    %v3683 = vld [vmem:[#allocation8 + $0x8c0] sm:$0xff]
    %v3684 = vld [vmem:[#allocation8 + $0x8c8] sm:$0xff]
    %v3685 = vld [vmem:[#allocation8 + $0x8d0] sm:$0xff]
    %v3686 = vld [vmem:[#allocation8 + $0x8d8] sm:$0xf]
    %v3687 = vld [vmem:[#allocation8 + $0x8dc] sm:$0xff]
    %v3688 = vld [vmem:[#allocation8 + $0x8e4] sm:$0xff]
    %v3689 = vld [vmem:[#allocation8 + $0x8ec] sm:$0xff]
    %v3690 = vld [vmem:[#allocation8 + $0x8f4] sm:$0xf]
    %v3691 = vld [vmem:[#allocation8 + $0x8f8] sm:$0xff]
    %v3692 = vld [vmem:[#allocation8 + $0x900] sm:$0xff]
    %v3693 = vld [vmem:[#allocation8 + $0x908] sm:$0xff]
    %v3694 = vld [vmem:[#allocation8 + $0x910] sm:$0xf]
    %v3695 = vld [vmem:[#allocation8 + $0x914] sm:$0xff]
    %v3696 = vld [vmem:[#allocation8 + $0x91c] sm:$0xff]
    %v3697 = vld [vmem:[#allocation8 + $0x924] sm:$0xff]
    %v3698 = vld [vmem:[#allocation8 + $0x92c] sm:$0xf]
    %v3699 = vld [vmem:[#allocation8 + $0x930] sm:$0xff]
    %v3700 = vld [vmem:[#allocation8 + $0x938] sm:$0xff]
    %v3701 = vld [vmem:[#allocation8 + $0x940] sm:$0xff]
    %v3702 = vld [vmem:[#allocation8 + $0x948] sm:$0xf]
    %v3703 = vld [vmem:[#allocation8 + $0x94c] sm:$0xff]
    %v3704 = vld [vmem:[#allocation8 + $0x954] sm:$0xff]
    %v3705 = vld [vmem:[#allocation8 + $0x95c] sm:$0xff]
    %v3706 = vld [vmem:[#allocation8 + $0x964] sm:$0xf]
    %v3707 = vld [vmem:[#allocation8 + $0x968] sm:$0xff]
    %v3708 = vld [vmem:[#allocation8 + $0x970] sm:$0xff]
    %v3709 = vld [vmem:[#allocation8 + $0x978] sm:$0xff]
    %v3710 = vld [vmem:[#allocation8 + $0x980] sm:$0xf]
    %v3711 = vld [vmem:[#allocation8 + $0x984] sm:$0xff]
    %v3712 = vld [vmem:[#allocation8 + $0x98c] sm:$0xff]
    %v3713 = vld [vmem:[#allocation8 + $0x994] sm:$0xff]
    %v3714 = vld [vmem:[#allocation8 + $0x99c] sm:$0xf]
    %v3715 = vld [vmem:[#allocation8 + $0x9a0] sm:$0xff]
    %v3716 = vld [vmem:[#allocation8 + $0x9a8] sm:$0xff]
    %v3717 = vld [vmem:[#allocation8 + $0x9b0] sm:$0xff]
    %v3718 = vld [vmem:[#allocation8 + $0x9b8] sm:$0xf]
    %v3719 = vld [vmem:[#allocation8 + $0x9bc] sm:$0xff]
    %v3720 = vld [vmem:[#allocation8 + $0x9c4] sm:$0xff]
    %v3721 = vld [vmem:[#allocation8 + $0x9cc] sm:$0xff]
    %v3722 = vld [vmem:[#allocation8 + $0x9d4] sm:$0xf]
    %v3723 = vld [vmem:[#allocation8 + $0x9d8] sm:$0xff]
    %v3724 = vld [vmem:[#allocation8 + $0x9e0] sm:$0xff]
    %v3725 = vld [vmem:[#allocation8 + $0x9e8] sm:$0xff]
    %v3726 = vld [vmem:[#allocation8 + $0x9f0] sm:$0xf]
    %v3727 = vld [vmem:[#allocation8 + $0x9f4] sm:$0xff]
    %v3728 = vld [vmem:[#allocation8 + $0x9fc] sm:$0xff]
    %v3729 = vld [vmem:[#allocation8 + $0xa04] sm:$0xff]
    %v3730 = vld [vmem:[#allocation8 + $0xa0c] sm:$0xf]
    %v3731 = vld [vmem:[#allocation8 + $0xa10] sm:$0xff]
    %v3732 = vld [vmem:[#allocation8 + $0xa18] sm:$0xff]
    %v3733 = vld [vmem:[#allocation8 + $0xa20] sm:$0xff]
    %v3734 = vld [vmem:[#allocation8 + $0xa28] sm:$0xf]
    %v3735 = vld [vmem:[#allocation8 + $0xa2c] sm:$0xff]
    %v3736 = vld [vmem:[#allocation8 + $0xa34] sm:$0xff]
    %v3737 = vld [vmem:[#allocation8 + $0xa3c] sm:$0xff]
    %v3738 = vld [vmem:[#allocation8 + $0xa44] sm:$0xf]
    %v3739 = vld [vmem:[#allocation8 + $0xa48] sm:$0xff]
    %v3740 = vld [vmem:[#allocation8 + $0xa50] sm:$0xff]
    %v3741 = vld [vmem:[#allocation8 + $0xa58] sm:$0xff]
    %v3742 = vld [vmem:[#allocation8 + $0xa60] sm:$0xf]
    %v3743 = vld [vmem:[#allocation8 + $0xa64] sm:$0xff]
    %v3744 = vld [vmem:[#allocation8 + $0xa6c] sm:$0xff]
    %v3745 = vld [vmem:[#allocation8 + $0xa74] sm:$0xff]
    %v3746 = vld [vmem:[#allocation8 + $0xa7c] sm:$0xf]
    %v3747 = vld [vmem:[#allocation8 + $0xa80] sm:$0xff]
    %v3748 = vld [vmem:[#allocation8 + $0xa88] sm:$0xff]
    %v3749 = vld [vmem:[#allocation8 + $0xa90] sm:$0xff]
    %v3750 = vld [vmem:[#allocation8 + $0xa98] sm:$0xf]
    %v3751 = vld [vmem:[#allocation8 + $0xa9c] sm:$0xff]
    %v3752 = vld [vmem:[#allocation8 + $0xaa4] sm:$0xff]
    %v3753 = vld [vmem:[#allocation8 + $0xaac] sm:$0xff]
    %v3754 = vld [vmem:[#allocation8 + $0xab4] sm:$0xf]
    %v3755 = vld [vmem:[#allocation8 + $0xab8] sm:$0xff]
    %v3756 = vld [vmem:[#allocation8 + $0xac0] sm:$0xff]
    %v3757 = vld [vmem:[#allocation8 + $0xac8] sm:$0xff]
    %v3758 = vld [vmem:[#allocation8 + $0xad0] sm:$0xf]
    %v3759 = vld [vmem:[#allocation8 + $0xad4] sm:$0xff]
    %v3760 = vld [vmem:[#allocation8 + $0xadc] sm:$0xff]
    %v3761 = vld [vmem:[#allocation8 + $0xae4] sm:$0xff]
    %v3762 = vld [vmem:[#allocation8 + $0xaec] sm:$0xf]
    %v3763 = vld [vmem:[#allocation8 + $0xaf0] sm:$0xff]
    %v3764 = vld [vmem:[#allocation8 + $0xaf8] sm:$0xff]
    %v3765 = vld [vmem:[#allocation8 + $0xb00] sm:$0xff]
    %v3766 = vld [vmem:[#allocation8 + $0xb08] sm:$0xf]
    %v3767 = vld [vmem:[#allocation8 + $0xb0c] sm:$0xff]
    %v3768 = vld [vmem:[#allocation8 + $0xb14] sm:$0xff]
    %v3769 = vld [vmem:[#allocation8 + $0xb1c] sm:$0xff]
    %v3770 = vld [vmem:[#allocation8 + $0xb24] sm:$0xf]
    %v3771 = vld [vmem:[#allocation8 + $0xb28] sm:$0xff]
    %v3772 = vld [vmem:[#allocation8 + $0xb30] sm:$0xff]
    %v3773 = vld [vmem:[#allocation8 + $0xb38] sm:$0xff]
    %v3774 = vld [vmem:[#allocation8 + $0xb40] sm:$0xf]
    %v3775 = vld [vmem:[#allocation8 + $0xb44] sm:$0xff]
    %v3776 = vld [vmem:[#allocation8 + $0xb4c] sm:$0xff]
    %v3777 = vld [vmem:[#allocation8 + $0xb54] sm:$0xff]
    %v3778 = vld [vmem:[#allocation8 + $0xb5c] sm:$0xf]
    %v3779 = vld [vmem:[#allocation8 + $0xb60] sm:$0xff]
    %v3780 = vld [vmem:[#allocation8 + $0xb68] sm:$0xff]
    %v3781 = vld [vmem:[#allocation8 + $0xb70] sm:$0xff]
    %v3782 = vld [vmem:[#allocation8 + $0xb78] sm:$0xf]
    %v3783 = vld [vmem:[#allocation8 + $0xb7c] sm:$0xff]
    %v3784 = vld [vmem:[#allocation8 + $0xb84] sm:$0xff]
    %v3785 = vld [vmem:[#allocation8 + $0xb8c] sm:$0xff]
    %v3786 = vld [vmem:[#allocation8 + $0xb94] sm:$0xf]
    %v3787 = vld [vmem:[#allocation8 + $0xb98] sm:$0xff]
    %v3788 = vld [vmem:[#allocation8 + $0xba0] sm:$0xff]
    %v3789 = vld [vmem:[#allocation8 + $0xba8] sm:$0xff]
    %v3790 = vld [vmem:[#allocation8 + $0xbb0] sm:$0xf]
    %v3791 = vld [vmem:[#allocation8 + $0xbb4] sm:$0xff]
    %v3792 = vld [vmem:[#allocation8 + $0xbbc] sm:$0xff]
    %v3793 = vld [vmem:[#allocation8 + $0xbc4] sm:$0xff]
    %v3794 = vld [vmem:[#allocation8 + $0xbcc] sm:$0xf]
    %v3795 = vld [vmem:[#allocation8 + $0xbd0] sm:$0xff]
    %v3796 = vld [vmem:[#allocation8 + $0xbd8] sm:$0xff]
    %v3797 = vld [vmem:[#allocation8 + $0xbe0] sm:$0xff]
    %v3798 = vld [vmem:[#allocation8 + $0xbe8] sm:$0xf]
    %v3799 = vld [vmem:[#allocation8 + $0xbec] sm:$0xff]
    %v3800 = vld [vmem:[#allocation8 + $0xbf4] sm:$0xff]
    %v3801 = vld [vmem:[#allocation8 + $0xbfc] sm:$0xff]
    %v3802 = vld [vmem:[#allocation8 + $0xc04] sm:$0xf]
    %v3803 = vld [vmem:[#allocation8 + $0xc08] sm:$0xff]
    %v3804 = vld [vmem:[#allocation8 + $0xc10] sm:$0xff]
    %v3805 = vld [vmem:[#allocation8 + $0xc18] sm:$0xff]
    %v3806 = vld [vmem:[#allocation8 + $0xc20] sm:$0xf]
    %v3807 = vld [vmem:[#allocation8 + $0xc24] sm:$0xff]
    %v3808 = vld [vmem:[#allocation8 + $0xc2c] sm:$0xff]
    %v3809 = vld [vmem:[#allocation8 + $0xc34] sm:$0xff]
    %v3810 = vld [vmem:[#allocation8 + $0xc3c] sm:$0xf]
    %v3811 = vld [vmem:[#allocation10] sm:$0xff]
    %v3813 = vlaneseq
    %v3814 = vshrl.u32 %v3813, 7
    %v3815 = vsub.s32 0, %v3814
    %v3816 = vrot.slane %v3811, %v3815
    %v3817 = vlaneseq
    %v3818 = vshrl.u32 %v3817, 7
    %v3819 = vsub.s32 1, %v3818
    %v3820 = vrot.slane %v3811, %v3819
    %v3821 = vlaneseq
    %v3822 = vshrl.u32 %v3821, 7
    %v3823 = vsub.s32 2, %v3822
    %v3824 = vrot.slane %v3811, %v3823
    %v3825 = vlaneseq
    %v3826 = vshrl.u32 %v3825, 7
    %v3827 = vsub.s32 3, %v3826
    %v3828 = vrot.slane %v3811, %v3827
    %v3829 = vlaneseq
    %v3830 = vshrl.u32 %v3829, 7
    %v3831 = vsub.s32 4, %v3830
    %v3832 = vrot.slane %v3811, %v3831
    %v3833 = vlaneseq
    %v3834 = vshrl.u32 %v3833, 7
    %v3835 = vsub.s32 5, %v3834
    %v3836 = vrot.slane %v3811, %v3835
    %v3837 = vlaneseq
    %v3838 = vshrl.u32 %v3837, 7
    %v3839 = vsub.s32 6, %v3838
    %v3840 = vrot.slane %v3811, %v3839
    %v4296 = vunpack.c.l.b16 %v3363
    %v4297 = vunpack.c.h.b16 %v3363
    %v4298 = vunpack.c.l.b16 %v3364
    %v4299 = vunpack.c.h.b16 %v3364
    %v4300 = vunpack.c.l.b16 %v3365
    %v4301 = vunpack.c.h.b16 %v3365
    %v4302 = vunpack.c.l.b16 %v3366
    %v4303 = vunpack.c.l.b16 %v3367
    %v4304 = vunpack.c.h.b16 %v3367
    %v4305 = vunpack.c.l.b16 %v3368
    %v4306 = vunpack.c.h.b16 %v3368
    %v4307 = vunpack.c.l.b16 %v3369
    %v4308 = vunpack.c.h.b16 %v3369
    %v4309 = vunpack.c.l.b16 %v3370
    %v4310 = vunpack.c.l.b16 %v3371
    %v4311 = vunpack.c.h.b16 %v3371
    %v4312 = vunpack.c.l.b16 %v3372
    %v4313 = vunpack.c.h.b16 %v3372
    %v4314 = vunpack.c.l.b16 %v3373
    %v4315 = vunpack.c.h.b16 %v3373
    %v4316 = vunpack.c.l.b16 %v3374
    %v4317 = vunpack.c.l.b16 %v3375
    %v4318 = vunpack.c.h.b16 %v3375
    %v4319 = vunpack.c.l.b16 %v3376
    %v4320 = vunpack.c.h.b16 %v3376
    %v4321 = vunpack.c.l.b16 %v3377
    %v4322 = vunpack.c.h.b16 %v3377
    %v4323 = vunpack.c.l.b16 %v3378
    %v4324 = vunpack.c.l.b16 %v3379
    %v4325 = vunpack.c.h.b16 %v3379
    %v4326 = vunpack.c.l.b16 %v3380
    %v4327 = vunpack.c.h.b16 %v3380
    %v4328 = vunpack.c.l.b16 %v3381
    %v4329 = vunpack.c.h.b16 %v3381
    %v4330 = vunpack.c.l.b16 %v3382
    %v4331 = vunpack.c.l.b16 %v3383
    %v4332 = vunpack.c.h.b16 %v3383
    %v4333 = vunpack.c.l.b16 %v3384
    %v4334 = vunpack.c.h.b16 %v3384
    %v4335 = vunpack.c.l.b16 %v3385
    %v4336 = vunpack.c.h.b16 %v3385
    %v4337 = vunpack.c.l.b16 %v3386
    %v4338 = vunpack.c.l.b16 %v3387
    %v4339 = vunpack.c.h.b16 %v3387
    %v4340 = vunpack.c.l.b16 %v3388
    %v4341 = vunpack.c.h.b16 %v3388
    %v4342 = vunpack.c.l.b16 %v3389
    %v4343 = vunpack.c.h.b16 %v3389
    %v4344 = vunpack.c.l.b16 %v3390
    %v4345 = vunpack.c.l.b16 %v3391
    %v4346 = vunpack.c.h.b16 %v3391
    %v4347 = vunpack.c.l.b16 %v3392
    %v4348 = vunpack.c.h.b16 %v3392
    %v4349 = vunpack.c.l.b16 %v3393
    %v4350 = vunpack.c.h.b16 %v3393
    %v4351 = vunpack.c.l.b16 %v3394
    %v4352 = vunpack.c.l.b16 %v3395
    %v4353 = vunpack.c.h.b16 %v3395
    %v4354 = vunpack.c.l.b16 %v3396
    %v4355 = vunpack.c.h.b16 %v3396
    %v4356 = vunpack.c.l.b16 %v3397
    %v4357 = vunpack.c.h.b16 %v3397
    %v4358 = vunpack.c.l.b16 %v3398
    %v4359 = vunpack.c.l.b16 %v3399
    %v4360 = vunpack.c.h.b16 %v3399
    %v4361 = vunpack.c.l.b16 %v3400
    %v4362 = vunpack.c.h.b16 %v3400
    %v4363 = vunpack.c.l.b16 %v3401
    %v4364 = vunpack.c.h.b16 %v3401
    %v4365 = vunpack.c.l.b16 %v3402
    %v4366 = vunpack.c.l.b16 %v3403
    %v4367 = vunpack.c.h.b16 %v3403
    %v4368 = vunpack.c.l.b16 %v3404
    %v4369 = vunpack.c.h.b16 %v3404
    %v4370 = vunpack.c.l.b16 %v3405
    %v4371 = vunpack.c.h.b16 %v3405
    %v4372 = vunpack.c.l.b16 %v3406
    %v4373 = vunpack.c.l.b16 %v3407
    %v4374 = vunpack.c.h.b16 %v3407
    %v4375 = vunpack.c.l.b16 %v3408
    %v4376 = vunpack.c.h.b16 %v3408
    %v4377 = vunpack.c.l.b16 %v3409
    %v4378 = vunpack.c.h.b16 %v3409
    %v4379 = vunpack.c.l.b16 %v3410
    %v4380 = vunpack.c.l.b16 %v3411
    %v4381 = vunpack.c.h.b16 %v3411
    %v4382 = vunpack.c.l.b16 %v3412
    %v4383 = vunpack.c.h.b16 %v3412
    %v4384 = vunpack.c.l.b16 %v3413
    %v4385 = vunpack.c.h.b16 %v3413
    %v4386 = vunpack.c.l.b16 %v3414
    %v4387 = vunpack.c.l.b16 %v3415
    %v4388 = vunpack.c.h.b16 %v3415
    %v4389 = vunpack.c.l.b16 %v3416
    %v4390 = vunpack.c.h.b16 %v3416
    %v4391 = vunpack.c.l.b16 %v3417
    %v4392 = vunpack.c.h.b16 %v3417
    %v4393 = vunpack.c.l.b16 %v3418
    %v4394 = vunpack.c.l.b16 %v3419
    %v4395 = vunpack.c.h.b16 %v3419
    %v4396 = vunpack.c.l.b16 %v3420
    %v4397 = vunpack.c.h.b16 %v3420
    %v4398 = vunpack.c.l.b16 %v3421
    %v4399 = vunpack.c.h.b16 %v3421
    %v4400 = vunpack.c.l.b16 %v3422
    %v4401 = vunpack.c.l.b16 %v3423
    %v4402 = vunpack.c.h.b16 %v3423
    %v4403 = vunpack.c.l.b16 %v3424
    %v4404 = vunpack.c.h.b16 %v3424
    %v4405 = vunpack.c.l.b16 %v3425
    %v4406 = vunpack.c.h.b16 %v3425
    %v4407 = vunpack.c.l.b16 %v3426
    %v4408 = vunpack.c.l.b16 %v3427
    %v4409 = vunpack.c.h.b16 %v3427
    %v4410 = vunpack.c.l.b16 %v3428
    %v4411 = vunpack.c.h.b16 %v3428
    %v4412 = vunpack.c.l.b16 %v3429
    %v4413 = vunpack.c.h.b16 %v3429
    %v4414 = vunpack.c.l.b16 %v3430
    %v4415 = vunpack.c.l.b16 %v3431
    %v4416 = vunpack.c.h.b16 %v3431
    %v4417 = vunpack.c.l.b16 %v3432
    %v4418 = vunpack.c.h.b16 %v3432
    %v4419 = vunpack.c.l.b16 %v3433
    %v4420 = vunpack.c.h.b16 %v3433
    %v4421 = vunpack.c.l.b16 %v3434
    %v4422 = vunpack.c.l.b16 %v3435
    %v4423 = vunpack.c.h.b16 %v3435
    %v4424 = vunpack.c.l.b16 %v3436
    %v4425 = vunpack.c.h.b16 %v3436
    %v4426 = vunpack.c.l.b16 %v3437
    %v4427 = vunpack.c.h.b16 %v3437
    %v4428 = vunpack.c.l.b16 %v3438
    %v4429 = vunpack.c.l.b16 %v3439
    %v4430 = vunpack.c.h.b16 %v3439
    %v4431 = vunpack.c.l.b16 %v3440
    %v4432 = vunpack.c.h.b16 %v3440
    %v4433 = vunpack.c.l.b16 %v3441
    %v4434 = vunpack.c.h.b16 %v3441
    %v4435 = vunpack.c.l.b16 %v3442
    %v4436 = vunpack.c.l.b16 %v3443
    %v4437 = vunpack.c.h.b16 %v3443
    %v4438 = vunpack.c.l.b16 %v3444
    %v4439 = vunpack.c.h.b16 %v3444
    %v4440 = vunpack.c.l.b16 %v3445
    %v4441 = vunpack.c.h.b16 %v3445
    %v4442 = vunpack.c.l.b16 %v3446
    %v4443 = vunpack.c.l.b16 %v3447
    %v4444 = vunpack.c.h.b16 %v3447
    %v4445 = vunpack.c.l.b16 %v3448
    %v4446 = vunpack.c.h.b16 %v3448
    %v4447 = vunpack.c.l.b16 %v3449
    %v4448 = vunpack.c.h.b16 %v3449
    %v4449 = vunpack.c.l.b16 %v3450
    %v4450 = vunpack.c.l.b16 %v3451
    %v4451 = vunpack.c.h.b16 %v3451
    %v4452 = vunpack.c.l.b16 %v3452
    %v4453 = vunpack.c.h.b16 %v3452
    %v4454 = vunpack.c.l.b16 %v3453
    %v4455 = vunpack.c.h.b16 %v3453
    %v4456 = vunpack.c.l.b16 %v3454
    %v4457 = vunpack.c.l.b16 %v3455
    %v4458 = vunpack.c.h.b16 %v3455
    %v4459 = vunpack.c.l.b16 %v3456
    %v4460 = vunpack.c.h.b16 %v3456
    %v4461 = vunpack.c.l.b16 %v3457
    %v4462 = vunpack.c.h.b16 %v3457
    %v4463 = vunpack.c.l.b16 %v3458
    %v4464 = vunpack.c.l.b16 %v3459
    %v4465 = vunpack.c.h.b16 %v3459
    %v4466 = vunpack.c.l.b16 %v3460
    %v4467 = vunpack.c.h.b16 %v3460
    %v4468 = vunpack.c.l.b16 %v3461
    %v4469 = vunpack.c.h.b16 %v3461
    %v4470 = vunpack.c.l.b16 %v3462
    %v4471 = vunpack.c.l.b16 %v3463
    %v4472 = vunpack.c.h.b16 %v3463
    %v4473 = vunpack.c.l.b16 %v3464
    %v4474 = vunpack.c.h.b16 %v3464
    %v4475 = vunpack.c.l.b16 %v3465
    %v4476 = vunpack.c.h.b16 %v3465
    %v4477 = vunpack.c.l.b16 %v3466
    %v4478 = vunpack.c.l.b16 %v3467
    %v4479 = vunpack.c.h.b16 %v3467
    %v4480 = vunpack.c.l.b16 %v3468
    %v4481 = vunpack.c.h.b16 %v3468
    %v4482 = vunpack.c.l.b16 %v3469
    %v4483 = vunpack.c.h.b16 %v3469
    %v4484 = vunpack.c.l.b16 %v3470
    %v4485 = vunpack.c.l.b16 %v3471
    %v4486 = vunpack.c.h.b16 %v3471
    %v4487 = vunpack.c.l.b16 %v3472
    %v4488 = vunpack.c.h.b16 %v3472
    %v4489 = vunpack.c.l.b16 %v3473
    %v4490 = vunpack.c.h.b16 %v3473
    %v4491 = vunpack.c.l.b16 %v3474
    %v4492 = vunpack.c.l.b16 %v3475
    %v4493 = vunpack.c.h.b16 %v3475
    %v4494 = vunpack.c.l.b16 %v3476
    %v4495 = vunpack.c.h.b16 %v3476
    %v4496 = vunpack.c.l.b16 %v3477
    %v4497 = vunpack.c.h.b16 %v3477
    %v4498 = vunpack.c.l.b16 %v3478
    %v4499 = vunpack.c.l.b16 %v3479
    %v4500 = vunpack.c.h.b16 %v3479
    %v4501 = vunpack.c.l.b16 %v3480
    %v4502 = vunpack.c.h.b16 %v3480
    %v4503 = vunpack.c.l.b16 %v3481
    %v4504 = vunpack.c.h.b16 %v3481
    %v4505 = vunpack.c.l.b16 %v3482
    %v4506 = vunpack.c.l.b16 %v3483
    %v4507 = vunpack.c.h.b16 %v3483
    %v4508 = vunpack.c.l.b16 %v3484
    %v4509 = vunpack.c.h.b16 %v3484
    %v4510 = vunpack.c.l.b16 %v3485
    %v4511 = vunpack.c.h.b16 %v3485
    %v4512 = vunpack.c.l.b16 %v3486
    %v4513 = vunpack.c.l.b16 %v3487
    %v4514 = vunpack.c.h.b16 %v3487
    %v4515 = vunpack.c.l.b16 %v3488
    %v4516 = vunpack.c.h.b16 %v3488
    %v4517 = vunpack.c.l.b16 %v3489
    %v4518 = vunpack.c.h.b16 %v3489
    %v4519 = vunpack.c.l.b16 %v3490
    %v4520 = vunpack.c.l.b16 %v3491
    %v4521 = vunpack.c.h.b16 %v3491
    %v4522 = vunpack.c.l.b16 %v3492
    %v4523 = vunpack.c.h.b16 %v3492
    %v4524 = vunpack.c.l.b16 %v3493
    %v4525 = vunpack.c.h.b16 %v3493
    %v4526 = vunpack.c.l.b16 %v3494
    %v4527 = vunpack.c.l.b16 %v3495
    %v4528 = vunpack.c.h.b16 %v3495
    %v4529 = vunpack.c.l.b16 %v3496
    %v4530 = vunpack.c.h.b16 %v3496
    %v4531 = vunpack.c.l.b16 %v3497
    %v4532 = vunpack.c.h.b16 %v3497
    %v4533 = vunpack.c.l.b16 %v3498
    %v4534 = vunpack.c.l.b16 %v3499
    %v4535 = vunpack.c.h.b16 %v3499
    %v4536 = vunpack.c.l.b16 %v3500
    %v4537 = vunpack.c.h.b16 %v3500
    %v4538 = vunpack.c.l.b16 %v3501
    %v4539 = vunpack.c.h.b16 %v3501
    %v4540 = vunpack.c.l.b16 %v3502
    %v4541 = vunpack.c.l.b16 %v3503
    %v4542 = vunpack.c.h.b16 %v3503
    %v4543 = vunpack.c.l.b16 %v3504
    %v4544 = vunpack.c.h.b16 %v3504
    %v4545 = vunpack.c.l.b16 %v3505
    %v4546 = vunpack.c.h.b16 %v3505
    %v4547 = vunpack.c.l.b16 %v3506
    %v4548 = vunpack.c.l.b16 %v3507
    %v4549 = vunpack.c.h.b16 %v3507
    %v4550 = vunpack.c.l.b16 %v3508
    %v4551 = vunpack.c.h.b16 %v3508
    %v4552 = vunpack.c.l.b16 %v3509
    %v4553 = vunpack.c.h.b16 %v3509
    %v4554 = vunpack.c.l.b16 %v3510
    %v4555 = vunpack.c.l.b16 %v3511
    %v4556 = vunpack.c.h.b16 %v3511
    %v4557 = vunpack.c.l.b16 %v3512
    %v4558 = vunpack.c.h.b16 %v3512
    %v4559 = vunpack.c.l.b16 %v3513
    %v4560 = vunpack.c.h.b16 %v3513
    %v4561 = vunpack.c.l.b16 %v3514
    %v4562 = vunpack.c.l.b16 %v3515
    %v4563 = vunpack.c.h.b16 %v3515
    %v4564 = vunpack.c.l.b16 %v3516
    %v4565 = vunpack.c.h.b16 %v3516
    %v4566 = vunpack.c.l.b16 %v3517
    %v4567 = vunpack.c.h.b16 %v3517
    %v4568 = vunpack.c.l.b16 %v3518
    %v4569 = vunpack.c.l.b16 %v3519
    %v4570 = vunpack.c.h.b16 %v3519
    %v4571 = vunpack.c.l.b16 %v3520
    %v4572 = vunpack.c.h.b16 %v3520
    %v4573 = vunpack.c.l.b16 %v3521
    %v4574 = vunpack.c.h.b16 %v3521
    %v4575 = vunpack.c.l.b16 %v3522
    %v4576 = vunpack.c.l.b16 %v3523
    %v4577 = vunpack.c.h.b16 %v3523
    %v4578 = vunpack.c.l.b16 %v3524
    %v4579 = vunpack.c.h.b16 %v3524
    %v4580 = vunpack.c.l.b16 %v3525
    %v4581 = vunpack.c.h.b16 %v3525
    %v4582 = vunpack.c.l.b16 %v3526
    %v4583 = vunpack.c.l.b16 %v3527
    %v4584 = vunpack.c.h.b16 %v3527
    %v4585 = vunpack.c.l.b16 %v3528
    %v4586 = vunpack.c.h.b16 %v3528
    %v4587 = vunpack.c.l.b16 %v3529
    %v4588 = vunpack.c.h.b16 %v3529
    %v4589 = vunpack.c.l.b16 %v3530
    %v4590 = vunpack.c.l.b16 %v3531
    %v4591 = vunpack.c.h.b16 %v3531
    %v4592 = vunpack.c.l.b16 %v3532
    %v4593 = vunpack.c.h.b16 %v3532
    %v4594 = vunpack.c.l.b16 %v3533
    %v4595 = vunpack.c.h.b16 %v3533
    %v4596 = vunpack.c.l.b16 %v3534
    %v4597 = vunpack.c.l.b16 %v3535
    %v4598 = vunpack.c.h.b16 %v3535
    %v4599 = vunpack.c.l.b16 %v3536
    %v4600 = vunpack.c.h.b16 %v3536
    %v4601 = vunpack.c.l.b16 %v3537
    %v4602 = vunpack.c.h.b16 %v3537
    %v4603 = vunpack.c.l.b16 %v3538
    %v4604 = vunpack.c.l.b16 %v3539
    %v4605 = vunpack.c.h.b16 %v3539
    %v4606 = vunpack.c.l.b16 %v3540
    %v4607 = vunpack.c.h.b16 %v3540
    %v4608 = vunpack.c.l.b16 %v3541
    %v4609 = vunpack.c.h.b16 %v3541
    %v4610 = vunpack.c.l.b16 %v3542
    %v4611 = vunpack.c.l.b16 %v3543
    %v4612 = vunpack.c.h.b16 %v3543
    %v4613 = vunpack.c.l.b16 %v3544
    %v4614 = vunpack.c.h.b16 %v3544
    %v4615 = vunpack.c.l.b16 %v3545
    %v4616 = vunpack.c.h.b16 %v3545
    %v4617 = vunpack.c.l.b16 %v3546
    %v4618 = vunpack.c.l.b16 %v3547
    %v4619 = vunpack.c.h.b16 %v3547
    %v4620 = vunpack.c.l.b16 %v3548
    %v4621 = vunpack.c.h.b16 %v3548
    %v4622 = vunpack.c.l.b16 %v3549
    %v4623 = vunpack.c.h.b16 %v3549
    %v4624 = vunpack.c.l.b16 %v3550
    %v4625 = vunpack.c.l.b16 %v3551
    %v4626 = vunpack.c.h.b16 %v3551
    %v4627 = vunpack.c.l.b16 %v3552
    %v4628 = vunpack.c.h.b16 %v3552
    %v4629 = vunpack.c.l.b16 %v3553
    %v4630 = vunpack.c.h.b16 %v3553
    %v4631 = vunpack.c.l.b16 %v3554
    %v4632 = vunpack.c.l.b16 %v3555
    %v4633 = vunpack.c.h.b16 %v3555
    %v4634 = vunpack.c.l.b16 %v3556
    %v4635 = vunpack.c.h.b16 %v3556
    %v4636 = vunpack.c.l.b16 %v3557
    %v4637 = vunpack.c.h.b16 %v3557
    %v4638 = vunpack.c.l.b16 %v3558
    %v4639 = vunpack.c.l.b16 %v3559
    %v4640 = vunpack.c.h.b16 %v3559
    %v4641 = vunpack.c.l.b16 %v3560
    %v4642 = vunpack.c.h.b16 %v3560
    %v4643 = vunpack.c.l.b16 %v3561
    %v4644 = vunpack.c.h.b16 %v3561
    %v4645 = vunpack.c.l.b16 %v3562
    %v4646 = vunpack.c.l.b16 %v3563
    %v4647 = vunpack.c.h.b16 %v3563
    %v4648 = vunpack.c.l.b16 %v3564
    %v4649 = vunpack.c.h.b16 %v3564
    %v4650 = vunpack.c.l.b16 %v3565
    %v4651 = vunpack.c.h.b16 %v3565
    %v4652 = vunpack.c.l.b16 %v3566
    %v4653 = vunpack.c.l.b16 %v3567
    %v4654 = vunpack.c.h.b16 %v3567
    %v4655 = vunpack.c.l.b16 %v3568
    %v4656 = vunpack.c.h.b16 %v3568
    %v4657 = vunpack.c.l.b16 %v3569
    %v4658 = vunpack.c.h.b16 %v3569
    %v4659 = vunpack.c.l.b16 %v3570
    %v4660 = vunpack.c.l.b16 %v3571
    %v4661 = vunpack.c.h.b16 %v3571
    %v4662 = vunpack.c.l.b16 %v3572
    %v4663 = vunpack.c.h.b16 %v3572
    %v4664 = vunpack.c.l.b16 %v3573
    %v4665 = vunpack.c.h.b16 %v3573
    %v4666 = vunpack.c.l.b16 %v3574
    %v4667 = vunpack.c.l.b16 %v3575
    %v4668 = vunpack.c.h.b16 %v3575
    %v4669 = vunpack.c.l.b16 %v3576
    %v4670 = vunpack.c.h.b16 %v3576
    %v4671 = vunpack.c.l.b16 %v3577
    %v4672 = vunpack.c.h.b16 %v3577
    %v4673 = vunpack.c.l.b16 %v3578
    %v4674 = vunpack.c.l.b16 %v3579
    %v4675 = vunpack.c.h.b16 %v3579
    %v4676 = vunpack.c.l.b16 %v3580
    %v4677 = vunpack.c.h.b16 %v3580
    %v4678 = vunpack.c.l.b16 %v3581
    %v4679 = vunpack.c.h.b16 %v3581
    %v4680 = vunpack.c.l.b16 %v3582
    %v4681 = vunpack.c.l.b16 %v3583
    %v4682 = vunpack.c.h.b16 %v3583
    %v4683 = vunpack.c.l.b16 %v3584
    %v4684 = vunpack.c.h.b16 %v3584
    %v4685 = vunpack.c.l.b16 %v3585
    %v4686 = vunpack.c.h.b16 %v3585
    %v4687 = vunpack.c.l.b16 %v3586
    %v4688 = vunpack.c.l.b16 %v3587
    %v4689 = vunpack.c.h.b16 %v3587
    %v4690 = vunpack.c.l.b16 %v3588
    %v4691 = vunpack.c.h.b16 %v3588
    %v4692 = vunpack.c.l.b16 %v3589
    %v4693 = vunpack.c.h.b16 %v3589
    %v4694 = vunpack.c.l.b16 %v3590
    %v4695 = vunpack.c.l.b16 %v3591
    %v4696 = vunpack.c.h.b16 %v3591
    %v4697 = vunpack.c.l.b16 %v3592
    %v4698 = vunpack.c.h.b16 %v3592
    %v4699 = vunpack.c.l.b16 %v3593
    %v4700 = vunpack.c.h.b16 %v3593
    %v4701 = vunpack.c.l.b16 %v3594
    %v4702 = vunpack.c.l.b16 %v3595
    %v4703 = vunpack.c.h.b16 %v3595
    %v4704 = vunpack.c.l.b16 %v3596
    %v4705 = vunpack.c.h.b16 %v3596
    %v4706 = vunpack.c.l.b16 %v3597
    %v4707 = vunpack.c.h.b16 %v3597
    %v4708 = vunpack.c.l.b16 %v3598
    %v4709 = vunpack.c.l.b16 %v3599
    %v4710 = vunpack.c.h.b16 %v3599
    %v4711 = vunpack.c.l.b16 %v3600
    %v4712 = vunpack.c.h.b16 %v3600
    %v4713 = vunpack.c.l.b16 %v3601
    %v4714 = vunpack.c.h.b16 %v3601
    %v4715 = vunpack.c.l.b16 %v3602
    %v4716 = vunpack.c.l.b16 %v3603
    %v4717 = vunpack.c.h.b16 %v3603
    %v4718 = vunpack.c.l.b16 %v3604
    %v4719 = vunpack.c.h.b16 %v3604
    %v4720 = vunpack.c.l.b16 %v3605
    %v4721 = vunpack.c.h.b16 %v3605
    %v4722 = vunpack.c.l.b16 %v3606
    %v4723 = vunpack.c.l.b16 %v3607
    %v4724 = vunpack.c.h.b16 %v3607
    %v4725 = vunpack.c.l.b16 %v3608
    %v4726 = vunpack.c.h.b16 %v3608
    %v4727 = vunpack.c.l.b16 %v3609
    %v4728 = vunpack.c.h.b16 %v3609
    %v4729 = vunpack.c.l.b16 %v3610
    %v4730 = vunpack.c.l.b16 %v3611
    %v4731 = vunpack.c.h.b16 %v3611
    %v4732 = vunpack.c.l.b16 %v3612
    %v4733 = vunpack.c.h.b16 %v3612
    %v4734 = vunpack.c.l.b16 %v3613
    %v4735 = vunpack.c.h.b16 %v3613
    %v4736 = vunpack.c.l.b16 %v3614
    %v4737 = vunpack.c.l.b16 %v3615
    %v4738 = vunpack.c.h.b16 %v3615
    %v4739 = vunpack.c.l.b16 %v3616
    %v4740 = vunpack.c.h.b16 %v3616
    %v4741 = vunpack.c.l.b16 %v3617
    %v4742 = vunpack.c.h.b16 %v3617
    %v4743 = vunpack.c.l.b16 %v3618
    %v4744 = vunpack.c.l.b16 %v3619
    %v4745 = vunpack.c.h.b16 %v3619
    %v4746 = vunpack.c.l.b16 %v3620
    %v4747 = vunpack.c.h.b16 %v3620
    %v4748 = vunpack.c.l.b16 %v3621
    %v4749 = vunpack.c.h.b16 %v3621
    %v4750 = vunpack.c.l.b16 %v3622
    %v4751 = vunpack.c.l.b16 %v3623
    %v4752 = vunpack.c.h.b16 %v3623
    %v4753 = vunpack.c.l.b16 %v3624
    %v4754 = vunpack.c.h.b16 %v3624
    %v4755 = vunpack.c.l.b16 %v3625
    %v4756 = vunpack.c.h.b16 %v3625
    %v4757 = vunpack.c.l.b16 %v3626
    %v4758 = vunpack.c.l.b16 %v3627
    %v4759 = vunpack.c.h.b16 %v3627
    %v4760 = vunpack.c.l.b16 %v3628
    %v4761 = vunpack.c.h.b16 %v3628
    %v4762 = vunpack.c.l.b16 %v3629
    %v4763 = vunpack.c.h.b16 %v3629
    %v4764 = vunpack.c.l.b16 %v3630
    %v4765 = vunpack.c.l.b16 %v3631
    %v4766 = vunpack.c.h.b16 %v3631
    %v4767 = vunpack.c.l.b16 %v3632
    %v4768 = vunpack.c.h.b16 %v3632
    %v4769 = vunpack.c.l.b16 %v3633
    %v4770 = vunpack.c.h.b16 %v3633
    %v4771 = vunpack.c.l.b16 %v3634
    %v4772 = vunpack.c.l.b16 %v3635
    %v4773 = vunpack.c.h.b16 %v3635
    %v4774 = vunpack.c.l.b16 %v3636
    %v4775 = vunpack.c.h.b16 %v3636
    %v4776 = vunpack.c.l.b16 %v3637
    %v4777 = vunpack.c.h.b16 %v3637
    %v4778 = vunpack.c.l.b16 %v3638
    %v4779 = vunpack.c.l.b16 %v3639
    %v4780 = vunpack.c.h.b16 %v3639
    %v4781 = vunpack.c.l.b16 %v3640
    %v4782 = vunpack.c.h.b16 %v3640
    %v4783 = vunpack.c.l.b16 %v3641
    %v4784 = vunpack.c.h.b16 %v3641
    %v4785 = vunpack.c.l.b16 %v3642
    %v4786 = vunpack.c.l.b16 %v3643
    %v4787 = vunpack.c.h.b16 %v3643
    %v4788 = vunpack.c.l.b16 %v3644
    %v4789 = vunpack.c.h.b16 %v3644
    %v4790 = vunpack.c.l.b16 %v3645
    %v4791 = vunpack.c.h.b16 %v3645
    %v4792 = vunpack.c.l.b16 %v3646
    %v4793 = vunpack.c.l.b16 %v3647
    %v4794 = vunpack.c.h.b16 %v3647
    %v4795 = vunpack.c.l.b16 %v3648
    %v4796 = vunpack.c.h.b16 %v3648
    %v4797 = vunpack.c.l.b16 %v3649
    %v4798 = vunpack.c.h.b16 %v3649
    %v4799 = vunpack.c.l.b16 %v3650
    %v4800 = vunpack.c.l.b16 %v3651
    %v4801 = vunpack.c.h.b16 %v3651
    %v4802 = vunpack.c.l.b16 %v3652
    %v4803 = vunpack.c.h.b16 %v3652
    %v4804 = vunpack.c.l.b16 %v3653
    %v4805 = vunpack.c.h.b16 %v3653
    %v4806 = vunpack.c.l.b16 %v3654
    %v4807 = vunpack.c.l.b16 %v3655
    %v4808 = vunpack.c.h.b16 %v3655
    %v4809 = vunpack.c.l.b16 %v3656
    %v4810 = vunpack.c.h.b16 %v3656
    %v4811 = vunpack.c.l.b16 %v3657
    %v4812 = vunpack.c.h.b16 %v3657
    %v4813 = vunpack.c.l.b16 %v3658
    %v4814 = vunpack.c.l.b16 %v3659
    %v4815 = vunpack.c.h.b16 %v3659
    %v4816 = vunpack.c.l.b16 %v3660
    %v4817 = vunpack.c.h.b16 %v3660
    %v4818 = vunpack.c.l.b16 %v3661
    %v4819 = vunpack.c.h.b16 %v3661
    %v4820 = vunpack.c.l.b16 %v3662
    %v4821 = vunpack.c.l.b16 %v3663
    %v4822 = vunpack.c.h.b16 %v3663
    %v4823 = vunpack.c.l.b16 %v3664
    %v4824 = vunpack.c.h.b16 %v3664
    %v4825 = vunpack.c.l.b16 %v3665
    %v4826 = vunpack.c.h.b16 %v3665
    %v4827 = vunpack.c.l.b16 %v3666
    %v4828 = vunpack.c.l.b16 %v3667
    %v4829 = vunpack.c.h.b16 %v3667
    %v4830 = vunpack.c.l.b16 %v3668
    %v4831 = vunpack.c.h.b16 %v3668
    %v4832 = vunpack.c.l.b16 %v3669
    %v4833 = vunpack.c.h.b16 %v3669
    %v4834 = vunpack.c.l.b16 %v3670
    %v4835 = vunpack.c.l.b16 %v3671
    %v4836 = vunpack.c.h.b16 %v3671
    %v4837 = vunpack.c.l.b16 %v3672
    %v4838 = vunpack.c.h.b16 %v3672
    %v4839 = vunpack.c.l.b16 %v3673
    %v4840 = vunpack.c.h.b16 %v3673
    %v4841 = vunpack.c.l.b16 %v3674
    %v4842 = vunpack.c.l.b16 %v3675
    %v4843 = vunpack.c.h.b16 %v3675
    %v4844 = vunpack.c.l.b16 %v3676
    %v4845 = vunpack.c.h.b16 %v3676
    %v4846 = vunpack.c.l.b16 %v3677
    %v4847 = vunpack.c.h.b16 %v3677
    %v4848 = vunpack.c.l.b16 %v3678
    %v4849 = vunpack.c.l.b16 %v3679
    %v4850 = vunpack.c.h.b16 %v3679
    %v4851 = vunpack.c.l.b16 %v3680
    %v4852 = vunpack.c.h.b16 %v3680
    %v4853 = vunpack.c.l.b16 %v3681
    %v4854 = vunpack.c.h.b16 %v3681
    %v4855 = vunpack.c.l.b16 %v3682
    %v4856 = vunpack.c.l.b16 %v3683
    %v4857 = vunpack.c.h.b16 %v3683
    %v4858 = vunpack.c.l.b16 %v3684
    %v4859 = vunpack.c.h.b16 %v3684
    %v4860 = vunpack.c.l.b16 %v3685
    %v4861 = vunpack.c.h.b16 %v3685
    %v4862 = vunpack.c.l.b16 %v3686
    %v4863 = vunpack.c.l.b16 %v3687
    %v4864 = vunpack.c.h.b16 %v3687
    %v4865 = vunpack.c.l.b16 %v3688
    %v4866 = vunpack.c.h.b16 %v3688
    %v4867 = vunpack.c.l.b16 %v3689
    %v4868 = vunpack.c.h.b16 %v3689
    %v4869 = vunpack.c.l.b16 %v3690
    %v4870 = vunpack.c.l.b16 %v3691
    %v4871 = vunpack.c.h.b16 %v3691
    %v4872 = vunpack.c.l.b16 %v3692
    %v4873 = vunpack.c.h.b16 %v3692
    %v4874 = vunpack.c.l.b16 %v3693
    %v4875 = vunpack.c.h.b16 %v3693
    %v4876 = vunpack.c.l.b16 %v3694
    %v4877 = vunpack.c.l.b16 %v3695
    %v4878 = vunpack.c.h.b16 %v3695
    %v4879 = vunpack.c.l.b16 %v3696
    %v4880 = vunpack.c.h.b16 %v3696
    %v4881 = vunpack.c.l.b16 %v3697
    %v4882 = vunpack.c.h.b16 %v3697
    %v4883 = vunpack.c.l.b16 %v3698
    %v4884 = vunpack.c.l.b16 %v3699
    %v4885 = vunpack.c.h.b16 %v3699
    %v4886 = vunpack.c.l.b16 %v3700
    %v4887 = vunpack.c.h.b16 %v3700
    %v4888 = vunpack.c.l.b16 %v3701
    %v4889 = vunpack.c.h.b16 %v3701
    %v4890 = vunpack.c.l.b16 %v3702
    %v4891 = vunpack.c.l.b16 %v3703
    %v4892 = vunpack.c.h.b16 %v3703
    %v4893 = vunpack.c.l.b16 %v3704
    %v4894 = vunpack.c.h.b16 %v3704
    %v4895 = vunpack.c.l.b16 %v3705
    %v4896 = vunpack.c.h.b16 %v3705
    %v4897 = vunpack.c.l.b16 %v3706
    %v4898 = vunpack.c.l.b16 %v3707
    %v4899 = vunpack.c.h.b16 %v3707
    %v4900 = vunpack.c.l.b16 %v3708
    %v4901 = vunpack.c.h.b16 %v3708
    %v4902 = vunpack.c.l.b16 %v3709
    %v4903 = vunpack.c.h.b16 %v3709
    %v4904 = vunpack.c.l.b16 %v3710
    %v4905 = vunpack.c.l.b16 %v3711
    %v4906 = vunpack.c.h.b16 %v3711
    %v4907 = vunpack.c.l.b16 %v3712
    %v4908 = vunpack.c.h.b16 %v3712
    %v4909 = vunpack.c.l.b16 %v3713
    %v4910 = vunpack.c.h.b16 %v3713
    %v4911 = vunpack.c.l.b16 %v3714
    %v4912 = vunpack.c.l.b16 %v3715
    %v4913 = vunpack.c.h.b16 %v3715
    %v4914 = vunpack.c.l.b16 %v3716
    %v4915 = vunpack.c.h.b16 %v3716
    %v4916 = vunpack.c.l.b16 %v3717
    %v4917 = vunpack.c.h.b16 %v3717
    %v4918 = vunpack.c.l.b16 %v3718
    %v4919 = vunpack.c.l.b16 %v3719
    %v4920 = vunpack.c.h.b16 %v3719
    %v4921 = vunpack.c.l.b16 %v3720
    %v4922 = vunpack.c.h.b16 %v3720
    %v4923 = vunpack.c.l.b16 %v3721
    %v4924 = vunpack.c.h.b16 %v3721
    %v4925 = vunpack.c.l.b16 %v3722
    %v4926 = vunpack.c.l.b16 %v3723
    %v4927 = vunpack.c.h.b16 %v3723
    %v4928 = vunpack.c.l.b16 %v3724
    %v4929 = vunpack.c.h.b16 %v3724
    %v4930 = vunpack.c.l.b16 %v3725
    %v4931 = vunpack.c.h.b16 %v3725
    %v4932 = vunpack.c.l.b16 %v3726
    %v4933 = vunpack.c.l.b16 %v3727
    %v4934 = vunpack.c.h.b16 %v3727
    %v4935 = vunpack.c.l.b16 %v3728
    %v4936 = vunpack.c.h.b16 %v3728
    %v4937 = vunpack.c.l.b16 %v3729
    %v4938 = vunpack.c.h.b16 %v3729
    %v4939 = vunpack.c.l.b16 %v3730
    %v4940 = vunpack.c.l.b16 %v3731
    %v4941 = vunpack.c.h.b16 %v3731
    %v4942 = vunpack.c.l.b16 %v3732
    %v4943 = vunpack.c.h.b16 %v3732
    %v4944 = vunpack.c.l.b16 %v3733
    %v4945 = vunpack.c.h.b16 %v3733
    %v4946 = vunpack.c.l.b16 %v3734
    %v4947 = vunpack.c.l.b16 %v3735
    %v4948 = vunpack.c.h.b16 %v3735
    %v4949 = vunpack.c.l.b16 %v3736
    %v4950 = vunpack.c.h.b16 %v3736
    %v4951 = vunpack.c.l.b16 %v3737
    %v4952 = vunpack.c.h.b16 %v3737
    %v4953 = vunpack.c.l.b16 %v3738
    %v4954 = vunpack.c.l.b16 %v3739
    %v4955 = vunpack.c.h.b16 %v3739
    %v4956 = vunpack.c.l.b16 %v3740
    %v4957 = vunpack.c.h.b16 %v3740
    %v4958 = vunpack.c.l.b16 %v3741
    %v4959 = vunpack.c.h.b16 %v3741
    %v4960 = vunpack.c.l.b16 %v3742
    %v4961 = vunpack.c.l.b16 %v3743
    %v4962 = vunpack.c.h.b16 %v3743
    %v4963 = vunpack.c.l.b16 %v3744
    %v4964 = vunpack.c.h.b16 %v3744
    %v4965 = vunpack.c.l.b16 %v3745
    %v4966 = vunpack.c.h.b16 %v3745
    %v4967 = vunpack.c.l.b16 %v3746
    %v4968 = vunpack.c.l.b16 %v3747
    %v4969 = vunpack.c.h.b16 %v3747
    %v4970 = vunpack.c.l.b16 %v3748
    %v4971 = vunpack.c.h.b16 %v3748
    %v4972 = vunpack.c.l.b16 %v3749
    %v4973 = vunpack.c.h.b16 %v3749
    %v4974 = vunpack.c.l.b16 %v3750
    %v4975 = vunpack.c.l.b16 %v3751
    %v4976 = vunpack.c.h.b16 %v3751
    %v4977 = vunpack.c.l.b16 %v3752
    %v4978 = vunpack.c.h.b16 %v3752
    %v4979 = vunpack.c.l.b16 %v3753
    %v4980 = vunpack.c.h.b16 %v3753
    %v4981 = vunpack.c.l.b16 %v3754
    %v4982 = vunpack.c.l.b16 %v3755
    %v4983 = vunpack.c.h.b16 %v3755
    %v4984 = vunpack.c.l.b16 %v3756
    %v4985 = vunpack.c.h.b16 %v3756
    %v4986 = vunpack.c.l.b16 %v3757
    %v4987 = vunpack.c.h.b16 %v3757
    %v4988 = vunpack.c.l.b16 %v3758
    %v4989 = vunpack.c.l.b16 %v3759
    %v4990 = vunpack.c.h.b16 %v3759
    %v4991 = vunpack.c.l.b16 %v3760
    %v4992 = vunpack.c.h.b16 %v3760
    %v4993 = vunpack.c.l.b16 %v3761
    %v4994 = vunpack.c.h.b16 %v3761
    %v4995 = vunpack.c.l.b16 %v3762
    %v4996 = vunpack.c.l.b16 %v3763
    %v4997 = vunpack.c.h.b16 %v3763
    %v4998 = vunpack.c.l.b16 %v3764
    %v4999 = vunpack.c.h.b16 %v3764
    %v5000 = vunpack.c.l.b16 %v3765
    %v5001 = vunpack.c.h.b16 %v3765
    %v5002 = vunpack.c.l.b16 %v3766
    %v5003 = vunpack.c.l.b16 %v3767
    %v5004 = vunpack.c.h.b16 %v3767
    %v5005 = vunpack.c.l.b16 %v3768
    %v5006 = vunpack.c.h.b16 %v3768
    %v5007 = vunpack.c.l.b16 %v3769
    %v5008 = vunpack.c.h.b16 %v3769
    %v5009 = vunpack.c.l.b16 %v3770
    %v5010 = vunpack.c.l.b16 %v3771
    %v5011 = vunpack.c.h.b16 %v3771
    %v5012 = vunpack.c.l.b16 %v3772
    %v5013 = vunpack.c.h.b16 %v3772
    %v5014 = vunpack.c.l.b16 %v3773
    %v5015 = vunpack.c.h.b16 %v3773
    %v5016 = vunpack.c.l.b16 %v3774
    %v5017 = vunpack.c.l.b16 %v3775
    %v5018 = vunpack.c.h.b16 %v3775
    %v5019 = vunpack.c.l.b16 %v3776
    %v5020 = vunpack.c.h.b16 %v3776
    %v5021 = vunpack.c.l.b16 %v3777
    %v5022 = vunpack.c.h.b16 %v3777
    %v5023 = vunpack.c.l.b16 %v3778
    %v5024 = vunpack.c.l.b16 %v3779
    %v5025 = vunpack.c.h.b16 %v3779
    %v5026 = vunpack.c.l.b16 %v3780
    %v5027 = vunpack.c.h.b16 %v3780
    %v5028 = vunpack.c.l.b16 %v3781
    %v5029 = vunpack.c.h.b16 %v3781
    %v5030 = vunpack.c.l.b16 %v3782
    %v5031 = vunpack.c.l.b16 %v3783
    %v5032 = vunpack.c.h.b16 %v3783
    %v5033 = vunpack.c.l.b16 %v3784
    %v5034 = vunpack.c.h.b16 %v3784
    %v5035 = vunpack.c.l.b16 %v3785
    %v5036 = vunpack.c.h.b16 %v3785
    %v5037 = vunpack.c.l.b16 %v3786
    %v5038 = vunpack.c.l.b16 %v3787
    %v5039 = vunpack.c.h.b16 %v3787
    %v5040 = vunpack.c.l.b16 %v3788
    %v5041 = vunpack.c.h.b16 %v3788
    %v5042 = vunpack.c.l.b16 %v3789
    %v5043 = vunpack.c.h.b16 %v3789
    %v5044 = vunpack.c.l.b16 %v3790
    %v5045 = vunpack.c.l.b16 %v3791
    %v5046 = vunpack.c.h.b16 %v3791
    %v5047 = vunpack.c.l.b16 %v3792
    %v5048 = vunpack.c.h.b16 %v3792
    %v5049 = vunpack.c.l.b16 %v3793
    %v5050 = vunpack.c.h.b16 %v3793
    %v5051 = vunpack.c.l.b16 %v3794
    %v5052 = vunpack.c.l.b16 %v3795
    %v5053 = vunpack.c.h.b16 %v3795
    %v5054 = vunpack.c.l.b16 %v3796
    %v5055 = vunpack.c.h.b16 %v3796
    %v5056 = vunpack.c.l.b16 %v3797
    %v5057 = vunpack.c.h.b16 %v3797
    %v5058 = vunpack.c.l.b16 %v3798
    %v5059 = vunpack.c.l.b16 %v3799
    %v5060 = vunpack.c.h.b16 %v3799
    %v5061 = vunpack.c.l.b16 %v3800
    %v5062 = vunpack.c.h.b16 %v3800
    %v5063 = vunpack.c.l.b16 %v3801
    %v5064 = vunpack.c.h.b16 %v3801
    %v5065 = vunpack.c.l.b16 %v3802
    %v5066 = vunpack.c.l.b16 %v3803
    %v5067 = vunpack.c.h.b16 %v3803
    %v5068 = vunpack.c.l.b16 %v3804
    %v5069 = vunpack.c.h.b16 %v3804
    %v5070 = vunpack.c.l.b16 %v3805
    %v5071 = vunpack.c.h.b16 %v3805
    %v5072 = vunpack.c.l.b16 %v3806
    %v5073 = vunpack.c.l.b16 %v3807
    %v5074 = vunpack.c.h.b16 %v3807
    %v5075 = vunpack.c.l.b16 %v3808
    %v5076 = vunpack.c.h.b16 %v3808
    %v5077 = vunpack.c.l.b16 %v3809
    %v5078 = vunpack.c.h.b16 %v3809
    %v5079 = vunpack.c.l.b16 %v3810
    %v5080 = vpack.c.b16 %v4303, %v4296
    %v5081 = vpack.c.b16 %v4304, %v4297
    %v5082 = vpack.c.b16 %v4305, %v4298
    %v5083 = vpack.c.b16 %v4306, %v4299
    %v5084 = vpack.c.b16 %v4307, %v4300
    %v5085 = vpack.c.b16 %v4308, %v4301
    %v5086 = vpack.c.b16 %v4309, %v4302
    %v5087 = vpack.c.b16 %v4317, %v4310
    %v5088 = vpack.c.b16 %v4318, %v4311
    %v5089 = vpack.c.b16 %v4319, %v4312
    %v5090 = vpack.c.b16 %v4320, %v4313
    %v5091 = vpack.c.b16 %v4321, %v4314
    %v5092 = vpack.c.b16 %v4322, %v4315
    %v5093 = vpack.c.b16 %v4323, %v4316
    %v5094 = vpack.c.b16 %v4331, %v4324
    %v5095 = vpack.c.b16 %v4332, %v4325
    %v5096 = vpack.c.b16 %v4333, %v4326
    %v5097 = vpack.c.b16 %v4334, %v4327
    %v5098 = vpack.c.b16 %v4335, %v4328
    %v5099 = vpack.c.b16 %v4336, %v4329
    %v5100 = vpack.c.b16 %v4337, %v4330
    %v5101 = vpack.c.b16 %v4345, %v4338
    %v5102 = vpack.c.b16 %v4346, %v4339
    %v5103 = vpack.c.b16 %v4347, %v4340
    %v5104 = vpack.c.b16 %v4348, %v4341
    %v5105 = vpack.c.b16 %v4349, %v4342
    %v5106 = vpack.c.b16 %v4350, %v4343
    %v5107 = vpack.c.b16 %v4351, %v4344
    %v5108 = vpack.c.b16 %v4359, %v4352
    %v5109 = vpack.c.b16 %v4360, %v4353
    %v5110 = vpack.c.b16 %v4361, %v4354
    %v5111 = vpack.c.b16 %v4362, %v4355
    %v5112 = vpack.c.b16 %v4363, %v4356
    %v5113 = vpack.c.b16 %v4364, %v4357
    %v5114 = vpack.c.b16 %v4365, %v4358
    %v5115 = vpack.c.b16 %v4373, %v4366
    %v5116 = vpack.c.b16 %v4374, %v4367
    %v5117 = vpack.c.b16 %v4375, %v4368
    %v5118 = vpack.c.b16 %v4376, %v4369
    %v5119 = vpack.c.b16 %v4377, %v4370
    %v5120 = vpack.c.b16 %v4378, %v4371
    %v5121 = vpack.c.b16 %v4379, %v4372
    %v5122 = vpack.c.b16 %v4387, %v4380
    %v5123 = vpack.c.b16 %v4388, %v4381
    %v5124 = vpack.c.b16 %v4389, %v4382
    %v5125 = vpack.c.b16 %v4390, %v4383
    %v5126 = vpack.c.b16 %v4391, %v4384
    %v5127 = vpack.c.b16 %v4392, %v4385
    %v5128 = vpack.c.b16 %v4393, %v4386
    %v5129 = vpack.c.b16 %v4401, %v4394
    %v5130 = vpack.c.b16 %v4402, %v4395
    %v5131 = vpack.c.b16 %v4403, %v4396
    %v5132 = vpack.c.b16 %v4404, %v4397
    %v5133 = vpack.c.b16 %v4405, %v4398
    %v5134 = vpack.c.b16 %v4406, %v4399
    %v5135 = vpack.c.b16 %v4407, %v4400
    %v5136 = vpack.c.b16 %v4415, %v4408
    %v5137 = vpack.c.b16 %v4416, %v4409
    %v5138 = vpack.c.b16 %v4417, %v4410
    %v5139 = vpack.c.b16 %v4418, %v4411
    %v5140 = vpack.c.b16 %v4419, %v4412
    %v5141 = vpack.c.b16 %v4420, %v4413
    %v5142 = vpack.c.b16 %v4421, %v4414
    %v5143 = vpack.c.b16 %v4429, %v4422
    %v5144 = vpack.c.b16 %v4430, %v4423
    %v5145 = vpack.c.b16 %v4431, %v4424
    %v5146 = vpack.c.b16 %v4432, %v4425
    %v5147 = vpack.c.b16 %v4433, %v4426
    %v5148 = vpack.c.b16 %v4434, %v4427
    %v5149 = vpack.c.b16 %v4435, %v4428
    %v5150 = vpack.c.b16 %v4443, %v4436
    %v5151 = vpack.c.b16 %v4444, %v4437
    %v5152 = vpack.c.b16 %v4445, %v4438
    %v5153 = vpack.c.b16 %v4446, %v4439
    %v5154 = vpack.c.b16 %v4447, %v4440
    %v5155 = vpack.c.b16 %v4448, %v4441
    %v5156 = vpack.c.b16 %v4449, %v4442
    %v5157 = vpack.c.b16 %v4457, %v4450
    %v5158 = vpack.c.b16 %v4458, %v4451
    %v5159 = vpack.c.b16 %v4459, %v4452
    %v5160 = vpack.c.b16 %v4460, %v4453
    %v5161 = vpack.c.b16 %v4461, %v4454
    %v5162 = vpack.c.b16 %v4462, %v4455
    %v5163 = vpack.c.b16 %v4463, %v4456
    %v5164 = vpack.c.b16 %v4471, %v4464
    %v5165 = vpack.c.b16 %v4472, %v4465
    %v5166 = vpack.c.b16 %v4473, %v4466
    %v5167 = vpack.c.b16 %v4474, %v4467
    %v5168 = vpack.c.b16 %v4475, %v4468
    %v5169 = vpack.c.b16 %v4476, %v4469
    %v5170 = vpack.c.b16 %v4477, %v4470
    %v5171 = vpack.c.b16 %v4485, %v4478
    %v5172 = vpack.c.b16 %v4486, %v4479
    %v5173 = vpack.c.b16 %v4487, %v4480
    %v5174 = vpack.c.b16 %v4488, %v4481
    %v5175 = vpack.c.b16 %v4489, %v4482
    %v5176 = vpack.c.b16 %v4490, %v4483
    %v5177 = vpack.c.b16 %v4491, %v4484
    %v5178 = vpack.c.b16 %v4499, %v4492
    %v5179 = vpack.c.b16 %v4500, %v4493
    %v5180 = vpack.c.b16 %v4501, %v4494
    %v5181 = vpack.c.b16 %v4502, %v4495
    %v5182 = vpack.c.b16 %v4503, %v4496
    %v5183 = vpack.c.b16 %v4504, %v4497
    %v5184 = vpack.c.b16 %v4505, %v4498
    %v5185 = vpack.c.b16 %v4513, %v4506
    %v5186 = vpack.c.b16 %v4514, %v4507
    %v5187 = vpack.c.b16 %v4515, %v4508
    %v5188 = vpack.c.b16 %v4516, %v4509
    %v5189 = vpack.c.b16 %v4517, %v4510
    %v5190 = vpack.c.b16 %v4518, %v4511
    %v5191 = vpack.c.b16 %v4519, %v4512
    %v5192 = vpack.c.b16 %v4527, %v4520
    %v5193 = vpack.c.b16 %v4528, %v4521
    %v5194 = vpack.c.b16 %v4529, %v4522
    %v5195 = vpack.c.b16 %v4530, %v4523
    %v5196 = vpack.c.b16 %v4531, %v4524
    %v5197 = vpack.c.b16 %v4532, %v4525
    %v5198 = vpack.c.b16 %v4533, %v4526
    %v5199 = vpack.c.b16 %v4541, %v4534
    %v5200 = vpack.c.b16 %v4542, %v4535
    %v5201 = vpack.c.b16 %v4543, %v4536
    %v5202 = vpack.c.b16 %v4544, %v4537
    %v5203 = vpack.c.b16 %v4545, %v4538
    %v5204 = vpack.c.b16 %v4546, %v4539
    %v5205 = vpack.c.b16 %v4547, %v4540
    %v5206 = vpack.c.b16 %v4555, %v4548
    %v5207 = vpack.c.b16 %v4556, %v4549
    %v5208 = vpack.c.b16 %v4557, %v4550
    %v5209 = vpack.c.b16 %v4558, %v4551
    %v5210 = vpack.c.b16 %v4559, %v4552
    %v5211 = vpack.c.b16 %v4560, %v4553
    %v5212 = vpack.c.b16 %v4561, %v4554
    %v5213 = vpack.c.b16 %v4569, %v4562
    %v5214 = vpack.c.b16 %v4570, %v4563
    %v5215 = vpack.c.b16 %v4571, %v4564
    %v5216 = vpack.c.b16 %v4572, %v4565
    %v5217 = vpack.c.b16 %v4573, %v4566
    %v5218 = vpack.c.b16 %v4574, %v4567
    %v5219 = vpack.c.b16 %v4575, %v4568
    %v5220 = vpack.c.b16 %v4583, %v4576
    %v5221 = vpack.c.b16 %v4584, %v4577
    %v5222 = vpack.c.b16 %v4585, %v4578
    %v5223 = vpack.c.b16 %v4586, %v4579
    %v5224 = vpack.c.b16 %v4587, %v4580
    %v5225 = vpack.c.b16 %v4588, %v4581
    %v5226 = vpack.c.b16 %v4589, %v4582
    %v5227 = vpack.c.b16 %v4597, %v4590
    %v5228 = vpack.c.b16 %v4598, %v4591
    %v5229 = vpack.c.b16 %v4599, %v4592
    %v5230 = vpack.c.b16 %v4600, %v4593
    %v5231 = vpack.c.b16 %v4601, %v4594
    %v5232 = vpack.c.b16 %v4602, %v4595
    %v5233 = vpack.c.b16 %v4603, %v4596
    %v5234 = vpack.c.b16 %v4611, %v4604
    %v5235 = vpack.c.b16 %v4612, %v4605
    %v5236 = vpack.c.b16 %v4613, %v4606
    %v5237 = vpack.c.b16 %v4614, %v4607
    %v5238 = vpack.c.b16 %v4615, %v4608
    %v5239 = vpack.c.b16 %v4616, %v4609
    %v5240 = vpack.c.b16 %v4617, %v4610
    %v5241 = vpack.c.b16 %v4625, %v4618
    %v5242 = vpack.c.b16 %v4626, %v4619
    %v5243 = vpack.c.b16 %v4627, %v4620
    %v5244 = vpack.c.b16 %v4628, %v4621
    %v5245 = vpack.c.b16 %v4629, %v4622
    %v5246 = vpack.c.b16 %v4630, %v4623
    %v5247 = vpack.c.b16 %v4631, %v4624
    %v5248 = vpack.c.b16 %v4639, %v4632
    %v5249 = vpack.c.b16 %v4640, %v4633
    %v5250 = vpack.c.b16 %v4641, %v4634
    %v5251 = vpack.c.b16 %v4642, %v4635
    %v5252 = vpack.c.b16 %v4643, %v4636
    %v5253 = vpack.c.b16 %v4644, %v4637
    %v5254 = vpack.c.b16 %v4645, %v4638
    %v5255 = vpack.c.b16 %v4653, %v4646
    %v5256 = vpack.c.b16 %v4654, %v4647
    %v5257 = vpack.c.b16 %v4655, %v4648
    %v5258 = vpack.c.b16 %v4656, %v4649
    %v5259 = vpack.c.b16 %v4657, %v4650
    %v5260 = vpack.c.b16 %v4658, %v4651
    %v5261 = vpack.c.b16 %v4659, %v4652
    %v5262 = vpack.c.b16 %v4667, %v4660
    %v5263 = vpack.c.b16 %v4668, %v4661
    %v5264 = vpack.c.b16 %v4669, %v4662
    %v5265 = vpack.c.b16 %v4670, %v4663
    %v5266 = vpack.c.b16 %v4671, %v4664
    %v5267 = vpack.c.b16 %v4672, %v4665
    %v5268 = vpack.c.b16 %v4673, %v4666
    %v5269 = vpack.c.b16 %v4681, %v4674
    %v5270 = vpack.c.b16 %v4682, %v4675
    %v5271 = vpack.c.b16 %v4683, %v4676
    %v5272 = vpack.c.b16 %v4684, %v4677
    %v5273 = vpack.c.b16 %v4685, %v4678
    %v5274 = vpack.c.b16 %v4686, %v4679
    %v5275 = vpack.c.b16 %v4687, %v4680
    %v5276 = vpack.c.b16 %v4695, %v4688
    %v5277 = vpack.c.b16 %v4696, %v4689
    %v5278 = vpack.c.b16 %v4697, %v4690
    %v5279 = vpack.c.b16 %v4698, %v4691
    %v5280 = vpack.c.b16 %v4699, %v4692
    %v5281 = vpack.c.b16 %v4700, %v4693
    %v5282 = vpack.c.b16 %v4701, %v4694
    %v5283 = vpack.c.b16 %v4709, %v4702
    %v5284 = vpack.c.b16 %v4710, %v4703
    %v5285 = vpack.c.b16 %v4711, %v4704
    %v5286 = vpack.c.b16 %v4712, %v4705
    %v5287 = vpack.c.b16 %v4713, %v4706
    %v5288 = vpack.c.b16 %v4714, %v4707
    %v5289 = vpack.c.b16 %v4715, %v4708
    %v5290 = vpack.c.b16 %v4723, %v4716
    %v5291 = vpack.c.b16 %v4724, %v4717
    %v5292 = vpack.c.b16 %v4725, %v4718
    %v5293 = vpack.c.b16 %v4726, %v4719
    %v5294 = vpack.c.b16 %v4727, %v4720
    %v5295 = vpack.c.b16 %v4728, %v4721
    %v5296 = vpack.c.b16 %v4729, %v4722
    %v5297 = vpack.c.b16 %v4737, %v4730
    %v5298 = vpack.c.b16 %v4738, %v4731
    %v5299 = vpack.c.b16 %v4739, %v4732
    %v5300 = vpack.c.b16 %v4740, %v4733
    %v5301 = vpack.c.b16 %v4741, %v4734
    %v5302 = vpack.c.b16 %v4742, %v4735
    %v5303 = vpack.c.b16 %v4743, %v4736
    %v5304 = vpack.c.b16 %v4751, %v4744
    %v5305 = vpack.c.b16 %v4752, %v4745
    %v5306 = vpack.c.b16 %v4753, %v4746
    %v5307 = vpack.c.b16 %v4754, %v4747
    %v5308 = vpack.c.b16 %v4755, %v4748
    %v5309 = vpack.c.b16 %v4756, %v4749
    %v5310 = vpack.c.b16 %v4757, %v4750
    %v5311 = vpack.c.b16 %v4765, %v4758
    %v5312 = vpack.c.b16 %v4766, %v4759
    %v5313 = vpack.c.b16 %v4767, %v4760
    %v5314 = vpack.c.b16 %v4768, %v4761
    %v5315 = vpack.c.b16 %v4769, %v4762
    %v5316 = vpack.c.b16 %v4770, %v4763
    %v5317 = vpack.c.b16 %v4771, %v4764
    %v5318 = vpack.c.b16 %v4779, %v4772
    %v5319 = vpack.c.b16 %v4780, %v4773
    %v5320 = vpack.c.b16 %v4781, %v4774
    %v5321 = vpack.c.b16 %v4782, %v4775
    %v5322 = vpack.c.b16 %v4783, %v4776
    %v5323 = vpack.c.b16 %v4784, %v4777
    %v5324 = vpack.c.b16 %v4785, %v4778
    %v5325 = vpack.c.b16 %v4793, %v4786
    %v5326 = vpack.c.b16 %v4794, %v4787
    %v5327 = vpack.c.b16 %v4795, %v4788
    %v5328 = vpack.c.b16 %v4796, %v4789
    %v5329 = vpack.c.b16 %v4797, %v4790
    %v5330 = vpack.c.b16 %v4798, %v4791
    %v5331 = vpack.c.b16 %v4799, %v4792
    %v5332 = vpack.c.b16 %v4807, %v4800
    %v5333 = vpack.c.b16 %v4808, %v4801
    %v5334 = vpack.c.b16 %v4809, %v4802
    %v5335 = vpack.c.b16 %v4810, %v4803
    %v5336 = vpack.c.b16 %v4811, %v4804
    %v5337 = vpack.c.b16 %v4812, %v4805
    %v5338 = vpack.c.b16 %v4813, %v4806
    %v5339 = vpack.c.b16 %v4821, %v4814
    %v5340 = vpack.c.b16 %v4822, %v4815
    %v5341 = vpack.c.b16 %v4823, %v4816
    %v5342 = vpack.c.b16 %v4824, %v4817
    %v5343 = vpack.c.b16 %v4825, %v4818
    %v5344 = vpack.c.b16 %v4826, %v4819
    %v5345 = vpack.c.b16 %v4827, %v4820
    %v5346 = vpack.c.b16 %v4835, %v4828
    %v5347 = vpack.c.b16 %v4836, %v4829
    %v5348 = vpack.c.b16 %v4837, %v4830
    %v5349 = vpack.c.b16 %v4838, %v4831
    %v5350 = vpack.c.b16 %v4839, %v4832
    %v5351 = vpack.c.b16 %v4840, %v4833
    %v5352 = vpack.c.b16 %v4841, %v4834
    %v5353 = vpack.c.b16 %v4849, %v4842
    %v5354 = vpack.c.b16 %v4850, %v4843
    %v5355 = vpack.c.b16 %v4851, %v4844
    %v5356 = vpack.c.b16 %v4852, %v4845
    %v5357 = vpack.c.b16 %v4853, %v4846
    %v5358 = vpack.c.b16 %v4854, %v4847
    %v5359 = vpack.c.b16 %v4855, %v4848
    %v5360 = vpack.c.b16 %v4863, %v4856
    %v5361 = vpack.c.b16 %v4864, %v4857
    %v5362 = vpack.c.b16 %v4865, %v4858
    %v5363 = vpack.c.b16 %v4866, %v4859
    %v5364 = vpack.c.b16 %v4867, %v4860
    %v5365 = vpack.c.b16 %v4868, %v4861
    %v5366 = vpack.c.b16 %v4869, %v4862
    %v5367 = vpack.c.b16 %v4877, %v4870
    %v5368 = vpack.c.b16 %v4878, %v4871
    %v5369 = vpack.c.b16 %v4879, %v4872
    %v5370 = vpack.c.b16 %v4880, %v4873
    %v5371 = vpack.c.b16 %v4881, %v4874
    %v5372 = vpack.c.b16 %v4882, %v4875
    %v5373 = vpack.c.b16 %v4883, %v4876
    %v5374 = vpack.c.b16 %v4891, %v4884
    %v5375 = vpack.c.b16 %v4892, %v4885
    %v5376 = vpack.c.b16 %v4893, %v4886
    %v5377 = vpack.c.b16 %v4894, %v4887
    %v5378 = vpack.c.b16 %v4895, %v4888
    %v5379 = vpack.c.b16 %v4896, %v4889
    %v5380 = vpack.c.b16 %v4897, %v4890
    %v5381 = vpack.c.b16 %v4905, %v4898
    %v5382 = vpack.c.b16 %v4906, %v4899
    %v5383 = vpack.c.b16 %v4907, %v4900
    %v5384 = vpack.c.b16 %v4908, %v4901
    %v5385 = vpack.c.b16 %v4909, %v4902
    %v5386 = vpack.c.b16 %v4910, %v4903
    %v5387 = vpack.c.b16 %v4911, %v4904
    %v5388 = vpack.c.b16 %v4919, %v4912
    %v5389 = vpack.c.b16 %v4920, %v4913
    %v5390 = vpack.c.b16 %v4921, %v4914
    %v5391 = vpack.c.b16 %v4922, %v4915
    %v5392 = vpack.c.b16 %v4923, %v4916
    %v5393 = vpack.c.b16 %v4924, %v4917
    %v5394 = vpack.c.b16 %v4925, %v4918
    %v5395 = vpack.c.b16 %v4933, %v4926
    %v5396 = vpack.c.b16 %v4934, %v4927
    %v5397 = vpack.c.b16 %v4935, %v4928
    %v5398 = vpack.c.b16 %v4936, %v4929
    %v5399 = vpack.c.b16 %v4937, %v4930
    %v5400 = vpack.c.b16 %v4938, %v4931
    %v5401 = vpack.c.b16 %v4939, %v4932
    %v5402 = vpack.c.b16 %v4947, %v4940
    %v5403 = vpack.c.b16 %v4948, %v4941
    %v5404 = vpack.c.b16 %v4949, %v4942
    %v5405 = vpack.c.b16 %v4950, %v4943
    %v5406 = vpack.c.b16 %v4951, %v4944
    %v5407 = vpack.c.b16 %v4952, %v4945
    %v5408 = vpack.c.b16 %v4953, %v4946
    %v5409 = vpack.c.b16 %v4961, %v4954
    %v5410 = vpack.c.b16 %v4962, %v4955
    %v5411 = vpack.c.b16 %v4963, %v4956
    %v5412 = vpack.c.b16 %v4964, %v4957
    %v5413 = vpack.c.b16 %v4965, %v4958
    %v5414 = vpack.c.b16 %v4966, %v4959
    %v5415 = vpack.c.b16 %v4967, %v4960
    %v5416 = vpack.c.b16 %v4975, %v4968
    %v5417 = vpack.c.b16 %v4976, %v4969
    %v5418 = vpack.c.b16 %v4977, %v4970
    %v5419 = vpack.c.b16 %v4978, %v4971
    %v5420 = vpack.c.b16 %v4979, %v4972
    %v5421 = vpack.c.b16 %v4980, %v4973
    %v5422 = vpack.c.b16 %v4981, %v4974
    %v5423 = vpack.c.b16 %v4989, %v4982
    %v5424 = vpack.c.b16 %v4990, %v4983
    %v5425 = vpack.c.b16 %v4991, %v4984
    %v5426 = vpack.c.b16 %v4992, %v4985
    %v5427 = vpack.c.b16 %v4993, %v4986
    %v5428 = vpack.c.b16 %v4994, %v4987
    %v5429 = vpack.c.b16 %v4995, %v4988
    %v5430 = vpack.c.b16 %v5003, %v4996
    %v5431 = vpack.c.b16 %v5004, %v4997
    %v5432 = vpack.c.b16 %v5005, %v4998
    %v5433 = vpack.c.b16 %v5006, %v4999
    %v5434 = vpack.c.b16 %v5007, %v5000
    %v5435 = vpack.c.b16 %v5008, %v5001
    %v5436 = vpack.c.b16 %v5009, %v5002
    %v5437 = vpack.c.b16 %v5017, %v5010
    %v5438 = vpack.c.b16 %v5018, %v5011
    %v5439 = vpack.c.b16 %v5019, %v5012
    %v5440 = vpack.c.b16 %v5020, %v5013
    %v5441 = vpack.c.b16 %v5021, %v5014
    %v5442 = vpack.c.b16 %v5022, %v5015
    %v5443 = vpack.c.b16 %v5023, %v5016
    %v5444 = vpack.c.b16 %v5031, %v5024
    %v5445 = vpack.c.b16 %v5032, %v5025
    %v5446 = vpack.c.b16 %v5033, %v5026
    %v5447 = vpack.c.b16 %v5034, %v5027
    %v5448 = vpack.c.b16 %v5035, %v5028
    %v5449 = vpack.c.b16 %v5036, %v5029
    %v5450 = vpack.c.b16 %v5037, %v5030
    %v5451 = vpack.c.b16 %v5045, %v5038
    %v5452 = vpack.c.b16 %v5046, %v5039
    %v5453 = vpack.c.b16 %v5047, %v5040
    %v5454 = vpack.c.b16 %v5048, %v5041
    %v5455 = vpack.c.b16 %v5049, %v5042
    %v5456 = vpack.c.b16 %v5050, %v5043
    %v5457 = vpack.c.b16 %v5051, %v5044
    %v5458 = vpack.c.b16 %v5059, %v5052
    %v5459 = vpack.c.b16 %v5060, %v5053
    %v5460 = vpack.c.b16 %v5061, %v5054
    %v5461 = vpack.c.b16 %v5062, %v5055
    %v5462 = vpack.c.b16 %v5063, %v5056
    %v5463 = vpack.c.b16 %v5064, %v5057
    %v5464 = vpack.c.b16 %v5065, %v5058
    %v5465 = vpack.c.b16 %v5073, %v5066
    %v5466 = vpack.c.b16 %v5074, %v5067
    %v5467 = vpack.c.b16 %v5075, %v5068
    %v5468 = vpack.c.b16 %v5076, %v5069
    %v5469 = vpack.c.b16 %v5077, %v5070
    %v5470 = vpack.c.b16 %v5078, %v5071
    %v5471 = vpack.c.b16 %v5079, %v5072
    %5864 = vmatprep.subr.bf16.mxu0 %v5130
    %5865 = vmatpush1.bf16.msra.mxu0 %v5129
    %5866 = vmatprep.subr.bf16.mxu0 %v5123
    %5867 = vmatpush1.bf16.msra.mxu0 %v5122
    %5868 = vmatprep.subr.bf16.mxu0 %v5116
    %5869 = vmatpush1.bf16.msra.mxu0 %v5115
    %5870 = vmatprep.subr.bf16.mxu0 %v5109
    %5871 = vmatpush1.bf16.msra.mxu0 %v5108
    %5872 = vmatprep.subr.bf16.mxu0 %v5102
    %5873 = vmatpush1.bf16.msra.mxu0 %v5101
    %5874 = vmatprep.subr.bf16.mxu0 %v5095
    %5875 = vmatpush1.bf16.msra.mxu0 %v5094
    %5876 = vmatprep.subr.bf16.mxu0 %v5088
    %5877 = vmatpush1.bf16.msra.mxu0 %v5087
    %5878 = vmatprep.subr.bf16.mxu0 %v5081
    %5879 = vmatpush1.bf16.msra.mxu0 %v5080
    %5880 = vmatprep.subr.bf16.mxu0 %v5186
    %5881 = vmatpush2.bf16.msra.mxu0 %v5185
    %5882 = vmatprep.subr.bf16.mxu0 %v5179
    %5883 = vmatpush2.bf16.msra.mxu0 %v5178
    %5884 = vmatprep.subr.bf16.mxu0 %v5172
    %5885 = vmatpush2.bf16.msra.mxu0 %v5171
    %5886 = vmatprep.subr.bf16.mxu0 %v5165
    %5887 = vmatpush2.bf16.msra.mxu0 %v5164
    %5888 = vmatprep.subr.bf16.mxu0 %v5158
    %5889 = vmatpush2.bf16.msra.mxu0 %v5157
    %5890 = vmatprep.subr.bf16.mxu0 %v5151
    %5891 = vmatpush2.bf16.msra.mxu0 %v5150
    %5892 = vmatprep.subr.bf16.mxu0 %v5144
    %5893 = vmatpush2.bf16.msra.mxu0 %v5143
    %5894 = vmatprep.subr.bf16.mxu0 %v5137
    %5895 = vmatpush2.bf16.msra.mxu0 %v5136
    %5896 = vmatprep.mubr.bf16.mxu0 %v3357
    %5897 = vmatmul.mubr.bf16.gmra.mxu0 %v3356
    %v5898 = vpop.f32.mrf.mxu0
    %v5899 = vadd.f32 %v3816, %v5898
    %v5900 = vpop.f32.mrf.mxu0
    %v5901 = vadd.f32 %v3820, %v5900
    %v5902 = vpop.f32.mrf.mxu0
    %v5903 = vadd.f32 %v3816, %v5902
    %v5904 = vpop.f32.mrf.mxu0
    %v5905 = vadd.f32 %v3820, %v5904
    %5906 = vdwg.mxu0
    %5907 = vmatprep.subr.bf16.mxu0 %v5242
    %5908 = vmatpush1.bf16.msra.mxu0 %v5241
    %5909 = vmatprep.subr.bf16.mxu0 %v5235
    %5910 = vmatpush1.bf16.msra.mxu0 %v5234
    %5911 = vmatprep.subr.bf16.mxu0 %v5228
    %5912 = vmatpush1.bf16.msra.mxu0 %v5227
    %5913 = vmatprep.subr.bf16.mxu0 %v5221
    %5914 = vmatpush1.bf16.msra.mxu0 %v5220
    %5915 = vmatprep.subr.bf16.mxu0 %v5214
    %5916 = vmatpush1.bf16.msra.mxu0 %v5213
    %5917 = vmatprep.subr.bf16.mxu0 %v5207
    %5918 = vmatpush1.bf16.msra.mxu0 %v5206
    %5919 = vmatprep.subr.bf16.mxu0 %v5200
    %5920 = vmatpush1.bf16.msra.mxu0 %v5199
    %5921 = vmatprep.subr.bf16.mxu0 %v5193
    %5922 = vmatpush1.bf16.msra.mxu0 %v5192
    %5923 = vmatprep.subr.bf16.mxu0 %v5298
    %5924 = vmatpush2.bf16.msra.mxu0 %v5297
    %5925 = vmatprep.subr.bf16.mxu0 %v5291
    %5926 = vmatpush2.bf16.msra.mxu0 %v5290
    %5927 = vmatprep.subr.bf16.mxu0 %v5284
    %5928 = vmatpush2.bf16.msra.mxu0 %v5283
    %5929 = vmatprep.subr.bf16.mxu0 %v5277
    %5930 = vmatpush2.bf16.msra.mxu0 %v5276
    %5931 = vmatprep.subr.bf16.mxu0 %v5270
    %5932 = vmatpush2.bf16.msra.mxu0 %v5269
    %5933 = vmatprep.subr.bf16.mxu0 %v5263
    %5934 = vmatpush2.bf16.msra.mxu0 %v5262
    %5935 = vmatprep.subr.bf16.mxu0 %v5256
    %5936 = vmatpush2.bf16.msra.mxu0 %v5255
    %5937 = vmatprep.subr.bf16.mxu0 %v5249
    %5938 = vmatpush2.bf16.msra.mxu0 %v5248
    %5939 = vmatprep.mubr.bf16.mxu0 %v3359
    %5940 = vmatmul.mubr.bf16.gmra.mxu0 %v3358
    %v5941 = vpop.f32.mrf.mxu0
    %v5942 = vadd.f32 %v5899, %v5941
    %v5943 = vpop.f32.mrf.mxu0
    %v5944 = vadd.f32 %v5901, %v5943
    %v5945 = vpop.f32.mrf.mxu0
    %v5946 = vadd.f32 %v5903, %v5945
    %v5947 = vpop.f32.mrf.mxu0
    %v5948 = vadd.f32 %v5905, %v5947
    %5949 = vdwg.mxu0
    %5950 = vmatprep.subr.bf16.mxu0 %v5354
    %5951 = vmatpush1.bf16.msra.mxu0 %v5353
    %5952 = vmatprep.subr.bf16.mxu0 %v5347
    %5953 = vmatpush1.bf16.msra.mxu0 %v5346
    %5954 = vmatprep.subr.bf16.mxu0 %v5340
    %5955 = vmatpush1.bf16.msra.mxu0 %v5339
    %5956 = vmatprep.subr.bf16.mxu0 %v5333
    %5957 = vmatpush1.bf16.msra.mxu0 %v5332
    %5958 = vmatprep.subr.bf16.mxu0 %v5326
    %5959 = vmatpush1.bf16.msra.mxu0 %v5325
    %5960 = vmatprep.subr.bf16.mxu0 %v5319
    %5961 = vmatpush1.bf16.msra.mxu0 %v5318
    %5962 = vmatprep.subr.bf16.mxu0 %v5312
    %5963 = vmatpush1.bf16.msra.mxu0 %v5311
    %5964 = vmatprep.subr.bf16.mxu0 %v5305
    %5965 = vmatpush1.bf16.msra.mxu0 %v5304
    %5966 = vmatprep.subr.bf16.mxu0 %v5410
    %5967 = vmatpush2.bf16.msra.mxu0 %v5409
    %5968 = vmatprep.subr.bf16.mxu0 %v5403
    %5969 = vmatpush2.bf16.msra.mxu0 %v5402
    %5970 = vmatprep.subr.bf16.mxu0 %v5396
    %5971 = vmatpush2.bf16.msra.mxu0 %v5395
    %5972 = vmatprep.subr.bf16.mxu0 %v5389
    %5973 = vmatpush2.bf16.msra.mxu0 %v5388
    %5974 = vmatprep.subr.bf16.mxu0 %v5382
    %5975 = vmatpush2.bf16.msra.mxu0 %v5381
    %5976 = vmatprep.subr.bf16.mxu0 %v5375
    %5977 = vmatpush2.bf16.msra.mxu0 %v5374
    %5978 = vmatprep.subr.bf16.mxu0 %v5368
    %5979 = vmatpush2.bf16.msra.mxu0 %v5367
    %5980 = vmatprep.subr.bf16.mxu0 %v5361
    %5981 = vmatpush2.bf16.msra.mxu0 %v5360
    %5982 = vmatprep.mubr.bf16.mxu0 %v3361
    %5983 = vmatmul.mubr.bf16.gmra.mxu0 %v3360
    %v5984 = vpop.f32.mrf.mxu0
    %v5985 = vadd.f32 %v5942, %v5984
    %v5986 = vpop.f32.mrf.mxu0
    %v5987 = vadd.f32 %v5944, %v5986
    %v5988 = vpop.f32.mrf.mxu0
    %v5989 = vadd.f32 %v5946, %v5988
    %v5990 = vpop.f32.mrf.mxu0
    %v5991 = vadd.f32 %v5948, %v5990
    %5992 = vdwg.mxu0
    %5993 = vmatprep.subr.bf16.mxu0 %v5466
    %5994 = vmatpush1.bf16.msra.mxu0 %v5465
    %5995 = vmatprep.subr.bf16.mxu0 %v5459
    %5996 = vmatpush1.bf16.msra.mxu0 %v5458
    %5997 = vmatprep.subr.bf16.mxu0 %v5452
    %5998 = vmatpush1.bf16.msra.mxu0 %v5451
    %5999 = vmatprep.subr.bf16.mxu0 %v5445
    %6000 = vmatpush1.bf16.msra.mxu0 %v5444
    %6001 = vmatprep.subr.bf16.mxu0 %v5438
    %6002 = vmatpush1.bf16.msra.mxu0 %v5437
    %6003 = vmatprep.subr.bf16.mxu0 %v5431
    %6004 = vmatpush1.bf16.msra.mxu0 %v5430
    %6005 = vmatprep.subr.bf16.mxu0 %v5424
    %6006 = vmatpush1.bf16.msra.mxu0 %v5423
    %6007 = vmatprep.subr.bf16.mxu0 %v5417
    %6008 = vmatpush1.bf16.msra.mxu0 %v5416
    %6009 = vmatprep.subr.bf16.mxu0 0
    %6010 = vmatpush2.bf16.msra.mxu0 0
    %6011 = vmatprep.subr.bf16.mxu0 0
    %6012 = vmatpush2.bf16.msra.mxu0 0
    %6013 = vmatprep.subr.bf16.mxu0 0
    %6014 = vmatpush2.bf16.msra.mxu0 0
    %6015 = vmatprep.subr.bf16.mxu0 0
    %6016 = vmatpush2.bf16.msra.mxu0 0
    %6017 = vmatprep.subr.bf16.mxu0 0
    %6018 = vmatpush2.bf16.msra.mxu0 0
    %6019 = vmatprep.subr.bf16.mxu0 0
    %6020 = vmatpush2.bf16.msra.mxu0 0
    %6021 = vmatprep.subr.bf16.mxu0 0
    %6022 = vmatpush2.bf16.msra.mxu0 0
    %6023 = vmatprep.subr.bf16.mxu0 0
    %6024 = vmatpush2.bf16.msra.mxu0 0
    %6025 = vmatprep.mubr.bf16.mxu0 0
    %6026 = vmatmul.mubr.bf16.gmra.mxu0 %v3362
    %v6027 = vpop.f32.mrf.mxu0
    %v6028 = vadd.f32 %v5985, %v6027
    %v6029 = vpop.f32.mrf.mxu0
    %v6030 = vadd.f32 %v5987, %v6029
    %v6031 = vpop.f32.mrf.mxu0
    %v6032 = vadd.f32 %v5989, %v6031
    %v6033 = vpop.f32.mrf.mxu0
    %v6034 = vadd.f32 %v5991, %v6033
    %6035 = vdwg.mxu0
    %6036 = vmatprep.subr.bf16.mxu0 %v5132
    %6037 = vmatpush1.bf16.msra.mxu0 %v5131
    %6038 = vmatprep.subr.bf16.mxu0 %v5125
    %6039 = vmatpush1.bf16.msra.mxu0 %v5124
    %6040 = vmatprep.subr.bf16.mxu0 %v5118
    %6041 = vmatpush1.bf16.msra.mxu0 %v5117
    %6042 = vmatprep.subr.bf16.mxu0 %v5111
    %6043 = vmatpush1.bf16.msra.mxu0 %v5110
    %6044 = vmatprep.subr.bf16.mxu0 %v5104
    %6045 = vmatpush1.bf16.msra.mxu0 %v5103
    %6046 = vmatprep.subr.bf16.mxu0 %v5097
    %6047 = vmatpush1.bf16.msra.mxu0 %v5096
    %6048 = vmatprep.subr.bf16.mxu0 %v5090
    %6049 = vmatpush1.bf16.msra.mxu0 %v5089
    %6050 = vmatprep.subr.bf16.mxu0 %v5083
    %6051 = vmatpush1.bf16.msra.mxu0 %v5082
    %6052 = vmatprep.subr.bf16.mxu0 %v5188
    %6053 = vmatpush2.bf16.msra.mxu0 %v5187
    %6054 = vmatprep.subr.bf16.mxu0 %v5181
    %6055 = vmatpush2.bf16.msra.mxu0 %v5180
    %6056 = vmatprep.subr.bf16.mxu0 %v5174
    %6057 = vmatpush2.bf16.msra.mxu0 %v5173
    %6058 = vmatprep.subr.bf16.mxu0 %v5167
    %6059 = vmatpush2.bf16.msra.mxu0 %v5166
    %6060 = vmatprep.subr.bf16.mxu0 %v5160
    %6061 = vmatpush2.bf16.msra.mxu0 %v5159
    %6062 = vmatprep.subr.bf16.mxu0 %v5153
    %6063 = vmatpush2.bf16.msra.mxu0 %v5152
    %6064 = vmatprep.subr.bf16.mxu0 %v5146
    %6065 = vmatpush2.bf16.msra.mxu0 %v5145
    %6066 = vmatprep.subr.bf16.mxu0 %v5139
    %6067 = vmatpush2.bf16.msra.mxu0 %v5138
    %6068 = vmatprep.mubr.bf16.mxu0 %v3357
    %6069 = vmatmul.mubr.bf16.gmra.mxu0 %v3356
    %v6070 = vpop.f32.mrf.mxu0
    %v6071 = vadd.f32 %v3824, %v6070
    %v6072 = vpop.f32.mrf.mxu0
    %v6073 = vadd.f32 %v3828, %v6072
    %v6074 = vpop.f32.mrf.mxu0
    %v6075 = vadd.f32 %v3824, %v6074
    %v6076 = vpop.f32.mrf.mxu0
    %v6077 = vadd.f32 %v3828, %v6076
    %6078 = vdwg.mxu0
    %6079 = vmatprep.subr.bf16.mxu0 %v5244
    %6080 = vmatpush1.bf16.msra.mxu0 %v5243
    %6081 = vmatprep.subr.bf16.mxu0 %v5237
    %6082 = vmatpush1.bf16.msra.mxu0 %v5236
    %6083 = vmatprep.subr.bf16.mxu0 %v5230
    %6084 = vmatpush1.bf16.msra.mxu0 %v5229
    %6085 = vmatprep.subr.bf16.mxu0 %v5223
    %6086 = vmatpush1.bf16.msra.mxu0 %v5222
    %6087 = vmatprep.subr.bf16.mxu0 %v5216
    %6088 = vmatpush1.bf16.msra.mxu0 %v5215
    %6089 = vmatprep.subr.bf16.mxu0 %v5209
    %6090 = vmatpush1.bf16.msra.mxu0 %v5208
    %6091 = vmatprep.subr.bf16.mxu0 %v5202
    %6092 = vmatpush1.bf16.msra.mxu0 %v5201
    %6093 = vmatprep.subr.bf16.mxu0 %v5195
    %6094 = vmatpush1.bf16.msra.mxu0 %v5194
    %6095 = vmatprep.subr.bf16.mxu0 %v5300
    %6096 = vmatpush2.bf16.msra.mxu0 %v5299
    %6097 = vmatprep.subr.bf16.mxu0 %v5293
    %6098 = vmatpush2.bf16.msra.mxu0 %v5292
    %6099 = vmatprep.subr.bf16.mxu0 %v5286
    %6100 = vmatpush2.bf16.msra.mxu0 %v5285
    %6101 = vmatprep.subr.bf16.mxu0 %v5279
    %6102 = vmatpush2.bf16.msra.mxu0 %v5278
    %6103 = vmatprep.subr.bf16.mxu0 %v5272
    %6104 = vmatpush2.bf16.msra.mxu0 %v5271
    %6105 = vmatprep.subr.bf16.mxu0 %v5265
    %6106 = vmatpush2.bf16.msra.mxu0 %v5264
    %6107 = vmatprep.subr.bf16.mxu0 %v5258
    %6108 = vmatpush2.bf16.msra.mxu0 %v5257
    %6109 = vmatprep.subr.bf16.mxu0 %v5251
    %6110 = vmatpush2.bf16.msra.mxu0 %v5250
    %6111 = vmatprep.mubr.bf16.mxu0 %v3359
    %6112 = vmatmul.mubr.bf16.gmra.mxu0 %v3358
    %v6113 = vpop.f32.mrf.mxu0
    %v6114 = vadd.f32 %v6071, %v6113
    %v6115 = vpop.f32.mrf.mxu0
    %v6116 = vadd.f32 %v6073, %v6115
    %v6117 = vpop.f32.mrf.mxu0
    %v6118 = vadd.f32 %v6075, %v6117
    %v6119 = vpop.f32.mrf.mxu0
    %v6120 = vadd.f32 %v6077, %v6119
    %6121 = vdwg.mxu0
    %6122 = vmatprep.subr.bf16.mxu0 %v5356
    %6123 = vmatpush1.bf16.msra.mxu0 %v5355
    %6124 = vmatprep.subr.bf16.mxu0 %v5349
    %6125 = vmatpush1.bf16.msra.mxu0 %v5348
    %6126 = vmatprep.subr.bf16.mxu0 %v5342
    %6127 = vmatpush1.bf16.msra.mxu0 %v5341
    %6128 = vmatprep.subr.bf16.mxu0 %v5335
    %6129 = vmatpush1.bf16.msra.mxu0 %v5334
    %6130 = vmatprep.subr.bf16.mxu0 %v5328
    %6131 = vmatpush1.bf16.msra.mxu0 %v5327
    %6132 = vmatprep.subr.bf16.mxu0 %v5321
    %6133 = vmatpush1.bf16.msra.mxu0 %v5320
    %6134 = vmatprep.subr.bf16.mxu0 %v5314
    %6135 = vmatpush1.bf16.msra.mxu0 %v5313
    %6136 = vmatprep.subr.bf16.mxu0 %v5307
    %6137 = vmatpush1.bf16.msra.mxu0 %v5306
    %6138 = vmatprep.subr.bf16.mxu0 %v5412
    %6139 = vmatpush2.bf16.msra.mxu0 %v5411
    %6140 = vmatprep.subr.bf16.mxu0 %v5405
    %6141 = vmatpush2.bf16.msra.mxu0 %v5404
    %6142 = vmatprep.subr.bf16.mxu0 %v5398
    %6143 = vmatpush2.bf16.msra.mxu0 %v5397
    %6144 = vmatprep.subr.bf16.mxu0 %v5391
    %6145 = vmatpush2.bf16.msra.mxu0 %v5390
    %6146 = vmatprep.subr.bf16.mxu0 %v5384
    %6147 = vmatpush2.bf16.msra.mxu0 %v5383
    %6148 = vmatprep.subr.bf16.mxu0 %v5377
    %6149 = vmatpush2.bf16.msra.mxu0 %v5376
    %6150 = vmatprep.subr.bf16.mxu0 %v5370
    %6151 = vmatpush2.bf16.msra.mxu0 %v5369
    %6152 = vmatprep.subr.bf16.mxu0 %v5363
    %6153 = vmatpush2.bf16.msra.mxu0 %v5362
    %6154 = vmatprep.mubr.bf16.mxu0 %v3361
    %6155 = vmatmul.mubr.bf16.gmra.mxu0 %v3360
    %v6156 = vpop.f32.mrf.mxu0
    %v6157 = vadd.f32 %v6114, %v6156
    %v6158 = vpop.f32.mrf.mxu0
    %v6159 = vadd.f32 %v6116, %v6158
    %v6160 = vpop.f32.mrf.mxu0
    %v6161 = vadd.f32 %v6118, %v6160
    %v6162 = vpop.f32.mrf.mxu0
    %v6163 = vadd.f32 %v6120, %v6162
    %6164 = vdwg.mxu0
    %6165 = vmatprep.subr.bf16.mxu0 %v5468
    %6166 = vmatpush1.bf16.msra.mxu0 %v5467
    %6167 = vmatprep.subr.bf16.mxu0 %v5461
    %6168 = vmatpush1.bf16.msra.mxu0 %v5460
    %6169 = vmatprep.subr.bf16.mxu0 %v5454
    %6170 = vmatpush1.bf16.msra.mxu0 %v5453
    %6171 = vmatprep.subr.bf16.mxu0 %v5447
    %6172 = vmatpush1.bf16.msra.mxu0 %v5446
    %6173 = vmatprep.subr.bf16.mxu0 %v5440
    %6174 = vmatpush1.bf16.msra.mxu0 %v5439
    %6175 = vmatprep.subr.bf16.mxu0 %v5433
    %6176 = vmatpush1.bf16.msra.mxu0 %v5432
    %6177 = vmatprep.subr.bf16.mxu0 %v5426
    %6178 = vmatpush1.bf16.msra.mxu0 %v5425
    %6179 = vmatprep.subr.bf16.mxu0 %v5419
    %6180 = vmatpush1.bf16.msra.mxu0 %v5418
    %6181 = vmatprep.subr.bf16.mxu0 0
    %6182 = vmatpush2.bf16.msra.mxu0 0
    %6183 = vmatprep.subr.bf16.mxu0 0
    %6184 = vmatpush2.bf16.msra.mxu0 0
    %6185 = vmatprep.subr.bf16.mxu0 0
    %6186 = vmatpush2.bf16.msra.mxu0 0
    %6187 = vmatprep.subr.bf16.mxu0 0
    %6188 = vmatpush2.bf16.msra.mxu0 0
    %6189 = vmatprep.subr.bf16.mxu0 0
    %6190 = vmatpush2.bf16.msra.mxu0 0
    %6191 = vmatprep.subr.bf16.mxu0 0
    %6192 = vmatpush2.bf16.msra.mxu0 0
    %6193 = vmatprep.subr.bf16.mxu0 0
    %6194 = vmatpush2.bf16.msra.mxu0 0
    %6195 = vmatprep.subr.bf16.mxu0 0
    %6196 = vmatpush2.bf16.msra.mxu0 0
    %6197 = vmatprep.mubr.bf16.mxu0 0
    %6198 = vmatmul.mubr.bf16.gmra.mxu0 %v3362
    %v6199 = vpop.f32.mrf.mxu0
    %v6200 = vadd.f32 %v6157, %v6199
    %v6201 = vpop.f32.mrf.mxu0
    %v6202 = vadd.f32 %v6159, %v6201
    %v6203 = vpop.f32.mrf.mxu0
    %v6204 = vadd.f32 %v6161, %v6203
    %v6205 = vpop.f32.mrf.mxu0
    %v6206 = vadd.f32 %v6163, %v6205
    %6207 = vdwg.mxu0
    %6208 = vmatprep.subr.bf16.mxu0 %v5134
    %6209 = vmatpush1.bf16.msra.mxu0 %v5133
    %6210 = vmatprep.subr.bf16.mxu0 %v5127
    %6211 = vmatpush1.bf16.msra.mxu0 %v5126
    %6212 = vmatprep.subr.bf16.mxu0 %v5120
    %6213 = vmatpush1.bf16.msra.mxu0 %v5119
    %6214 = vmatprep.subr.bf16.mxu0 %v5113
    %6215 = vmatpush1.bf16.msra.mxu0 %v5112
    %6216 = vmatprep.subr.bf16.mxu0 %v5106
    %6217 = vmatpush1.bf16.msra.mxu0 %v5105
    %6218 = vmatprep.subr.bf16.mxu0 %v5099
    %6219 = vmatpush1.bf16.msra.mxu0 %v5098
    %6220 = vmatprep.subr.bf16.mxu0 %v5092
    %6221 = vmatpush1.bf16.msra.mxu0 %v5091
    %6222 = vmatprep.subr.bf16.mxu0 %v5085
    %6223 = vmatpush1.bf16.msra.mxu0 %v5084
    %6224 = vmatprep.subr.bf16.mxu0 %v5190
    %6225 = vmatpush2.bf16.msra.mxu0 %v5189
    %6226 = vmatprep.subr.bf16.mxu0 %v5183
    %6227 = vmatpush2.bf16.msra.mxu0 %v5182
    %6228 = vmatprep.subr.bf16.mxu0 %v5176
    %6229 = vmatpush2.bf16.msra.mxu0 %v5175
    %6230 = vmatprep.subr.bf16.mxu0 %v5169
    %6231 = vmatpush2.bf16.msra.mxu0 %v5168
    %6232 = vmatprep.subr.bf16.mxu0 %v5162
    %6233 = vmatpush2.bf16.msra.mxu0 %v5161
    %6234 = vmatprep.subr.bf16.mxu0 %v5155
    %6235 = vmatpush2.bf16.msra.mxu0 %v5154
    %6236 = vmatprep.subr.bf16.mxu0 %v5148
    %6237 = vmatpush2.bf16.msra.mxu0 %v5147
    %6238 = vmatprep.subr.bf16.mxu0 %v5141
    %6239 = vmatpush2.bf16.msra.mxu0 %v5140
    %6240 = vmatprep.mubr.bf16.mxu0 %v3357
    %6241 = vmatmul.mubr.bf16.gmra.mxu0 %v3356
    %v6242 = vpop.f32.mrf.mxu0
    %v6243 = vadd.f32 %v3832, %v6242
    %v6244 = vpop.f32.mrf.mxu0
    %v6245 = vadd.f32 %v3836, %v6244
    %v6246 = vpop.f32.mrf.mxu0
    %v6247 = vadd.f32 %v3832, %v6246
    %v6248 = vpop.f32.mrf.mxu0
    %v6249 = vadd.f32 %v3836, %v6248
    %6250 = vdwg.mxu0
    %6251 = vmatprep.subr.bf16.mxu0 %v5246
    %6252 = vmatpush1.bf16.msra.mxu0 %v5245
    %6253 = vmatprep.subr.bf16.mxu0 %v5239
    %6254 = vmatpush1.bf16.msra.mxu0 %v5238
    %6255 = vmatprep.subr.bf16.mxu0 %v5232
    %6256 = vmatpush1.bf16.msra.mxu0 %v5231
    %6257 = vmatprep.subr.bf16.mxu0 %v5225
    %6258 = vmatpush1.bf16.msra.mxu0 %v5224
    %6259 = vmatprep.subr.bf16.mxu0 %v5218
    %6260 = vmatpush1.bf16.msra.mxu0 %v5217
    %6261 = vmatprep.subr.bf16.mxu0 %v5211
    %6262 = vmatpush1.bf16.msra.mxu0 %v5210
    %6263 = vmatprep.subr.bf16.mxu0 %v5204
    %6264 = vmatpush1.bf16.msra.mxu0 %v5203
    %6265 = vmatprep.subr.bf16.mxu0 %v5197
    %6266 = vmatpush1.bf16.msra.mxu0 %v5196
    %6267 = vmatprep.subr.bf16.mxu0 %v5302
    %6268 = vmatpush2.bf16.msra.mxu0 %v5301
    %6269 = vmatprep.subr.bf16.mxu0 %v5295
    %6270 = vmatpush2.bf16.msra.mxu0 %v5294
    %6271 = vmatprep.subr.bf16.mxu0 %v5288
    %6272 = vmatpush2.bf16.msra.mxu0 %v5287
    %6273 = vmatprep.subr.bf16.mxu0 %v5281
    %6274 = vmatpush2.bf16.msra.mxu0 %v5280
    %6275 = vmatprep.subr.bf16.mxu0 %v5274
    %6276 = vmatpush2.bf16.msra.mxu0 %v5273
    %6277 = vmatprep.subr.bf16.mxu0 %v5267
    %6278 = vmatpush2.bf16.msra.mxu0 %v5266
    %6279 = vmatprep.subr.bf16.mxu0 %v5260
    %6280 = vmatpush2.bf16.msra.mxu0 %v5259
    %6281 = vmatprep.subr.bf16.mxu0 %v5253
    %6282 = vmatpush2.bf16.msra.mxu0 %v5252
    %6283 = vmatprep.mubr.bf16.mxu0 %v3359
    %6284 = vmatmul.mubr.bf16.gmra.mxu0 %v3358
    %v6285 = vpop.f32.mrf.mxu0
    %v6286 = vadd.f32 %v6243, %v6285
    %v6287 = vpop.f32.mrf.mxu0
    %v6288 = vadd.f32 %v6245, %v6287
    %v6289 = vpop.f32.mrf.mxu0
    %v6290 = vadd.f32 %v6247, %v6289
    %v6291 = vpop.f32.mrf.mxu0
    %v6292 = vadd.f32 %v6249, %v6291
    %6293 = vdwg.mxu0
    %6294 = vmatprep.subr.bf16.mxu0 %v5358
    %6295 = vmatpush1.bf16.msra.mxu0 %v5357
    %6296 = vmatprep.subr.bf16.mxu0 %v5351
    %6297 = vmatpush1.bf16.msra.mxu0 %v5350
    %6298 = vmatprep.subr.bf16.mxu0 %v5344
    %6299 = vmatpush1.bf16.msra.mxu0 %v5343
    %6300 = vmatprep.subr.bf16.mxu0 %v5337
    %6301 = vmatpush1.bf16.msra.mxu0 %v5336
    %6302 = vmatprep.subr.bf16.mxu0 %v5330
    %6303 = vmatpush1.bf16.msra.mxu0 %v5329
    %6304 = vmatprep.subr.bf16.mxu0 %v5323
    %6305 = vmatpush1.bf16.msra.mxu0 %v5322
    %6306 = vmatprep.subr.bf16.mxu0 %v5316
    %6307 = vmatpush1.bf16.msra.mxu0 %v5315
    %6308 = vmatprep.subr.bf16.mxu0 %v5309
    %6309 = vmatpush1.bf16.msra.mxu0 %v5308
    %6310 = vmatprep.subr.bf16.mxu0 %v5414
    %6311 = vmatpush2.bf16.msra.mxu0 %v5413
    %6312 = vmatprep.subr.bf16.mxu0 %v5407
    %6313 = vmatpush2.bf16.msra.mxu0 %v5406
    %6314 = vmatprep.subr.bf16.mxu0 %v5400
    %6315 = vmatpush2.bf16.msra.mxu0 %v5399
    %6316 = vmatprep.subr.bf16.mxu0 %v5393
    %6317 = vmatpush2.bf16.msra.mxu0 %v5392
    %6318 = vmatprep.subr.bf16.mxu0 %v5386
    %6319 = vmatpush2.bf16.msra.mxu0 %v5385
    %6320 = vmatprep.subr.bf16.mxu0 %v5379
    %6321 = vmatpush2.bf16.msra.mxu0 %v5378
    %6322 = vmatprep.subr.bf16.mxu0 %v5372
    %6323 = vmatpush2.bf16.msra.mxu0 %v5371
    %6324 = vmatprep.subr.bf16.mxu0 %v5365
    %6325 = vmatpush2.bf16.msra.mxu0 %v5364
    %6326 = vmatprep.mubr.bf16.mxu0 %v3361
    %6327 = vmatmul.mubr.bf16.gmra.mxu0 %v3360
    %v6328 = vpop.f32.mrf.mxu0
    %v6329 = vadd.f32 %v6286, %v6328
    %v6330 = vpop.f32.mrf.mxu0
    %v6331 = vadd.f32 %v6288, %v6330
    %v6332 = vpop.f32.mrf.mxu0
    %v6333 = vadd.f32 %v6290, %v6332
    %v6334 = vpop.f32.mrf.mxu0
    %v6335 = vadd.f32 %v6292, %v6334
    %6336 = vdwg.mxu0
    %6337 = vmatprep.subr.bf16.mxu0 %v5470
    %6338 = vmatpush1.bf16.msra.mxu0 %v5469
    %6339 = vmatprep.subr.bf16.mxu0 %v5463
    %6340 = vmatpush1.bf16.msra.mxu0 %v5462
    %6341 = vmatprep.subr.bf16.mxu0 %v5456
    %6342 = vmatpush1.bf16.msra.mxu0 %v5455
    %6343 = vmatprep.subr.bf16.mxu0 %v5449
    %6344 = vmatpush1.bf16.msra.mxu0 %v5448
    %6345 = vmatprep.subr.bf16.mxu0 %v5442
    %6346 = vmatpush1.bf16.msra.mxu0 %v5441
    %6347 = vmatprep.subr.bf16.mxu0 %v5435
    %6348 = vmatpush1.bf16.msra.mxu0 %v5434
    %6349 = vmatprep.subr.bf16.mxu0 %v5428
    %6350 = vmatpush1.bf16.msra.mxu0 %v5427
    %6351 = vmatprep.subr.bf16.mxu0 %v5421
    %6352 = vmatpush1.bf16.msra.mxu0 %v5420
    %6353 = vmatprep.subr.bf16.mxu0 0
    %6354 = vmatpush2.bf16.msra.mxu0 0
    %6355 = vmatprep.subr.bf16.mxu0 0
    %6356 = vmatpush2.bf16.msra.mxu0 0
    %6357 = vmatprep.subr.bf16.mxu0 0
    %6358 = vmatpush2.bf16.msra.mxu0 0
    %6359 = vmatprep.subr.bf16.mxu0 0
    %6360 = vmatpush2.bf16.msra.mxu0 0
    %6361 = vmatprep.subr.bf16.mxu0 0
    %6362 = vmatpush2.bf16.msra.mxu0 0
    %6363 = vmatprep.subr.bf16.mxu0 0
    %6364 = vmatpush2.bf16.msra.mxu0 0
    %6365 = vmatprep.subr.bf16.mxu0 0
    %6366 = vmatpush2.bf16.msra.mxu0 0
    %6367 = vmatprep.subr.bf16.mxu0 0
    %6368 = vmatpush2.bf16.msra.mxu0 0
    %6369 = vmatprep.mubr.bf16.mxu0 0
    %6370 = vmatmul.mubr.bf16.gmra.mxu0 %v3362
    %v6371 = vpop.f32.mrf.mxu0
    %v6372 = vadd.f32 %v6329, %v6371
    %v6373 = vpop.f32.mrf.mxu0
    %v6374 = vadd.f32 %v6331, %v6373
    %v6375 = vpop.f32.mrf.mxu0
    %v6376 = vadd.f32 %v6333, %v6375
    %v6377 = vpop.f32.mrf.mxu0
    %v6378 = vadd.f32 %v6335, %v6377
    %6379 = vdwg.mxu0
    %6380 = vmatprep.subr.bf16.mxu0 0
    %6381 = vmatpush1.bf16.msra.mxu0 %v5135
    %6382 = vmatprep.subr.bf16.mxu0 0
    %6383 = vmatpush1.bf16.msra.mxu0 %v5128
    %6384 = vmatprep.subr.bf16.mxu0 0
    %6385 = vmatpush1.bf16.msra.mxu0 %v5121
    %6386 = vmatprep.subr.bf16.mxu0 0
    %6387 = vmatpush1.bf16.msra.mxu0 %v5114
    %6388 = vmatprep.subr.bf16.mxu0 0
    %6389 = vmatpush1.bf16.msra.mxu0 %v5107
    %6390 = vmatprep.subr.bf16.mxu0 0
    %6391 = vmatpush1.bf16.msra.mxu0 %v5100
    %6392 = vmatprep.subr.bf16.mxu0 0
    %6393 = vmatpush1.bf16.msra.mxu0 %v5093
    %6394 = vmatprep.subr.bf16.mxu0 0
    %6395 = vmatpush1.bf16.msra.mxu0 %v5086
    %6396 = vmatprep.subr.bf16.mxu0 0
    %6397 = vmatpush2.bf16.msra.mxu0 %v5191
    %6398 = vmatprep.subr.bf16.mxu0 0
    %6399 = vmatpush2.bf16.msra.mxu0 %v5184
    %6400 = vmatprep.subr.bf16.mxu0 0
    %6401 = vmatpush2.bf16.msra.mxu0 %v5177
    %6402 = vmatprep.subr.bf16.mxu0 0
    %6403 = vmatpush2.bf16.msra.mxu0 %v5170
    %6404 = vmatprep.subr.bf16.mxu0 0
    %6405 = vmatpush2.bf16.msra.mxu0 %v5163
    %6406 = vmatprep.subr.bf16.mxu0 0
    %6407 = vmatpush2.bf16.msra.mxu0 %v5156
    %6408 = vmatprep.subr.bf16.mxu0 0
    %6409 = vmatpush2.bf16.msra.mxu0 %v5149
    %6410 = vmatprep.subr.bf16.mxu0 0
    %6411 = vmatpush2.bf16.msra.mxu0 %v5142
    %6412 = vmatprep.mubr.bf16.mxu0 %v3357
    %6413 = vmatmul.mubr.bf16.gmra.mxu0 %v3356
    %v6414 = vpop.f32.mrf.mxu0
    %v6415 = vadd.f32 %v3840, %v6414
    %v6416 = vpop.f32.mrf.mxu0
    %v6417 = vpop.f32.mrf.mxu0
    %v6418 = vadd.f32 %v3840, %v6417
    %v6419 = vpop.f32.mrf.mxu0
    %6420 = vdwg.mxu0
    %6421 = vmatprep.subr.bf16.mxu0 0
    %6422 = vmatpush1.bf16.msra.mxu0 %v5247
    %6423 = vmatprep.subr.bf16.mxu0 0
    %6424 = vmatpush1.bf16.msra.mxu0 %v5240
    %6425 = vmatprep.subr.bf16.mxu0 0
    %6426 = vmatpush1.bf16.msra.mxu0 %v5233
    %6427 = vmatprep.subr.bf16.mxu0 0
    %6428 = vmatpush1.bf16.msra.mxu0 %v5226
    %6429 = vmatprep.subr.bf16.mxu0 0
    %6430 = vmatpush1.bf16.msra.mxu0 %v5219
    %6431 = vmatprep.subr.bf16.mxu0 0
    %6432 = vmatpush1.bf16.msra.mxu0 %v5212
    %6433 = vmatprep.subr.bf16.mxu0 0
    %6434 = vmatpush1.bf16.msra.mxu0 %v5205
    %6435 = vmatprep.subr.bf16.mxu0 0
    %6436 = vmatpush1.bf16.msra.mxu0 %v5198
    %6437 = vmatprep.subr.bf16.mxu0 0
    %6438 = vmatpush2.bf16.msra.mxu0 %v5303
    %6439 = vmatprep.subr.bf16.mxu0 0
    %6440 = vmatpush2.bf16.msra.mxu0 %v5296
    %6441 = vmatprep.subr.bf16.mxu0 0
    %6442 = vmatpush2.bf16.msra.mxu0 %v5289
    %6443 = vmatprep.subr.bf16.mxu0 0
    %6444 = vmatpush2.bf16.msra.mxu0 %v5282
    %6445 = vmatprep.subr.bf16.mxu0 0
    %6446 = vmatpush2.bf16.msra.mxu0 %v5275
    %6447 = vmatprep.subr.bf16.mxu0 0
    %6448 = vmatpush2.bf16.msra.mxu0 %v5268
    %6449 = vmatprep.subr.bf16.mxu0 0
    %6450 = vmatpush2.bf16.msra.mxu0 %v5261
    %6451 = vmatprep.subr.bf16.mxu0 0
    %6452 = vmatpush2.bf16.msra.mxu0 %v5254
    %6453 = vmatprep.mubr.bf16.mxu0 %v3359
    %6454 = vmatmul.mubr.bf16.gmra.mxu0 %v3358
    %v6455 = vpop.f32.mrf.mxu0
    %v6456 = vadd.f32 %v6415, %v6455
    %v6457 = vpop.f32.mrf.mxu0
    %v6458 = vpop.f32.mrf.mxu0
    %v6459 = vadd.f32 %v6418, %v6458
    %v6460 = vpop.f32.mrf.mxu0
    %6461 = vdwg.mxu0
    %6462 = vmatprep.subr.bf16.mxu0 0
    %6463 = vmatpush1.bf16.msra.mxu0 %v5359
    %6464 = vmatprep.subr.bf16.mxu0 0
    %6465 = vmatpush1.bf16.msra.mxu0 %v5352
    %6466 = vmatprep.subr.bf16.mxu0 0
    %6467 = vmatpush1.bf16.msra.mxu0 %v5345
    %6468 = vmatprep.subr.bf16.mxu0 0
    %6469 = vmatpush1.bf16.msra.mxu0 %v5338
    %6470 = vmatprep.subr.bf16.mxu0 0
    %6471 = vmatpush1.bf16.msra.mxu0 %v5331
    %6472 = vmatprep.subr.bf16.mxu0 0
    %6473 = vmatpush1.bf16.msra.mxu0 %v5324
    %6474 = vmatprep.subr.bf16.mxu0 0
    %6475 = vmatpush1.bf16.msra.mxu0 %v5317
    %6476 = vmatprep.subr.bf16.mxu0 0
    %6477 = vmatpush1.bf16.msra.mxu0 %v5310
    %6478 = vmatprep.subr.bf16.mxu0 0
    %6479 = vmatpush2.bf16.msra.mxu0 %v5415
    %6480 = vmatprep.subr.bf16.mxu0 0
    %6481 = vmatpush2.bf16.msra.mxu0 %v5408
    %6482 = vmatprep.subr.bf16.mxu0 0
    %6483 = vmatpush2.bf16.msra.mxu0 %v5401
    %6484 = vmatprep.subr.bf16.mxu0 0
    %6485 = vmatpush2.bf16.msra.mxu0 %v5394
    %6486 = vmatprep.subr.bf16.mxu0 0
    %6487 = vmatpush2.bf16.msra.mxu0 %v5387
    %6488 = vmatprep.subr.bf16.mxu0 0
    %6489 = vmatpush2.bf16.msra.mxu0 %v5380
    %6490 = vmatprep.subr.bf16.mxu0 0
    %6491 = vmatpush2.bf16.msra.mxu0 %v5373
    %6492 = vmatprep.subr.bf16.mxu0 0
    %6493 = vmatpush2.bf16.msra.mxu0 %v5366
    %6494 = vmatprep.mubr.bf16.mxu0 %v3361
    %6495 = vmatmul.mubr.bf16.gmra.mxu0 %v3360
    %v6496 = vpop.f32.mrf.mxu0
    %v6497 = vadd.f32 %v6456, %v6496
    %v6498 = vpop.f32.mrf.mxu0
    %v6499 = vpop.f32.mrf.mxu0
    %v6500 = vadd.f32 %v6459, %v6499
    %v6501 = vpop.f32.mrf.mxu0
    %6502 = vdwg.mxu0
    %6503 = vmatprep.subr.bf16.mxu0 0
    %6504 = vmatpush1.bf16.msra.mxu0 %v5471
    %6505 = vmatprep.subr.bf16.mxu0 0
    %6506 = vmatpush1.bf16.msra.mxu0 %v5464
    %6507 = vmatprep.subr.bf16.mxu0 0
    %6508 = vmatpush1.bf16.msra.mxu0 %v5457
    %6509 = vmatprep.subr.bf16.mxu0 0
    %6510 = vmatpush1.bf16.msra.mxu0 %v5450
    %6511 = vmatprep.subr.bf16.mxu0 0
    %6512 = vmatpush1.bf16.msra.mxu0 %v5443
    %6513 = vmatprep.subr.bf16.mxu0 0
    %6514 = vmatpush1.bf16.msra.mxu0 %v5436
    %6515 = vmatprep.subr.bf16.mxu0 0
    %6516 = vmatpush1.bf16.msra.mxu0 %v5429
    %6517 = vmatprep.subr.bf16.mxu0 0
    %6518 = vmatpush1.bf16.msra.mxu0 %v5422
    %6519 = vmatprep.subr.bf16.mxu0 0
    %6520 = vmatpush2.bf16.msra.mxu0 0
    %6521 = vmatprep.subr.bf16.mxu0 0
    %6522 = vmatpush2.bf16.msra.mxu0 0
    %6523 = vmatprep.subr.bf16.mxu0 0
    %6524 = vmatpush2.bf16.msra.mxu0 0
    %6525 = vmatprep.subr.bf16.mxu0 0
    %6526 = vmatpush2.bf16.msra.mxu0 0
    %6527 = vmatprep.subr.bf16.mxu0 0
    %6528 = vmatpush2.bf16.msra.mxu0 0
    %6529 = vmatprep.subr.bf16.mxu0 0
    %6530 = vmatpush2.bf16.msra.mxu0 0
    %6531 = vmatprep.subr.bf16.mxu0 0
    %6532 = vmatpush2.bf16.msra.mxu0 0
    %6533 = vmatprep.subr.bf16.mxu0 0
    %6534 = vmatpush2.bf16.msra.mxu0 0
    %6535 = vmatprep.mubr.bf16.mxu0 0
    %6536 = vmatmul.mubr.bf16.gmra.mxu0 %v3362
    %v6537 = vpop.f32.mrf.mxu0
    %v6538 = vadd.f32 %v6497, %v6537
    %v6539 = vpop.f32.mrf.mxu0
    %v6540 = vpop.f32.mrf.mxu0
    %v6541 = vadd.f32 %v6500, %v6540
    %v6542 = vpop.f32.mrf.mxu0
    %6543 = vdwg.mxu0
    %v6544 = vtanh.pop %v6028
    %v6545 = vtanh.pop %v6030
    %v6546 = vtanh.pop %v6200
    %v6547 = vtanh.pop %v6202
    %v6548 = vtanh.pop %v6372
    %v6549 = vtanh.pop %v6374
    %v6550 = vtanh.pop %v6538
    %v6551 = vtanh.pop %v6032
    %v6552 = vtanh.pop %v6034
    %v6553 = vtanh.pop %v6204
    %v6554 = vtanh.pop %v6206
    %v6555 = vtanh.pop %v6376
    %v6556 = vtanh.pop %v6378
    %v6557 = vtanh.pop %v6541
    %v6558 = vpack.c.bf16 %v6551, %v6544
    %v6559 = vpack.c.bf16 %v6552, %v6545
    %v6560 = vpack.c.bf16 %v6553, %v6546
    %v6561 = vpack.c.bf16 %v6554, %v6547
    %v6562 = vpack.c.bf16 %v6555, %v6548
    %v6563 = vpack.c.bf16 %v6556, %v6549
    %v6564 = vpack.c.bf16 %v6557, %v6550
    %v6565 = vld [vmem:[#allocation11] sm:$0xf]
    %v6566 = vld [vmem:[#allocation11 + $0x4] sm:$0xf]
    %v6567 = vld [vmem:[#allocation11 + $0x8] sm:$0xf]
    %v6568 = vld [vmem:[#allocation11 + $0xc] sm:$0xf]
    %v6569 = vld [vmem:[#allocation11 + $0x10] sm:$0xf]
    %v6570 = vld [vmem:[#allocation11 + $0x14] sm:$0xf]
    %v6571 = vld [vmem:[#allocation11 + $0x18] sm:$0xf]
    %v6572 = vld [vmem:[#allocation11 + $0x1c] sm:$0xf]
    %v6573 = vld [vmem:[#allocation11 + $0x20] sm:$0xf]
    %v6574 = vld [vmem:[#allocation11 + $0x24] sm:$0xf]
    %v6575 = vld [vmem:[#allocation11 + $0x28] sm:$0xf]
    %v6576 = vld [vmem:[#allocation11 + $0x2c] sm:$0xf]
    %v6577 = vld [vmem:[#allocation11 + $0x30] sm:$0xf]
    %v6578 = vld [vmem:[#allocation11 + $0x34] sm:$0xf]
    %v6579 = vld [vmem:[#allocation11 + $0x38] sm:$0xf]
    %v6580 = vld [vmem:[#allocation11 + $0x3c] sm:$0xf]
    %v6581 = vld [vmem:[#allocation11 + $0x40] sm:$0xf]
    %v6582 = vld [vmem:[#allocation11 + $0x44] sm:$0xf]
    %v6583 = vld [vmem:[#allocation11 + $0x48] sm:$0xf]
    %v6584 = vld [vmem:[#allocation11 + $0x4c] sm:$0xf]
    %v6585 = vld [vmem:[#allocation11 + $0x50] sm:$0xf]
    %v6586 = vld [vmem:[#allocation11 + $0x54] sm:$0xf]
    %v6587 = vld [vmem:[#allocation11 + $0x58] sm:$0xf]
    %v6588 = vld [vmem:[#allocation11 + $0x5c] sm:$0xf]
    %v6589 = vld [vmem:[#allocation11 + $0x60] sm:$0xf]
    %v6590 = vld [vmem:[#allocation11 + $0x64] sm:$0xf]
    %v6591 = vld [vmem:[#allocation11 + $0x68] sm:$0xf]
    %v6592 = vld [vmem:[#allocation11 + $0x6c] sm:$0xf]
    %v6593 = vld [vmem:[#allocation11 + $0x70] sm:$0xf]
    %v6594 = vld [vmem:[#allocation11 + $0x74] sm:$0xf]
    %v6595 = vld [vmem:[#allocation11 + $0x78] sm:$0xf]
    %v6596 = vld [vmem:[#allocation11 + $0x7c] sm:$0xf]
    %v6597 = vld [vmem:[#allocation11 + $0x80] sm:$0xf]
    %v6598 = vld [vmem:[#allocation11 + $0x84] sm:$0xf]
    %v6599 = vld [vmem:[#allocation11 + $0x88] sm:$0xf]
    %v6600 = vld [vmem:[#allocation11 + $0x8c] sm:$0xf]
    %v6601 = vld [vmem:[#allocation11 + $0x90] sm:$0xf]
    %v6602 = vld [vmem:[#allocation11 + $0x94] sm:$0xf]
    %v6603 = vld [vmem:[#allocation11 + $0x98] sm:$0xf]
    %v6604 = vld [vmem:[#allocation11 + $0x9c] sm:$0xf]
    %v6605 = vld [vmem:[#allocation11 + $0xa0] sm:$0xf]
    %v6606 = vld [vmem:[#allocation11 + $0xa4] sm:$0xf]
    %v6607 = vld [vmem:[#allocation11 + $0xa8] sm:$0xf]
    %v6608 = vld [vmem:[#allocation11 + $0xac] sm:$0xf]
    %v6609 = vld [vmem:[#allocation11 + $0xb0] sm:$0xf]
    %v6610 = vld [vmem:[#allocation11 + $0xb4] sm:$0xf]
    %v6611 = vld [vmem:[#allocation11 + $0xb8] sm:$0xf]
    %v6612 = vld [vmem:[#allocation11 + $0xbc] sm:$0xf]
    %v6613 = vld [vmem:[#allocation11 + $0xc0] sm:$0xf]
    %v6614 = vld [vmem:[#allocation11 + $0xc4] sm:$0xf]
    %v6615 = vld [vmem:[#allocation11 + $0xc8] sm:$0xf]
    %v6616 = vld [vmem:[#allocation11 + $0xcc] sm:$0xf]
    %v6617 = vld [vmem:[#allocation11 + $0xd0] sm:$0xf]
    %v6618 = vld [vmem:[#allocation11 + $0xd4] sm:$0xf]
    %v6619 = vld [vmem:[#allocation11 + $0xd8] sm:$0xf]
    %v6620 = vld [vmem:[#allocation11 + $0xdc] sm:$0xf]
    %v6621 = vld [vmem:[#allocation11 + $0xe0] sm:$0xf]
    %v6622 = vld [vmem:[#allocation11 + $0xe4] sm:$0xf]
    %v6623 = vld [vmem:[#allocation11 + $0xe8] sm:$0xf]
    %v6624 = vld [vmem:[#allocation11 + $0xec] sm:$0xf]
    %v6625 = vld [vmem:[#allocation11 + $0xf0] sm:$0xf]
    %v6626 = vld [vmem:[#allocation11 + $0xf4] sm:$0xf]
    %v6627 = vld [vmem:[#allocation11 + $0xf8] sm:$0xf]
    %v6628 = vld [vmem:[#allocation11 + $0xfc] sm:$0xf]
    %v6629 = vld [vmem:[#allocation11 + $0x100] sm:$0xf]
    %v6630 = vld [vmem:[#allocation11 + $0x104] sm:$0xf]
    %v6631 = vld [vmem:[#allocation11 + $0x108] sm:$0xf]
    %v6632 = vld [vmem:[#allocation11 + $0x10c] sm:$0xf]
    %v6633 = vld [vmem:[#allocation11 + $0x110] sm:$0xf]
    %v6634 = vld [vmem:[#allocation11 + $0x114] sm:$0xf]
    %v6635 = vld [vmem:[#allocation11 + $0x118] sm:$0xf]
    %v6636 = vld [vmem:[#allocation11 + $0x11c] sm:$0xf]
    %v6637 = vld [vmem:[#allocation11 + $0x120] sm:$0xf]
    %v6638 = vld [vmem:[#allocation11 + $0x124] sm:$0xf]
    %v6639 = vld [vmem:[#allocation11 + $0x128] sm:$0xf]
    %v6640 = vld [vmem:[#allocation11 + $0x12c] sm:$0xf]
    %v6641 = vld [vmem:[#allocation11 + $0x130] sm:$0xf]
    %v6642 = vld [vmem:[#allocation11 + $0x134] sm:$0xf]
    %v6643 = vld [vmem:[#allocation11 + $0x138] sm:$0xf]
    %v6644 = vld [vmem:[#allocation11 + $0x13c] sm:$0xf]
    %v6645 = vld [vmem:[#allocation11 + $0x140] sm:$0xf]
    %v6646 = vld [vmem:[#allocation11 + $0x144] sm:$0xf]
    %v6647 = vld [vmem:[#allocation11 + $0x148] sm:$0xf]
    %v6648 = vld [vmem:[#allocation11 + $0x14c] sm:$0xf]
    %v6649 = vld [vmem:[#allocation11 + $0x150] sm:$0xf]
    %v6650 = vld [vmem:[#allocation11 + $0x154] sm:$0xf]
    %v6651 = vld [vmem:[#allocation11 + $0x158] sm:$0xf]
    %v6652 = vld [vmem:[#allocation11 + $0x15c] sm:$0xf]
    %v6653 = vld [vmem:[#allocation11 + $0x160] sm:$0xf]
    %v6654 = vld [vmem:[#allocation11 + $0x164] sm:$0xf]
    %v6655 = vld [vmem:[#allocation11 + $0x168] sm:$0xf]
    %v6656 = vld [vmem:[#allocation11 + $0x16c] sm:$0xf]
    %v6657 = vld [vmem:[#allocation11 + $0x170] sm:$0xf]
    %v6658 = vld [vmem:[#allocation11 + $0x174] sm:$0xf]
    %v6659 = vld [vmem:[#allocation11 + $0x178] sm:$0xf]
    %v6660 = vld [vmem:[#allocation11 + $0x17c] sm:$0xf]
    %v6661 = vld [vmem:[#allocation11 + $0x180] sm:$0xf]
    %v6662 = vld [vmem:[#allocation11 + $0x184] sm:$0xf]
    %v6663 = vld [vmem:[#allocation11 + $0x188] sm:$0xf]
    %v6664 = vld [vmem:[#allocation11 + $0x18c] sm:$0xf]
    %v6665 = vld [vmem:[#allocation11 + $0x190] sm:$0xf]
    %v6666 = vld [vmem:[#allocation11 + $0x194] sm:$0xf]
    %v6667 = vld [vmem:[#allocation11 + $0x198] sm:$0xf]
    %v6668 = vld [vmem:[#allocation11 + $0x19c] sm:$0xf]
    %v6669 = vld [vmem:[#allocation11 + $0x1a0] sm:$0xf]
    %v6670 = vld [vmem:[#allocation11 + $0x1a4] sm:$0xf]
    %v6671 = vld [vmem:[#allocation11 + $0x1a8] sm:$0xf]
    %v6672 = vld [vmem:[#allocation11 + $0x1ac] sm:$0xf]
    %v6673 = vld [vmem:[#allocation11 + $0x1b0] sm:$0xf]
    %v6674 = vld [vmem:[#allocation11 + $0x1b4] sm:$0xf]
    %v6675 = vld [vmem:[#allocation11 + $0x1b8] sm:$0xf]
    %v6676 = vld [vmem:[#allocation11 + $0x1bc] sm:$0xf]
    %v6677 = vld [vmem:[#allocation13] sm:$0x1]
    %v6679 = vlaneseq
    %v6680 = vshrl.u32 %v6679, 7
    %v6681 = vsub.s32 0, %v6680
    %v6682 = vrot.slane %v6677, %v6681
    %v6796 = vunpack.c.l.b16 %v6565
    %v6797 = vunpack.c.l.b16 %v6566
    %v6798 = vunpack.c.l.b16 %v6567
    %v6799 = vunpack.c.l.b16 %v6568
    %v6800 = vunpack.c.l.b16 %v6569
    %v6801 = vunpack.c.l.b16 %v6570
    %v6802 = vunpack.c.l.b16 %v6571
    %v6803 = vunpack.c.l.b16 %v6572
    %v6804 = vunpack.c.l.b16 %v6573
    %v6805 = vunpack.c.l.b16 %v6574
    %v6806 = vunpack.c.l.b16 %v6575
    %v6807 = vunpack.c.l.b16 %v6576
    %v6808 = vunpack.c.l.b16 %v6577
    %v6809 = vunpack.c.l.b16 %v6578
    %v6810 = vunpack.c.l.b16 %v6579
    %v6811 = vunpack.c.l.b16 %v6580
    %v6812 = vunpack.c.l.b16 %v6581
    %v6813 = vunpack.c.l.b16 %v6582
    %v6814 = vunpack.c.l.b16 %v6583
    %v6815 = vunpack.c.l.b16 %v6584
    %v6816 = vunpack.c.l.b16 %v6585
    %v6817 = vunpack.c.l.b16 %v6586
    %v6818 = vunpack.c.l.b16 %v6587
    %v6819 = vunpack.c.l.b16 %v6588
    %v6820 = vunpack.c.l.b16 %v6589
    %v6821 = vunpack.c.l.b16 %v6590
    %v6822 = vunpack.c.l.b16 %v6591
    %v6823 = vunpack.c.l.b16 %v6592
    %v6824 = vunpack.c.l.b16 %v6593
    %v6825 = vunpack.c.l.b16 %v6594
    %v6826 = vunpack.c.l.b16 %v6595
    %v6827 = vunpack.c.l.b16 %v6596
    %v6828 = vunpack.c.l.b16 %v6597
    %v6829 = vunpack.c.l.b16 %v6598
    %v6830 = vunpack.c.l.b16 %v6599
    %v6831 = vunpack.c.l.b16 %v6600
    %v6832 = vunpack.c.l.b16 %v6601
    %v6833 = vunpack.c.l.b16 %v6602
    %v6834 = vunpack.c.l.b16 %v6603
    %v6835 = vunpack.c.l.b16 %v6604
    %v6836 = vunpack.c.l.b16 %v6605
    %v6837 = vunpack.c.l.b16 %v6606
    %v6838 = vunpack.c.l.b16 %v6607
    %v6839 = vunpack.c.l.b16 %v6608
    %v6840 = vunpack.c.l.b16 %v6609
    %v6841 = vunpack.c.l.b16 %v6610
    %v6842 = vunpack.c.l.b16 %v6611
    %v6843 = vunpack.c.l.b16 %v6612
    %v6844 = vunpack.c.l.b16 %v6613
    %v6845 = vunpack.c.l.b16 %v6614
    %v6846 = vunpack.c.l.b16 %v6615
    %v6847 = vunpack.c.l.b16 %v6616
    %v6848 = vunpack.c.l.b16 %v6617
    %v6849 = vunpack.c.l.b16 %v6618
    %v6850 = vunpack.c.l.b16 %v6619
    %v6851 = vunpack.c.l.b16 %v6620
    %v6852 = vunpack.c.l.b16 %v6621
    %v6853 = vunpack.c.l.b16 %v6622
    %v6854 = vunpack.c.l.b16 %v6623
    %v6855 = vunpack.c.l.b16 %v6624
    %v6856 = vunpack.c.l.b16 %v6625
    %v6857 = vunpack.c.l.b16 %v6626
    %v6858 = vunpack.c.l.b16 %v6627
    %v6859 = vunpack.c.l.b16 %v6628
    %v6860 = vunpack.c.l.b16 %v6629
    %v6861 = vunpack.c.l.b16 %v6630
    %v6862 = vunpack.c.l.b16 %v6631
    %v6863 = vunpack.c.l.b16 %v6632
    %v6864 = vunpack.c.l.b16 %v6633
    %v6865 = vunpack.c.l.b16 %v6634
    %v6866 = vunpack.c.l.b16 %v6635
    %v6867 = vunpack.c.l.b16 %v6636
    %v6868 = vunpack.c.l.b16 %v6637
    %v6869 = vunpack.c.l.b16 %v6638
    %v6870 = vunpack.c.l.b16 %v6639
    %v6871 = vunpack.c.l.b16 %v6640
    %v6872 = vunpack.c.l.b16 %v6641
    %v6873 = vunpack.c.l.b16 %v6642
    %v6874 = vunpack.c.l.b16 %v6643
    %v6875 = vunpack.c.l.b16 %v6644
    %v6876 = vunpack.c.l.b16 %v6645
    %v6877 = vunpack.c.l.b16 %v6646
    %v6878 = vunpack.c.l.b16 %v6647
    %v6879 = vunpack.c.l.b16 %v6648
    %v6880 = vunpack.c.l.b16 %v6649
    %v6881 = vunpack.c.l.b16 %v6650
    %v6882 = vunpack.c.l.b16 %v6651
    %v6883 = vunpack.c.l.b16 %v6652
    %v6884 = vunpack.c.l.b16 %v6653
    %v6885 = vunpack.c.l.b16 %v6654
    %v6886 = vunpack.c.l.b16 %v6655
    %v6887 = vunpack.c.l.b16 %v6656
    %v6888 = vunpack.c.l.b16 %v6657
    %v6889 = vunpack.c.l.b16 %v6658
    %v6890 = vunpack.c.l.b16 %v6659
    %v6891 = vunpack.c.l.b16 %v6660
    %v6892 = vunpack.c.l.b16 %v6661
    %v6893 = vunpack.c.l.b16 %v6662
    %v6894 = vunpack.c.l.b16 %v6663
    %v6895 = vunpack.c.l.b16 %v6664
    %v6896 = vunpack.c.l.b16 %v6665
    %v6897 = vunpack.c.l.b16 %v6666
    %v6898 = vunpack.c.l.b16 %v6667
    %v6899 = vunpack.c.l.b16 %v6668
    %v6900 = vunpack.c.l.b16 %v6669
    %v6901 = vunpack.c.l.b16 %v6670
    %v6902 = vunpack.c.l.b16 %v6671
    %v6903 = vunpack.c.l.b16 %v6672
    %v6904 = vunpack.c.l.b16 %v6673
    %v6905 = vunpack.c.l.b16 %v6674
    %v6906 = vunpack.c.l.b16 %v6675
    %v6907 = vunpack.c.l.b16 %v6676
    %v6908 = vpack.c.b16 %v6797, %v6796
    %v6909 = vpack.c.b16 %v6799, %v6798
    %v6910 = vpack.c.b16 %v6801, %v6800
    %v6911 = vpack.c.b16 %v6803, %v6802
    %v6912 = vpack.c.b16 %v6805, %v6804
    %v6913 = vpack.c.b16 %v6807, %v6806
    %v6914 = vpack.c.b16 %v6809, %v6808
    %v6915 = vpack.c.b16 %v6811, %v6810
    %v6916 = vpack.c.b16 %v6813, %v6812
    %v6917 = vpack.c.b16 %v6815, %v6814
    %v6918 = vpack.c.b16 %v6817, %v6816
    %v6919 = vpack.c.b16 %v6819, %v6818
    %v6920 = vpack.c.b16 %v6821, %v6820
    %v6921 = vpack.c.b16 %v6823, %v6822
    %v6922 = vpack.c.b16 %v6825, %v6824
    %v6923 = vpack.c.b16 %v6827, %v6826
    %v6924 = vpack.c.b16 %v6829, %v6828
    %v6925 = vpack.c.b16 %v6831, %v6830
    %v6926 = vpack.c.b16 %v6833, %v6832
    %v6927 = vpack.c.b16 %v6835, %v6834
    %v6928 = vpack.c.b16 %v6837, %v6836
    %v6929 = vpack.c.b16 %v6839, %v6838
    %v6930 = vpack.c.b16 %v6841, %v6840
    %v6931 = vpack.c.b16 %v6843, %v6842
    %v6932 = vpack.c.b16 %v6845, %v6844
    %v6933 = vpack.c.b16 %v6847, %v6846
    %v6934 = vpack.c.b16 %v6849, %v6848
    %v6935 = vpack.c.b16 %v6851, %v6850
    %v6936 = vpack.c.b16 %v6853, %v6852
    %v6937 = vpack.c.b16 %v6855, %v6854
    %v6938 = vpack.c.b16 %v6857, %v6856
    %v6939 = vpack.c.b16 %v6859, %v6858
    %v6940 = vpack.c.b16 %v6861, %v6860
    %v6941 = vpack.c.b16 %v6863, %v6862
    %v6942 = vpack.c.b16 %v6865, %v6864
    %v6943 = vpack.c.b16 %v6867, %v6866
    %v6944 = vpack.c.b16 %v6869, %v6868
    %v6945 = vpack.c.b16 %v6871, %v6870
    %v6946 = vpack.c.b16 %v6873, %v6872
    %v6947 = vpack.c.b16 %v6875, %v6874
    %v6948 = vpack.c.b16 %v6877, %v6876
    %v6949 = vpack.c.b16 %v6879, %v6878
    %v6950 = vpack.c.b16 %v6881, %v6880
    %v6951 = vpack.c.b16 %v6883, %v6882
    %v6952 = vpack.c.b16 %v6885, %v6884
    %v6953 = vpack.c.b16 %v6887, %v6886
    %v6954 = vpack.c.b16 %v6889, %v6888
    %v6955 = vpack.c.b16 %v6891, %v6890
    %v6956 = vpack.c.b16 %v6893, %v6892
    %v6957 = vpack.c.b16 %v6895, %v6894
    %v6958 = vpack.c.b16 %v6897, %v6896
    %v6959 = vpack.c.b16 %v6899, %v6898
    %v6960 = vpack.c.b16 %v6901, %v6900
    %v6961 = vpack.c.b16 %v6903, %v6902
    %v6962 = vpack.c.b16 %v6905, %v6904
    %v6963 = vpack.c.b16 %v6907, %v6906
    %7020 = vmatprep.subr.bf16.mxu0 0
    %7021 = vmatpush1.bf16.msra.mxu0 %v6915
    %7022 = vmatprep.subr.bf16.mxu0 0
    %7023 = vmatpush1.bf16.msra.mxu0 %v6914
    %7024 = vmatprep.subr.bf16.mxu0 0
    %7025 = vmatpush1.bf16.msra.mxu0 %v6913
    %7026 = vmatprep.subr.bf16.mxu0 0
    %7027 = vmatpush1.bf16.msra.mxu0 %v6912
    %7028 = vmatprep.subr.bf16.mxu0 0
    %7029 = vmatpush1.bf16.msra.mxu0 %v6911
    %7030 = vmatprep.subr.bf16.mxu0 0
    %7031 = vmatpush1.bf16.msra.mxu0 %v6910
    %7032 = vmatprep.subr.bf16.mxu0 0
    %7033 = vmatpush1.bf16.msra.mxu0 %v6909
    %7034 = vmatprep.subr.bf16.mxu0 0
    %7035 = vmatpush1.bf16.msra.mxu0 %v6908
    %7036 = vmatprep.subr.bf16.mxu0 0
    %7037 = vmatpush2.bf16.msra.mxu0 %v6923
    %7038 = vmatprep.subr.bf16.mxu0 0
    %7039 = vmatpush2.bf16.msra.mxu0 %v6922
    %7040 = vmatprep.subr.bf16.mxu0 0
    %7041 = vmatpush2.bf16.msra.mxu0 %v6921
    %7042 = vmatprep.subr.bf16.mxu0 0
    %7043 = vmatpush2.bf16.msra.mxu0 %v6920
    %7044 = vmatprep.subr.bf16.mxu0 0
    %7045 = vmatpush2.bf16.msra.mxu0 %v6919
    %7046 = vmatprep.subr.bf16.mxu0 0
    %7047 = vmatpush2.bf16.msra.mxu0 %v6918
    %7048 = vmatprep.subr.bf16.mxu0 0
    %7049 = vmatpush2.bf16.msra.mxu0 %v6917
    %7050 = vmatprep.subr.bf16.mxu0 0
    %7051 = vmatpush2.bf16.msra.mxu0 %v6916
    %7052 = vmatprep.mubr.bf16.mxu0 %v6559
    %7053 = vmatmul.mubr.bf16.gmra.mxu0 %v6558
    %v7054 = vpop.f32.mrf.mxu0
    %v7055 = vadd.f32 %v6682, %v7054
    %v7056 = vpop.f32.mrf.mxu0
    %v7057 = vpop.f32.mrf.mxu0
    %v7058 = vadd.f32 %v6682, %v7057
    %v7059 = vpop.f32.mrf.mxu0
    %7060 = vdwg.mxu0
    %7061 = vmatprep.subr.bf16.mxu0 0
    %7062 = vmatpush1.bf16.msra.mxu0 %v6931
    %7063 = vmatprep.subr.bf16.mxu0 0
    %7064 = vmatpush1.bf16.msra.mxu0 %v6930
    %7065 = vmatprep.subr.bf16.mxu0 0
    %7066 = vmatpush1.bf16.msra.mxu0 %v6929
    %7067 = vmatprep.subr.bf16.mxu0 0
    %7068 = vmatpush1.bf16.msra.mxu0 %v6928
    %7069 = vmatprep.subr.bf16.mxu0 0
    %7070 = vmatpush1.bf16.msra.mxu0 %v6927
    %7071 = vmatprep.subr.bf16.mxu0 0
    %7072 = vmatpush1.bf16.msra.mxu0 %v6926
    %7073 = vmatprep.subr.bf16.mxu0 0
    %7074 = vmatpush1.bf16.msra.mxu0 %v6925
    %7075 = vmatprep.subr.bf16.mxu0 0
    %7076 = vmatpush1.bf16.msra.mxu0 %v6924
    %7077 = vmatprep.subr.bf16.mxu0 0
    %7078 = vmatpush2.bf16.msra.mxu0 %v6939
    %7079 = vmatprep.subr.bf16.mxu0 0
    %7080 = vmatpush2.bf16.msra.mxu0 %v6938
    %7081 = vmatprep.subr.bf16.mxu0 0
    %7082 = vmatpush2.bf16.msra.mxu0 %v6937
    %7083 = vmatprep.subr.bf16.mxu0 0
    %7084 = vmatpush2.bf16.msra.mxu0 %v6936
    %7085 = vmatprep.subr.bf16.mxu0 0
    %7086 = vmatpush2.bf16.msra.mxu0 %v6935
    %7087 = vmatprep.subr.bf16.mxu0 0
    %7088 = vmatpush2.bf16.msra.mxu0 %v6934
    %7089 = vmatprep.subr.bf16.mxu0 0
    %7090 = vmatpush2.bf16.msra.mxu0 %v6933
    %7091 = vmatprep.subr.bf16.mxu0 0
    %7092 = vmatpush2.bf16.msra.mxu0 %v6932
    %7093 = vmatprep.mubr.bf16.mxu0 %v6561
    %7094 = vmatmul.mubr.bf16.gmra.mxu0 %v6560
    %v7095 = vpop.f32.mrf.mxu0
    %v7096 = vadd.f32 %v7055, %v7095
    %v7097 = vpop.f32.mrf.mxu0
    %v7098 = vpop.f32.mrf.mxu0
    %v7099 = vadd.f32 %v7058, %v7098
    %v7100 = vpop.f32.mrf.mxu0
    %7101 = vdwg.mxu0
    %7102 = vmatprep.subr.bf16.mxu0 0
    %7103 = vmatpush1.bf16.msra.mxu0 %v6947
    %7104 = vmatprep.subr.bf16.mxu0 0
    %7105 = vmatpush1.bf16.msra.mxu0 %v6946
    %7106 = vmatprep.subr.bf16.mxu0 0
    %7107 = vmatpush1.bf16.msra.mxu0 %v6945
    %7108 = vmatprep.subr.bf16.mxu0 0
    %7109 = vmatpush1.bf16.msra.mxu0 %v6944
    %7110 = vmatprep.subr.bf16.mxu0 0
    %7111 = vmatpush1.bf16.msra.mxu0 %v6943
    %7112 = vmatprep.subr.bf16.mxu0 0
    %7113 = vmatpush1.bf16.msra.mxu0 %v6942
    %7114 = vmatprep.subr.bf16.mxu0 0
    %7115 = vmatpush1.bf16.msra.mxu0 %v6941
    %7116 = vmatprep.subr.bf16.mxu0 0
    %7117 = vmatpush1.bf16.msra.mxu0 %v6940
    %7118 = vmatprep.subr.bf16.mxu0 0
    %7119 = vmatpush2.bf16.msra.mxu0 %v6955
    %7120 = vmatprep.subr.bf16.mxu0 0
    %7121 = vmatpush2.bf16.msra.mxu0 %v6954
    %7122 = vmatprep.subr.bf16.mxu0 0
    %7123 = vmatpush2.bf16.msra.mxu0 %v6953
    %7124 = vmatprep.subr.bf16.mxu0 0
    %7125 = vmatpush2.bf16.msra.mxu0 %v6952
    %7126 = vmatprep.subr.bf16.mxu0 0
    %7127 = vmatpush2.bf16.msra.mxu0 %v6951
    %7128 = vmatprep.subr.bf16.mxu0 0
    %7129 = vmatpush2.bf16.msra.mxu0 %v6950
    %7130 = vmatprep.subr.bf16.mxu0 0
    %7131 = vmatpush2.bf16.msra.mxu0 %v6949
    %7132 = vmatprep.subr.bf16.mxu0 0
    %7133 = vmatpush2.bf16.msra.mxu0 %v6948
    %7134 = vmatprep.mubr.bf16.mxu0 %v6563
    %7135 = vmatmul.mubr.bf16.gmra.mxu0 %v6562
    %v7136 = vpop.f32.mrf.mxu0
    %v7137 = vadd.f32 %v7096, %v7136
    %v7138 = vpop.f32.mrf.mxu0
    %v7139 = vpop.f32.mrf.mxu0
    %v7140 = vadd.f32 %v7099, %v7139
    %v7141 = vpop.f32.mrf.mxu0
    %7142 = vdwg.mxu0
    %7143 = vmatprep.subr.bf16.mxu0 0
    %7144 = vmatpush1.bf16.msra.mxu0 %v6963
    %7145 = vmatprep.subr.bf16.mxu0 0
    %7146 = vmatpush1.bf16.msra.mxu0 %v6962
    %7147 = vmatprep.subr.bf16.mxu0 0
    %7148 = vmatpush1.bf16.msra.mxu0 %v6961
    %7149 = vmatprep.subr.bf16.mxu0 0
    %7150 = vmatpush1.bf16.msra.mxu0 %v6960
    %7151 = vmatprep.subr.bf16.mxu0 0
    %7152 = vmatpush1.bf16.msra.mxu0 %v6959
    %7153 = vmatprep.subr.bf16.mxu0 0
    %7154 = vmatpush1.bf16.msra.mxu0 %v6958
    %7155 = vmatprep.subr.bf16.mxu0 0
    %7156 = vmatpush1.bf16.msra.mxu0 %v6957
    %7157 = vmatprep.subr.bf16.mxu0 0
    %7158 = vmatpush1.bf16.msra.mxu0 %v6956
    %7159 = vmatprep.subr.bf16.mxu0 0
    %7160 = vmatpush2.bf16.msra.mxu0 0
    %7161 = vmatprep.subr.bf16.mxu0 0
    %7162 = vmatpush2.bf16.msra.mxu0 0
    %7163 = vmatprep.subr.bf16.mxu0 0
    %7164 = vmatpush2.bf16.msra.mxu0 0
    %7165 = vmatprep.subr.bf16.mxu0 0
    %7166 = vmatpush2.bf16.msra.mxu0 0
    %7167 = vmatprep.subr.bf16.mxu0 0
    %7168 = vmatpush2.bf16.msra.mxu0 0
    %7169 = vmatprep.subr.bf16.mxu0 0
    %7170 = vmatpush2.bf16.msra.mxu0 0
    %7171 = vmatprep.subr.bf16.mxu0 0
    %7172 = vmatpush2.bf16.msra.mxu0 0
    %7173 = vmatprep.subr.bf16.mxu0 0
    %7174 = vmatpush2.bf16.msra.mxu0 0
    %7175 = vmatprep.mubr.bf16.mxu0 0
    %7176 = vmatmul.mubr.bf16.gmra.mxu0 %v6564
    %v7177 = vpop.f32.mrf.mxu0
    %v7178 = vadd.f32 %v7137, %v7177
    %v7179 = vpop.f32.mrf.mxu0
    %v7180 = vpop.f32.mrf.mxu0
    %v7181 = vadd.f32 %v7140, %v7180
    %v7182 = vpop.f32.mrf.mxu0
    %7183 = vdwg.mxu0
    %7184 = vst [vmem:[#allocation14] sm:$0xff] %v7178
    %7185 = vst [vmem:[#allocation14 + $0x8] sm:$0xff] %v7181
    // Predicated region
    $region58: #{tpu_custom_call.1} parent=1 // pred_check
      _
    $region59: #{tpu_custom_call.1} parent=1 // pred_check_branch
      %7187 = sbr.rel (0) target = $region61
    $region60: #{tpu_custom_call.1} parent=1 // pred_region
      %s7189 = ssub.s32 256, 256
      %7190 = vsyncadd [#allocation4], %s7189
      %s7191 = sshll.u32 [#allocation14], 4
      %s7192 = int_to_ptr.vmem [resolvable:$true] %s7191
      %7197 = dma.vmem_to_hbm [thread:$0]  %s7192, 256, %s7, [#allocation4], 128, 128, 8
    $region61: #{tpu_custom_call.1} parent=1 // pred_fallthru
      _
    // Predicated region
    $region62: #{tpu_custom_call.1} parent=1 // pred_check
      _
    $region63: #{tpu_custom_call.1} parent=1 // pred_check_branch
      %7199 = sbr.rel (0) target = $region65
    $region64: #{tpu_custom_call.1} parent=1 // pred_region
      %7200 = dma.done [#allocation4], 256
    $region65: #{tpu_custom_call.1} parent=1 // pred_fallthru
      _
    %7201 = vsyncpa [#allocation3], 1
    %7202 = vsyncpa [#allocation6], 1
    %7203 = vsyncpa [#allocation9], 1
    %7204 = vsyncpa [#allocation12], 1
    %7205 = vsyncpa [#allocation4], 1

</llo_original>
